<compile_context>
chip_gen: v5e
topology: v5e:2x2
jax: 0.10.0
libtpu: 0.0.40
codegen_flags: <defaults>
</compile_context>

<pallas_src>
import functools

import jax
import jax.numpy as jnp
import numpy as np
from jax import lax
from jax.experimental import pallas as pl
from jax.experimental.pallas import tpu as pltpu


def _featrans_kernel(xq_ref, xkv_ref, adj_ref, wq_ref, wk_ref, wv_ref,
                     wr_ref, wd_ref, b_ref, out_ref,
                     q_scr, m_scr, l_scr, acc_scr, *,
                     head_size, att_dim, dv, size_u, scale, block_q,
                     neg_slope, compute_dtype):
    """Grid = (q_tiles [parallel], kv_tiles [arbitrary, innermost])."""
    qi = pl.program_id(0)
    ki = pl.program_id(1)
    nk = pl.num_programs(1)

    # ---- first KV step for this query tile: project Q, reset online stats ----
    @pl.when(ki == 0)
    def _init():
        q = jnp.dot(xq_ref[...], wq_ref[...],
                    preferred_element_type=jnp.float32)
        q_scr[...] = (q * scale).astype(compute_dtype)
        m_scr[...] = jnp.full(m_scr.shape, -1e30, dtype=jnp.float32)
        l_scr[...] = jnp.zeros(l_scr.shape, jnp.float32)
        acc_scr[...] = jnp.zeros(acc_scr.shape, jnp.float32)

    # ---- K / V projections for this KV tile (weights are VMEM-resident) ----
    xkv = xkv_ref[...]
    k = jnp.dot(xkv, wk_ref[...],
                preferred_element_type=jnp.float32).astype(compute_dtype)
    v = jnp.dot(xkv, wv_ref[...],
                preferred_element_type=jnp.float32).astype(compute_dtype)

    # Adjacency mask computed ONCE and shared by all heads.
    mask = adj_ref[...] > 0
    neg = jnp.float32(-9.0e15)

    q_all = q_scr[...]
    for h in range(head_size):                 # head_size is small & static
        qh = q_all[:, h * att_dim:(h + 1) * att_dim]          # [TQ, d]
        kh = k[:, h * att_dim:(h + 1) * att_dim]               # [TK, d]
        vh = v[:, h * dv:(h + 1) * dv]                         # [TK, dv]
        # Contract last axis of both operands -> no materialized transpose.
        s = lax.dot_general(qh, kh, (((1,), (1,)), ((), ())),
                            preferred_element_type=jnp.float32)  # [TQ, TK]
        s = jnp.where(mask, s, neg)

        m_prev = m_scr[h]                                      # [TQ, 1]
        m_new = jnp.maximum(m_prev, jnp.max(s, axis=-1, keepdims=True))
        alpha = jnp.exp(m_prev - m_new)
        p = jnp.exp(s - m_new)                                 # unnormalized
        l_scr[h] = alpha * l_scr[h] + jnp.sum(p, axis=-1, keepdims=True)
        acc_scr[h] = alpha * acc_scr[h] + jnp.dot(
            p.astype(compute_dtype), vh, preferred_element_type=jnp.float32)
        m_scr[h] = m_new

    # ---- last KV step: normalize, split-K output transform, bias, LeakyReLU ----
    @pl.when(ki == nk - 1)
    def _finalize():
        # Deferred softmax normalization on [TQ, dv] (not [TQ, TK]).
        ctx = []
        for h in range(head_size):
            inv_l = pl.reciprocal(l_scr[h], approx=False)
            ctx.append((acc_scr[h] * inv_l).astype(compute_dtype))

        def transform(w_ref):
            # split-K over heads: concat(ctx) @ W == sum_h ctx_h @ W[h*dv:(h+1)*dv]
            w = w_ref[...]                                     # [v_dim, out]
            acc = jnp.dot(ctx[0], w[0:dv, :],
                          preferred_element_type=jnp.float32)
            for h in range(1, head_size):
                acc += jnp.dot(ctx[h], w[h * dv:(h + 1) * dv, :],
                               preferred_element_type=jnp.float32)
            return acc

        b = b_ref[...]                                         # [1, out] f32

        def activate(o):
            o = o + b
            return jnp.where(o >= 0, o, neg_slope * o)         # LeakyReLU(0.01)

        row0 = qi * block_q
        # Tile entirely in the "R" segment (rows < size_u): use weightr.
        @pl.when(row0 + block_q <= size_u)
        def _():
            out_ref[...] = activate(transform(wr_ref)).astype(out_ref.dtype)

        # Tile entirely in the "D" segment: use weightd.
        @pl.when(row0 >= size_u)
        def _():
            out_ref[...] = activate(transform(wd_ref)).astype(out_ref.dtype)

        # Tile straddles size_u: compute both and select per row (no misaligned
        # row slicing, works for arbitrary size_u).
        @pl.when(jnp.logical_and(row0 < size_u, row0 + block_q > size_u))
        def _():
            rows = row0 + lax.broadcasted_iota(jnp.int32, (block_q, 1), 0)
            o = jnp.where(rows < size_u, transform(wr_ref), transform(wd_ref))
            out_ref[...] = activate(o).astype(out_ref.dtype)


def _pick_block(n, target, align):
    """Largest block <= target that divides n and respects (8,128) alignment,
    falling back to the full dimension (always legal)."""
    if n <= target:
        return n
    for b in range(target, 0, -1):
        if b % align == 0 and n % b == 0:
            return b
    return n


def featrans_forward(x, wq, wk, wv, adj, wr, wd, bias, *, size_u, head_size,
                     block_q=128, block_k=128, compute_dtype=jnp.bfloat16):
    n, in_f = x.shape
    qk_dim = wq.shape[1]
    v_dim = wv.shape[1]
    out_f = wr.shape[1]
    assert qk_dim % head_size == 0 and v_dim % head_size == 0
    assert wr.shape[0] == v_dim and wd.shape[0] == v_dim
    att_dim = qk_dim // head_size
    dv = v_dim // head_size
    scale = float(att_dim) ** (-0.5)

    bq = _pick_block(n, block_q, 8)     # query-row tile
    bk = _pick_block(n, block_k, 128)   # key/value-row tile (lane axis of adj)
    grid = (n // bq, n // bk)

    # One-off casts: halves DMA for x / weights in bf16 mode, removes per-step
    # in-kernel casts (no-ops when compute_dtype == f32).
    xc = x.astype(compute_dtype)
    wqc, wkc, wvc = (w.astype(compute_dtype) for w in (wq, wk, wv))
    wrc, wdc = wr.astype(compute_dtype), wd.astype(compute_dtype)

    kernel = functools.partial(
        _featrans_kernel, head_size=head_size, att_dim=att_dim, dv=dv,
        size_u=size_u, scale=scale, block_q=bq, neg_slope=0.01,
        compute_dtype=compute_dtype)

    grid_spec = pltpu.PrefetchScalarGridSpec(
        num_scalar_prefetch=0,
        grid=grid,
        in_specs=[
            pl.BlockSpec((bq, in_f), lambda qi, ki: (qi, 0)),     # x (Q rows)
            pl.BlockSpec((bk, in_f), lambda qi, ki: (ki, 0)),     # x (K/V rows)
            pl.BlockSpec((bq, bk), lambda qi, ki: (qi, ki)),      # adj tile
            pl.BlockSpec((in_f, qk_dim), lambda qi, ki: (0, 0)),  # wq (resident)
            pl.BlockSpec((in_f, qk_dim), lambda qi, ki: (0, 0)),  # wk
            pl.BlockSpec((in_f, v_dim), lambda qi, ki: (0, 0)),   # wv
            pl.BlockSpec((v_dim, out_f), lambda qi, ki: (0, 0)),  # weightr
            pl.BlockSpec((v_dim, out_f), lambda qi, ki: (0, 0)),  # weightd
            pl.BlockSpec((1, out_f), lambda qi, ki: (0, 0)),      # bias
        ],
        out_specs=pl.BlockSpec((bq, out_f), lambda qi, ki: (qi, 0)),
        scratch_shapes=[
            pltpu.VMEM((bq, qk_dim), compute_dtype),              # scaled Q
            pltpu.VMEM((head_size, bq, 1), jnp.float32),          # running max
            pltpu.VMEM((head_size, bq, 1), jnp.float32),          # running sum
            pltpu.VMEM((head_size, bq, dv), jnp.float32),         # running ctx
        ],
    )

    return pl.pallas_call(
        kernel,
        out_shape=jax.ShapeDtypeStruct((n, out_f), jnp.float32),
        grid_spec=grid_spec,
        compiler_params=pltpu.CompilerParams(
            # q-tiles split across TensorCores; KV axis is a reduction.
            dimension_semantics=("parallel", "arbitrary"),
            vmem_limit_bytes=32 * 1024 * 1024),
    )(xc, xc, adj, wqc, wkc, wvc, wrc, wdc, bias.reshape(1, out_f))
    # TODO(synk): for multi-graph workloads, batch graphs along the row axis so
    # the small att_dim MXU contraction is amortized over full 128/256-wide tiles.


def featrans_reference(x, wq, wk, wv, adj, wr, wd, bias, *, size_u, head_size):
    """Pure-JAX transcription of the PyTorch forward (eval mode)."""
    n = x.shape[0]
    qk_dim = wq.shape[1]
    v_dim = wv.shape[1]
    att_dim = qk_dim // head_size
    dv = v_dim // head_size
    scale = float(att_dim) ** (-0.5)

    x1 = x @ wq
    x2 = x @ wk
    vv = x @ wv
    q = x1.reshape(n, head_size, att_dim).transpose(1, 0, 2) * scale  # [H,N,d]
    k = x2.reshape(n, head_size, att_dim).transpose(1, 2, 0)          # [H,d,N]
    v = vv.reshape(n, head_size, dv).transpose(1, 0, 2)               # [H,N,dv]
    s = jnp.einsum('hnd,hdm->hnm', q, k)
    s = jnp.where(adj[None, :, :] > 0, s, jnp.float32(-9.0e15))
    p = jax.nn.softmax(s, axis=-1)
    ctx = jnp.einsum('hnm,hmd->hnd', p, v)                            # [H,N,dv]
    sat = ctx.transpose(1, 0, 2).reshape(n, -1)                       # [N, vd]
    out = jnp.concatenate([sat[:size_u] @ wr, sat[size_u:] @ wd], axis=0)
    out = out + bias[None, :]
    return jnp.where(out >= 0, out, 0.01 * out)


if __name__ == "__main__":
    # Small but grid-exercising shapes (2 query tiles x 2 KV tiles).
    size_u, size_v = 128, 128
    n = size_u + size_v
    in_features = 32
    qk_dim = 32
    v_dim = 32            # must equal out_features for the weightr/weightd matmuls
    out_features = 32
    head_size = 4

    key = jax.random.PRNGKey(0)
    kx, kq, kk, kv, kr, kd, ka = jax.random.split(key, 7)

    def xavier(k, shape):
        lim = np.sqrt(6.0 / (shape[0] + shape[1]))
        return jax.random.uniform(k, shape, jnp.float32, -lim, lim)

    x = jax.random.normal(kx, (n, in_features), jnp.float32)
    wq = xavier(kq, (in_features, qk_dim))     # == linear_q.weight.T
    wk = xavier(kk, (in_features, qk_dim))     # == linear_k.weight.T
    wv = xavier(kv, (in_features, v_dim))      # == linear_v.weight.T
    wr = xavier(kr, (out_features, out_features))
    wd = xavier(kd, (out_features, out_features))
    bias = jnp.zeros((out_features,), jnp.float32)

    # Dense binary adjacency (every node at least self-connected).
    adj = (jax.random.uniform(ka, (n, n)) > 0.5).astype(jnp.float32)
    adj = jnp.maximum(adj, jnp.eye(n, dtype=jnp.float32))

    args = (x, wq, wk, wv, adj, wr, wd, bias)

    # 1) f32 compute mode: validates the online-softmax / split-K structure
    #    and the tile-aligned R/D branches (size_u == block_q).
    out_f32 = featrans_forward(*args, size_u=size_u, head_size=head_size,
                               compute_dtype=jnp.float32)
    out_f32 = jax.block_until_ready(out_f32)
    ref = featrans_reference(*args, size_u=size_u, head_size=head_size)
    np.testing.assert_allclose(np.asarray(out_f32), np.asarray(ref),
                               rtol=1e-2, atol=1e-2)

    # 2) Performance path: bf16 MXU inputs, f32 accumulation; size_u not
    #    aligned to the query tile (exercises the straddling branch).
    size_u_odd = 72
    out_bf16 = featrans_forward(*args, size_u=size_u_odd, head_size=head_size,
                                compute_dtype=jnp.bfloat16)
    out_bf16 = jax.block_until_ready(out_bf16)
    ref_odd = featrans_reference(*args, size_u=size_u_odd, head_size=head_size)
    np.testing.assert_allclose(np.asarray(out_bf16), np.asarray(ref_odd),
                               rtol=1e-1, atol=1e-1)

    print("KERNEL_OK")
</pallas_src>

<mosaic_0001>
module attributes {stable_mosaic.version = 11 : i64} {
  func.func @_featrans_kernel(%arg0: i32, %arg1: i32, %arg2: memref<128x32xf32, #tpu.memory_space<vmem>>, %arg3: memref<128x32xf32, #tpu.memory_space<vmem>>, %arg4: memref<128x128xf32, #tpu.memory_space<vmem>>, %arg5: memref<32x32xf32, #tpu.memory_space<vmem>>, %arg6: memref<32x32xf32, #tpu.memory_space<vmem>>, %arg7: memref<32x32xf32, #tpu.memory_space<vmem>>, %arg8: memref<32x32xf32, #tpu.memory_space<vmem>>, %arg9: memref<32x32xf32, #tpu.memory_space<vmem>>, %arg10: memref<1x32xf32, #tpu.memory_space<vmem>>, %arg11: memref<128x32xf32, #tpu.memory_space<vmem>>, %arg12: memref<128x32xf32, #tpu.memory_space<vmem>>, %arg13: memref<4x128x1xf32, #tpu.memory_space<vmem>>, %arg14: memref<4x128x1xf32, #tpu.memory_space<vmem>>, %arg15: memref<4x128x8xf32, #tpu.memory_space<vmem>>) attributes {dimension_semantics = [#tpu.dimension_semantics<parallel>, #tpu.dimension_semantics<arbitrary>], iteration_bounds = array<i64: 2, 2>, scalar_prefetch = 0 : i64, scratch_operands = 4 : i64, tpu.core_type = #tpu.core_type<tc>, window_params = [{transform_indices = @transform_0, window_bounds = array<i64: 128, 32>}, {transform_indices = @transform_1, window_bounds = array<i64: 128, 32>}, {transform_indices = @transform_2, window_bounds = array<i64: 128, 128>}, {pipeline_mode = #tpu.pipeline_mode<synchronous>, transform_indices = @transform_3, window_bounds = array<i64: 32, 32>}, {pipeline_mode = #tpu.pipeline_mode<synchronous>, transform_indices = @transform_4, window_bounds = array<i64: 32, 32>}, {pipeline_mode = #tpu.pipeline_mode<synchronous>, transform_indices = @transform_5, window_bounds = array<i64: 32, 32>}, {pipeline_mode = #tpu.pipeline_mode<synchronous>, transform_indices = @transform_6, window_bounds = array<i64: 32, 32>}, {pipeline_mode = #tpu.pipeline_mode<synchronous>, transform_indices = @transform_7, window_bounds = array<i64: 32, 32>}, {pipeline_mode = #tpu.pipeline_mode<synchronous>, transform_indices = @transform_8, window_bounds = array<i64: 1, 32>}, {transform_indices = @transform_9, window_bounds = array<i64: 128, 32>}]} {
    %c0_i32 = arith.constant 0 : i32
    %0 = arith.cmpi eq, %arg1, %c0_i32 : i32
    %1 = arith.extui %0 : i1 to i32
    %c0_i32_0 = arith.constant 0 : i32
    %2 = arith.cmpi ne, %1, %c0_i32_0 : i32
    scf.if %2 {
      %c0_102 = arith.constant 0 : index
      %c0_103 = arith.constant 0 : index
      %163 = vector.load %arg2[%c0_102, %c0_103] : memref<128x32xf32, #tpu.memory_space<vmem>>, vector<128x32xf32>
      %c0_104 = arith.constant 0 : index
      %c0_105 = arith.constant 0 : index
      %164 = vector.load %arg5[%c0_104, %c0_105] : memref<32x32xf32, #tpu.memory_space<vmem>>, vector<32x32xf32>
      %cst_106 = arith.constant dense<0.000000e+00> : vector<128x32xf32>
      %165 = tpu.matmul %163, %164, %cst_106 {dimension_numbers = #tpu.dot_dimension_numbers<[1], [0], [0], [1], [0, 0, 1, 1], [], []>} : vector<128x32xf32>, vector<32x32xf32>, vector<128x32xf32> -> vector<128x32xf32>
      %cst_107 = arith.constant 0.353553385 : f32
      %166 = vector.broadcast %cst_107 : f32 to vector<128x32xf32>
      %167 = arith.mulf %165, %166 : vector<128x32xf32>
      %c0_108 = arith.constant 0 : index
      %c0_109 = arith.constant 0 : index
      %168 = vector.load %arg12[%c0_108, %c0_109] : memref<128x32xf32, #tpu.memory_space<vmem>>, vector<128x32xf32>
      tpu.vector_store %arg12[%c0_108, %c0_109], %167 {strides = array<i32>} : memref<128x32xf32, #tpu.memory_space<vmem>>, vector<128x32xf32>,
      %cst_110 = arith.constant -1.000000e+30 : f32
      %169 = vector.broadcast %cst_110 : f32 to vector<4x128x1xf32>
      %c0_111 = arith.constant 0 : index
      %c0_112 = arith.constant 0 : index
      %c0_113 = arith.constant 0 : index
      %170 = vector.load %arg13[%c0_111, %c0_112, %c0_113] : memref<4x128x1xf32, #tpu.memory_space<vmem>>, vector<4x128x1xf32>
      tpu.vector_store %arg13[%c0_111, %c0_112, %c0_113], %169 {strides = array<i32>} : memref<4x128x1xf32, #tpu.memory_space<vmem>>, vector<4x128x1xf32>,
      %cst_114 = arith.constant 0.000000e+00 : f32
      %171 = vector.broadcast %cst_114 : f32 to vector<4x128x1xf32>
      %c0_115 = arith.constant 0 : index
      %c0_116 = arith.constant 0 : index
      %c0_117 = arith.constant 0 : index
      %172 = vector.load %arg14[%c0_115, %c0_116, %c0_117] : memref<4x128x1xf32, #tpu.memory_space<vmem>>, vector<4x128x1xf32>
      tpu.vector_store %arg14[%c0_115, %c0_116, %c0_117], %171 {strides = array<i32>} : memref<4x128x1xf32, #tpu.memory_space<vmem>>, vector<4x128x1xf32>,
      %cst_118 = arith.constant 0.000000e+00 : f32
      %173 = vector.broadcast %cst_118 : f32 to vector<4x128x8xf32>
      %c0_119 = arith.constant 0 : index
      %c0_120 = arith.constant 0 : index
      %c0_121 = arith.constant 0 : index
      %174 = vector.load %arg15[%c0_119, %c0_120, %c0_121] : memref<4x128x8xf32, #tpu.memory_space<vmem>>, vector<4x128x8xf32>
      tpu.vector_store %arg15[%c0_119, %c0_120, %c0_121], %173 {strides = array<i32>} : memref<4x128x8xf32, #tpu.memory_space<vmem>>, vector<4x128x8xf32>,
    } else {
    }
    %c0 = arith.constant 0 : index
    %c0_1 = arith.constant 0 : index
    %3 = vector.load %arg3[%c0, %c0_1] : memref<128x32xf32, #tpu.memory_space<vmem>>, vector<128x32xf32>
    %c0_2 = arith.constant 0 : index
    %c0_3 = arith.constant 0 : index
    %4 = vector.load %arg6[%c0_2, %c0_3] : memref<32x32xf32, #tpu.memory_space<vmem>>, vector<32x32xf32>
    %cst = arith.constant dense<0.000000e+00> : vector<128x32xf32>
    %5 = tpu.matmul %3, %4, %cst {dimension_numbers = #tpu.dot_dimension_numbers<[1], [0], [0], [1], [0, 0, 1, 1], [], []>} : vector<128x32xf32>, vector<32x32xf32>, vector<128x32xf32> -> vector<128x32xf32>
    %c0_4 = arith.constant 0 : index
    %c0_5 = arith.constant 0 : index
    %6 = vector.load %arg7[%c0_4, %c0_5] : memref<32x32xf32, #tpu.memory_space<vmem>>, vector<32x32xf32>
    %cst_6 = arith.constant dense<0.000000e+00> : vector<128x32xf32>
    %7 = tpu.matmul %3, %6, %cst_6 {dimension_numbers = #tpu.dot_dimension_numbers<[1], [0], [0], [1], [0, 0, 1, 1], [], []>} : vector<128x32xf32>, vector<32x32xf32>, vector<128x32xf32> -> vector<128x32xf32>
    %c0_7 = arith.constant 0 : index
    %c0_8 = arith.constant 0 : index
    %8 = vector.load %arg4[%c0_7, %c0_8] : memref<128x128xf32, #tpu.memory_space<vmem>>, vector<128x128xf32>
    %cst_9 = arith.constant 0.000000e+00 : f32
    %9 = vector.broadcast %cst_9 : f32 to vector<128x128xf32>
    %10 = arith.cmpf ogt, %8, %9 : vector<128x128xf32>
    %c0_10 = arith.constant 0 : index
    %c0_11 = arith.constant 0 : index
    %11 = vector.load %arg12[%c0_10, %c0_11] : memref<128x32xf32, #tpu.memory_space<vmem>>, vector<128x32xf32>
    %12 = vector.extract_strided_slice %11 {offsets = [0, 0], sizes = [128, 8], strides = [1, 1]} : vector<128x32xf32> to vector<128x8xf32>
    %13 = vector.extract_strided_slice %5 {offsets = [0, 0], sizes = [128, 8], strides = [1, 1]} : vector<128x32xf32> to vector<128x8xf32>
    %14 = vector.extract_strided_slice %7 {offsets = [0, 0], sizes = [128, 8], strides = [1, 1]} : vector<128x32xf32> to vector<128x8xf32>
    %cst_12 = arith.constant dense<0.000000e+00> : vector<128x128xf32>
    %15 = tpu.matmul %12, %13, %cst_12 {dimension_numbers = #tpu.dot_dimension_numbers<[1], [1], [0], [0], [0, 0, 1, 0], [], []>} : vector<128x8xf32>, vector<128x8xf32>, vector<128x128xf32> -> vector<128x128xf32>
    %cst_13 = arith.constant -9.000000e+15 : f32
    %16 = vector.broadcast %cst_13 : f32 to vector<128x128xf32>
    %17 = arith.select %10, %15, %16 : vector<128x128xi1>, vector<128x128xf32>
    %c0_14 = arith.constant 0 : index
    %c0_15 = arith.constant 0 : index
    %c0_16 = arith.constant 0 : index
    %18 = vector.load %arg13[%c0_14, %c0_15, %c0_16] : memref<4x128x1xf32, #tpu.memory_space<vmem>>, vector<1x128x1xf32>
    %19 = vector.shape_cast %18 : vector<1x128x1xf32> to vector<128x1xf32>
    %cst_17 = arith.constant dense<0xFF800000> : vector<128xf32>
    %20 = vector.multi_reduction <maximumf>, %17, %cst_17 [1] : vector<128x128xf32> to vector<128xf32>
    %21 = vector.shape_cast %20 : vector<128xf32> to vector<128x1xf32>
    %22 = arith.maximumf %19, %21 : vector<128x1xf32>
    %23 = arith.subf %19, %22 : vector<128x1xf32>
    %24 = math.exp %23 : vector<128x1xf32>
    %25 = vector.broadcast %22 : vector<128x1xf32> to vector<128x128xf32>
    %26 = arith.subf %17, %25 : vector<128x128xf32>
    %27 = math.exp %26 : vector<128x128xf32>
    %c0_18 = arith.constant 0 : index
    %c0_19 = arith.constant 0 : index
    %c0_20 = arith.constant 0 : index
    %28 = vector.load %arg14[%c0_18, %c0_19, %c0_20] : memref<4x128x1xf32, #tpu.memory_space<vmem>>, vector<1x128x1xf32>
    %29 = vector.shape_cast %28 : vector<1x128x1xf32> to vector<128x1xf32>
    %30 = arith.mulf %24, %29 : vector<128x1xf32>
    %cst_21 = arith.constant dense<0.000000e+00> : vector<128xf32>
    %31 = vector.multi_reduction <add>, %27, %cst_21 [1] : vector<128x128xf32> to vector<128xf32>
    %32 = vector.shape_cast %31 : vector<128xf32> to vector<128x1xf32>
    %33 = arith.addf %30, %32 : vector<128x1xf32>
    %c0_22 = arith.constant 0 : index
    %c0_23 = arith.constant 0 : index
    %c0_24 = arith.constant 0 : index
    %34 = vector.load %arg14[%c0_22, %c0_23, %c0_24] : memref<4x128x1xf32, #tpu.memory_space<vmem>>, vector<1x128x1xf32>
    %35 = vector.shape_cast %34 : vector<1x128x1xf32> to vector<128x1xf32>
    %36 = vector.shape_cast %33 : vector<128x1xf32> to vector<1x128x1xf32>
    tpu.vector_store %arg14[%c0_22, %c0_23, %c0_24], %36 {strides = array<i32>} : memref<4x128x1xf32, #tpu.memory_space<vmem>>, vector<1x128x1xf32>,
    %c0_25 = arith.constant 0 : index
    %c0_26 = arith.constant 0 : index
    %c0_27 = arith.constant 0 : index
    %37 = vector.load %arg15[%c0_25, %c0_26, %c0_27] : memref<4x128x8xf32, #tpu.memory_space<vmem>>, vector<1x128x8xf32>
    %38 = vector.shape_cast %37 : vector<1x128x8xf32> to vector<128x8xf32>
    %39 = vector.broadcast %24 : vector<128x1xf32> to vector<128x8xf32>
    %40 = arith.mulf %39, %38 : vector<128x8xf32>
    %cst_28 = arith.constant dense<0.000000e+00> : vector<128x8xf32>
    %41 = tpu.matmul %27, %14, %cst_28 {dimension_numbers = #tpu.dot_dimension_numbers<[1], [0], [0], [1], [0, 0, 1, 1], [], []>} : vector<128x128xf32>, vector<128x8xf32>, vector<128x8xf32> -> vector<128x8xf32>
    %42 = arith.addf %40, %41 : vector<128x8xf32>
    %c0_29 = arith.constant 0 : index
    %c0_30 = arith.constant 0 : index
    %c0_31 = arith.constant 0 : index
    %43 = vector.load %arg15[%c0_29, %c0_30, %c0_31] : memref<4x128x8xf32, #tpu.memory_space<vmem>>, vector<1x128x8xf32>
    %44 = vector.shape_cast %43 : vector<1x128x8xf32> to vector<128x8xf32>
    %45 = vector.shape_cast %42 : vector<128x8xf32> to vector<1x128x8xf32>
    tpu.vector_store %arg15[%c0_29, %c0_30, %c0_31], %45 {strides = array<i32>} : memref<4x128x8xf32, #tpu.memory_space<vmem>>, vector<1x128x8xf32>,
    %c0_32 = arith.constant 0 : index
    %c0_33 = arith.constant 0 : index
    %c0_34 = arith.constant 0 : index
    %46 = vector.load %arg13[%c0_32, %c0_33, %c0_34] : memref<4x128x1xf32, #tpu.memory_space<vmem>>, vector<1x128x1xf32>
    %47 = vector.shape_cast %46 : vector<1x128x1xf32> to vector<128x1xf32>
    %48 = vector.shape_cast %22 : vector<128x1xf32> to vector<1x128x1xf32>
    tpu.vector_store %arg13[%c0_32, %c0_33, %c0_34], %48 {strides = array<i32>} : memref<4x128x1xf32, #tpu.memory_space<vmem>>, vector<1x128x1xf32>,
    %49 = vector.extract_strided_slice %11 {offsets = [0, 8], sizes = [128, 8], strides = [1, 1]} : vector<128x32xf32> to vector<128x8xf32>
    %50 = vector.extract_strided_slice %5 {offsets = [0, 8], sizes = [128, 8], strides = [1, 1]} : vector<128x32xf32> to vector<128x8xf32>
    %51 = vector.extract_strided_slice %7 {offsets = [0, 8], sizes = [128, 8], strides = [1, 1]} : vector<128x32xf32> to vector<128x8xf32>
    %cst_35 = arith.constant dense<0.000000e+00> : vector<128x128xf32>
    %52 = tpu.matmul %49, %50, %cst_35 {dimension_numbers = #tpu.dot_dimension_numbers<[1], [1], [0], [0], [0, 0, 1, 0], [], []>} : vector<128x8xf32>, vector<128x8xf32>, vector<128x128xf32> -> vector<128x128xf32>
    %cst_36 = arith.constant -9.000000e+15 : f32
    %53 = vector.broadcast %cst_36 : f32 to vector<128x128xf32>
    %54 = arith.select %10, %52, %53 : vector<128x128xi1>, vector<128x128xf32>
    %c1 = arith.constant 1 : index
    %c0_37 = arith.constant 0 : index
    %c0_38 = arith.constant 0 : index
    %55 = vector.load %arg13[%c1, %c0_37, %c0_38] : memref<4x128x1xf32, #tpu.memory_space<vmem>>, vector<1x128x1xf32>
    %56 = vector.shape_cast %55 : vector<1x128x1xf32> to vector<128x1xf32>
    %cst_39 = arith.constant dense<0xFF800000> : vector<128xf32>
    %57 = vector.multi_reduction <maximumf>, %54, %cst_39 [1] : vector<128x128xf32> to vector<128xf32>
    %58 = vector.shape_cast %57 : vector<128xf32> to vector<128x1xf32>
    %59 = arith.maximumf %56, %58 : vector<128x1xf32>
    %60 = arith.subf %56, %59 : vector<128x1xf32>
    %61 = math.exp %60 : vector<128x1xf32>
    %62 = vector.broadcast %59 : vector<128x1xf32> to vector<128x128xf32>
    %63 = arith.subf %54, %62 : vector<128x128xf32>
    %64 = math.exp %63 : vector<128x128xf32>
    %c1_40 = arith.constant 1 : index
    %c0_41 = arith.constant 0 : index
    %c0_42 = arith.constant 0 : index
    %65 = vector.load %arg14[%c1_40, %c0_41, %c0_42] : memref<4x128x1xf32, #tpu.memory_space<vmem>>, vector<1x128x1xf32>
    %66 = vector.shape_cast %65 : vector<1x128x1xf32> to vector<128x1xf32>
    %67 = arith.mulf %61, %66 : vector<128x1xf32>
    %cst_43 = arith.constant dense<0.000000e+00> : vector<128xf32>
    %68 = vector.multi_reduction <add>, %64, %cst_43 [1] : vector<128x128xf32> to vector<128xf32>
    %69 = vector.shape_cast %68 : vector<128xf32> to vector<128x1xf32>
    %70 = arith.addf %67, %69 : vector<128x1xf32>
    %c1_44 = arith.constant 1 : index
    %c0_45 = arith.constant 0 : index
    %c0_46 = arith.constant 0 : index
    %71 = vector.load %arg14[%c1_44, %c0_45, %c0_46] : memref<4x128x1xf32, #tpu.memory_space<vmem>>, vector<1x128x1xf32>
    %72 = vector.shape_cast %71 : vector<1x128x1xf32> to vector<128x1xf32>
    %73 = vector.shape_cast %70 : vector<128x1xf32> to vector<1x128x1xf32>
    tpu.vector_store %arg14[%c1_44, %c0_45, %c0_46], %73 {strides = array<i32>} : memref<4x128x1xf32, #tpu.memory_space<vmem>>, vector<1x128x1xf32>,
    %c1_47 = arith.constant 1 : index
    %c0_48 = arith.constant 0 : index
    %c0_49 = arith.constant 0 : index
    %74 = vector.load %arg15[%c1_47, %c0_48, %c0_49] : memref<4x128x8xf32, #tpu.memory_space<vmem>>, vector<1x128x8xf32>
    %75 = vector.shape_cast %74 : vector<1x128x8xf32> to vector<128x8xf32>
    %76 = vector.broadcast %61 : vector<128x1xf32> to vector<128x8xf32>
    %77 = arith.mulf %76, %75 : vector<128x8xf32>
    %cst_50 = arith.constant dense<0.000000e+00> : vector<128x8xf32>
    %78 = tpu.matmul %64, %51, %cst_50 {dimension_numbers = #tpu.dot_dimension_numbers<[1], [0], [0], [1], [0, 0, 1, 1], [], []>} : vector<128x128xf32>, vector<128x8xf32>, vector<128x8xf32> -> vector<128x8xf32>
    %79 = arith.addf %77, %78 : vector<128x8xf32>
    %c1_51 = arith.constant 1 : index
    %c0_52 = arith.constant 0 : index
    %c0_53 = arith.constant 0 : index
    %80 = vector.load %arg15[%c1_51, %c0_52, %c0_53] : memref<4x128x8xf32, #tpu.memory_space<vmem>>, vector<1x128x8xf32>
    %81 = vector.shape_cast %80 : vector<1x128x8xf32> to vector<128x8xf32>
    %82 = vector.shape_cast %79 : vector<128x8xf32> to vector<1x128x8xf32>
    tpu.vector_store %arg15[%c1_51, %c0_52, %c0_53], %82 {strides = array<i32>} : memref<4x128x8xf32, #tpu.memory_space<vmem>>, vector<1x128x8xf32>,
    %c1_54 = arith.constant 1 : index
    %c0_55 = arith.constant 0 : index
    %c0_56 = arith.constant 0 : index
    %83 = vector.load %arg13[%c1_54, %c0_55, %c0_56] : memref<4x128x1xf32, #tpu.memory_space<vmem>>, vector<1x128x1xf32>
    %84 = vector.shape_cast %83 : vector<1x128x1xf32> to vector<128x1xf32>
    %85 = vector.shape_cast %59 : vector<128x1xf32> to vector<1x128x1xf32>
    tpu.vector_store %arg13[%c1_54, %c0_55, %c0_56], %85 {strides = array<i32>} : memref<4x128x1xf32, #tpu.memory_space<vmem>>, vector<1x128x1xf32>,
    %86 = vector.extract_strided_slice %11 {offsets = [0, 16], sizes = [128, 8], strides = [1, 1]} : vector<128x32xf32> to vector<128x8xf32>
    %87 = vector.extract_strided_slice %5 {offsets = [0, 16], sizes = [128, 8], strides = [1, 1]} : vector<128x32xf32> to vector<128x8xf32>
    %88 = vector.extract_strided_slice %7 {offsets = [0, 16], sizes = [128, 8], strides = [1, 1]} : vector<128x32xf32> to vector<128x8xf32>
    %cst_57 = arith.constant dense<0.000000e+00> : vector<128x128xf32>
    %89 = tpu.matmul %86, %87, %cst_57 {dimension_numbers = #tpu.dot_dimension_numbers<[1], [1], [0], [0], [0, 0, 1, 0], [], []>} : vector<128x8xf32>, vector<128x8xf32>, vector<128x128xf32> -> vector<128x128xf32>
    %cst_58 = arith.constant -9.000000e+15 : f32
    %90 = vector.broadcast %cst_58 : f32 to vector<128x128xf32>
    %91 = arith.select %10, %89, %90 : vector<128x128xi1>, vector<128x128xf32>
    %c2 = arith.constant 2 : index
    %c0_59 = arith.constant 0 : index
    %c0_60 = arith.constant 0 : index
    %92 = vector.load %arg13[%c2, %c0_59, %c0_60] : memref<4x128x1xf32, #tpu.memory_space<vmem>>, vector<1x128x1xf32>
    %93 = vector.shape_cast %92 : vector<1x128x1xf32> to vector<128x1xf32>
    %cst_61 = arith.constant dense<0xFF800000> : vector<128xf32>
    %94 = vector.multi_reduction <maximumf>, %91, %cst_61 [1] : vector<128x128xf32> to vector<128xf32>
    %95 = vector.shape_cast %94 : vector<128xf32> to vector<128x1xf32>
    %96 = arith.maximumf %93, %95 : vector<128x1xf32>
    %97 = arith.subf %93, %96 : vector<128x1xf32>
    %98 = math.exp %97 : vector<128x1xf32>
    %99 = vector.broadcast %96 : vector<128x1xf32> to vector<128x128xf32>
    %100 = arith.subf %91, %99 : vector<128x128xf32>
    %101 = math.exp %100 : vector<128x128xf32>
    %c2_62 = arith.constant 2 : index
    %c0_63 = arith.constant 0 : index
    %c0_64 = arith.constant 0 : index
    %102 = vector.load %arg14[%c2_62, %c0_63, %c0_64] : memref<4x128x1xf32, #tpu.memory_space<vmem>>, vector<1x128x1xf32>
    %103 = vector.shape_cast %102 : vector<1x128x1xf32> to vector<128x1xf32>
    %104 = arith.mulf %98, %103 : vector<128x1xf32>
    %cst_65 = arith.constant dense<0.000000e+00> : vector<128xf32>
    %105 = vector.multi_reduction <add>, %101, %cst_65 [1] : vector<128x128xf32> to vector<128xf32>
    %106 = vector.shape_cast %105 : vector<128xf32> to vector<128x1xf32>
    %107 = arith.addf %104, %106 : vector<128x1xf32>
    %c2_66 = arith.constant 2 : index
    %c0_67 = arith.constant 0 : index
    %c0_68 = arith.constant 0 : index
    %108 = vector.load %arg14[%c2_66, %c0_67, %c0_68] : memref<4x128x1xf32, #tpu.memory_space<vmem>>, vector<1x128x1xf32>
    %109 = vector.shape_cast %108 : vector<1x128x1xf32> to vector<128x1xf32>
    %110 = vector.shape_cast %107 : vector<128x1xf32> to vector<1x128x1xf32>
    tpu.vector_store %arg14[%c2_66, %c0_67, %c0_68], %110 {strides = array<i32>} : memref<4x128x1xf32, #tpu.memory_space<vmem>>, vector<1x128x1xf32>,
    %c2_69 = arith.constant 2 : index
    %c0_70 = arith.constant 0 : index
    %c0_71 = arith.constant 0 : index
    %111 = vector.load %arg15[%c2_69, %c0_70, %c0_71] : memref<4x128x8xf32, #tpu.memory_space<vmem>>, vector<1x128x8xf32>
    %112 = vector.shape_cast %111 : vector<1x128x8xf32> to vector<128x8xf32>
    %113 = vector.broadcast %98 : vector<128x1xf32> to vector<128x8xf32>
    %114 = arith.mulf %113, %112 : vector<128x8xf32>
    %cst_72 = arith.constant dense<0.000000e+00> : vector<128x8xf32>
    %115 = tpu.matmul %101, %88, %cst_72 {dimension_numbers = #tpu.dot_dimension_numbers<[1], [0], [0], [1], [0, 0, 1, 1], [], []>} : vector<128x128xf32>, vector<128x8xf32>, vector<128x8xf32> -> vector<128x8xf32>
    %116 = arith.addf %114, %115 : vector<128x8xf32>
    %c2_73 = arith.constant 2 : index
    %c0_74 = arith.constant 0 : index
    %c0_75 = arith.constant 0 : index
    %117 = vector.load %arg15[%c2_73, %c0_74, %c0_75] : memref<4x128x8xf32, #tpu.memory_space<vmem>>, vector<1x128x8xf32>
    %118 = vector.shape_cast %117 : vector<1x128x8xf32> to vector<128x8xf32>
    %119 = vector.shape_cast %116 : vector<128x8xf32> to vector<1x128x8xf32>
    tpu.vector_store %arg15[%c2_73, %c0_74, %c0_75], %119 {strides = array<i32>} : memref<4x128x8xf32, #tpu.memory_space<vmem>>, vector<1x128x8xf32>,
    %c2_76 = arith.constant 2 : index
    %c0_77 = arith.constant 0 : index
    %c0_78 = arith.constant 0 : index
    %120 = vector.load %arg13[%c2_76, %c0_77, %c0_78] : memref<4x128x1xf32, #tpu.memory_space<vmem>>, vector<1x128x1xf32>
    %121 = vector.shape_cast %120 : vector<1x128x1xf32> to vector<128x1xf32>
    %122 = vector.shape_cast %96 : vector<128x1xf32> to vector<1x128x1xf32>
    tpu.vector_store %arg13[%c2_76, %c0_77, %c0_78], %122 {strides = array<i32>} : memref<4x128x1xf32, #tpu.memory_space<vmem>>, vector<1x128x1xf32>,
    %123 = vector.extract_strided_slice %11 {offsets = [0, 24], sizes = [128, 8], strides = [1, 1]} : vector<128x32xf32> to vector<128x8xf32>
    %124 = vector.extract_strided_slice %5 {offsets = [0, 24], sizes = [128, 8], strides = [1, 1]} : vector<128x32xf32> to vector<128x8xf32>
    %125 = vector.extract_strided_slice %7 {offsets = [0, 24], sizes = [128, 8], strides = [1, 1]} : vector<128x32xf32> to vector<128x8xf32>
    %cst_79 = arith.constant dense<0.000000e+00> : vector<128x128xf32>
    %126 = tpu.matmul %123, %124, %cst_79 {dimension_numbers = #tpu.dot_dimension_numbers<[1], [1], [0], [0], [0, 0, 1, 0], [], []>} : vector<128x8xf32>, vector<128x8xf32>, vector<128x128xf32> -> vector<128x128xf32>
    %cst_80 = arith.constant -9.000000e+15 : f32
    %127 = vector.broadcast %cst_80 : f32 to vector<128x128xf32>
    %128 = arith.select %10, %126, %127 : vector<128x128xi1>, vector<128x128xf32>
    %c3 = arith.constant 3 : index
    %c0_81 = arith.constant 0 : index
    %c0_82 = arith.constant 0 : index
    %129 = vector.load %arg13[%c3, %c0_81, %c0_82] : memref<4x128x1xf32, #tpu.memory_space<vmem>>, vector<1x128x1xf32>
    %130 = vector.shape_cast %129 : vector<1x128x1xf32> to vector<128x1xf32>
    %cst_83 = arith.constant dense<0xFF800000> : vector<128xf32>
    %131 = vector.multi_reduction <maximumf>, %128, %cst_83 [1] : vector<128x128xf32> to vector<128xf32>
    %132 = vector.shape_cast %131 : vector<128xf32> to vector<128x1xf32>
    %133 = arith.maximumf %130, %132 : vector<128x1xf32>
    %134 = arith.subf %130, %133 : vector<128x1xf32>
    %135 = math.exp %134 : vector<128x1xf32>
    %136 = vector.broadcast %133 : vector<128x1xf32> to vector<128x128xf32>
    %137 = arith.subf %128, %136 : vector<128x128xf32>
    %138 = math.exp %137 : vector<128x128xf32>
    %c3_84 = arith.constant 3 : index
    %c0_85 = arith.constant 0 : index
    %c0_86 = arith.constant 0 : index
    %139 = vector.load %arg14[%c3_84, %c0_85, %c0_86] : memref<4x128x1xf32, #tpu.memory_space<vmem>>, vector<1x128x1xf32>
    %140 = vector.shape_cast %139 : vector<1x128x1xf32> to vector<128x1xf32>
    %141 = arith.mulf %135, %140 : vector<128x1xf32>
    %cst_87 = arith.constant dense<0.000000e+00> : vector<128xf32>
    %142 = vector.multi_reduction <add>, %138, %cst_87 [1] : vector<128x128xf32> to vector<128xf32>
    %143 = vector.shape_cast %142 : vector<128xf32> to vector<128x1xf32>
    %144 = arith.addf %141, %143 : vector<128x1xf32>
    %c3_88 = arith.constant 3 : index
    %c0_89 = arith.constant 0 : index
    %c0_90 = arith.constant 0 : index
    %145 = vector.load %arg14[%c3_88, %c0_89, %c0_90] : memref<4x128x1xf32, #tpu.memory_space<vmem>>, vector<1x128x1xf32>
    %146 = vector.shape_cast %145 : vector<1x128x1xf32> to vector<128x1xf32>
    %147 = vector.shape_cast %144 : vector<128x1xf32> to vector<1x128x1xf32>
    tpu.vector_store %arg14[%c3_88, %c0_89, %c0_90], %147 {strides = array<i32>} : memref<4x128x1xf32, #tpu.memory_space<vmem>>, vector<1x128x1xf32>,
    %c3_91 = arith.constant 3 : index
    %c0_92 = arith.constant 0 : index
    %c0_93 = arith.constant 0 : index
    %148 = vector.load %arg15[%c3_91, %c0_92, %c0_93] : memref<4x128x8xf32, #tpu.memory_space<vmem>>, vector<1x128x8xf32>
    %149 = vector.shape_cast %148 : vector<1x128x8xf32> to vector<128x8xf32>
    %150 = vector.broadcast %135 : vector<128x1xf32> to vector<128x8xf32>
    %151 = arith.mulf %150, %149 : vector<128x8xf32>
    %cst_94 = arith.constant dense<0.000000e+00> : vector<128x8xf32>
    %152 = tpu.matmul %138, %125, %cst_94 {dimension_numbers = #tpu.dot_dimension_numbers<[1], [0], [0], [1], [0, 0, 1, 1], [], []>} : vector<128x128xf32>, vector<128x8xf32>, vector<128x8xf32> -> vector<128x8xf32>
    %153 = arith.addf %151, %152 : vector<128x8xf32>
    %c3_95 = arith.constant 3 : index
    %c0_96 = arith.constant 0 : index
    %c0_97 = arith.constant 0 : index
    %154 = vector.load %arg15[%c3_95, %c0_96, %c0_97] : memref<4x128x8xf32, #tpu.memory_space<vmem>>, vector<1x128x8xf32>
    %155 = vector.shape_cast %154 : vector<1x128x8xf32> to vector<128x8xf32>
    %156 = vector.shape_cast %153 : vector<128x8xf32> to vector<1x128x8xf32>
    tpu.vector_store %arg15[%c3_95, %c0_96, %c0_97], %156 {strides = array<i32>} : memref<4x128x8xf32, #tpu.memory_space<vmem>>, vector<1x128x8xf32>,
    %c3_98 = arith.constant 3 : index
    %c0_99 = arith.constant 0 : index
    %c0_100 = arith.constant 0 : index
    %157 = vector.load %arg13[%c3_98, %c0_99, %c0_100] : memref<4x128x1xf32, #tpu.memory_space<vmem>>, vector<1x128x1xf32>
    %158 = vector.shape_cast %157 : vector<1x128x1xf32> to vector<128x1xf32>
    %159 = vector.shape_cast %133 : vector<128x1xf32> to vector<1x128x1xf32>
    tpu.vector_store %arg13[%c3_98, %c0_99, %c0_100], %159 {strides = array<i32>} : memref<4x128x1xf32, #tpu.memory_space<vmem>>, vector<1x128x1xf32>,
    %c1_i32 = arith.constant 1 : i32
    %160 = arith.cmpi eq, %arg1, %c1_i32 : i32
    %161 = arith.extui %160 : i1 to i32
    %c0_i32_101 = arith.constant 0 : i32
    %162 = arith.cmpi ne, %161, %c0_i32_101 : i32
    scf.if %162 {
      %c0_102 = arith.constant 0 : index
      %c0_103 = arith.constant 0 : index
      %c0_104 = arith.constant 0 : index
      %163 = vector.load %arg14[%c0_102, %c0_103, %c0_104] : memref<4x128x1xf32, #tpu.memory_space<vmem>>, vector<1x128x1xf32>
      %164 = vector.shape_cast %163 : vector<1x128x1xf32> to vector<128x1xf32>
      %165 = tpu.reciprocal %164 : vector<128x1xf32> -> vector<128x1xf32>
      %c0_105 = arith.constant 0 : index
      %c0_106 = arith.constant 0 : index
      %c0_107 = arith.constant 0 : index
      %166 = vector.load %arg15[%c0_105, %c0_106, %c0_107] : memref<4x128x8xf32, #tpu.memory_space<vmem>>, vector<1x128x8xf32>
      %167 = vector.shape_cast %166 : vector<1x128x8xf32> to vector<128x8xf32>
      %168 = vector.broadcast %165 : vector<128x1xf32> to vector<128x8xf32>
      %169 = arith.mulf %167, %168 : vector<128x8xf32>
      %c1_108 = arith.constant 1 : index
      %c0_109 = arith.constant 0 : index
      %c0_110 = arith.constant 0 : index
      %170 = vector.load %arg14[%c1_108, %c0_109, %c0_110] : memref<4x128x1xf32, #tpu.memory_space<vmem>>, vector<1x128x1xf32>
      %171 = vector.shape_cast %170 : vector<1x128x1xf32> to vector<128x1xf32>
      %172 = tpu.reciprocal %171 : vector<128x1xf32> -> vector<128x1xf32>
      %c1_111 = arith.constant 1 : index
      %c0_112 = arith.constant 0 : index
      %c0_113 = arith.constant 0 : index
      %173 = vector.load %arg15[%c1_111, %c0_112, %c0_113] : memref<4x128x8xf32, #tpu.memory_space<vmem>>, vector<1x128x8xf32>
      %174 = vector.shape_cast %173 : vector<1x128x8xf32> to vector<128x8xf32>
      %175 = vector.broadcast %172 : vector<128x1xf32> to vector<128x8xf32>
      %176 = arith.mulf %174, %175 : vector<128x8xf32>
      %c2_114 = arith.constant 2 : index
      %c0_115 = arith.constant 0 : index
      %c0_116 = arith.constant 0 : index
      %177 = vector.load %arg14[%c2_114, %c0_115, %c0_116] : memref<4x128x1xf32, #tpu.memory_space<vmem>>, vector<1x128x1xf32>
      %178 = vector.shape_cast %177 : vector<1x128x1xf32> to vector<128x1xf32>
      %179 = tpu.reciprocal %178 : vector<128x1xf32> -> vector<128x1xf32>
      %c2_117 = arith.constant 2 : index
      %c0_118 = arith.constant 0 : index
      %c0_119 = arith.constant 0 : index
      %180 = vector.load %arg15[%c2_117, %c0_118, %c0_119] : memref<4x128x8xf32, #tpu.memory_space<vmem>>, vector<1x128x8xf32>
      %181 = vector.shape_cast %180 : vector<1x128x8xf32> to vector<128x8xf32>
      %182 = vector.broadcast %179 : vector<128x1xf32> to vector<128x8xf32>
      %183 = arith.mulf %181, %182 : vector<128x8xf32>
      %c3_120 = arith.constant 3 : index
      %c0_121 = arith.constant 0 : index
      %c0_122 = arith.constant 0 : index
      %184 = vector.load %arg14[%c3_120, %c0_121, %c0_122] : memref<4x128x1xf32, #tpu.memory_space<vmem>>, vector<1x128x1xf32>
      %185 = vector.shape_cast %184 : vector<1x128x1xf32> to vector<128x1xf32>
      %186 = tpu.reciprocal %185 : vector<128x1xf32> -> vector<128x1xf32>
      %c3_123 = arith.constant 3 : index
      %c0_124 = arith.constant 0 : index
      %c0_125 = arith.constant 0 : index
      %187 = vector.load %arg15[%c3_123, %c0_124, %c0_125] : memref<4x128x8xf32, #tpu.memory_space<vmem>>, vector<1x128x8xf32>
      %188 = vector.shape_cast %187 : vector<1x128x8xf32> to vector<128x8xf32>
      %189 = vector.broadcast %186 : vector<128x1xf32> to vector<128x8xf32>
      %190 = arith.mulf %188, %189 : vector<128x8xf32>
      %c0_126 = arith.constant 0 : index
      %c0_127 = arith.constant 0 : index
      %191 = vector.load %arg10[%c0_126, %c0_127] : memref<1x32xf32, #tpu.memory_space<vmem>>, vector<1x32xf32>
      %c128_i32 = arith.constant 128 : i32
      %192 = arith.muli %arg0, %c128_i32 : i32
      %c128_i32_128 = arith.constant 128 : i32
      %193 = arith.addi %192, %c128_i32_128 : i32
      %c128_i32_129 = arith.constant 128 : i32
      %194 = arith.cmpi sle, %193, %c128_i32_129 : i32
      %195 = arith.extui %194 : i1 to i32
      %c0_i32_130 = arith.constant 0 : i32
      %196 = arith.cmpi ne, %195, %c0_i32_130 : i32
      scf.if %196 {
        %c0_137 = arith.constant 0 : index
        %c0_138 = arith.constant 0 : index
        %206 = vector.load %arg8[%c0_137, %c0_138] : memref<32x32xf32, #tpu.memory_space<vmem>>, vector<32x32xf32>
        %207 = vector.extract_strided_slice %206 {offsets = [0, 0], sizes = [8, 32], strides = [1, 1]} : vector<32x32xf32> to vector<8x32xf32>
        %cst_139 = arith.constant dense<0.000000e+00> : vector<128x32xf32>
        %208 = tpu.matmul %169, %207, %cst_139 {dimension_numbers = #tpu.dot_dimension_numbers<[1], [0], [0], [1], [0, 0, 1, 1], [], []>} : vector<128x8xf32>, vector<8x32xf32>, vector<128x32xf32> -> vector<128x32xf32>
        %209 = vector.extract_strided_slice %206 {offsets = [8, 0], sizes = [8, 32], strides = [1, 1]} : vector<32x32xf32> to vector<8x32xf32>
        %cst_140 = arith.constant dense<0.000000e+00> : vector<128x32xf32>
        %210 = tpu.matmul %176, %209, %cst_140 {dimension_numbers = #tpu.dot_dimension_numbers<[1], [0], [0], [1], [0, 0, 1, 1], [], []>} : vector<128x8xf32>, vector<8x32xf32>, vector<128x32xf32> -> vector<128x32xf32>
        %211 = arith.addf %208, %210 : vector<128x32xf32>
        %212 = vector.extract_strided_slice %206 {offsets = [16, 0], sizes = [8, 32], strides = [1, 1]} : vector<32x32xf32> to vector<8x32xf32>
        %cst_141 = arith.constant dense<0.000000e+00> : vector<128x32xf32>
        %213 = tpu.matmul %183, %212, %cst_141 {dimension_numbers = #tpu.dot_dimension_numbers<[1], [0], [0], [1], [0, 0, 1, 1], [], []>} : vector<128x8xf32>, vector<8x32xf32>, vector<128x32xf32> -> vector<128x32xf32>
        %214 = arith.addf %211, %213 : vector<128x32xf32>
        %215 = vector.extract_strided_slice %206 {offsets = [24, 0], sizes = [8, 32], strides = [1, 1]} : vector<32x32xf32> to vector<8x32xf32>
        %cst_142 = arith.constant dense<0.000000e+00> : vector<128x32xf32>
        %216 = tpu.matmul %190, %215, %cst_142 {dimension_numbers = #tpu.dot_dimension_numbers<[1], [0], [0], [1], [0, 0, 1, 1], [], []>} : vector<128x8xf32>, vector<8x32xf32>, vector<128x32xf32> -> vector<128x32xf32>
        %217 = arith.addf %214, %216 : vector<128x32xf32>
        %218 = vector.broadcast %191 : vector<1x32xf32> to vector<128x32xf32>
        %219 = arith.addf %217, %218 : vector<128x32xf32>
        %cst_143 = arith.constant 0.000000e+00 : f32
        %220 = vector.broadcast %cst_143 : f32 to vector<128x32xf32>
        %221 = arith.cmpf oge, %219, %220 : vector<128x32xf32>
        %cst_144 = arith.constant 0.00999999977 : f32
        %222 = vector.broadcast %cst_144 : f32 to vector<128x32xf32>
        %223 = arith.mulf %222, %219 : vector<128x32xf32>
        %224 = arith.select %221, %219, %223 : vector<128x32xi1>, vector<128x32xf32>
        %c0_145 = arith.constant 0 : index
        %c0_146 = arith.constant 0 : index
        %225 = vector.load %arg11[%c0_145, %c0_146] : memref<128x32xf32, #tpu.memory_space<vmem>>, vector<128x32xf32>
        tpu.vector_store %arg11[%c0_145, %c0_146], %224 {strides = array<i32>} : memref<128x32xf32, #tpu.memory_space<vmem>>, vector<128x32xf32>,
      } else {
      }
      %c128_i32_131 = arith.constant 128 : i32
      %197 = arith.cmpi sge, %192, %c128_i32_131 : i32
      %198 = arith.extui %197 : i1 to i32
      %c0_i32_132 = arith.constant 0 : i32
      %199 = arith.cmpi ne, %198, %c0_i32_132 : i32
      scf.if %199 {
        %c0_137 = arith.constant 0 : index
        %c0_138 = arith.constant 0 : index
        %206 = vector.load %arg9[%c0_137, %c0_138] : memref<32x32xf32, #tpu.memory_space<vmem>>, vector<32x32xf32>
        %207 = vector.extract_strided_slice %206 {offsets = [0, 0], sizes = [8, 32], strides = [1, 1]} : vector<32x32xf32> to vector<8x32xf32>
        %cst_139 = arith.constant dense<0.000000e+00> : vector<128x32xf32>
        %208 = tpu.matmul %169, %207, %cst_139 {dimension_numbers = #tpu.dot_dimension_numbers<[1], [0], [0], [1], [0, 0, 1, 1], [], []>} : vector<128x8xf32>, vector<8x32xf32>, vector<128x32xf32> -> vector<128x32xf32>
        %209 = vector.extract_strided_slice %206 {offsets = [8, 0], sizes = [8, 32], strides = [1, 1]} : vector<32x32xf32> to vector<8x32xf32>
        %cst_140 = arith.constant dense<0.000000e+00> : vector<128x32xf32>
        %210 = tpu.matmul %176, %209, %cst_140 {dimension_numbers = #tpu.dot_dimension_numbers<[1], [0], [0], [1], [0, 0, 1, 1], [], []>} : vector<128x8xf32>, vector<8x32xf32>, vector<128x32xf32> -> vector<128x32xf32>
        %211 = arith.addf %208, %210 : vector<128x32xf32>
        %212 = vector.extract_strided_slice %206 {offsets = [16, 0], sizes = [8, 32], strides = [1, 1]} : vector<32x32xf32> to vector<8x32xf32>
        %cst_141 = arith.constant dense<0.000000e+00> : vector<128x32xf32>
        %213 = tpu.matmul %183, %212, %cst_141 {dimension_numbers = #tpu.dot_dimension_numbers<[1], [0], [0], [1], [0, 0, 1, 1], [], []>} : vector<128x8xf32>, vector<8x32xf32>, vector<128x32xf32> -> vector<128x32xf32>
        %214 = arith.addf %211, %213 : vector<128x32xf32>
        %215 = vector.extract_strided_slice %206 {offsets = [24, 0], sizes = [8, 32], strides = [1, 1]} : vector<32x32xf32> to vector<8x32xf32>
        %cst_142 = arith.constant dense<0.000000e+00> : vector<128x32xf32>
        %216 = tpu.matmul %190, %215, %cst_142 {dimension_numbers = #tpu.dot_dimension_numbers<[1], [0], [0], [1], [0, 0, 1, 1], [], []>} : vector<128x8xf32>, vector<8x32xf32>, vector<128x32xf32> -> vector<128x32xf32>
        %217 = arith.addf %214, %216 : vector<128x32xf32>
        %218 = vector.broadcast %191 : vector<1x32xf32> to vector<128x32xf32>
        %219 = arith.addf %217, %218 : vector<128x32xf32>
        %cst_143 = arith.constant 0.000000e+00 : f32
        %220 = vector.broadcast %cst_143 : f32 to vector<128x32xf32>
        %221 = arith.cmpf oge, %219, %220 : vector<128x32xf32>
        %cst_144 = arith.constant 0.00999999977 : f32
        %222 = vector.broadcast %cst_144 : f32 to vector<128x32xf32>
        %223 = arith.mulf %222, %219 : vector<128x32xf32>
        %224 = arith.select %221, %219, %223 : vector<128x32xi1>, vector<128x32xf32>
        %c0_145 = arith.constant 0 : index
        %c0_146 = arith.constant 0 : index
        %225 = vector.load %arg11[%c0_145, %c0_146] : memref<128x32xf32, #tpu.memory_space<vmem>>, vector<128x32xf32>
        tpu.vector_store %arg11[%c0_145, %c0_146], %224 {strides = array<i32>} : memref<128x32xf32, #tpu.memory_space<vmem>>, vector<128x32xf32>,
      } else {
      }
      %c128_i32_133 = arith.constant 128 : i32
      %200 = arith.cmpi slt, %192, %c128_i32_133 : i32
      %c128_i32_134 = arith.constant 128 : i32
      %201 = arith.addi %192, %c128_i32_134 : i32
      %c128_i32_135 = arith.constant 128 : i32
      %202 = arith.cmpi sgt, %201, %c128_i32_135 : i32
      %203 = arith.andi %200, %202 : i1
      %204 = arith.extui %203 : i1 to i32
      %c0_i32_136 = arith.constant 0 : i32
      %205 = arith.cmpi ne, %204, %c0_i32_136 : i32
      scf.if %205 {
        %206 = tpu.iota {dimensions = array<i32: 0>} : vector<128x1xi32>
        %207 = vector.broadcast %192 : i32 to vector<128x1xi32>
        %208 = arith.addi %207, %206 : vector<128x1xi32>
        %c128_i32_137 = arith.constant 128 : i32
        %209 = vector.broadcast %c128_i32_137 : i32 to vector<128x1xi32>
        %210 = arith.cmpi slt, %208, %209 : vector<128x1xi32>
        %c0_138 = arith.constant 0 : index
        %c0_139 = arith.constant 0 : index
        %211 = vector.load %arg8[%c0_138, %c0_139] : memref<32x32xf32, #tpu.memory_space<vmem>>, vector<32x32xf32>
        %212 = vector.extract_strided_slice %211 {offsets = [0, 0], sizes = [8, 32], strides = [1, 1]} : vector<32x32xf32> to vector<8x32xf32>
        %cst_140 = arith.constant dense<0.000000e+00> : vector<128x32xf32>
        %213 = tpu.matmul %169, %212, %cst_140 {dimension_numbers = #tpu.dot_dimension_numbers<[1], [0], [0], [1], [0, 0, 1, 1], [], []>} : vector<128x8xf32>, vector<8x32xf32>, vector<128x32xf32> -> vector<128x32xf32>
        %214 = vector.extract_strided_slice %211 {offsets = [8, 0], sizes = [8, 32], strides = [1, 1]} : vector<32x32xf32> to vector<8x32xf32>
        %cst_141 = arith.constant dense<0.000000e+00> : vector<128x32xf32>
        %215 = tpu.matmul %176, %214, %cst_141 {dimension_numbers = #tpu.dot_dimension_numbers<[1], [0], [0], [1], [0, 0, 1, 1], [], []>} : vector<128x8xf32>, vector<8x32xf32>, vector<128x32xf32> -> vector<128x32xf32>
        %216 = arith.addf %213, %215 : vector<128x32xf32>
        %217 = vector.extract_strided_slice %211 {offsets = [16, 0], sizes = [8, 32], strides = [1, 1]} : vector<32x32xf32> to vector<8x32xf32>
        %cst_142 = arith.constant dense<0.000000e+00> : vector<128x32xf32>
        %218 = tpu.matmul %183, %217, %cst_142 {dimension_numbers = #tpu.dot_dimension_numbers<[1], [0], [0], [1], [0, 0, 1, 1], [], []>} : vector<128x8xf32>, vector<8x32xf32>, vector<128x32xf32> -> vector<128x32xf32>
        %219 = arith.addf %216, %218 : vector<128x32xf32>
        %220 = vector.extract_strided_slice %211 {offsets = [24, 0], sizes = [8, 32], strides = [1, 1]} : vector<32x32xf32> to vector<8x32xf32>
        %cst_143 = arith.constant dense<0.000000e+00> : vector<128x32xf32>
        %221 = tpu.matmul %190, %220, %cst_143 {dimension_numbers = #tpu.dot_dimension_numbers<[1], [0], [0], [1], [0, 0, 1, 1], [], []>} : vector<128x8xf32>, vector<8x32xf32>, vector<128x32xf32> -> vector<128x32xf32>
        %222 = arith.addf %219, %221 : vector<128x32xf32>
        %c0_144 = arith.constant 0 : index
        %c0_145 = arith.constant 0 : index
        %223 = vector.load %arg9[%c0_144, %c0_145] : memref<32x32xf32, #tpu.memory_space<vmem>>, vector<32x32xf32>
        %224 = vector.extract_strided_slice %223 {offsets = [0, 0], sizes = [8, 32], strides = [1, 1]} : vector<32x32xf32> to vector<8x32xf32>
        %cst_146 = arith.constant dense<0.000000e+00> : vector<128x32xf32>
        %225 = tpu.matmul %169, %224, %cst_146 {dimension_numbers = #tpu.dot_dimension_numbers<[1], [0], [0], [1], [0, 0, 1, 1], [], []>} : vector<128x8xf32>, vector<8x32xf32>, vector<128x32xf32> -> vector<128x32xf32>
        %226 = vector.extract_strided_slice %223 {offsets = [8, 0], sizes = [8, 32], strides = [1, 1]} : vector<32x32xf32> to vector<8x32xf32>
        %cst_147 = arith.constant dense<0.000000e+00> : vector<128x32xf32>
        %227 = tpu.matmul %176, %226, %cst_147 {dimension_numbers = #tpu.dot_dimension_numbers<[1], [0], [0], [1], [0, 0, 1, 1], [], []>} : vector<128x8xf32>, vector<8x32xf32>, vector<128x32xf32> -> vector<128x32xf32>
        %228 = arith.addf %225, %227 : vector<128x32xf32>
        %229 = vector.extract_strided_slice %223 {offsets = [16, 0], sizes = [8, 32], strides = [1, 1]} : vector<32x32xf32> to vector<8x32xf32>
        %cst_148 = arith.constant dense<0.000000e+00> : vector<128x32xf32>
        %230 = tpu.matmul %183, %229, %cst_148 {dimension_numbers = #tpu.dot_dimension_numbers<[1], [0], [0], [1], [0, 0, 1, 1], [], []>} : vector<128x8xf32>, vector<8x32xf32>, vector<128x32xf32> -> vector<128x32xf32>
        %231 = arith.addf %228, %230 : vector<128x32xf32>
        %232 = vector.extract_strided_slice %223 {offsets = [24, 0], sizes = [8, 32], strides = [1, 1]} : vector<32x32xf32> to vector<8x32xf32>
        %cst_149 = arith.constant dense<0.000000e+00> : vector<128x32xf32>
        %233 = tpu.matmul %190, %232, %cst_149 {dimension_numbers = #tpu.dot_dimension_numbers<[1], [0], [0], [1], [0, 0, 1, 1], [], []>} : vector<128x8xf32>, vector<8x32xf32>, vector<128x32xf32> -> vector<128x32xf32>
        %234 = arith.addf %231, %233 : vector<128x32xf32>
        %235 = vector.shape_cast %210 : vector<128x1xi1> to vector<128x1xi1>
        %236 = vector.broadcast %235 : vector<128x1xi1> to vector<128x32xi1>
        %237 = arith.select %236, %222, %234 : vector<128x32xi1>, vector<128x32xf32>
        %238 = vector.broadcast %191 : vector<1x32xf32> to vector<128x32xf32>
        %239 = arith.addf %237, %238 : vector<128x32xf32>
        %cst_150 = arith.constant 0.000000e+00 : f32
        %240 = vector.broadcast %cst_150 : f32 to vector<128x32xf32>
        %241 = arith.cmpf oge, %239, %240 : vector<128x32xf32>
        %cst_151 = arith.constant 0.00999999977 : f32
        %242 = vector.broadcast %cst_151 : f32 to vector<128x32xf32>
        %243 = arith.mulf %242, %239 : vector<128x32xf32>
        %244 = arith.select %241, %239, %243 : vector<128x32xi1>, vector<128x32xf32>
        %c0_152 = arith.constant 0 : index
        %c0_153 = arith.constant 0 : index
        %245 = vector.load %arg11[%c0_152, %c0_153] : memref<128x32xf32, #tpu.memory_space<vmem>>, vector<128x32xf32>
        tpu.vector_store %arg11[%c0_152, %c0_153], %244 {strides = array<i32>} : memref<128x32xf32, #tpu.memory_space<vmem>>, vector<128x32xf32>,
      } else {
      }
    } else {
    }
    return
  }
  func.func @transform_0(%arg0: i32, %arg1: i32) -> (i32, i32) {
    %c0_i32 = arith.constant 0 : i32
    %c0_i32_0 = arith.constant 0 : i32
    return %arg0, %c0_i32 : i32, i32
  }
  func.func @transform_1(%arg0: i32, %arg1: i32) -> (i32, i32) {
    %c0_i32 = arith.constant 0 : i32
    %c0_i32_0 = arith.constant 0 : i32
    return %arg1, %c0_i32 : i32, i32
  }
  func.func @transform_2(%arg0: i32, %arg1: i32) -> (i32, i32) {
    %c0_i32 = arith.constant 0 : i32
    return %arg0, %arg1 : i32, i32
  }
  func.func @transform_3(%arg0: i32, %arg1: i32) -> (i32, i32) {
    %c0_i32 = arith.constant 0 : i32
    %c0_i32_0 = arith.constant 0 : i32
    %c0_i32_1 = arith.constant 0 : i32
    return %c0_i32, %c0_i32_0 : i32, i32
  }
  func.func @transform_4(%arg0: i32, %arg1: i32) -> (i32, i32) {
    %c0_i32 = arith.constant 0 : i32
    %c0_i32_0 = arith.constant 0 : i32
    %c0_i32_1 = arith.constant 0 : i32
    return %c0_i32, %c0_i32_0 : i32, i32
  }
  func.func @transform_5(%arg0: i32, %arg1: i32) -> (i32, i32) {
    %c0_i32 = arith.constant 0 : i32
    %c0_i32_0 = arith.constant 0 : i32
    %c0_i32_1 = arith.constant 0 : i32
    return %c0_i32, %c0_i32_0 : i32, i32
  }
  func.func @transform_6(%arg0: i32, %arg1: i32) -> (i32, i32) {
    %c0_i32 = arith.constant 0 : i32
    %c0_i32_0 = arith.constant 0 : i32
    %c0_i32_1 = arith.constant 0 : i32
    return %c0_i32, %c0_i32_0 : i32, i32
  }
  func.func @transform_7(%arg0: i32, %arg1: i32) -> (i32, i32) {
    %c0_i32 = arith.constant 0 : i32
    %c0_i32_0 = arith.constant 0 : i32
    %c0_i32_1 = arith.constant 0 : i32
    return %c0_i32, %c0_i32_0 : i32, i32
  }
  func.func @transform_8(%arg0: i32, %arg1: i32) -> (i32, i32) {
    %c0_i32 = arith.constant 0 : i32
    %c0_i32_0 = arith.constant 0 : i32
    %c0_i32_1 = arith.constant 0 : i32
    return %c0_i32, %c0_i32_0 : i32, i32
  }
  func.func @transform_9(%arg0: i32, %arg1: i32) -> (i32, i32) {
    %c0_i32 = arith.constant 0 : i32
    %c0_i32_0 = arith.constant 0 : i32
    return %arg0, %c0_i32 : i32, i32
  }
}

</mosaic_0001>

<llo_original>
// kernel: tpu_custom_call.1
$region0: #{tpu_custom_call.1}
  #allocation0 [shape = 'u32[]', space=smem, size = 0x4, offset = 0x4, fixed_abs, tag = 'smem constant byte address 0x4 - core index']
  #allocation1 [shape = 'u32[72,128]{1,0:T(1,128)}', space=vmem, size = 0x9000, scoped, tag = 'internal scratch']
  #allocation2 [shape = 'f32[128,32]{1,0:T(8,128)}', space=vmem, size = 0x10000, scoped, tag = 'scratch operand']
  #allocation3 [shape = 'f32[4,128,1]{2,1,0:T(8,128)}', space=vmem, size = 0x40000, scoped, tag = 'scratch operand']
  #allocation4 [shape = 'f32[4,128,1]{2,1,0:T(8,128)}', space=vmem, size = 0x40000, scoped, tag = 'scratch operand']
  #allocation5 [shape = 'f32[4,128,8]{2,1,0:T(8,128)}', space=vmem, size = 0x40000, scoped, tag = 'scratch operand']
  %s0 = inlined_call_operand.vmem [shape: f32[256,32], index: 0, kind: input, shape index: {}]
  %s1 = inlined_call_operand.vmem [shape: f32[256,32], index: 1, kind: input, shape index: {}]
  %s2 = inlined_call_operand.vmem [shape: f32[256,256], index: 2, kind: input, shape index: {}]
  %s3 = inlined_call_operand.vmem [shape: f32[32,32], index: 3, kind: input, shape index: {}]
  %s4 = inlined_call_operand.vmem [shape: f32[32,32], index: 4, kind: input, shape index: {}]
  %s5 = inlined_call_operand.hbm [shape: f32[32,32], index: 5, kind: input, shape index: {}]
  %s6 = inlined_call_operand.hbm [shape: f32[32,32], index: 6, kind: input, shape index: {}]
  %s7 = inlined_call_operand.hbm [shape: f32[32,32], index: 7, kind: input, shape index: {}]
  %s8 = inlined_call_operand.vmem [shape: f32[1,32], index: 8, kind: input, shape index: {}]
  %s9 = inlined_call_operand.vmem [shape: f32[256,32], index: 9, kind: output, shape index: {}]
  %s10 = sld [smem:[#allocation0]]
  $region139: #{tpu_custom_call.1} parent=0
    _
  %s12 = ssub.s32 1, %s10
  %s13 = scalar_select 0, %s12, %s10
  $region1: #{tpu_custom_call.1} parent=0
    #allocation6 [shape = 'u8[131072]{0}', space=vmem, size = 0x20000, scoped, tag = 'input window, operand 2']
    #allocation7 [shape = 'u8[16384]{0}', space=vmem, size = 0x4000, scoped, tag = 'input window, operand 5, single buffered']
    #allocation8 [shape = 's32[2]{0}', space=sflag, size = 0x8, scoped, tag = 'scoped memory for tpu_custom_call.1']
    #allocation9 [shape = 'u8[16384]{0}', space=vmem, size = 0x4000, scoped, tag = 'input window, operand 6, single buffered']
    #allocation10 [shape = 's32[1]{0}', space=sflag, size = 0x4, scoped, tag = 'scoped memory for tpu_custom_call.1']
    #allocation11 [shape = 'u8[16384]{0}', space=vmem, size = 0x4000, scoped, tag = 'input window, operand 7, single buffered']
    %14 = vsyncpa [#allocation8], 0
    %15 = vsyncpa [#allocation10], 0
    loop: start=0, step=1, limit=6
    $region2: #{tpu_custom_call.1} parent=1 // loop_pre_header
      _
    $region3: #{tpu_custom_call.1} parent=1 // loop_header
      %s17 = sphi 0, %s21
      %p18 = scmp.ge.s32.totalorder %s17, 6
      %s24 = sphi 0, %s36
      %s25 = sphi 0, %s32
      %s26 = sphi 0, %s24
      %s27 = sphi 0, %s25
      %s28 = sphi 0, %s26
      %s29 = sphi 0, %s27
      %s39 = sphi 0, %s41
      %s42 = sphi 0, %s39
      %s43 = sphi 0, %s42
      %s59 = sphi 0, %s43
      %s65 = sphi 0, %s67
      %s68 = sphi 0, %s65
      %s69 = sphi 0, %s68
      %s85 = sphi 0, %s69
      %s93 = sphi 0, %s95
      %s96 = sphi 0, %s93
      %s97 = sphi 0, %s96
      %s113 = sphi 0, %s97
      %s117 = sphi 0, %s117
      %s119 = sphi 0, %s117
      %s120 = sphi 0, %s119
      %s134 = sphi 0, %s120
      %s138 = sphi 0, %s138
      %s140 = sphi 0, %s138
      %s141 = sphi 0, %s140
      %s155 = sphi 0, %s141
      %s159 = sphi 0, %s159
      %s161 = sphi 0, %s159
      %s162 = sphi 0, %s161
      %s176 = sphi 0, %s162
      %s180 = sphi 0, %s180
      %s182 = sphi 0, %s180
      %s183 = sphi 0, %s182
      %s197 = sphi 0, %s183
      %s201 = sphi 0, %s201
      %s203 = sphi 0, %s201
      %s204 = sphi 0, %s203
      %s218 = sphi 0, %s204
      %s222 = sphi 0, %s222
      %s224 = sphi 0, %s222
      %s225 = sphi 0, %s224
      %s239 = sphi 0, %s225
      %s245 = sphi 0, %s247
      %s248 = sphi 0, %s245
      %s249 = sphi 0, %s248
      %s265 = sphi 0, %s249
    $region4: #{tpu_custom_call.1} parent=1 // loop_header_branch
      %20 = sbr.rel (%p18) target = $region8
    $region5: #{tpu_custom_call.1} parent=1 // loop_body
      %s22 = ssub.s32 %s17, 1
      %s23 = ssub.s32 %s17, 2
      %s30 = sadd.s32 1, %s25
      %p31 = scmp.ge.s32.totalorder %s30, 2
      %s32 = scalar_select %p31, 0, %s30
      %s33 = sadd.s32 1, %s24
      %s34 = scalar_select %p31, %s33, %s24
      %p35 = scmp.ge.s32.totalorder %s34, 2
      %s36 = scalar_select %p35, 0, %s34
      %s37 = ssub.s32 %s24, %s36
      %p38 = scmp.eq.s32.totalorder %s37, 0
      %s40 = sadd.s32 %s39, 1
      %s41 = scalar_select %p38, %s39, %s40
      %p44 = pneg %p38
      %p45 = scmp.eq.s32.totalorder %s17, 3
      %p46 = por %p44, %p45
      %p47 = scmp.ne.s32.totalorder %s39, %s42
      %p48 = scmp.eq.s32.totalorder %s17, 0
      %p49 = por %p47, %p48
      %p50 = scmp.ne.s32.totalorder %s39, %s42
      %p51 = scmp.eq.s32.totalorder %s22, 3
      %p52 = por %p50, %p51
      %p53 = scmp.ne.s32.totalorder %s42, %s43
      %p54 = scmp.eq.s32.totalorder %s22, 0
      %p55 = por %p53, %p54
      %p56 = scmp.ne.s32.totalorder %s42, %s43
      %p57 = scmp.eq.s32.totalorder %s23, 3
      %p58 = por %p56, %p57
      %p60 = scmp.ne.s32.totalorder %s43, %s59
      %p61 = scmp.eq.s32.totalorder %s23, 0
      %p62 = por %p60, %p61
      %s63 = ssub.s32 %s25, %s32
      %p64 = scmp.eq.s32.totalorder %s63, 0
      %s66 = sadd.s32 %s65, 1
      %s67 = scalar_select %p64, %s65, %s66
      %p70 = pneg %p64
      %p71 = scmp.eq.s32.totalorder %s17, 3
      %p72 = por %p70, %p71
      %p73 = scmp.ne.s32.totalorder %s65, %s68
      %p74 = scmp.eq.s32.totalorder %s17, 0
      %p75 = por %p73, %p74
      %p76 = scmp.ne.s32.totalorder %s65, %s68
      %p77 = scmp.eq.s32.totalorder %s22, 3
      %p78 = por %p76, %p77
      %p79 = scmp.ne.s32.totalorder %s68, %s69
      %p80 = scmp.eq.s32.totalorder %s22, 0
      %p81 = por %p79, %p80
      %p82 = scmp.ne.s32.totalorder %s68, %s69
      %p83 = scmp.eq.s32.totalorder %s23, 3
      %p84 = por %p82, %p83
      %p86 = scmp.ne.s32.totalorder %s69, %s85
      %p87 = scmp.eq.s32.totalorder %s23, 0
      %p88 = por %p86, %p87
      %s89 = ssub.s32 %s24, %s36
      %s90 = ssub.s32 %s25, %s32
      %s91 = sor.u32 %s89, %s90
      %p92 = scmp.eq.s32.totalorder %s91, 0
      %s94 = sadd.s32 %s93, 1
      %s95 = scalar_select %p92, %s93, %s94
      %p98 = pneg %p92
      %p99 = scmp.eq.s32.totalorder %s17, 3
      %p100 = por %p98, %p99
      %p101 = scmp.ne.s32.totalorder %s93, %s96
      %p102 = scmp.eq.s32.totalorder %s17, 0
      %p103 = por %p101, %p102
      %p104 = scmp.ne.s32.totalorder %s93, %s96
      %p105 = scmp.eq.s32.totalorder %s22, 3
      %p106 = por %p104, %p105
      %p107 = scmp.ne.s32.totalorder %s96, %s97
      %p108 = scmp.eq.s32.totalorder %s22, 0
      %p109 = por %p107, %p108
      %p110 = scmp.ne.s32.totalorder %s96, %s97
      %p111 = scmp.eq.s32.totalorder %s23, 3
      %p112 = por %p110, %p111
      %p114 = scmp.ne.s32.totalorder %s97, %s113
      %p115 = scmp.eq.s32.totalorder %s23, 0
      %p116 = por %p114, %p115
      %s118 = sadd.s32 %s117, 1
      %p121 = scmp.eq.s32.totalorder %s17, 3
      %p122 = scmp.ne.s32.totalorder %s117, %s119
      %p123 = scmp.eq.s32.totalorder %s17, 0
      %p124 = por %p122, %p123
      %p125 = scmp.ne.s32.totalorder %s117, %s119
      %p126 = scmp.eq.s32.totalorder %s22, 3
      %p127 = por %p125, %p126
      %p128 = scmp.ne.s32.totalorder %s119, %s120
      %p129 = scmp.eq.s32.totalorder %s22, 0
      %p130 = por %p128, %p129
      %p131 = scmp.ne.s32.totalorder %s119, %s120
      %p132 = scmp.eq.s32.totalorder %s23, 3
      %p133 = por %p131, %p132
      %p135 = scmp.ne.s32.totalorder %s120, %s134
      %p136 = scmp.eq.s32.totalorder %s23, 0
      %p137 = por %p135, %p136
      %s139 = sadd.s32 %s138, 1
      %p142 = scmp.eq.s32.totalorder %s17, 3
      %p143 = scmp.ne.s32.totalorder %s138, %s140
      %p144 = scmp.eq.s32.totalorder %s17, 0
      %p145 = por %p143, %p144
      %p146 = scmp.ne.s32.totalorder %s138, %s140
      %p147 = scmp.eq.s32.totalorder %s22, 3
      %p148 = por %p146, %p147
      %p149 = scmp.ne.s32.totalorder %s140, %s141
      %p150 = scmp.eq.s32.totalorder %s22, 0
      %p151 = por %p149, %p150
      %p152 = scmp.ne.s32.totalorder %s140, %s141
      %p153 = scmp.eq.s32.totalorder %s23, 3
      %p154 = por %p152, %p153
      %p156 = scmp.ne.s32.totalorder %s141, %s155
      %p157 = scmp.eq.s32.totalorder %s23, 0
      %p158 = por %p156, %p157
      %s160 = sadd.s32 %s159, 1
      %p163 = scmp.eq.s32.totalorder %s17, 3
      %p164 = scmp.ne.s32.totalorder %s159, %s161
      %p165 = scmp.eq.s32.totalorder %s17, 0
      %p166 = por %p164, %p165
      %p167 = scmp.ne.s32.totalorder %s159, %s161
      %p168 = scmp.eq.s32.totalorder %s22, 3
      %p169 = por %p167, %p168
      %p170 = scmp.ne.s32.totalorder %s161, %s162
      %p171 = scmp.eq.s32.totalorder %s22, 0
      %p172 = por %p170, %p171
      %p173 = scmp.ne.s32.totalorder %s161, %s162
      %p174 = scmp.eq.s32.totalorder %s23, 3
      %p175 = por %p173, %p174
      %p177 = scmp.ne.s32.totalorder %s162, %s176
      %p178 = scmp.eq.s32.totalorder %s23, 0
      %p179 = por %p177, %p178
      %s181 = sadd.s32 %s180, 1
      %p184 = scmp.eq.s32.totalorder %s17, 3
      %p185 = scmp.ne.s32.totalorder %s180, %s182
      %p186 = scmp.eq.s32.totalorder %s17, 0
      %p187 = por %p185, %p186
      %p188 = scmp.ne.s32.totalorder %s180, %s182
      %p189 = scmp.eq.s32.totalorder %s22, 3
      %p190 = por %p188, %p189
      %p191 = scmp.ne.s32.totalorder %s182, %s183
      %p192 = scmp.eq.s32.totalorder %s22, 0
      %p193 = por %p191, %p192
      %p194 = scmp.ne.s32.totalorder %s182, %s183
      %p195 = scmp.eq.s32.totalorder %s23, 3
      %p196 = por %p194, %p195
      %p198 = scmp.ne.s32.totalorder %s183, %s197
      %p199 = scmp.eq.s32.totalorder %s23, 0
      %p200 = por %p198, %p199
      %s202 = sadd.s32 %s201, 1
      %p205 = scmp.eq.s32.totalorder %s17, 3
      %p206 = scmp.ne.s32.totalorder %s201, %s203
      %p207 = scmp.eq.s32.totalorder %s17, 0
      %p208 = por %p206, %p207
      %p209 = scmp.ne.s32.totalorder %s201, %s203
      %p210 = scmp.eq.s32.totalorder %s22, 3
      %p211 = por %p209, %p210
      %p212 = scmp.ne.s32.totalorder %s203, %s204
      %p213 = scmp.eq.s32.totalorder %s22, 0
      %p214 = por %p212, %p213
      %p215 = scmp.ne.s32.totalorder %s203, %s204
      %p216 = scmp.eq.s32.totalorder %s23, 3
      %p217 = por %p215, %p216
      %p219 = scmp.ne.s32.totalorder %s204, %s218
      %p220 = scmp.eq.s32.totalorder %s23, 0
      %p221 = por %p219, %p220
      %s223 = sadd.s32 %s222, 1
      %p226 = scmp.eq.s32.totalorder %s17, 3
      %p227 = scmp.ne.s32.totalorder %s222, %s224
      %p228 = scmp.eq.s32.totalorder %s17, 0
      %p229 = por %p227, %p228
      %p230 = scmp.ne.s32.totalorder %s222, %s224
      %p231 = scmp.eq.s32.totalorder %s22, 3
      %p232 = por %p230, %p231
      %p233 = scmp.ne.s32.totalorder %s224, %s225
      %p234 = scmp.eq.s32.totalorder %s22, 0
      %p235 = por %p233, %p234
      %p236 = scmp.ne.s32.totalorder %s224, %s225
      %p237 = scmp.eq.s32.totalorder %s23, 3
      %p238 = por %p236, %p237
      %p240 = scmp.ne.s32.totalorder %s225, %s239
      %p241 = scmp.eq.s32.totalorder %s23, 0
      %p242 = por %p240, %p241
      %s243 = ssub.s32 %s24, %s36
      %p244 = scmp.eq.s32.totalorder %s243, 0
      %s246 = sadd.s32 %s245, 1
      %s247 = scalar_select %p244, %s245, %s246
      %p250 = pneg %p244
      %p251 = scmp.eq.s32.totalorder %s17, 3
      %p252 = por %p250, %p251
      %p253 = scmp.ne.s32.totalorder %s245, %s248
      %p254 = scmp.eq.s32.totalorder %s17, 0
      %p255 = por %p253, %p254
      %p256 = scmp.ne.s32.totalorder %s245, %s248
      %p257 = scmp.eq.s32.totalorder %s22, 3
      %p258 = por %p256, %p257
      %p259 = scmp.ne.s32.totalorder %s248, %s249
      %p260 = scmp.eq.s32.totalorder %s22, 0
      %p261 = por %p259, %p260
      %p262 = scmp.ne.s32.totalorder %s248, %s249
      %p263 = scmp.eq.s32.totalorder %s23, 3
      %p264 = por %p262, %p263
      %p266 = scmp.ne.s32.totalorder %s249, %s265
      %p267 = scmp.eq.s32.totalorder %s23, 0
      %p268 = por %p266, %p267
      %p269 = scmp.le.s32.totalorder 1, %s17
      %p270 = scmp.lt.s32.totalorder %s17, 5
      %p271 = pnand %p269, %p270
      %p272 = pneg %p271
      // Predicated region
      $region9: #{tpu_custom_call.1} parent=5 // pred_check
        _
      $region10: #{tpu_custom_call.1} parent=5 // pred_check_branch
        %274 = sbr.rel (%p271) target = $region12
      $region11: #{tpu_custom_call.1} parent=5 // pred_region
        %s275 = ssub.s32 %s17, 1
        // Predicated region
        $region13: #{tpu_custom_call.1} parent=11 // pred_check
          %p276 = pneg %p130
        $region14: #{tpu_custom_call.1} parent=11 // pred_check_branch
          %278 = sbr.rel (%p276) target = $region16
        $region15: #{tpu_custom_call.1} parent=11 // pred_region
          _
        $region16: #{tpu_custom_call.1} parent=11 // pred_fallthru
          _
        // Predicated region
        $region17: #{tpu_custom_call.1} parent=11 // pred_check
          %p279 = pneg %p151
        $region18: #{tpu_custom_call.1} parent=11 // pred_check_branch
          %281 = sbr.rel (%p279) target = $region20
        $region19: #{tpu_custom_call.1} parent=11 // pred_region
          _
        $region20: #{tpu_custom_call.1} parent=11 // pred_fallthru
          _
        // Predicated region
        $region21: #{tpu_custom_call.1} parent=11 // pred_check
          %p282 = pneg %p172
        $region22: #{tpu_custom_call.1} parent=11 // pred_check_branch
          %284 = sbr.rel (%p282) target = $region24
        $region23: #{tpu_custom_call.1} parent=11 // pred_region
          %286 = vsyncadd [#allocation8], 0
          %s287 = sshll.u32 %s5, 4
          %s288 = int_to_ptr.hbm [resolvable:$true] %s287
          %s289 = sshll.u32 [#allocation7], 4
          %s290 = int_to_ptr.vmem [resolvable:$true] %s289
          %295 = dma.hbm_to_vmem [thread:$0]  %s288, 512, %s290, [#allocation8], 128, 128, 8
        $region24: #{tpu_custom_call.1} parent=11 // pred_fallthru
          _
        // Predicated region
        $region25: #{tpu_custom_call.1} parent=11 // pred_check
          %p296 = pneg %p193
        $region26: #{tpu_custom_call.1} parent=11 // pred_check_branch
          %298 = sbr.rel (%p296) target = $region28
        $region27: #{tpu_custom_call.1} parent=11 // pred_region
          %300 = vsyncadd [#allocation10], 0
          %s301 = sshll.u32 %s6, 4
          %s302 = int_to_ptr.hbm [resolvable:$true] %s301
          %s303 = sshll.u32 [#allocation9], 4
          %s304 = int_to_ptr.vmem [resolvable:$true] %s303
          %309 = dma.hbm_to_vmem [thread:$0]  %s302, 512, %s304, [#allocation10], 128, 128, 8
        $region28: #{tpu_custom_call.1} parent=11 // pred_fallthru
          _
        // Predicated region
        $region29: #{tpu_custom_call.1} parent=11 // pred_check
          %p310 = pneg %p214
        $region30: #{tpu_custom_call.1} parent=11 // pred_check_branch
          %312 = sbr.rel (%p310) target = $region32
        $region31: #{tpu_custom_call.1} parent=11 // pred_region
          %314 = vsyncadd [#allocation10], 0
          %s315 = sshll.u32 %s7, 4
          %s316 = int_to_ptr.hbm [resolvable:$true] %s315
          %s317 = sshll.u32 [#allocation11], 4
          %s318 = int_to_ptr.vmem [resolvable:$true] %s317
          %323 = dma.hbm_to_vmem [thread:$0]  %s316, 512, %s318, [#allocation10], 128, 128, 8
        $region32: #{tpu_custom_call.1} parent=11 // pred_fallthru
          _
        // Predicated region
        $region33: #{tpu_custom_call.1} parent=11 // pred_check
          %p324 = pneg %p235
        $region34: #{tpu_custom_call.1} parent=11 // pred_check_branch
          %326 = sbr.rel (%p324) target = $region36
        $region35: #{tpu_custom_call.1} parent=11 // pred_region
          _
        $region36: #{tpu_custom_call.1} parent=11 // pred_fallthru
          _
      $region12: #{tpu_custom_call.1} parent=5 // pred_fallthru
        _
      %p327 = scmp.lt.s32.totalorder %s17, 4
      // Predicated region
      $region37: #{tpu_custom_call.1} parent=5 // pred_check
        %p328 = pneg %p327
      $region38: #{tpu_custom_call.1} parent=5 // pred_check_branch
        %330 = sbr.rel (%p328) target = $region40
      $region39: #{tpu_custom_call.1} parent=5 // pred_region
        // Predicated region
        $region41: #{tpu_custom_call.1} parent=39 // pred_check
          %p331 = pneg %p49
        $region42: #{tpu_custom_call.1} parent=39 // pred_check_branch
          %333 = sbr.rel (%p331) target = $region44
        $region43: #{tpu_custom_call.1} parent=39 // pred_region
          %s334 = smul.u32 16, %s24
          %p335 = scmp.lt.s32.totalorder %s334, 31
          %s336 = scalar_select %p335, %s334, 31
          %s337 = smul.addr %s336, 8
          %s338 = scalar_lea.vmem %s0, %s337
          %s339 = smul.u32 16, %s24
        $region44: #{tpu_custom_call.1} parent=39 // pred_fallthru
          _
        // Predicated region
        $region45: #{tpu_custom_call.1} parent=39 // pred_check
          %p340 = pneg %p75
        $region46: #{tpu_custom_call.1} parent=39 // pred_check_branch
          %342 = sbr.rel (%p340) target = $region48
        $region47: #{tpu_custom_call.1} parent=39 // pred_region
          %s343 = smul.u32 16, %s25
          %p344 = scmp.lt.s32.totalorder %s343, 31
          %s345 = scalar_select %p344, %s343, 31
          %s346 = smul.addr %s345, 8
          %s347 = scalar_lea.vmem %s1, %s346
          %s348 = smul.u32 16, %s25
        $region48: #{tpu_custom_call.1} parent=39 // pred_fallthru
          _
        // Predicated region
        $region49: #{tpu_custom_call.1} parent=39 // pred_check
          %p349 = pneg %p103
        $region50: #{tpu_custom_call.1} parent=39 // pred_check_branch
          %351 = sbr.rel (%p349) target = $region52
        $region51: #{tpu_custom_call.1} parent=39 // pred_region
          %s352 = sand.u32 %s93, 1
          %s353 = sand.u32 %s93, 1
          %s354 = smul.addr %s353, 128
          %s355 = scalar_lea.vmem [#allocation6], %s354
          %s356 = smul.u32 16, %s24
          %s357 = smul.addr %s356, 2
          %s358 = sadd.s32 %s25, %s357
          %s359 = smul.addr %s358, 8
          %s360 = scalar_lea.vmem %s2, %s359
          // Predicated region
          $region53: #{tpu_custom_call.1} parent=51 // pred_check
            _
          $region54: #{tpu_custom_call.1} parent=51 // pred_check_branch
            %362 = sbr.rel (0) target = $region56
          $region55: #{tpu_custom_call.1} parent=51 // pred_region
            // Predicated region
            $region57: #{tpu_custom_call.1} parent=55 // pred_check
              _
            $region58: #{tpu_custom_call.1} parent=55 // pred_check_branch
              %364 = sbr.rel (0) target = $region60
            $region59: #{tpu_custom_call.1} parent=55 // pred_region
              // Predicated region
              $region72: #{tpu_custom_call.1} parent=59 // pred_check
                _
              $region73: #{tpu_custom_call.1} parent=59 // pred_check_branch
                %410 = sbr.rel (0) target = $region75
              $region74: #{tpu_custom_call.1} parent=59 // pred_region
                loop: start=0, step=1, limit=1
                $region76: #{tpu_custom_call.1} parent=74 // loop_pre_header
                  _
                $region77: #{tpu_custom_call.1} parent=74 // loop_header
                  %s412 = sphi 0, %s416
                  %p413 = scmp.ge.s32.totalorder %s412, 1
                  %s417 = sphi %s360, %s360
                  %s418 = sphi %s355, %s355
                $region78: #{tpu_custom_call.1} parent=74 // loop_header_branch
                  %415 = sbr.rel (%p413) target = $region82
                $region79: #{tpu_custom_call.1} parent=74 // loop_body
                  %v419 = vld [vmem:[%s417] sm:$0xff]
                  %420 = vst [vmem:[%s418] sm:$0xff] %v419
                  %v421 = vld [vmem:[%s417 + $0x10] sm:$0xff]
                  %422 = vst [vmem:[%s418 + $0x8] sm:$0xff] %v421
                  %v423 = vld [vmem:[%s417 + $0x20] sm:$0xff]
                  %424 = vst [vmem:[%s418 + $0x10] sm:$0xff] %v423
                  %v425 = vld [vmem:[%s417 + $0x30] sm:$0xff]
                  %426 = vst [vmem:[%s418 + $0x18] sm:$0xff] %v425
                  %v427 = vld [vmem:[%s417 + $0x40] sm:$0xff]
                  %428 = vst [vmem:[%s418 + $0x20] sm:$0xff] %v427
                  %v429 = vld [vmem:[%s417 + $0x50] sm:$0xff]
                  %430 = vst [vmem:[%s418 + $0x28] sm:$0xff] %v429
                  %v431 = vld [vmem:[%s417 + $0x60] sm:$0xff]
                  %432 = vst [vmem:[%s418 + $0x30] sm:$0xff] %v431
                  %v433 = vld [vmem:[%s417 + $0x70] sm:$0xff]
                  %434 = vst [vmem:[%s418 + $0x38] sm:$0xff] %v433
                  %v435 = vld [vmem:[%s417 + $0x80] sm:$0xff]
                  %436 = vst [vmem:[%s418 + $0x40] sm:$0xff] %v435
                  %v437 = vld [vmem:[%s417 + $0x90] sm:$0xff]
                  %438 = vst [vmem:[%s418 + $0x48] sm:$0xff] %v437
                  %v439 = vld [vmem:[%s417 + $0xa0] sm:$0xff]
                  %440 = vst [vmem:[%s418 + $0x50] sm:$0xff] %v439
                  %v441 = vld [vmem:[%s417 + $0xb0] sm:$0xff]
                  %442 = vst [vmem:[%s418 + $0x58] sm:$0xff] %v441
                  %v443 = vld [vmem:[%s417 + $0xc0] sm:$0xff]
                  %444 = vst [vmem:[%s418 + $0x60] sm:$0xff] %v443
                  %v445 = vld [vmem:[%s417 + $0xd0] sm:$0xff]
                  %446 = vst [vmem:[%s418 + $0x68] sm:$0xff] %v445
                  %v447 = vld [vmem:[%s417 + $0xe0] sm:$0xff]
                  %448 = vst [vmem:[%s418 + $0x70] sm:$0xff] %v447
                  %v449 = vld [vmem:[%s417 + $0xf0] sm:$0xff]
                  %450 = vst [vmem:[%s418 + $0x78] sm:$0xff] %v449
                $region80: #{tpu_custom_call.1} parent=74 // loop_footer
                  %s416 = sadd.s32 1, %s412
                $region81: #{tpu_custom_call.1} parent=74 // loop_footer_branch
                  %411 = sbr.rel target = $region77
                $region82: #{tpu_custom_call.1} parent=74 // loop_exit
                  _
              $region75: #{tpu_custom_call.1} parent=59 // pred_fallthru
                _
              // Predicated region
              $region83: #{tpu_custom_call.1} parent=59 // pred_check
                _
              $region84: #{tpu_custom_call.1} parent=59 // pred_check_branch
                %452 = sbr.rel target = $region86
              $region85: #{tpu_custom_call.1} parent=59 // pred_region
                _
              $region86: #{tpu_custom_call.1} parent=59 // pred_fallthru
                _
            $region60: #{tpu_custom_call.1} parent=55 // pred_fallthru
              _
            // Predicated region
            $region61: #{tpu_custom_call.1} parent=55 // pred_check
              _
            $region62: #{tpu_custom_call.1} parent=55 // pred_check_branch
              %366 = sbr.rel target = $region64
            $region63: #{tpu_custom_call.1} parent=55 // pred_region
              %s368 = ssub.s32 256, 1
              loop: start=0, step=1, limit=1
              $region65: #{tpu_custom_call.1} parent=63 // loop_pre_header
                _
              $region66: #{tpu_custom_call.1} parent=63 // loop_header
                %s370 = sphi 0, %s374
                %p371 = scmp.ge.s32.totalorder %s370, 1
                %s375 = sphi %s360, %s360
                %s376 = sphi %s355, %s355
              $region67: #{tpu_custom_call.1} parent=63 // loop_header_branch
                %373 = sbr.rel (%p371) target = $region71
              $region68: #{tpu_custom_call.1} parent=63 // loop_body
                %v377 = vld [vmem:[%s375] sm:%s368]
                %378 = vst [vmem:[%s376] sm:%s368] %v377
                %v379 = vld [vmem:[%s375 + $0x10] sm:%s368]
                %380 = vst [vmem:[%s376 + $0x8] sm:%s368] %v379
                %v381 = vld [vmem:[%s375 + $0x20] sm:%s368]
                %382 = vst [vmem:[%s376 + $0x10] sm:%s368] %v381
                %v383 = vld [vmem:[%s375 + $0x30] sm:%s368]
                %384 = vst [vmem:[%s376 + $0x18] sm:%s368] %v383
                %v385 = vld [vmem:[%s375 + $0x40] sm:%s368]
                %386 = vst [vmem:[%s376 + $0x20] sm:%s368] %v385
                %v387 = vld [vmem:[%s375 + $0x50] sm:%s368]
                %388 = vst [vmem:[%s376 + $0x28] sm:%s368] %v387
                %v389 = vld [vmem:[%s375 + $0x60] sm:%s368]
                %390 = vst [vmem:[%s376 + $0x30] sm:%s368] %v389
                %v391 = vld [vmem:[%s375 + $0x70] sm:%s368]
                %392 = vst [vmem:[%s376 + $0x38] sm:%s368] %v391
                %v393 = vld [vmem:[%s375 + $0x80] sm:%s368]
                %394 = vst [vmem:[%s376 + $0x40] sm:%s368] %v393
                %v395 = vld [vmem:[%s375 + $0x90] sm:%s368]
                %396 = vst [vmem:[%s376 + $0x48] sm:%s368] %v395
                %v397 = vld [vmem:[%s375 + $0xa0] sm:%s368]
                %398 = vst [vmem:[%s376 + $0x50] sm:%s368] %v397
                %v399 = vld [vmem:[%s375 + $0xb0] sm:%s368]
                %400 = vst [vmem:[%s376 + $0x58] sm:%s368] %v399
                %v401 = vld [vmem:[%s375 + $0xc0] sm:%s368]
                %402 = vst [vmem:[%s376 + $0x60] sm:%s368] %v401
                %v403 = vld [vmem:[%s375 + $0xd0] sm:%s368]
                %404 = vst [vmem:[%s376 + $0x68] sm:%s368] %v403
                %v405 = vld [vmem:[%s375 + $0xe0] sm:%s368]
                %406 = vst [vmem:[%s376 + $0x70] sm:%s368] %v405
                %v407 = vld [vmem:[%s375 + $0xf0] sm:%s368]
                %408 = vst [vmem:[%s376 + $0x78] sm:%s368] %v407
              $region69: #{tpu_custom_call.1} parent=63 // loop_footer
                %s374 = sadd.s32 1, %s370
              $region70: #{tpu_custom_call.1} parent=63 // loop_footer_branch
                %369 = sbr.rel target = $region66
              $region71: #{tpu_custom_call.1} parent=63 // loop_exit
                _
            $region64: #{tpu_custom_call.1} parent=55 // pred_fallthru
              _
          $region56: #{tpu_custom_call.1} parent=51 // pred_fallthru
            _
          %453 = vnop
        $region52: #{tpu_custom_call.1} parent=39 // pred_fallthru
          _
      $region40: #{tpu_custom_call.1} parent=5 // pred_fallthru
        _
      %p454 = scmp.le.s32.totalorder 1, %s17
      %p455 = scmp.lt.s32.totalorder %s17, 5
      %p456 = pnand %p454, %p455
      %p457 = pneg %p456
      // Predicated region
      $region87: #{tpu_custom_call.1} parent=5 // pred_check
        _
      $region88: #{tpu_custom_call.1} parent=5 // pred_check_branch
        %459 = sbr.rel (%p456) target = $region90
      $region89: #{tpu_custom_call.1} parent=5 // pred_region
        %s460 = ssub.s32 %s17, 1
        %s461 = sand.u32 %s96, 1
        %s462 = sand.u32 %s96, 1
        %s463 = smul.addr %s462, 128
        %s464 = scalar_lea.vmem [#allocation6], %s463
        // Predicated region
        $region91: #{tpu_custom_call.1} parent=89 // pred_check
          %p465 = pneg %p109
        $region92: #{tpu_custom_call.1} parent=89 // pred_check_branch
          %467 = sbr.rel (%p465) target = $region94
        $region93: #{tpu_custom_call.1} parent=89 // pred_region
          _
        $region94: #{tpu_custom_call.1} parent=89 // pred_fallthru
          _
        // Predicated region
        $region95: #{tpu_custom_call.1} parent=89 // pred_check
          %p468 = pneg %p172
        $region96: #{tpu_custom_call.1} parent=89 // pred_check_branch
          %470 = sbr.rel (%p468) target = $region98
        $region97: #{tpu_custom_call.1} parent=89 // pred_region
          %472 = dma.done [#allocation8], 512
        $region98: #{tpu_custom_call.1} parent=89 // pred_fallthru
          _
        // Predicated region
        $region99: #{tpu_custom_call.1} parent=89 // pred_check
          %p473 = pneg %p193
        $region100: #{tpu_custom_call.1} parent=89 // pred_check_branch
          %475 = sbr.rel (%p473) target = $region102
        $region101: #{tpu_custom_call.1} parent=89 // pred_region
          %477 = dma.done [#allocation10], 512
        $region102: #{tpu_custom_call.1} parent=89 // pred_fallthru
          _
        // Predicated region
        $region103: #{tpu_custom_call.1} parent=89 // pred_check
          %p478 = pneg %p214
        $region104: #{tpu_custom_call.1} parent=89 // pred_check_branch
          %480 = sbr.rel (%p478) target = $region106
        $region105: #{tpu_custom_call.1} parent=89 // pred_region
          %482 = dma.done [#allocation10], 512
        $region106: #{tpu_custom_call.1} parent=89 // pred_fallthru
          _
        %s483 = smul.u32 16, %s26
        %p484 = scmp.lt.s32.totalorder %s483, 31
        %s485 = scalar_select %p484, %s483, 31
        %s486 = smul.addr %s485, 8
        %s487 = scalar_lea.vmem %s0, %s486
        %p488 = pneg %p55
        %p489 = pneg %p52
        %s490 = smul.u32 16, %s27
        %p491 = scmp.lt.s32.totalorder %s490, 31
        %s492 = scalar_select %p491, %s490, 31
        %s493 = smul.addr %s492, 8
        %s494 = scalar_lea.vmem %s1, %s493
        %p495 = pneg %p81
        %p496 = pneg %p78
        %s497 = sand.u32 %s96, 1
        %s498 = sand.u32 %s96, 1
        %s499 = smul.addr %s498, 128
        %s500 = scalar_lea.vmem [#allocation6], %s499
        %p501 = pneg %p109
        %p502 = pneg %p106
        %p503 = pneg %p130
        %p504 = pneg %p127
        %p505 = pneg %p151
        %p506 = pneg %p148
        %p507 = pneg %p172
        %p508 = pneg %p169
        %p509 = pneg %p193
        %p510 = pneg %p190
        %p511 = pneg %p214
        %p512 = pneg %p211
        %p513 = pneg %p235
        %p514 = pneg %p232
        %p515 = pneg %p261
        %p516 = pneg %p258
        %s517 = smul.u32 16, %s26
        %p518 = scmp.lt.s32.totalorder %s517, 31
        %s519 = scalar_select %p518, %s517, 31
        %s520 = smul.addr %s519, 8
        %s521 = scalar_lea.vmem %s9, %s520
        %s522 = smul.u32 16, %s26
        %p523 = scmp.lt.s32.totalorder %s522, 31
        %s524 = scalar_select %p523, %s522, 31
        %s525 = smul.addr %s524, 8
        %s526 = scalar_lea.vmem %s0, %s525
        %s527 = smul.u32 16, %s26
        %s528 = smul.u32 16, %s27
        %p529 = scmp.lt.s32.totalorder %s528, 31
        %s530 = scalar_select %p529, %s528, 31
        %s531 = smul.addr %s530, 8
        %s532 = scalar_lea.vmem %s1, %s531
        %s533 = smul.u32 16, %s27
        %s534 = smul.u32 16, %s26
        %s535 = smul.u32 16, %s26
        %p536 = scmp.lt.s32.totalorder %s535, 31
        %s537 = scalar_select %p536, %s535, 31
        %s538 = smul.addr %s537, 8
        %s539 = scalar_lea.vmem %s9, %s538
        %s540 = smul.u32 16, %s26
        %p541 = scmp.eq.s32.totalorder %s27, 0
        // Predicated region
        $region107: #{tpu_custom_call.1} parent=89 // pred_check
          %p542 = pneg %p541
        $region108: #{tpu_custom_call.1} parent=89 // pred_check_branch
          %544 = sbr.rel (%p542) target = $region110
        $region109: #{tpu_custom_call.1} parent=89 // pred_region
          %v545 = vld [vmem:[%s526] sm:$0xff]
          %v546 = vld [vmem:[%s526 + $0x8] sm:$0xff]
          %v547 = vld [vmem:[%s526 + $0x10] sm:$0xff]
          %v548 = vld [vmem:[%s526 + $0x18] sm:$0xff]
          %v549 = vld [vmem:[%s526 + $0x20] sm:$0xff]
          %v550 = vld [vmem:[%s526 + $0x28] sm:$0xff]
          %v551 = vld [vmem:[%s526 + $0x30] sm:$0xff]
          %v552 = vld [vmem:[%s526 + $0x38] sm:$0xff]
          %v553 = vld [vmem:[%s526 + $0x40] sm:$0xff]
          %v554 = vld [vmem:[%s526 + $0x48] sm:$0xff]
          %v555 = vld [vmem:[%s526 + $0x50] sm:$0xff]
          %v556 = vld [vmem:[%s526 + $0x58] sm:$0xff]
          %v557 = vld [vmem:[%s526 + $0x60] sm:$0xff]
          %v558 = vld [vmem:[%s526 + $0x68] sm:$0xff]
          %v559 = vld [vmem:[%s526 + $0x70] sm:$0xff]
          %v560 = vld [vmem:[%s526 + $0x78] sm:$0xff]
          %v561 = vld [vmem:[%s3] sm:$0xff]
          %v562 = vld [vmem:[%s3 + $0x8] sm:$0xff]
          %v563 = vld [vmem:[%s3 + $0x10] sm:$0xff]
          %v564 = vld [vmem:[%s3 + $0x18] sm:$0xff]
          %vm565 = vcmask 261120
          %v567 = vsel %vm565, %v545, 0
          %v570 = vsel %vm565, %v546, 0
          %v573 = vsel %vm565, %v547, 0
          %v576 = vsel %vm565, %v548, 0
          %v579 = vsel %vm565, %v549, 0
          %v582 = vsel %vm565, %v550, 0
          %v585 = vsel %vm565, %v551, 0
          %v588 = vsel %vm565, %v552, 0
          %v591 = vsel %vm565, %v553, 0
          %v594 = vsel %vm565, %v554, 0
          %v597 = vsel %vm565, %v555, 0
          %v600 = vsel %vm565, %v556, 0
          %v603 = vsel %vm565, %v557, 0
          %v606 = vsel %vm565, %v558, 0
          %v609 = vsel %vm565, %v559, 0
          %v612 = vsel %vm565, %v560, 0
          %614 = vmatpush.msra.mxu0 0.0
          %615 = vmatpush.msra.mxu0 0.0
          %616 = vmatpush.msra.mxu0 0.0
          %617 = vmatpush.msra.mxu0 0.0
          %618 = vmatpush.msra.mxu0 0.0
          %619 = vmatpush.msra.mxu0 0.0
          %620 = vmatpush.msra.mxu0 0.0
          %621 = vmatpush.msra.mxu0 0.0
          %622 = vmatpush.msra.mxu0 0.0
          %623 = vmatpush.msra.mxu0 0.0
          %624 = vmatpush.msra.mxu0 0.0
          %625 = vmatpush.msra.mxu0 0.0
          %626 = vmatpush.msra.mxu0 %v564
          %627 = vmatpush.msra.mxu0 %v563
          %628 = vmatpush.msra.mxu0 %v562
          %629 = vmatpush.msra.mxu0 %v561
          %630 = vmatmul.f32.gmra.mxu0 %v567
          %v631 = vpop.f32.mrf.mxu0
          %v632 = vadd.f32 0.0, %v631
          %633 = vmatmul.f32.gmra.mxu0 %v570
          %v634 = vpop.f32.mrf.mxu0
          %v635 = vadd.f32 0.0, %v634
          %636 = vmatmul.f32.gmra.mxu0 %v573
          %v637 = vpop.f32.mrf.mxu0
          %v638 = vadd.f32 0.0, %v637
          %639 = vmatmul.f32.gmra.mxu0 %v576
          %v640 = vpop.f32.mrf.mxu0
          %v641 = vadd.f32 0.0, %v640
          %642 = vmatmul.f32.gmra.mxu0 %v579
          %v643 = vpop.f32.mrf.mxu0
          %v644 = vadd.f32 0.0, %v643
          %645 = vmatmul.f32.gmra.mxu0 %v582
          %v646 = vpop.f32.mrf.mxu0
          %v647 = vadd.f32 0.0, %v646
          %648 = vmatmul.f32.gmra.mxu0 %v585
          %v649 = vpop.f32.mrf.mxu0
          %v650 = vadd.f32 0.0, %v649
          %651 = vmatmul.f32.gmra.mxu0 %v588
          %v652 = vpop.f32.mrf.mxu0
          %v653 = vadd.f32 0.0, %v652
          %654 = vmatmul.f32.gmra.mxu0 %v591
          %v655 = vpop.f32.mrf.mxu0
          %v656 = vadd.f32 0.0, %v655
          %657 = vmatmul.f32.gmra.mxu0 %v594
          %v658 = vpop.f32.mrf.mxu0
          %v659 = vadd.f32 0.0, %v658
          %660 = vmatmul.f32.gmra.mxu0 %v597
          %v661 = vpop.f32.mrf.mxu0
          %v662 = vadd.f32 0.0, %v661
          %663 = vmatmul.f32.gmra.mxu0 %v600
          %v664 = vpop.f32.mrf.mxu0
          %v665 = vadd.f32 0.0, %v664
          %666 = vmatmul.f32.gmra.mxu0 %v603
          %v667 = vpop.f32.mrf.mxu0
          %v668 = vadd.f32 0.0, %v667
          %669 = vmatmul.f32.gmra.mxu0 %v606
          %v670 = vpop.f32.mrf.mxu0
          %v671 = vadd.f32 0.0, %v670
          %672 = vmatmul.f32.gmra.mxu0 %v609
          %v673 = vpop.f32.mrf.mxu0
          %v674 = vadd.f32 0.0, %v673
          %675 = vmatmul.f32.gmra.mxu0 %v612
          %v676 = vpop.f32.mrf.mxu0
          %v677 = vadd.f32 0.0, %v676
          %678 = vdwg.mxu0
          %v679 = vmul.f32 %v632, 0.35355338
          %v680 = vmul.f32 %v635, 0.35355338
          %v681 = vmul.f32 %v638, 0.35355338
          %v682 = vmul.f32 %v641, 0.35355338
          %v683 = vmul.f32 %v644, 0.35355338
          %v684 = vmul.f32 %v647, 0.35355338
          %v685 = vmul.f32 %v650, 0.35355338
          %v686 = vmul.f32 %v653, 0.35355338
          %v687 = vmul.f32 %v656, 0.35355338
          %v688 = vmul.f32 %v659, 0.35355338
          %v689 = vmul.f32 %v662, 0.35355338
          %v690 = vmul.f32 %v665, 0.35355338
          %v691 = vmul.f32 %v668, 0.35355338
          %v692 = vmul.f32 %v671, 0.35355338
          %v693 = vmul.f32 %v674, 0.35355338
          %v694 = vmul.f32 %v677, 0.35355338
          %695 = vst.msk [vmem:[#allocation2] sm:$0xff] %vm565, %v679
          %696 = vst.msk [vmem:[#allocation2 + $0x8] sm:$0xff] %vm565, %v680
          %697 = vst.msk [vmem:[#allocation2 + $0x10] sm:$0xff] %vm565, %v681
          %698 = vst.msk [vmem:[#allocation2 + $0x18] sm:$0xff] %vm565, %v682
          %699 = vst.msk [vmem:[#allocation2 + $0x20] sm:$0xff] %vm565, %v683
          %700 = vst.msk [vmem:[#allocation2 + $0x28] sm:$0xff] %vm565, %v684
          %701 = vst.msk [vmem:[#allocation2 + $0x30] sm:$0xff] %vm565, %v685
          %702 = vst.msk [vmem:[#allocation2 + $0x38] sm:$0xff] %vm565, %v686
          %703 = vst.msk [vmem:[#allocation2 + $0x40] sm:$0xff] %vm565, %v687
          %704 = vst.msk [vmem:[#allocation2 + $0x48] sm:$0xff] %vm565, %v688
          %705 = vst.msk [vmem:[#allocation2 + $0x50] sm:$0xff] %vm565, %v689
          %706 = vst.msk [vmem:[#allocation2 + $0x58] sm:$0xff] %vm565, %v690
          %707 = vst.msk [vmem:[#allocation2 + $0x60] sm:$0xff] %vm565, %v691
          %708 = vst.msk [vmem:[#allocation2 + $0x68] sm:$0xff] %vm565, %v692
          %709 = vst.msk [vmem:[#allocation2 + $0x70] sm:$0xff] %vm565, %v693
          %710 = vst.msk [vmem:[#allocation2 + $0x78] sm:$0xff] %vm565, %v694
          %vm711 = vcmask 7168
          %712 = vst.msk [vmem:[#allocation3] sm:$0xff] %vm711, -1e+30
          %713 = vst.msk [vmem:[#allocation3 + $0x8] sm:$0xff] %vm711, -1e+30
          %714 = vst.msk [vmem:[#allocation3 + $0x10] sm:$0xff] %vm711, -1e+30
          %715 = vst.msk [vmem:[#allocation3 + $0x18] sm:$0xff] %vm711, -1e+30
          %716 = vst.msk [vmem:[#allocation3 + $0x20] sm:$0xff] %vm711, -1e+30
          %717 = vst.msk [vmem:[#allocation3 + $0x28] sm:$0xff] %vm711, -1e+30
          %718 = vst.msk [vmem:[#allocation3 + $0x30] sm:$0xff] %vm711, -1e+30
          %719 = vst.msk [vmem:[#allocation3 + $0x38] sm:$0xff] %vm711, -1e+30
          %720 = vst.msk [vmem:[#allocation3 + $0x40] sm:$0xff] %vm711, -1e+30
          %721 = vst.msk [vmem:[#allocation3 + $0x48] sm:$0xff] %vm711, -1e+30
          %722 = vst.msk [vmem:[#allocation3 + $0x50] sm:$0xff] %vm711, -1e+30
          %723 = vst.msk [vmem:[#allocation3 + $0x58] sm:$0xff] %vm711, -1e+30
          %724 = vst.msk [vmem:[#allocation3 + $0x60] sm:$0xff] %vm711, -1e+30
          %725 = vst.msk [vmem:[#allocation3 + $0x68] sm:$0xff] %vm711, -1e+30
          %726 = vst.msk [vmem:[#allocation3 + $0x70] sm:$0xff] %vm711, -1e+30
          %727 = vst.msk [vmem:[#allocation3 + $0x78] sm:$0xff] %vm711, -1e+30
          %728 = vst.msk [vmem:[#allocation3 + $0x80] sm:$0xff] %vm711, -1e+30
          %729 = vst.msk [vmem:[#allocation3 + $0x88] sm:$0xff] %vm711, -1e+30
          %730 = vst.msk [vmem:[#allocation3 + $0x90] sm:$0xff] %vm711, -1e+30
          %731 = vst.msk [vmem:[#allocation3 + $0x98] sm:$0xff] %vm711, -1e+30
          %732 = vst.msk [vmem:[#allocation3 + $0xa0] sm:$0xff] %vm711, -1e+30
          %733 = vst.msk [vmem:[#allocation3 + $0xa8] sm:$0xff] %vm711, -1e+30
          %734 = vst.msk [vmem:[#allocation3 + $0xb0] sm:$0xff] %vm711, -1e+30
          %735 = vst.msk [vmem:[#allocation3 + $0xb8] sm:$0xff] %vm711, -1e+30
          %736 = vst.msk [vmem:[#allocation3 + $0xc0] sm:$0xff] %vm711, -1e+30
          %737 = vst.msk [vmem:[#allocation3 + $0xc8] sm:$0xff] %vm711, -1e+30
          %738 = vst.msk [vmem:[#allocation3 + $0xd0] sm:$0xff] %vm711, -1e+30
          %739 = vst.msk [vmem:[#allocation3 + $0xd8] sm:$0xff] %vm711, -1e+30
          %740 = vst.msk [vmem:[#allocation3 + $0xe0] sm:$0xff] %vm711, -1e+30
          %741 = vst.msk [vmem:[#allocation3 + $0xe8] sm:$0xff] %vm711, -1e+30
          %742 = vst.msk [vmem:[#allocation3 + $0xf0] sm:$0xff] %vm711, -1e+30
          %743 = vst.msk [vmem:[#allocation3 + $0xf8] sm:$0xff] %vm711, -1e+30
          %744 = vst.msk [vmem:[#allocation3 + $0x100] sm:$0xff] %vm711, -1e+30
          %745 = vst.msk [vmem:[#allocation3 + $0x108] sm:$0xff] %vm711, -1e+30
          %746 = vst.msk [vmem:[#allocation3 + $0x110] sm:$0xff] %vm711, -1e+30
          %747 = vst.msk [vmem:[#allocation3 + $0x118] sm:$0xff] %vm711, -1e+30
          %748 = vst.msk [vmem:[#allocation3 + $0x120] sm:$0xff] %vm711, -1e+30
          %749 = vst.msk [vmem:[#allocation3 + $0x128] sm:$0xff] %vm711, -1e+30
          %750 = vst.msk [vmem:[#allocation3 + $0x130] sm:$0xff] %vm711, -1e+30
          %751 = vst.msk [vmem:[#allocation3 + $0x138] sm:$0xff] %vm711, -1e+30
          %752 = vst.msk [vmem:[#allocation3 + $0x140] sm:$0xff] %vm711, -1e+30
          %753 = vst.msk [vmem:[#allocation3 + $0x148] sm:$0xff] %vm711, -1e+30
          %754 = vst.msk [vmem:[#allocation3 + $0x150] sm:$0xff] %vm711, -1e+30
          %755 = vst.msk [vmem:[#allocation3 + $0x158] sm:$0xff] %vm711, -1e+30
          %756 = vst.msk [vmem:[#allocation3 + $0x160] sm:$0xff] %vm711, -1e+30
          %757 = vst.msk [vmem:[#allocation3 + $0x168] sm:$0xff] %vm711, -1e+30
          %758 = vst.msk [vmem:[#allocation3 + $0x170] sm:$0xff] %vm711, -1e+30
          %759 = vst.msk [vmem:[#allocation3 + $0x178] sm:$0xff] %vm711, -1e+30
          %760 = vst.msk [vmem:[#allocation3 + $0x180] sm:$0xff] %vm711, -1e+30
          %761 = vst.msk [vmem:[#allocation3 + $0x188] sm:$0xff] %vm711, -1e+30
          %762 = vst.msk [vmem:[#allocation3 + $0x190] sm:$0xff] %vm711, -1e+30
          %763 = vst.msk [vmem:[#allocation3 + $0x198] sm:$0xff] %vm711, -1e+30
          %764 = vst.msk [vmem:[#allocation3 + $0x1a0] sm:$0xff] %vm711, -1e+30
          %765 = vst.msk [vmem:[#allocation3 + $0x1a8] sm:$0xff] %vm711, -1e+30
          %766 = vst.msk [vmem:[#allocation3 + $0x1b0] sm:$0xff] %vm711, -1e+30
          %767 = vst.msk [vmem:[#allocation3 + $0x1b8] sm:$0xff] %vm711, -1e+30
          %768 = vst.msk [vmem:[#allocation3 + $0x1c0] sm:$0xff] %vm711, -1e+30
          %769 = vst.msk [vmem:[#allocation3 + $0x1c8] sm:$0xff] %vm711, -1e+30
          %770 = vst.msk [vmem:[#allocation3 + $0x1d0] sm:$0xff] %vm711, -1e+30
          %771 = vst.msk [vmem:[#allocation3 + $0x1d8] sm:$0xff] %vm711, -1e+30
          %772 = vst.msk [vmem:[#allocation3 + $0x1e0] sm:$0xff] %vm711, -1e+30
          %773 = vst.msk [vmem:[#allocation3 + $0x1e8] sm:$0xff] %vm711, -1e+30
          %774 = vst.msk [vmem:[#allocation3 + $0x1f0] sm:$0xff] %vm711, -1e+30
          %775 = vst.msk [vmem:[#allocation3 + $0x1f8] sm:$0xff] %vm711, -1e+30
          %776 = vst.msk [vmem:[#allocation4] sm:$0xff] %vm711, 0.0
          %777 = vst.msk [vmem:[#allocation4 + $0x8] sm:$0xff] %vm711, 0.0
          %778 = vst.msk [vmem:[#allocation4 + $0x10] sm:$0xff] %vm711, 0.0
          %779 = vst.msk [vmem:[#allocation4 + $0x18] sm:$0xff] %vm711, 0.0
          %780 = vst.msk [vmem:[#allocation4 + $0x20] sm:$0xff] %vm711, 0.0
          %781 = vst.msk [vmem:[#allocation4 + $0x28] sm:$0xff] %vm711, 0.0
          %782 = vst.msk [vmem:[#allocation4 + $0x30] sm:$0xff] %vm711, 0.0
          %783 = vst.msk [vmem:[#allocation4 + $0x38] sm:$0xff] %vm711, 0.0
          %784 = vst.msk [vmem:[#allocation4 + $0x40] sm:$0xff] %vm711, 0.0
          %785 = vst.msk [vmem:[#allocation4 + $0x48] sm:$0xff] %vm711, 0.0
          %786 = vst.msk [vmem:[#allocation4 + $0x50] sm:$0xff] %vm711, 0.0
          %787 = vst.msk [vmem:[#allocation4 + $0x58] sm:$0xff] %vm711, 0.0
          %788 = vst.msk [vmem:[#allocation4 + $0x60] sm:$0xff] %vm711, 0.0
          %789 = vst.msk [vmem:[#allocation4 + $0x68] sm:$0xff] %vm711, 0.0
          %790 = vst.msk [vmem:[#allocation4 + $0x70] sm:$0xff] %vm711, 0.0
          %791 = vst.msk [vmem:[#allocation4 + $0x78] sm:$0xff] %vm711, 0.0
          %792 = vst.msk [vmem:[#allocation4 + $0x80] sm:$0xff] %vm711, 0.0
          %793 = vst.msk [vmem:[#allocation4 + $0x88] sm:$0xff] %vm711, 0.0
          %794 = vst.msk [vmem:[#allocation4 + $0x90] sm:$0xff] %vm711, 0.0
          %795 = vst.msk [vmem:[#allocation4 + $0x98] sm:$0xff] %vm711, 0.0
          %796 = vst.msk [vmem:[#allocation4 + $0xa0] sm:$0xff] %vm711, 0.0
          %797 = vst.msk [vmem:[#allocation4 + $0xa8] sm:$0xff] %vm711, 0.0
          %798 = vst.msk [vmem:[#allocation4 + $0xb0] sm:$0xff] %vm711, 0.0
          %799 = vst.msk [vmem:[#allocation4 + $0xb8] sm:$0xff] %vm711, 0.0
          %800 = vst.msk [vmem:[#allocation4 + $0xc0] sm:$0xff] %vm711, 0.0
          %801 = vst.msk [vmem:[#allocation4 + $0xc8] sm:$0xff] %vm711, 0.0
          %802 = vst.msk [vmem:[#allocation4 + $0xd0] sm:$0xff] %vm711, 0.0
          %803 = vst.msk [vmem:[#allocation4 + $0xd8] sm:$0xff] %vm711, 0.0
          %804 = vst.msk [vmem:[#allocation4 + $0xe0] sm:$0xff] %vm711, 0.0
          %805 = vst.msk [vmem:[#allocation4 + $0xe8] sm:$0xff] %vm711, 0.0
          %806 = vst.msk [vmem:[#allocation4 + $0xf0] sm:$0xff] %vm711, 0.0
          %807 = vst.msk [vmem:[#allocation4 + $0xf8] sm:$0xff] %vm711, 0.0
          %808 = vst.msk [vmem:[#allocation4 + $0x100] sm:$0xff] %vm711, 0.0
          %809 = vst.msk [vmem:[#allocation4 + $0x108] sm:$0xff] %vm711, 0.0
          %810 = vst.msk [vmem:[#allocation4 + $0x110] sm:$0xff] %vm711, 0.0
          %811 = vst.msk [vmem:[#allocation4 + $0x118] sm:$0xff] %vm711, 0.0
          %812 = vst.msk [vmem:[#allocation4 + $0x120] sm:$0xff] %vm711, 0.0
          %813 = vst.msk [vmem:[#allocation4 + $0x128] sm:$0xff] %vm711, 0.0
          %814 = vst.msk [vmem:[#allocation4 + $0x130] sm:$0xff] %vm711, 0.0
          %815 = vst.msk [vmem:[#allocation4 + $0x138] sm:$0xff] %vm711, 0.0
          %816 = vst.msk [vmem:[#allocation4 + $0x140] sm:$0xff] %vm711, 0.0
          %817 = vst.msk [vmem:[#allocation4 + $0x148] sm:$0xff] %vm711, 0.0
          %818 = vst.msk [vmem:[#allocation4 + $0x150] sm:$0xff] %vm711, 0.0
          %819 = vst.msk [vmem:[#allocation4 + $0x158] sm:$0xff] %vm711, 0.0
          %820 = vst.msk [vmem:[#allocation4 + $0x160] sm:$0xff] %vm711, 0.0
          %821 = vst.msk [vmem:[#allocation4 + $0x168] sm:$0xff] %vm711, 0.0
          %822 = vst.msk [vmem:[#allocation4 + $0x170] sm:$0xff] %vm711, 0.0
          %823 = vst.msk [vmem:[#allocation4 + $0x178] sm:$0xff] %vm711, 0.0
          %824 = vst.msk [vmem:[#allocation4 + $0x180] sm:$0xff] %vm711, 0.0
          %825 = vst.msk [vmem:[#allocation4 + $0x188] sm:$0xff] %vm711, 0.0
          %826 = vst.msk [vmem:[#allocation4 + $0x190] sm:$0xff] %vm711, 0.0
          %827 = vst.msk [vmem:[#allocation4 + $0x198] sm:$0xff] %vm711, 0.0
          %828 = vst.msk [vmem:[#allocation4 + $0x1a0] sm:$0xff] %vm711, 0.0
          %829 = vst.msk [vmem:[#allocation4 + $0x1a8] sm:$0xff] %vm711, 0.0
          %830 = vst.msk [vmem:[#allocation4 + $0x1b0] sm:$0xff] %vm711, 0.0
          %831 = vst.msk [vmem:[#allocation4 + $0x1b8] sm:$0xff] %vm711, 0.0
          %832 = vst.msk [vmem:[#allocation4 + $0x1c0] sm:$0xff] %vm711, 0.0
          %833 = vst.msk [vmem:[#allocation4 + $0x1c8] sm:$0xff] %vm711, 0.0
          %834 = vst.msk [vmem:[#allocation4 + $0x1d0] sm:$0xff] %vm711, 0.0
          %835 = vst.msk [vmem:[#allocation4 + $0x1d8] sm:$0xff] %vm711, 0.0
          %836 = vst.msk [vmem:[#allocation4 + $0x1e0] sm:$0xff] %vm711, 0.0
          %837 = vst.msk [vmem:[#allocation4 + $0x1e8] sm:$0xff] %vm711, 0.0
          %838 = vst.msk [vmem:[#allocation4 + $0x1f0] sm:$0xff] %vm711, 0.0
          %839 = vst.msk [vmem:[#allocation4 + $0x1f8] sm:$0xff] %vm711, 0.0
          %vm840 = vcmask 64512
          %841 = vst.msk [vmem:[#allocation5] sm:$0xff] %vm840, 0.0
          %842 = vst.msk [vmem:[#allocation5 + $0x8] sm:$0xff] %vm840, 0.0
          %843 = vst.msk [vmem:[#allocation5 + $0x10] sm:$0xff] %vm840, 0.0
          %844 = vst.msk [vmem:[#allocation5 + $0x18] sm:$0xff] %vm840, 0.0
          %845 = vst.msk [vmem:[#allocation5 + $0x20] sm:$0xff] %vm840, 0.0
          %846 = vst.msk [vmem:[#allocation5 + $0x28] sm:$0xff] %vm840, 0.0
          %847 = vst.msk [vmem:[#allocation5 + $0x30] sm:$0xff] %vm840, 0.0
          %848 = vst.msk [vmem:[#allocation5 + $0x38] sm:$0xff] %vm840, 0.0
          %849 = vst.msk [vmem:[#allocation5 + $0x40] sm:$0xff] %vm840, 0.0
          %850 = vst.msk [vmem:[#allocation5 + $0x48] sm:$0xff] %vm840, 0.0
          %851 = vst.msk [vmem:[#allocation5 + $0x50] sm:$0xff] %vm840, 0.0
          %852 = vst.msk [vmem:[#allocation5 + $0x58] sm:$0xff] %vm840, 0.0
          %853 = vst.msk [vmem:[#allocation5 + $0x60] sm:$0xff] %vm840, 0.0
          %854 = vst.msk [vmem:[#allocation5 + $0x68] sm:$0xff] %vm840, 0.0
          %855 = vst.msk [vmem:[#allocation5 + $0x70] sm:$0xff] %vm840, 0.0
          %856 = vst.msk [vmem:[#allocation5 + $0x78] sm:$0xff] %vm840, 0.0
          %857 = vst.msk [vmem:[#allocation5 + $0x80] sm:$0xff] %vm840, 0.0
          %858 = vst.msk [vmem:[#allocation5 + $0x88] sm:$0xff] %vm840, 0.0
          %859 = vst.msk [vmem:[#allocation5 + $0x90] sm:$0xff] %vm840, 0.0
          %860 = vst.msk [vmem:[#allocation5 + $0x98] sm:$0xff] %vm840, 0.0
          %861 = vst.msk [vmem:[#allocation5 + $0xa0] sm:$0xff] %vm840, 0.0
          %862 = vst.msk [vmem:[#allocation5 + $0xa8] sm:$0xff] %vm840, 0.0
          %863 = vst.msk [vmem:[#allocation5 + $0xb0] sm:$0xff] %vm840, 0.0
          %864 = vst.msk [vmem:[#allocation5 + $0xb8] sm:$0xff] %vm840, 0.0
          %865 = vst.msk [vmem:[#allocation5 + $0xc0] sm:$0xff] %vm840, 0.0
          %866 = vst.msk [vmem:[#allocation5 + $0xc8] sm:$0xff] %vm840, 0.0
          %867 = vst.msk [vmem:[#allocation5 + $0xd0] sm:$0xff] %vm840, 0.0
          %868 = vst.msk [vmem:[#allocation5 + $0xd8] sm:$0xff] %vm840, 0.0
          %869 = vst.msk [vmem:[#allocation5 + $0xe0] sm:$0xff] %vm840, 0.0
          %870 = vst.msk [vmem:[#allocation5 + $0xe8] sm:$0xff] %vm840, 0.0
          %871 = vst.msk [vmem:[#allocation5 + $0xf0] sm:$0xff] %vm840, 0.0
          %872 = vst.msk [vmem:[#allocation5 + $0xf8] sm:$0xff] %vm840, 0.0
          %873 = vst.msk [vmem:[#allocation5 + $0x100] sm:$0xff] %vm840, 0.0
          %874 = vst.msk [vmem:[#allocation5 + $0x108] sm:$0xff] %vm840, 0.0
          %875 = vst.msk [vmem:[#allocation5 + $0x110] sm:$0xff] %vm840, 0.0
          %876 = vst.msk [vmem:[#allocation5 + $0x118] sm:$0xff] %vm840, 0.0
          %877 = vst.msk [vmem:[#allocation5 + $0x120] sm:$0xff] %vm840, 0.0
          %878 = vst.msk [vmem:[#allocation5 + $0x128] sm:$0xff] %vm840, 0.0
          %879 = vst.msk [vmem:[#allocation5 + $0x130] sm:$0xff] %vm840, 0.0
          %880 = vst.msk [vmem:[#allocation5 + $0x138] sm:$0xff] %vm840, 0.0
          %881 = vst.msk [vmem:[#allocation5 + $0x140] sm:$0xff] %vm840, 0.0
          %882 = vst.msk [vmem:[#allocation5 + $0x148] sm:$0xff] %vm840, 0.0
          %883 = vst.msk [vmem:[#allocation5 + $0x150] sm:$0xff] %vm840, 0.0
          %884 = vst.msk [vmem:[#allocation5 + $0x158] sm:$0xff] %vm840, 0.0
          %885 = vst.msk [vmem:[#allocation5 + $0x160] sm:$0xff] %vm840, 0.0
          %886 = vst.msk [vmem:[#allocation5 + $0x168] sm:$0xff] %vm840, 0.0
          %887 = vst.msk [vmem:[#allocation5 + $0x170] sm:$0xff] %vm840, 0.0
          %888 = vst.msk [vmem:[#allocation5 + $0x178] sm:$0xff] %vm840, 0.0
          %889 = vst.msk [vmem:[#allocation5 + $0x180] sm:$0xff] %vm840, 0.0
          %890 = vst.msk [vmem:[#allocation5 + $0x188] sm:$0xff] %vm840, 0.0
          %891 = vst.msk [vmem:[#allocation5 + $0x190] sm:$0xff] %vm840, 0.0
          %892 = vst.msk [vmem:[#allocation5 + $0x198] sm:$0xff] %vm840, 0.0
          %893 = vst.msk [vmem:[#allocation5 + $0x1a0] sm:$0xff] %vm840, 0.0
          %894 = vst.msk [vmem:[#allocation5 + $0x1a8] sm:$0xff] %vm840, 0.0
          %895 = vst.msk [vmem:[#allocation5 + $0x1b0] sm:$0xff] %vm840, 0.0
          %896 = vst.msk [vmem:[#allocation5 + $0x1b8] sm:$0xff] %vm840, 0.0
          %897 = vst.msk [vmem:[#allocation5 + $0x1c0] sm:$0xff] %vm840, 0.0
          %898 = vst.msk [vmem:[#allocation5 + $0x1c8] sm:$0xff] %vm840, 0.0
          %899 = vst.msk [vmem:[#allocation5 + $0x1d0] sm:$0xff] %vm840, 0.0
          %900 = vst.msk [vmem:[#allocation5 + $0x1d8] sm:$0xff] %vm840, 0.0
          %901 = vst.msk [vmem:[#allocation5 + $0x1e0] sm:$0xff] %vm840, 0.0
          %902 = vst.msk [vmem:[#allocation5 + $0x1e8] sm:$0xff] %vm840, 0.0
          %903 = vst.msk [vmem:[#allocation5 + $0x1f0] sm:$0xff] %vm840, 0.0
          %904 = vst.msk [vmem:[#allocation5 + $0x1f8] sm:$0xff] %vm840, 0.0
        $region110: #{tpu_custom_call.1} parent=89 // pred_fallthru
          _
        %v905 = vld [vmem:[%s532] sm:$0xff]
        %v906 = vld [vmem:[%s532 + $0x8] sm:$0xff]
        %v907 = vld [vmem:[%s532 + $0x10] sm:$0xff]
        %v908 = vld [vmem:[%s532 + $0x18] sm:$0xff]
        %v909 = vld [vmem:[%s532 + $0x20] sm:$0xff]
        %v910 = vld [vmem:[%s532 + $0x28] sm:$0xff]
        %v911 = vld [vmem:[%s532 + $0x30] sm:$0xff]
        %v912 = vld [vmem:[%s532 + $0x38] sm:$0xff]
        %v913 = vld [vmem:[%s532 + $0x40] sm:$0xff]
        %v914 = vld [vmem:[%s532 + $0x48] sm:$0xff]
        %v915 = vld [vmem:[%s532 + $0x50] sm:$0xff]
        %v916 = vld [vmem:[%s532 + $0x58] sm:$0xff]
        %v917 = vld [vmem:[%s532 + $0x60] sm:$0xff]
        %v918 = vld [vmem:[%s532 + $0x68] sm:$0xff]
        %v919 = vld [vmem:[%s532 + $0x70] sm:$0xff]
        %v920 = vld [vmem:[%s532 + $0x78] sm:$0xff]
        %v921 = vld [vmem:[%s4] sm:$0xff]
        %v922 = vld [vmem:[%s4 + $0x8] sm:$0xff]
        %v923 = vld [vmem:[%s4 + $0x10] sm:$0xff]
        %v924 = vld [vmem:[%s4 + $0x18] sm:$0xff]
        %vm925 = vcmask 261120
        %v927 = vsel %vm925, %v905, 0
        %v930 = vsel %vm925, %v906, 0
        %v933 = vsel %vm925, %v907, 0
        %v936 = vsel %vm925, %v908, 0
        %v939 = vsel %vm925, %v909, 0
        %v942 = vsel %vm925, %v910, 0
        %v945 = vsel %vm925, %v911, 0
        %v948 = vsel %vm925, %v912, 0
        %v951 = vsel %vm925, %v913, 0
        %v954 = vsel %vm925, %v914, 0
        %v957 = vsel %vm925, %v915, 0
        %v960 = vsel %vm925, %v916, 0
        %v963 = vsel %vm925, %v917, 0
        %v966 = vsel %vm925, %v918, 0
        %v969 = vsel %vm925, %v919, 0
        %v972 = vsel %vm925, %v920, 0
        %974 = vmatpush.msra.mxu0 0.0
        %975 = vmatpush.msra.mxu0 0.0
        %976 = vmatpush.msra.mxu0 0.0
        %977 = vmatpush.msra.mxu0 0.0
        %978 = vmatpush.msra.mxu0 0.0
        %979 = vmatpush.msra.mxu0 0.0
        %980 = vmatpush.msra.mxu0 0.0
        %981 = vmatpush.msra.mxu0 0.0
        %982 = vmatpush.msra.mxu0 0.0
        %983 = vmatpush.msra.mxu0 0.0
        %984 = vmatpush.msra.mxu0 0.0
        %985 = vmatpush.msra.mxu0 0.0
        %986 = vmatpush.msra.mxu0 %v924
        %987 = vmatpush.msra.mxu0 %v923
        %988 = vmatpush.msra.mxu0 %v922
        %989 = vmatpush.msra.mxu0 %v921
        %990 = vmatmul.f32.gmra.mxu0 %v927
        %v991 = vpop.f32.mrf.mxu0
        %v992 = vadd.f32 0.0, %v991
        %993 = vmatmul.f32.gmra.mxu0 %v930
        %v994 = vpop.f32.mrf.mxu0
        %v995 = vadd.f32 0.0, %v994
        %996 = vmatmul.f32.gmra.mxu0 %v933
        %v997 = vpop.f32.mrf.mxu0
        %v998 = vadd.f32 0.0, %v997
        %999 = vmatmul.f32.gmra.mxu0 %v936
        %v1000 = vpop.f32.mrf.mxu0
        %v1001 = vadd.f32 0.0, %v1000
        %1002 = vmatmul.f32.gmra.mxu0 %v939
        %v1003 = vpop.f32.mrf.mxu0
        %v1004 = vadd.f32 0.0, %v1003
        %1005 = vmatmul.f32.gmra.mxu0 %v942
        %v1006 = vpop.f32.mrf.mxu0
        %v1007 = vadd.f32 0.0, %v1006
        %1008 = vmatmul.f32.gmra.mxu0 %v945
        %v1009 = vpop.f32.mrf.mxu0
        %v1010 = vadd.f32 0.0, %v1009
        %1011 = vmatmul.f32.gmra.mxu0 %v948
        %v1012 = vpop.f32.mrf.mxu0
        %v1013 = vadd.f32 0.0, %v1012
        %1014 = vmatmul.f32.gmra.mxu0 %v951
        %v1015 = vpop.f32.mrf.mxu0
        %v1016 = vadd.f32 0.0, %v1015
        %1017 = vmatmul.f32.gmra.mxu0 %v954
        %v1018 = vpop.f32.mrf.mxu0
        %v1019 = vadd.f32 0.0, %v1018
        %1020 = vmatmul.f32.gmra.mxu0 %v957
        %v1021 = vpop.f32.mrf.mxu0
        %v1022 = vadd.f32 0.0, %v1021
        %1023 = vmatmul.f32.gmra.mxu0 %v960
        %v1024 = vpop.f32.mrf.mxu0
        %v1025 = vadd.f32 0.0, %v1024
        %1026 = vmatmul.f32.gmra.mxu0 %v963
        %v1027 = vpop.f32.mrf.mxu0
        %v1028 = vadd.f32 0.0, %v1027
        %1029 = vmatmul.f32.gmra.mxu0 %v966
        %v1030 = vpop.f32.mrf.mxu0
        %v1031 = vadd.f32 0.0, %v1030
        %1032 = vmatmul.f32.gmra.mxu0 %v969
        %v1033 = vpop.f32.mrf.mxu0
        %v1034 = vadd.f32 0.0, %v1033
        %1035 = vmatmul.f32.gmra.mxu0 %v972
        %v1036 = vpop.f32.mrf.mxu0
        %v1037 = vadd.f32 0.0, %v1036
        %1038 = vdwg.mxu0
        %v1039 = vld [vmem:[#allocation7] sm:$0xff]
        %v1040 = vld [vmem:[#allocation7 + $0x8] sm:$0xff]
        %v1041 = vld [vmem:[#allocation7 + $0x10] sm:$0xff]
        %v1042 = vld [vmem:[#allocation7 + $0x18] sm:$0xff]
        %1043 = vmatpush.msra.mxu0 0.0
        %1044 = vmatpush.msra.mxu0 0.0
        %1045 = vmatpush.msra.mxu0 0.0
        %1046 = vmatpush.msra.mxu0 0.0
        %1047 = vmatpush.msra.mxu0 0.0
        %1048 = vmatpush.msra.mxu0 0.0
        %1049 = vmatpush.msra.mxu0 0.0
        %1050 = vmatpush.msra.mxu0 0.0
        %1051 = vmatpush.msra.mxu0 0.0
        %1052 = vmatpush.msra.mxu0 0.0
        %1053 = vmatpush.msra.mxu0 0.0
        %1054 = vmatpush.msra.mxu0 0.0
        %1055 = vmatpush.msra.mxu0 %v1042
        %1056 = vmatpush.msra.mxu0 %v1041
        %1057 = vmatpush.msra.mxu0 %v1040
        %1058 = vmatpush.msra.mxu0 %v1039
        %1059 = vmatmul.f32.gmra.mxu0 %v927
        %v1060 = vpop.f32.mrf.mxu0
        %v1061 = vadd.f32 0.0, %v1060
        %1062 = vmatmul.f32.gmra.mxu0 %v930
        %v1063 = vpop.f32.mrf.mxu0
        %v1064 = vadd.f32 0.0, %v1063
        %1065 = vmatmul.f32.gmra.mxu0 %v933
        %v1066 = vpop.f32.mrf.mxu0
        %v1067 = vadd.f32 0.0, %v1066
        %1068 = vmatmul.f32.gmra.mxu0 %v936
        %v1069 = vpop.f32.mrf.mxu0
        %v1070 = vadd.f32 0.0, %v1069
        %1071 = vmatmul.f32.gmra.mxu0 %v939
        %v1072 = vpop.f32.mrf.mxu0
        %v1073 = vadd.f32 0.0, %v1072
        %1074 = vmatmul.f32.gmra.mxu0 %v942
        %v1075 = vpop.f32.mrf.mxu0
        %v1076 = vadd.f32 0.0, %v1075
        %1077 = vmatmul.f32.gmra.mxu0 %v945
        %v1078 = vpop.f32.mrf.mxu0
        %v1079 = vadd.f32 0.0, %v1078
        %1080 = vmatmul.f32.gmra.mxu0 %v948
        %v1081 = vpop.f32.mrf.mxu0
        %v1082 = vadd.f32 0.0, %v1081
        %1083 = vmatmul.f32.gmra.mxu0 %v951
        %v1084 = vpop.f32.mrf.mxu0
        %v1085 = vadd.f32 0.0, %v1084
        %1086 = vmatmul.f32.gmra.mxu0 %v954
        %v1087 = vpop.f32.mrf.mxu0
        %v1088 = vadd.f32 0.0, %v1087
        %1089 = vmatmul.f32.gmra.mxu0 %v957
        %v1090 = vpop.f32.mrf.mxu0
        %v1091 = vadd.f32 0.0, %v1090
        %1092 = vmatmul.f32.gmra.mxu0 %v960
        %v1093 = vpop.f32.mrf.mxu0
        %v1094 = vadd.f32 0.0, %v1093
        %1095 = vmatmul.f32.gmra.mxu0 %v963
        %v1096 = vpop.f32.mrf.mxu0
        %v1097 = vadd.f32 0.0, %v1096
        %1098 = vmatmul.f32.gmra.mxu0 %v966
        %v1099 = vpop.f32.mrf.mxu0
        %v1100 = vadd.f32 0.0, %v1099
        %1101 = vmatmul.f32.gmra.mxu0 %v969
        %v1102 = vpop.f32.mrf.mxu0
        %v1103 = vadd.f32 0.0, %v1102
        %1104 = vmatmul.f32.gmra.mxu0 %v972
        %v1105 = vpop.f32.mrf.mxu0
        %v1106 = vadd.f32 0.0, %v1105
        %1107 = vdwg.mxu0
        %v1108 = vld [vmem:[%s464] sm:$0xff]
        %v1109 = vld [vmem:[%s464 + $0x8] sm:$0xff]
        %v1110 = vld [vmem:[%s464 + $0x10] sm:$0xff]
        %v1111 = vld [vmem:[%s464 + $0x18] sm:$0xff]
        %v1112 = vld [vmem:[%s464 + $0x20] sm:$0xff]
        %v1113 = vld [vmem:[%s464 + $0x28] sm:$0xff]
        %v1114 = vld [vmem:[%s464 + $0x30] sm:$0xff]
        %v1115 = vld [vmem:[%s464 + $0x38] sm:$0xff]
        %v1116 = vld [vmem:[%s464 + $0x40] sm:$0xff]
        %v1117 = vld [vmem:[%s464 + $0x48] sm:$0xff]
        %v1118 = vld [vmem:[%s464 + $0x50] sm:$0xff]
        %v1119 = vld [vmem:[%s464 + $0x58] sm:$0xff]
        %v1120 = vld [vmem:[%s464 + $0x60] sm:$0xff]
        %v1121 = vld [vmem:[%s464 + $0x68] sm:$0xff]
        %v1122 = vld [vmem:[%s464 + $0x70] sm:$0xff]
        %v1123 = vld [vmem:[%s464 + $0x78] sm:$0xff]
        %vm1124 = vcmp.gt.f32.partialorder %v1108, 0.0
        %vm1125 = vcmp.gt.f32.partialorder %v1109, 0.0
        %vm1126 = vcmp.gt.f32.partialorder %v1110, 0.0
        %vm1127 = vcmp.gt.f32.partialorder %v1111, 0.0
        %vm1128 = vcmp.gt.f32.partialorder %v1112, 0.0
        %vm1129 = vcmp.gt.f32.partialorder %v1113, 0.0
        %vm1130 = vcmp.gt.f32.partialorder %v1114, 0.0
        %vm1131 = vcmp.gt.f32.partialorder %v1115, 0.0
        %vm1132 = vcmp.gt.f32.partialorder %v1116, 0.0
        %vm1133 = vcmp.gt.f32.partialorder %v1117, 0.0
        %vm1134 = vcmp.gt.f32.partialorder %v1118, 0.0
        %vm1135 = vcmp.gt.f32.partialorder %v1119, 0.0
        %vm1136 = vcmp.gt.f32.partialorder %v1120, 0.0
        %vm1137 = vcmp.gt.f32.partialorder %v1121, 0.0
        %vm1138 = vcmp.gt.f32.partialorder %v1122, 0.0
        %vm1139 = vcmp.gt.f32.partialorder %v1123, 0.0
        %v1140 = vld [vmem:[#allocation2] sm:$0xff]
        %v1141 = vld [vmem:[#allocation2 + $0x8] sm:$0xff]
        %v1142 = vld [vmem:[#allocation2 + $0x10] sm:$0xff]
        %v1143 = vld [vmem:[#allocation2 + $0x18] sm:$0xff]
        %v1144 = vld [vmem:[#allocation2 + $0x20] sm:$0xff]
        %v1145 = vld [vmem:[#allocation2 + $0x28] sm:$0xff]
        %v1146 = vld [vmem:[#allocation2 + $0x30] sm:$0xff]
        %v1147 = vld [vmem:[#allocation2 + $0x38] sm:$0xff]
        %v1148 = vld [vmem:[#allocation2 + $0x40] sm:$0xff]
        %v1149 = vld [vmem:[#allocation2 + $0x48] sm:$0xff]
        %v1150 = vld [vmem:[#allocation2 + $0x50] sm:$0xff]
        %v1151 = vld [vmem:[#allocation2 + $0x58] sm:$0xff]
        %v1152 = vld [vmem:[#allocation2 + $0x60] sm:$0xff]
        %v1153 = vld [vmem:[#allocation2 + $0x68] sm:$0xff]
        %v1154 = vld [vmem:[#allocation2 + $0x70] sm:$0xff]
        %v1155 = vld [vmem:[#allocation2 + $0x78] sm:$0xff]
        %vm1156 = vcmask 64512
        %v1158 = vsel %vm1156, %v1140, 0
        %v1161 = vsel %vm1156, %v1141, 0
        %v1164 = vsel %vm1156, %v1142, 0
        %v1167 = vsel %vm1156, %v1143, 0
        %v1170 = vsel %vm1156, %v1144, 0
        %v1173 = vsel %vm1156, %v1145, 0
        %v1176 = vsel %vm1156, %v1146, 0
        %v1179 = vsel %vm1156, %v1147, 0
        %v1182 = vsel %vm1156, %v1148, 0
        %v1185 = vsel %vm1156, %v1149, 0
        %v1188 = vsel %vm1156, %v1150, 0
        %v1191 = vsel %vm1156, %v1151, 0
        %v1194 = vsel %vm1156, %v1152, 0
        %v1197 = vsel %vm1156, %v1153, 0
        %v1200 = vsel %vm1156, %v1154, 0
        %v1203 = vsel %vm1156, %v1155, 0
        %v1206 = vsel %vm1156, %v992, 0
        %v1209 = vsel %vm1156, %v995, 0
        %v1212 = vsel %vm1156, %v998, 0
        %v1215 = vsel %vm1156, %v1001, 0
        %v1218 = vsel %vm1156, %v1004, 0
        %v1221 = vsel %vm1156, %v1007, 0
        %v1224 = vsel %vm1156, %v1010, 0
        %v1227 = vsel %vm1156, %v1013, 0
        %v1230 = vsel %vm1156, %v1016, 0
        %v1233 = vsel %vm1156, %v1019, 0
        %v1236 = vsel %vm1156, %v1022, 0
        %v1239 = vsel %vm1156, %v1025, 0
        %v1242 = vsel %vm1156, %v1028, 0
        %v1245 = vsel %vm1156, %v1031, 0
        %v1248 = vsel %vm1156, %v1034, 0
        %v1251 = vsel %vm1156, %v1037, 0
        %1253 = vmatpush.xpose.msra.mxu0 %v1251
        %1254 = vmatpush.xpose.msra.mxu0 %v1248
        %1255 = vmatpush.xpose.msra.mxu0 %v1245
        %1256 = vmatpush.xpose.msra.mxu0 %v1242
        %1257 = vmatpush.xpose.msra.mxu0 %v1239
        %1258 = vmatpush.xpose.msra.mxu0 %v1236
        %1259 = vmatpush.xpose.msra.mxu0 %v1233
        %1260 = vmatpush.xpose.msra.mxu0 %v1230
        %1261 = vmatpush.xpose.msra.mxu0 %v1227
        %1262 = vmatpush.xpose.msra.mxu0 %v1224
        %1263 = vmatpush.xpose.msra.mxu0 %v1221
        %1264 = vmatpush.xpose.msra.mxu0 %v1218
        %1265 = vmatpush.xpose.msra.mxu0 %v1215
        %1266 = vmatpush.xpose.msra.mxu0 %v1212
        %1267 = vmatpush.xpose.msra.mxu0 %v1209
        %1268 = vmatpush.xpose.msra.mxu0 %v1206
        %1269 = vmatmul.f32.gmra.mxu0 %v1158
        %v1270 = vpop.f32.mrf.mxu0
        %v1271 = vadd.f32 0.0, %v1270
        %1272 = vmatmul.f32.gmra.mxu0 %v1161
        %v1273 = vpop.f32.mrf.mxu0
        %v1274 = vadd.f32 0.0, %v1273
        %1275 = vmatmul.f32.gmra.mxu0 %v1164
        %v1276 = vpop.f32.mrf.mxu0
        %v1277 = vadd.f32 0.0, %v1276
        %1278 = vmatmul.f32.gmra.mxu0 %v1167
        %v1279 = vpop.f32.mrf.mxu0
        %v1280 = vadd.f32 0.0, %v1279
        %1281 = vmatmul.f32.gmra.mxu0 %v1170
        %v1282 = vpop.f32.mrf.mxu0
        %v1283 = vadd.f32 0.0, %v1282
        %1284 = vmatmul.f32.gmra.mxu0 %v1173
        %v1285 = vpop.f32.mrf.mxu0
        %v1286 = vadd.f32 0.0, %v1285
        %1287 = vmatmul.f32.gmra.mxu0 %v1176
        %v1288 = vpop.f32.mrf.mxu0
        %v1289 = vadd.f32 0.0, %v1288
        %1290 = vmatmul.f32.gmra.mxu0 %v1179
        %v1291 = vpop.f32.mrf.mxu0
        %v1292 = vadd.f32 0.0, %v1291
        %1293 = vmatmul.f32.gmra.mxu0 %v1182
        %v1294 = vpop.f32.mrf.mxu0
        %v1295 = vadd.f32 0.0, %v1294
        %1296 = vmatmul.f32.gmra.mxu0 %v1185
        %v1297 = vpop.f32.mrf.mxu0
        %v1298 = vadd.f32 0.0, %v1297
        %1299 = vmatmul.f32.gmra.mxu0 %v1188
        %v1300 = vpop.f32.mrf.mxu0
        %v1301 = vadd.f32 0.0, %v1300
        %1302 = vmatmul.f32.gmra.mxu0 %v1191
        %v1303 = vpop.f32.mrf.mxu0
        %v1304 = vadd.f32 0.0, %v1303
        %1305 = vmatmul.f32.gmra.mxu0 %v1194
        %v1306 = vpop.f32.mrf.mxu0
        %v1307 = vadd.f32 0.0, %v1306
        %1308 = vmatmul.f32.gmra.mxu0 %v1197
        %v1309 = vpop.f32.mrf.mxu0
        %v1310 = vadd.f32 0.0, %v1309
        %1311 = vmatmul.f32.gmra.mxu0 %v1200
        %v1312 = vpop.f32.mrf.mxu0
        %v1313 = vadd.f32 0.0, %v1312
        %1314 = vmatmul.f32.gmra.mxu0 %v1203
        %v1315 = vpop.f32.mrf.mxu0
        %v1316 = vadd.f32 0.0, %v1315
        %1317 = vdwg.mxu0
        %v1318 = vsel %vm1124, %v1271, -9e+15
        %v1319 = vsel %vm1125, %v1274, -9e+15
        %v1320 = vsel %vm1126, %v1277, -9e+15
        %v1321 = vsel %vm1127, %v1280, -9e+15
        %v1322 = vsel %vm1128, %v1283, -9e+15
        %v1323 = vsel %vm1129, %v1286, -9e+15
        %v1324 = vsel %vm1130, %v1289, -9e+15
        %v1325 = vsel %vm1131, %v1292, -9e+15
        %v1326 = vsel %vm1132, %v1295, -9e+15
        %v1327 = vsel %vm1133, %v1298, -9e+15
        %v1328 = vsel %vm1134, %v1301, -9e+15
        %v1329 = vsel %vm1135, %v1304, -9e+15
        %v1330 = vsel %vm1136, %v1307, -9e+15
        %v1331 = vsel %vm1137, %v1310, -9e+15
        %v1332 = vsel %vm1138, %v1313, -9e+15
        %v1333 = vsel %vm1139, %v1316, -9e+15
        %v1334 = vld [vmem:[#allocation3] sm:$0xff]
        %v1335 = vld [vmem:[#allocation3 + $0x8] sm:$0xff]
        %v1336 = vld [vmem:[#allocation3 + $0x10] sm:$0xff]
        %v1337 = vld [vmem:[#allocation3 + $0x18] sm:$0xff]
        %v1338 = vld [vmem:[#allocation3 + $0x20] sm:$0xff]
        %v1339 = vld [vmem:[#allocation3 + $0x28] sm:$0xff]
        %v1340 = vld [vmem:[#allocation3 + $0x30] sm:$0xff]
        %v1341 = vld [vmem:[#allocation3 + $0x38] sm:$0xff]
        %v1342 = vld [vmem:[#allocation3 + $0x40] sm:$0xff]
        %v1343 = vld [vmem:[#allocation3 + $0x48] sm:$0xff]
        %v1344 = vld [vmem:[#allocation3 + $0x50] sm:$0xff]
        %v1345 = vld [vmem:[#allocation3 + $0x58] sm:$0xff]
        %v1346 = vld [vmem:[#allocation3 + $0x60] sm:$0xff]
        %v1347 = vld [vmem:[#allocation3 + $0x68] sm:$0xff]
        %v1348 = vld [vmem:[#allocation3 + $0x70] sm:$0xff]
        %v1349 = vld [vmem:[#allocation3 + $0x78] sm:$0xff]
        %1350 = vmax.xlane.f32.xlu0 %v1318
        %v1351 = vpop.xlane.xlu0 %1350
        %1352 = vmax.xlane.f32.xlu0 %v1319
        %v1353 = vpop.xlane.xlu0 %1352
        %1354 = vmax.xlane.f32.xlu0 %v1320
        %v1355 = vpop.xlane.xlu0 %1354
        %1356 = vmax.xlane.f32.xlu0 %v1321
        %v1357 = vpop.xlane.xlu0 %1356
        %1358 = vmax.xlane.f32.xlu0 %v1322
        %v1359 = vpop.xlane.xlu0 %1358
        %1360 = vmax.xlane.f32.xlu0 %v1323
        %v1361 = vpop.xlane.xlu0 %1360
        %1362 = vmax.xlane.f32.xlu0 %v1324
        %v1363 = vpop.xlane.xlu0 %1362
        %1364 = vmax.xlane.f32.xlu0 %v1325
        %v1365 = vpop.xlane.xlu0 %1364
        %1366 = vmax.xlane.f32.xlu0 %v1326
        %v1367 = vpop.xlane.xlu0 %1366
        %1368 = vmax.xlane.f32.xlu0 %v1327
        %v1369 = vpop.xlane.xlu0 %1368
        %1370 = vmax.xlane.f32.xlu0 %v1328
        %v1371 = vpop.xlane.xlu0 %1370
        %1372 = vmax.xlane.f32.xlu0 %v1329
        %v1373 = vpop.xlane.xlu0 %1372
        %1374 = vmax.xlane.f32.xlu0 %v1330
        %v1375 = vpop.xlane.xlu0 %1374
        %1376 = vmax.xlane.f32.xlu0 %v1331
        %v1377 = vpop.xlane.xlu0 %1376
        %1378 = vmax.xlane.f32.xlu0 %v1332
        %v1379 = vpop.xlane.xlu0 %1378
        %1380 = vmax.xlane.f32.xlu0 %v1333
        %v1381 = vpop.xlane.xlu0 %1380
        %v1382 = vmax.f32 %v1334, %v1351
        %v1383 = vmax.f32 %v1335, %v1353
        %v1384 = vmax.f32 %v1336, %v1355
        %v1385 = vmax.f32 %v1337, %v1357
        %v1386 = vmax.f32 %v1338, %v1359
        %v1387 = vmax.f32 %v1339, %v1361
        %v1388 = vmax.f32 %v1340, %v1363
        %v1389 = vmax.f32 %v1341, %v1365
        %v1390 = vmax.f32 %v1342, %v1367
        %v1391 = vmax.f32 %v1343, %v1369
        %v1392 = vmax.f32 %v1344, %v1371
        %v1393 = vmax.f32 %v1345, %v1373
        %v1394 = vmax.f32 %v1346, %v1375
        %v1395 = vmax.f32 %v1347, %v1377
        %v1396 = vmax.f32 %v1348, %v1379
        %v1397 = vmax.f32 %v1349, %v1381
        %v1398 = vsub.f32 %v1334, %v1382
        %v1399 = vsub.f32 %v1335, %v1383
        %v1400 = vsub.f32 %v1336, %v1384
        %v1401 = vsub.f32 %v1337, %v1385
        %v1402 = vsub.f32 %v1338, %v1386
        %v1403 = vsub.f32 %v1339, %v1387
        %v1404 = vsub.f32 %v1340, %v1388
        %v1405 = vsub.f32 %v1341, %v1389
        %v1406 = vsub.f32 %v1342, %v1390
        %v1407 = vsub.f32 %v1343, %v1391
        %v1408 = vsub.f32 %v1344, %v1392
        %v1409 = vsub.f32 %v1345, %v1393
        %v1410 = vsub.f32 %v1346, %v1394
        %v1411 = vsub.f32 %v1347, %v1395
        %v1412 = vsub.f32 %v1348, %v1396
        %v1413 = vsub.f32 %v1349, %v1397
        %v1414 = vmul.f32 %v1398, 1.442695
        %v1415 = vpow.pop %v1414
        %v1416 = vmul.f32 %v1399, 1.442695
        %v1417 = vpow.pop %v1416
        %v1418 = vmul.f32 %v1400, 1.442695
        %v1419 = vpow.pop %v1418
        %v1420 = vmul.f32 %v1401, 1.442695
        %v1421 = vpow.pop %v1420
        %v1422 = vmul.f32 %v1402, 1.442695
        %v1423 = vpow.pop %v1422
        %v1424 = vmul.f32 %v1403, 1.442695
        %v1425 = vpow.pop %v1424
        %v1426 = vmul.f32 %v1404, 1.442695
        %v1427 = vpow.pop %v1426
        %v1428 = vmul.f32 %v1405, 1.442695
        %v1429 = vpow.pop %v1428
        %v1430 = vmul.f32 %v1406, 1.442695
        %v1431 = vpow.pop %v1430
        %v1432 = vmul.f32 %v1407, 1.442695
        %v1433 = vpow.pop %v1432
        %v1434 = vmul.f32 %v1408, 1.442695
        %v1435 = vpow.pop %v1434
        %v1436 = vmul.f32 %v1409, 1.442695
        %v1437 = vpow.pop %v1436
        %v1438 = vmul.f32 %v1410, 1.442695
        %v1439 = vpow.pop %v1438
        %v1440 = vmul.f32 %v1411, 1.442695
        %v1441 = vpow.pop %v1440
        %v1442 = vmul.f32 %v1412, 1.442695
        %v1443 = vpow.pop %v1442
        %v1444 = vmul.f32 %v1413, 1.442695
        %v1445 = vpow.pop %v1444
        %1447 = vset.pattern.permute.xlu0 0
        %1448 = vperm.xlu0 %1447, %v1382
        %v1449 = vpop.permute.xlu0 %1448
        %1452 = vset.pattern.permute.xlu0 0
        %1453 = vperm.xlu0 %1452, %v1383
        %v1454 = vpop.permute.xlu0 %1453
        %1457 = vset.pattern.permute.xlu0 0
        %1458 = vperm.xlu0 %1457, %v1384
        %v1459 = vpop.permute.xlu0 %1458
        %1462 = vset.pattern.permute.xlu0 0
        %1463 = vperm.xlu0 %1462, %v1385
        %v1464 = vpop.permute.xlu0 %1463
        %1467 = vset.pattern.permute.xlu0 0
        %1468 = vperm.xlu0 %1467, %v1386
        %v1469 = vpop.permute.xlu0 %1468
        %1472 = vset.pattern.permute.xlu0 0
        %1473 = vperm.xlu0 %1472, %v1387
        %v1474 = vpop.permute.xlu0 %1473
        %1477 = vset.pattern.permute.xlu0 0
        %1478 = vperm.xlu0 %1477, %v1388
        %v1479 = vpop.permute.xlu0 %1478
        %1482 = vset.pattern.permute.xlu0 0
        %1483 = vperm.xlu0 %1482, %v1389
        %v1484 = vpop.permute.xlu0 %1483
        %1487 = vset.pattern.permute.xlu0 0
        %1488 = vperm.xlu0 %1487, %v1390
        %v1489 = vpop.permute.xlu0 %1488
        %1492 = vset.pattern.permute.xlu0 0
        %1493 = vperm.xlu0 %1492, %v1391
        %v1494 = vpop.permute.xlu0 %1493
        %1497 = vset.pattern.permute.xlu0 0
        %1498 = vperm.xlu0 %1497, %v1392
        %v1499 = vpop.permute.xlu0 %1498
        %1502 = vset.pattern.permute.xlu0 0
        %1503 = vperm.xlu0 %1502, %v1393
        %v1504 = vpop.permute.xlu0 %1503
        %1507 = vset.pattern.permute.xlu0 0
        %1508 = vperm.xlu0 %1507, %v1394
        %v1509 = vpop.permute.xlu0 %1508
        %1512 = vset.pattern.permute.xlu0 0
        %1513 = vperm.xlu0 %1512, %v1395
        %v1514 = vpop.permute.xlu0 %1513
        %1517 = vset.pattern.permute.xlu0 0
        %1518 = vperm.xlu0 %1517, %v1396
        %v1519 = vpop.permute.xlu0 %1518
        %1522 = vset.pattern.permute.xlu0 0
        %1523 = vperm.xlu0 %1522, %v1397
        %v1524 = vpop.permute.xlu0 %1523
        %v1526 = vsub.f32 %v1318, %v1449
        %v1527 = vsub.f32 %v1319, %v1454
        %v1528 = vsub.f32 %v1320, %v1459
        %v1529 = vsub.f32 %v1321, %v1464
        %v1530 = vsub.f32 %v1322, %v1469
        %v1531 = vsub.f32 %v1323, %v1474
        %v1532 = vsub.f32 %v1324, %v1479
        %v1533 = vsub.f32 %v1325, %v1484
        %v1534 = vsub.f32 %v1326, %v1489
        %v1535 = vsub.f32 %v1327, %v1494
        %v1536 = vsub.f32 %v1328, %v1499
        %v1537 = vsub.f32 %v1329, %v1504
        %v1538 = vsub.f32 %v1330, %v1509
        %v1539 = vsub.f32 %v1331, %v1514
        %v1540 = vsub.f32 %v1332, %v1519
        %v1541 = vsub.f32 %v1333, %v1524
        %v1542 = vmul.f32 %v1526, 1.442695
        %v1543 = vpow.pop %v1542
        %v1544 = vmul.f32 %v1527, 1.442695
        %v1545 = vpow.pop %v1544
        %v1546 = vmul.f32 %v1528, 1.442695
        %v1547 = vpow.pop %v1546
        %v1548 = vmul.f32 %v1529, 1.442695
        %v1549 = vpow.pop %v1548
        %v1550 = vmul.f32 %v1530, 1.442695
        %v1551 = vpow.pop %v1550
        %v1552 = vmul.f32 %v1531, 1.442695
        %v1553 = vpow.pop %v1552
        %v1554 = vmul.f32 %v1532, 1.442695
        %v1555 = vpow.pop %v1554
        %v1556 = vmul.f32 %v1533, 1.442695
        %v1557 = vpow.pop %v1556
        %v1558 = vmul.f32 %v1534, 1.442695
        %v1559 = vpow.pop %v1558
        %v1560 = vmul.f32 %v1535, 1.442695
        %v1561 = vpow.pop %v1560
        %v1562 = vmul.f32 %v1536, 1.442695
        %v1563 = vpow.pop %v1562
        %v1564 = vmul.f32 %v1537, 1.442695
        %v1565 = vpow.pop %v1564
        %v1566 = vmul.f32 %v1538, 1.442695
        %v1567 = vpow.pop %v1566
        %v1568 = vmul.f32 %v1539, 1.442695
        %v1569 = vpow.pop %v1568
        %v1570 = vmul.f32 %v1540, 1.442695
        %v1571 = vpow.pop %v1570
        %v1572 = vmul.f32 %v1541, 1.442695
        %v1573 = vpow.pop %v1572
        %v1574 = vld [vmem:[#allocation4] sm:$0xff]
        %v1575 = vld [vmem:[#allocation4 + $0x8] sm:$0xff]
        %v1576 = vld [vmem:[#allocation4 + $0x10] sm:$0xff]
        %v1577 = vld [vmem:[#allocation4 + $0x18] sm:$0xff]
        %v1578 = vld [vmem:[#allocation4 + $0x20] sm:$0xff]
        %v1579 = vld [vmem:[#allocation4 + $0x28] sm:$0xff]
        %v1580 = vld [vmem:[#allocation4 + $0x30] sm:$0xff]
        %v1581 = vld [vmem:[#allocation4 + $0x38] sm:$0xff]
        %v1582 = vld [vmem:[#allocation4 + $0x40] sm:$0xff]
        %v1583 = vld [vmem:[#allocation4 + $0x48] sm:$0xff]
        %v1584 = vld [vmem:[#allocation4 + $0x50] sm:$0xff]
        %v1585 = vld [vmem:[#allocation4 + $0x58] sm:$0xff]
        %v1586 = vld [vmem:[#allocation4 + $0x60] sm:$0xff]
        %v1587 = vld [vmem:[#allocation4 + $0x68] sm:$0xff]
        %v1588 = vld [vmem:[#allocation4 + $0x70] sm:$0xff]
        %v1589 = vld [vmem:[#allocation4 + $0x78] sm:$0xff]
        %v1590 = vmul.f32 %v1415, %v1574
        %v1591 = vmul.f32 %v1417, %v1575
        %v1592 = vmul.f32 %v1419, %v1576
        %v1593 = vmul.f32 %v1421, %v1577
        %v1594 = vmul.f32 %v1423, %v1578
        %v1595 = vmul.f32 %v1425, %v1579
        %v1596 = vmul.f32 %v1427, %v1580
        %v1597 = vmul.f32 %v1429, %v1581
        %v1598 = vmul.f32 %v1431, %v1582
        %v1599 = vmul.f32 %v1433, %v1583
        %v1600 = vmul.f32 %v1435, %v1584
        %v1601 = vmul.f32 %v1437, %v1585
        %v1602 = vmul.f32 %v1439, %v1586
        %v1603 = vmul.f32 %v1441, %v1587
        %v1604 = vmul.f32 %v1443, %v1588
        %v1605 = vmul.f32 %v1445, %v1589
        %1606 = vadd.xlane.f32.xlu0 %v1543
        %v1607 = vpop.xlane.xlu0 %1606
        %1608 = vadd.xlane.f32.xlu0 %v1545
        %v1609 = vpop.xlane.xlu0 %1608
        %1610 = vadd.xlane.f32.xlu0 %v1547
        %v1611 = vpop.xlane.xlu0 %1610
        %1612 = vadd.xlane.f32.xlu0 %v1549
        %v1613 = vpop.xlane.xlu0 %1612
        %1614 = vadd.xlane.f32.xlu0 %v1551
        %v1615 = vpop.xlane.xlu0 %1614
        %1616 = vadd.xlane.f32.xlu0 %v1553
        %v1617 = vpop.xlane.xlu0 %1616
        %1618 = vadd.xlane.f32.xlu0 %v1555
        %v1619 = vpop.xlane.xlu0 %1618
        %1620 = vadd.xlane.f32.xlu0 %v1557
        %v1621 = vpop.xlane.xlu0 %1620
        %1622 = vadd.xlane.f32.xlu0 %v1559
        %v1623 = vpop.xlane.xlu0 %1622
        %1624 = vadd.xlane.f32.xlu0 %v1561
        %v1625 = vpop.xlane.xlu0 %1624
        %1626 = vadd.xlane.f32.xlu0 %v1563
        %v1627 = vpop.xlane.xlu0 %1626
        %1628 = vadd.xlane.f32.xlu0 %v1565
        %v1629 = vpop.xlane.xlu0 %1628
        %1630 = vadd.xlane.f32.xlu0 %v1567
        %v1631 = vpop.xlane.xlu0 %1630
        %1632 = vadd.xlane.f32.xlu0 %v1569
        %v1633 = vpop.xlane.xlu0 %1632
        %1634 = vadd.xlane.f32.xlu0 %v1571
        %v1635 = vpop.xlane.xlu0 %1634
        %1636 = vadd.xlane.f32.xlu0 %v1573
        %v1637 = vpop.xlane.xlu0 %1636
        %v1638 = vadd.f32 %v1590, %v1607
        %v1639 = vadd.f32 %v1591, %v1609
        %v1640 = vadd.f32 %v1592, %v1611
        %v1641 = vadd.f32 %v1593, %v1613
        %v1642 = vadd.f32 %v1594, %v1615
        %v1643 = vadd.f32 %v1595, %v1617
        %v1644 = vadd.f32 %v1596, %v1619
        %v1645 = vadd.f32 %v1597, %v1621
        %v1646 = vadd.f32 %v1598, %v1623
        %v1647 = vadd.f32 %v1599, %v1625
        %v1648 = vadd.f32 %v1600, %v1627
        %v1649 = vadd.f32 %v1601, %v1629
        %v1650 = vadd.f32 %v1602, %v1631
        %v1651 = vadd.f32 %v1603, %v1633
        %v1652 = vadd.f32 %v1604, %v1635
        %v1653 = vadd.f32 %v1605, %v1637
        %vm1654 = vcmask 7168
        %1655 = vst.msk [vmem:[#allocation4] sm:$0xff] %vm1654, %v1638
        %1656 = vst.msk [vmem:[#allocation4 + $0x8] sm:$0xff] %vm1654, %v1639
        %1657 = vst.msk [vmem:[#allocation4 + $0x10] sm:$0xff] %vm1654, %v1640
        %1658 = vst.msk [vmem:[#allocation4 + $0x18] sm:$0xff] %vm1654, %v1641
        %1659 = vst.msk [vmem:[#allocation4 + $0x20] sm:$0xff] %vm1654, %v1642
        %1660 = vst.msk [vmem:[#allocation4 + $0x28] sm:$0xff] %vm1654, %v1643
        %1661 = vst.msk [vmem:[#allocation4 + $0x30] sm:$0xff] %vm1654, %v1644
        %1662 = vst.msk [vmem:[#allocation4 + $0x38] sm:$0xff] %vm1654, %v1645
        %1663 = vst.msk [vmem:[#allocation4 + $0x40] sm:$0xff] %vm1654, %v1646
        %1664 = vst.msk [vmem:[#allocation4 + $0x48] sm:$0xff] %vm1654, %v1647
        %1665 = vst.msk [vmem:[#allocation4 + $0x50] sm:$0xff] %vm1654, %v1648
        %1666 = vst.msk [vmem:[#allocation4 + $0x58] sm:$0xff] %vm1654, %v1649
        %1667 = vst.msk [vmem:[#allocation4 + $0x60] sm:$0xff] %vm1654, %v1650
        %1668 = vst.msk [vmem:[#allocation4 + $0x68] sm:$0xff] %vm1654, %v1651
        %1669 = vst.msk [vmem:[#allocation4 + $0x70] sm:$0xff] %vm1654, %v1652
        %1670 = vst.msk [vmem:[#allocation4 + $0x78] sm:$0xff] %vm1654, %v1653
        %v1671 = vld [vmem:[#allocation5] sm:$0xff]
        %v1672 = vld [vmem:[#allocation5 + $0x8] sm:$0xff]
        %v1673 = vld [vmem:[#allocation5 + $0x10] sm:$0xff]
        %v1674 = vld [vmem:[#allocation5 + $0x18] sm:$0xff]
        %v1675 = vld [vmem:[#allocation5 + $0x20] sm:$0xff]
        %v1676 = vld [vmem:[#allocation5 + $0x28] sm:$0xff]
        %v1677 = vld [vmem:[#allocation5 + $0x30] sm:$0xff]
        %v1678 = vld [vmem:[#allocation5 + $0x38] sm:$0xff]
        %v1679 = vld [vmem:[#allocation5 + $0x40] sm:$0xff]
        %v1680 = vld [vmem:[#allocation5 + $0x48] sm:$0xff]
        %v1681 = vld [vmem:[#allocation5 + $0x50] sm:$0xff]
        %v1682 = vld [vmem:[#allocation5 + $0x58] sm:$0xff]
        %v1683 = vld [vmem:[#allocation5 + $0x60] sm:$0xff]
        %v1684 = vld [vmem:[#allocation5 + $0x68] sm:$0xff]
        %v1685 = vld [vmem:[#allocation5 + $0x70] sm:$0xff]
        %v1686 = vld [vmem:[#allocation5 + $0x78] sm:$0xff]
        %1688 = vset.pattern.permute.xlu0 0
        %1689 = vperm.xlu0 %1688, %v1415
        %v1690 = vpop.permute.xlu0 %1689
        %1693 = vset.pattern.permute.xlu0 0
        %1694 = vperm.xlu0 %1693, %v1417
        %v1695 = vpop.permute.xlu0 %1694
        %1698 = vset.pattern.permute.xlu0 0
        %1699 = vperm.xlu0 %1698, %v1419
        %v1700 = vpop.permute.xlu0 %1699
        %1703 = vset.pattern.permute.xlu0 0
        %1704 = vperm.xlu0 %1703, %v1421
        %v1705 = vpop.permute.xlu0 %1704
        %1708 = vset.pattern.permute.xlu0 0
        %1709 = vperm.xlu0 %1708, %v1423
        %v1710 = vpop.permute.xlu0 %1709
        %1713 = vset.pattern.permute.xlu0 0
        %1714 = vperm.xlu0 %1713, %v1425
        %v1715 = vpop.permute.xlu0 %1714
        %1718 = vset.pattern.permute.xlu0 0
        %1719 = vperm.xlu0 %1718, %v1427
        %v1720 = vpop.permute.xlu0 %1719
        %1723 = vset.pattern.permute.xlu0 0
        %1724 = vperm.xlu0 %1723, %v1429
        %v1725 = vpop.permute.xlu0 %1724
        %1728 = vset.pattern.permute.xlu0 0
        %1729 = vperm.xlu0 %1728, %v1431
        %v1730 = vpop.permute.xlu0 %1729
        %1733 = vset.pattern.permute.xlu0 0
        %1734 = vperm.xlu0 %1733, %v1433
        %v1735 = vpop.permute.xlu0 %1734
        %1738 = vset.pattern.permute.xlu0 0
        %1739 = vperm.xlu0 %1738, %v1435
        %v1740 = vpop.permute.xlu0 %1739
        %1743 = vset.pattern.permute.xlu0 0
        %1744 = vperm.xlu0 %1743, %v1437
        %v1745 = vpop.permute.xlu0 %1744
        %1748 = vset.pattern.permute.xlu0 0
        %1749 = vperm.xlu0 %1748, %v1439
        %v1750 = vpop.permute.xlu0 %1749
        %1753 = vset.pattern.permute.xlu0 0
        %1754 = vperm.xlu0 %1753, %v1441
        %v1755 = vpop.permute.xlu0 %1754
        %1758 = vset.pattern.permute.xlu0 0
        %1759 = vperm.xlu0 %1758, %v1443
        %v1760 = vpop.permute.xlu0 %1759
        %1763 = vset.pattern.permute.xlu0 0
        %1764 = vperm.xlu0 %1763, %v1445
        %v1765 = vpop.permute.xlu0 %1764
        %v1767 = vmul.f32 %v1690, %v1671
        %v1768 = vmul.f32 %v1695, %v1672
        %v1769 = vmul.f32 %v1700, %v1673
        %v1770 = vmul.f32 %v1705, %v1674
        %v1771 = vmul.f32 %v1710, %v1675
        %v1772 = vmul.f32 %v1715, %v1676
        %v1773 = vmul.f32 %v1720, %v1677
        %v1774 = vmul.f32 %v1725, %v1678
        %v1775 = vmul.f32 %v1730, %v1679
        %v1776 = vmul.f32 %v1735, %v1680
        %v1777 = vmul.f32 %v1740, %v1681
        %v1778 = vmul.f32 %v1745, %v1682
        %v1779 = vmul.f32 %v1750, %v1683
        %v1780 = vmul.f32 %v1755, %v1684
        %v1781 = vmul.f32 %v1760, %v1685
        %v1782 = vmul.f32 %v1765, %v1686
        %1783 = vmatpush.msra.mxu0 %v1106
        %1784 = vmatpush.msra.mxu0 %v1103
        %1785 = vmatpush.msra.mxu0 %v1100
        %1786 = vmatpush.msra.mxu0 %v1097
        %1787 = vmatpush.msra.mxu0 %v1094
        %1788 = vmatpush.msra.mxu0 %v1091
        %1789 = vmatpush.msra.mxu0 %v1088
        %1790 = vmatpush.msra.mxu0 %v1085
        %1791 = vmatpush.msra.mxu0 %v1082
        %1792 = vmatpush.msra.mxu0 %v1079
        %1793 = vmatpush.msra.mxu0 %v1076
        %1794 = vmatpush.msra.mxu0 %v1073
        %1795 = vmatpush.msra.mxu0 %v1070
        %1796 = vmatpush.msra.mxu0 %v1067
        %1797 = vmatpush.msra.mxu0 %v1064
        %1798 = vmatpush.msra.mxu0 %v1061
        %1799 = vmatmul.f32.gmra.mxu0 %v1543
        %v1800 = vpop.f32.mrf.mxu0
        %v1801 = vadd.f32 0.0, %v1800
        %1802 = vmatmul.f32.gmra.mxu0 %v1545
        %v1803 = vpop.f32.mrf.mxu0
        %v1804 = vadd.f32 0.0, %v1803
        %1805 = vmatmul.f32.gmra.mxu0 %v1547
        %v1806 = vpop.f32.mrf.mxu0
        %v1807 = vadd.f32 0.0, %v1806
        %1808 = vmatmul.f32.gmra.mxu0 %v1549
        %v1809 = vpop.f32.mrf.mxu0
        %v1810 = vadd.f32 0.0, %v1809
        %1811 = vmatmul.f32.gmra.mxu0 %v1551
        %v1812 = vpop.f32.mrf.mxu0
        %v1813 = vadd.f32 0.0, %v1812
        %1814 = vmatmul.f32.gmra.mxu0 %v1553
        %v1815 = vpop.f32.mrf.mxu0
        %v1816 = vadd.f32 0.0, %v1815
        %1817 = vmatmul.f32.gmra.mxu0 %v1555
        %v1818 = vpop.f32.mrf.mxu0
        %v1819 = vadd.f32 0.0, %v1818
        %1820 = vmatmul.f32.gmra.mxu0 %v1557
        %v1821 = vpop.f32.mrf.mxu0
        %v1822 = vadd.f32 0.0, %v1821
        %1823 = vmatmul.f32.gmra.mxu0 %v1559
        %v1824 = vpop.f32.mrf.mxu0
        %v1825 = vadd.f32 0.0, %v1824
        %1826 = vmatmul.f32.gmra.mxu0 %v1561
        %v1827 = vpop.f32.mrf.mxu0
        %v1828 = vadd.f32 0.0, %v1827
        %1829 = vmatmul.f32.gmra.mxu0 %v1563
        %v1830 = vpop.f32.mrf.mxu0
        %v1831 = vadd.f32 0.0, %v1830
        %1832 = vmatmul.f32.gmra.mxu0 %v1565
        %v1833 = vpop.f32.mrf.mxu0
        %v1834 = vadd.f32 0.0, %v1833
        %1835 = vmatmul.f32.gmra.mxu0 %v1567
        %v1836 = vpop.f32.mrf.mxu0
        %v1837 = vadd.f32 0.0, %v1836
        %1838 = vmatmul.f32.gmra.mxu0 %v1569
        %v1839 = vpop.f32.mrf.mxu0
        %v1840 = vadd.f32 0.0, %v1839
        %1841 = vmatmul.f32.gmra.mxu0 %v1571
        %v1842 = vpop.f32.mrf.mxu0
        %v1843 = vadd.f32 0.0, %v1842
        %1844 = vmatmul.f32.gmra.mxu0 %v1573
        %v1845 = vpop.f32.mrf.mxu0
        %v1846 = vadd.f32 0.0, %v1845
        %1847 = vdwg.mxu0
        %v1848 = vadd.f32 %v1767, %v1801
        %v1849 = vadd.f32 %v1768, %v1804
        %v1850 = vadd.f32 %v1769, %v1807
        %v1851 = vadd.f32 %v1770, %v1810
        %v1852 = vadd.f32 %v1771, %v1813
        %v1853 = vadd.f32 %v1772, %v1816
        %v1854 = vadd.f32 %v1773, %v1819
        %v1855 = vadd.f32 %v1774, %v1822
        %v1856 = vadd.f32 %v1775, %v1825
        %v1857 = vadd.f32 %v1776, %v1828
        %v1858 = vadd.f32 %v1777, %v1831
        %v1859 = vadd.f32 %v1778, %v1834
        %v1860 = vadd.f32 %v1779, %v1837
        %v1861 = vadd.f32 %v1780, %v1840
        %v1862 = vadd.f32 %v1781, %v1843
        %v1863 = vadd.f32 %v1782, %v1846
        %1864 = vst.msk [vmem:[#allocation5] sm:$0xff] %vm1156, %v1848
        %1865 = vst.msk [vmem:[#allocation5 + $0x8] sm:$0xff] %vm1156, %v1849
        %1866 = vst.msk [vmem:[#allocation5 + $0x10] sm:$0xff] %vm1156, %v1850
        %1867 = vst.msk [vmem:[#allocation5 + $0x18] sm:$0xff] %vm1156, %v1851
        %1868 = vst.msk [vmem:[#allocation5 + $0x20] sm:$0xff] %vm1156, %v1852
        %1869 = vst.msk [vmem:[#allocation5 + $0x28] sm:$0xff] %vm1156, %v1853
        %1870 = vst.msk [vmem:[#allocation5 + $0x30] sm:$0xff] %vm1156, %v1854
        %1871 = vst.msk [vmem:[#allocation5 + $0x38] sm:$0xff] %vm1156, %v1855
        %1872 = vst.msk [vmem:[#allocation5 + $0x40] sm:$0xff] %vm1156, %v1856
        %1873 = vst.msk [vmem:[#allocation5 + $0x48] sm:$0xff] %vm1156, %v1857
        %1874 = vst.msk [vmem:[#allocation5 + $0x50] sm:$0xff] %vm1156, %v1858
        %1875 = vst.msk [vmem:[#allocation5 + $0x58] sm:$0xff] %vm1156, %v1859
        %1876 = vst.msk [vmem:[#allocation5 + $0x60] sm:$0xff] %vm1156, %v1860
        %1877 = vst.msk [vmem:[#allocation5 + $0x68] sm:$0xff] %vm1156, %v1861
        %1878 = vst.msk [vmem:[#allocation5 + $0x70] sm:$0xff] %vm1156, %v1862
        %1879 = vst.msk [vmem:[#allocation5 + $0x78] sm:$0xff] %vm1156, %v1863
        %1880 = vst.msk [vmem:[#allocation3] sm:$0xff] %vm1654, %v1382
        %1881 = vst.msk [vmem:[#allocation3 + $0x8] sm:$0xff] %vm1654, %v1383
        %1882 = vst.msk [vmem:[#allocation3 + $0x10] sm:$0xff] %vm1654, %v1384
        %1883 = vst.msk [vmem:[#allocation3 + $0x18] sm:$0xff] %vm1654, %v1385
        %1884 = vst.msk [vmem:[#allocation3 + $0x20] sm:$0xff] %vm1654, %v1386
        %1885 = vst.msk [vmem:[#allocation3 + $0x28] sm:$0xff] %vm1654, %v1387
        %1886 = vst.msk [vmem:[#allocation3 + $0x30] sm:$0xff] %vm1654, %v1388
        %1887 = vst.msk [vmem:[#allocation3 + $0x38] sm:$0xff] %vm1654, %v1389
        %1888 = vst.msk [vmem:[#allocation3 + $0x40] sm:$0xff] %vm1654, %v1390
        %1889 = vst.msk [vmem:[#allocation3 + $0x48] sm:$0xff] %vm1654, %v1391
        %1890 = vst.msk [vmem:[#allocation3 + $0x50] sm:$0xff] %vm1654, %v1392
        %1891 = vst.msk [vmem:[#allocation3 + $0x58] sm:$0xff] %vm1654, %v1393
        %1892 = vst.msk [vmem:[#allocation3 + $0x60] sm:$0xff] %vm1654, %v1394
        %1893 = vst.msk [vmem:[#allocation3 + $0x68] sm:$0xff] %vm1654, %v1395
        %1894 = vst.msk [vmem:[#allocation3 + $0x70] sm:$0xff] %vm1654, %v1396
        %1895 = vst.msk [vmem:[#allocation3 + $0x78] sm:$0xff] %vm1654, %v1397
        %1896 = vrot.lane.b32.xlu0 %v1140, 120
        %v1897 = vpop.permute.xlu0 %1896
        %1898 = vrot.lane.b32.xlu0 %v1141, 120
        %v1899 = vpop.permute.xlu0 %1898
        %1900 = vrot.lane.b32.xlu0 %v1142, 120
        %v1901 = vpop.permute.xlu0 %1900
        %1902 = vrot.lane.b32.xlu0 %v1143, 120
        %v1903 = vpop.permute.xlu0 %1902
        %1904 = vrot.lane.b32.xlu0 %v1144, 120
        %v1905 = vpop.permute.xlu0 %1904
        %1906 = vrot.lane.b32.xlu0 %v1145, 120
        %v1907 = vpop.permute.xlu0 %1906
        %1908 = vrot.lane.b32.xlu0 %v1146, 120
        %v1909 = vpop.permute.xlu0 %1908
        %1910 = vrot.lane.b32.xlu0 %v1147, 120
        %v1911 = vpop.permute.xlu0 %1910
        %1912 = vrot.lane.b32.xlu0 %v1148, 120
        %v1913 = vpop.permute.xlu0 %1912
        %1914 = vrot.lane.b32.xlu0 %v1149, 120
        %v1915 = vpop.permute.xlu0 %1914
        %1916 = vrot.lane.b32.xlu0 %v1150, 120
        %v1917 = vpop.permute.xlu0 %1916
        %1918 = vrot.lane.b32.xlu0 %v1151, 120
        %v1919 = vpop.permute.xlu0 %1918
        %1920 = vrot.lane.b32.xlu0 %v1152, 120
        %v1921 = vpop.permute.xlu0 %1920
        %1922 = vrot.lane.b32.xlu0 %v1153, 120
        %v1923 = vpop.permute.xlu0 %1922
        %1924 = vrot.lane.b32.xlu0 %v1154, 120
        %v1925 = vpop.permute.xlu0 %1924
        %1926 = vrot.lane.b32.xlu0 %v1155, 120
        %v1927 = vpop.permute.xlu0 %1926
        %1928 = vrot.lane.b32.xlu0 %v992, 120
        %v1929 = vpop.permute.xlu0 %1928
        %1930 = vrot.lane.b32.xlu0 %v995, 120
        %v1931 = vpop.permute.xlu0 %1930
        %1932 = vrot.lane.b32.xlu0 %v998, 120
        %v1933 = vpop.permute.xlu0 %1932
        %1934 = vrot.lane.b32.xlu0 %v1001, 120
        %v1935 = vpop.permute.xlu0 %1934
        %1936 = vrot.lane.b32.xlu0 %v1004, 120
        %v1937 = vpop.permute.xlu0 %1936
        %1938 = vrot.lane.b32.xlu0 %v1007, 120
        %v1939 = vpop.permute.xlu0 %1938
        %1940 = vrot.lane.b32.xlu0 %v1010, 120
        %v1941 = vpop.permute.xlu0 %1940
        %1942 = vrot.lane.b32.xlu0 %v1013, 120
        %v1943 = vpop.permute.xlu0 %1942
        %1944 = vrot.lane.b32.xlu0 %v1016, 120
        %v1945 = vpop.permute.xlu0 %1944
        %1946 = vrot.lane.b32.xlu0 %v1019, 120
        %v1947 = vpop.permute.xlu0 %1946
        %1948 = vrot.lane.b32.xlu0 %v1022, 120
        %v1949 = vpop.permute.xlu0 %1948
        %1950 = vrot.lane.b32.xlu0 %v1025, 120
        %v1951 = vpop.permute.xlu0 %1950
        %1952 = vrot.lane.b32.xlu0 %v1028, 120
        %v1953 = vpop.permute.xlu0 %1952
        %1954 = vrot.lane.b32.xlu0 %v1031, 120
        %v1955 = vpop.permute.xlu0 %1954
        %1956 = vrot.lane.b32.xlu0 %v1034, 120
        %v1957 = vpop.permute.xlu0 %1956
        %1958 = vrot.lane.b32.xlu0 %v1037, 120
        %v1959 = vpop.permute.xlu0 %1958
        %v1960 = vsel %vm1156, %v1897, 0
        %v1962 = vsel %vm1156, %v1899, 0
        %v1964 = vsel %vm1156, %v1901, 0
        %v1966 = vsel %vm1156, %v1903, 0
        %v1968 = vsel %vm1156, %v1905, 0
        %v1970 = vsel %vm1156, %v1907, 0
        %v1972 = vsel %vm1156, %v1909, 0
        %v1974 = vsel %vm1156, %v1911, 0
        %v1976 = vsel %vm1156, %v1913, 0
        %v1978 = vsel %vm1156, %v1915, 0
        %v1980 = vsel %vm1156, %v1917, 0
        %v1982 = vsel %vm1156, %v1919, 0
        %v1984 = vsel %vm1156, %v1921, 0
        %v1986 = vsel %vm1156, %v1923, 0
        %v1988 = vsel %vm1156, %v1925, 0
        %v1990 = vsel %vm1156, %v1927, 0
        %v1992 = vsel %vm1156, %v1929, 0
        %v1994 = vsel %vm1156, %v1931, 0
        %v1996 = vsel %vm1156, %v1933, 0
        %v1998 = vsel %vm1156, %v1935, 0
        %v2000 = vsel %vm1156, %v1937, 0
        %v2002 = vsel %vm1156, %v1939, 0
        %v2004 = vsel %vm1156, %v1941, 0
        %v2006 = vsel %vm1156, %v1943, 0
        %v2008 = vsel %vm1156, %v1945, 0
        %v2010 = vsel %vm1156, %v1947, 0
        %v2012 = vsel %vm1156, %v1949, 0
        %v2014 = vsel %vm1156, %v1951, 0
        %v2016 = vsel %vm1156, %v1953, 0
        %v2018 = vsel %vm1156, %v1955, 0
        %v2020 = vsel %vm1156, %v1957, 0
        %v2022 = vsel %vm1156, %v1959, 0
        %2024 = vmatpush.xpose.msra.mxu0 %v2022
        %2025 = vmatpush.xpose.msra.mxu0 %v2020
        %2026 = vmatpush.xpose.msra.mxu0 %v2018
        %2027 = vmatpush.xpose.msra.mxu0 %v2016
        %2028 = vmatpush.xpose.msra.mxu0 %v2014
        %2029 = vmatpush.xpose.msra.mxu0 %v2012
        %2030 = vmatpush.xpose.msra.mxu0 %v2010
        %2031 = vmatpush.xpose.msra.mxu0 %v2008
        %2032 = vmatpush.xpose.msra.mxu0 %v2006
        %2033 = vmatpush.xpose.msra.mxu0 %v2004
        %2034 = vmatpush.xpose.msra.mxu0 %v2002
        %2035 = vmatpush.xpose.msra.mxu0 %v2000
        %2036 = vmatpush.xpose.msra.mxu0 %v1998
        %2037 = vmatpush.xpose.msra.mxu0 %v1996
        %2038 = vmatpush.xpose.msra.mxu0 %v1994
        %2039 = vmatpush.xpose.msra.mxu0 %v1992
        %2040 = vmatmul.f32.gmra.mxu0 %v1960
        %v2041 = vpop.f32.mrf.mxu0
        %v2042 = vadd.f32 0.0, %v2041
        %2043 = vmatmul.f32.gmra.mxu0 %v1962
        %v2044 = vpop.f32.mrf.mxu0
        %v2045 = vadd.f32 0.0, %v2044
        %2046 = vmatmul.f32.gmra.mxu0 %v1964
        %v2047 = vpop.f32.mrf.mxu0
        %v2048 = vadd.f32 0.0, %v2047
        %2049 = vmatmul.f32.gmra.mxu0 %v1966
        %v2050 = vpop.f32.mrf.mxu0
        %v2051 = vadd.f32 0.0, %v2050
        %2052 = vmatmul.f32.gmra.mxu0 %v1968
        %v2053 = vpop.f32.mrf.mxu0
        %v2054 = vadd.f32 0.0, %v2053
        %2055 = vmatmul.f32.gmra.mxu0 %v1970
        %v2056 = vpop.f32.mrf.mxu0
        %v2057 = vadd.f32 0.0, %v2056
        %2058 = vmatmul.f32.gmra.mxu0 %v1972
        %v2059 = vpop.f32.mrf.mxu0
        %v2060 = vadd.f32 0.0, %v2059
        %2061 = vmatmul.f32.gmra.mxu0 %v1974
        %v2062 = vpop.f32.mrf.mxu0
        %v2063 = vadd.f32 0.0, %v2062
        %2064 = vmatmul.f32.gmra.mxu0 %v1976
        %v2065 = vpop.f32.mrf.mxu0
        %v2066 = vadd.f32 0.0, %v2065
        %2067 = vmatmul.f32.gmra.mxu0 %v1978
        %v2068 = vpop.f32.mrf.mxu0
        %v2069 = vadd.f32 0.0, %v2068
        %2070 = vmatmul.f32.gmra.mxu0 %v1980
        %v2071 = vpop.f32.mrf.mxu0
        %v2072 = vadd.f32 0.0, %v2071
        %2073 = vmatmul.f32.gmra.mxu0 %v1982
        %v2074 = vpop.f32.mrf.mxu0
        %v2075 = vadd.f32 0.0, %v2074
        %2076 = vmatmul.f32.gmra.mxu0 %v1984
        %v2077 = vpop.f32.mrf.mxu0
        %v2078 = vadd.f32 0.0, %v2077
        %2079 = vmatmul.f32.gmra.mxu0 %v1986
        %v2080 = vpop.f32.mrf.mxu0
        %v2081 = vadd.f32 0.0, %v2080
        %2082 = vmatmul.f32.gmra.mxu0 %v1988
        %v2083 = vpop.f32.mrf.mxu0
        %v2084 = vadd.f32 0.0, %v2083
        %2085 = vmatmul.f32.gmra.mxu0 %v1990
        %v2086 = vpop.f32.mrf.mxu0
        %v2087 = vadd.f32 0.0, %v2086
        %2088 = vdwg.mxu0
        %v2089 = vsel %vm1124, %v2042, -9e+15
        %v2090 = vsel %vm1125, %v2045, -9e+15
        %v2091 = vsel %vm1126, %v2048, -9e+15
        %v2092 = vsel %vm1127, %v2051, -9e+15
        %v2093 = vsel %vm1128, %v2054, -9e+15
        %v2094 = vsel %vm1129, %v2057, -9e+15
        %v2095 = vsel %vm1130, %v2060, -9e+15
        %v2096 = vsel %vm1131, %v2063, -9e+15
        %v2097 = vsel %vm1132, %v2066, -9e+15
        %v2098 = vsel %vm1133, %v2069, -9e+15
        %v2099 = vsel %vm1134, %v2072, -9e+15
        %v2100 = vsel %vm1135, %v2075, -9e+15
        %v2101 = vsel %vm1136, %v2078, -9e+15
        %v2102 = vsel %vm1137, %v2081, -9e+15
        %v2103 = vsel %vm1138, %v2084, -9e+15
        %v2104 = vsel %vm1139, %v2087, -9e+15
        %s2105 = scalar_lea.vmem [#allocation3], 128
        %v2106 = vld [vmem:[%s2105] sm:$0xff]
        %v2107 = vld [vmem:[%s2105 + $0x8] sm:$0xff]
        %v2108 = vld [vmem:[%s2105 + $0x10] sm:$0xff]
        %v2109 = vld [vmem:[%s2105 + $0x18] sm:$0xff]
        %v2110 = vld [vmem:[%s2105 + $0x20] sm:$0xff]
        %v2111 = vld [vmem:[%s2105 + $0x28] sm:$0xff]
        %v2112 = vld [vmem:[%s2105 + $0x30] sm:$0xff]
        %v2113 = vld [vmem:[%s2105 + $0x38] sm:$0xff]
        %v2114 = vld [vmem:[%s2105 + $0x40] sm:$0xff]
        %v2115 = vld [vmem:[%s2105 + $0x48] sm:$0xff]
        %v2116 = vld [vmem:[%s2105 + $0x50] sm:$0xff]
        %v2117 = vld [vmem:[%s2105 + $0x58] sm:$0xff]
        %v2118 = vld [vmem:[%s2105 + $0x60] sm:$0xff]
        %v2119 = vld [vmem:[%s2105 + $0x68] sm:$0xff]
        %v2120 = vld [vmem:[%s2105 + $0x70] sm:$0xff]
        %v2121 = vld [vmem:[%s2105 + $0x78] sm:$0xff]
        %2122 = vmax.xlane.f32.xlu0 %v2089
        %v2123 = vpop.xlane.xlu0 %2122
        %2124 = vmax.xlane.f32.xlu0 %v2090
        %v2125 = vpop.xlane.xlu0 %2124
        %2126 = vmax.xlane.f32.xlu0 %v2091
        %v2127 = vpop.xlane.xlu0 %2126
        %2128 = vmax.xlane.f32.xlu0 %v2092
        %v2129 = vpop.xlane.xlu0 %2128
        %2130 = vmax.xlane.f32.xlu0 %v2093
        %v2131 = vpop.xlane.xlu0 %2130
        %2132 = vmax.xlane.f32.xlu0 %v2094
        %v2133 = vpop.xlane.xlu0 %2132
        %2134 = vmax.xlane.f32.xlu0 %v2095
        %v2135 = vpop.xlane.xlu0 %2134
        %2136 = vmax.xlane.f32.xlu0 %v2096
        %v2137 = vpop.xlane.xlu0 %2136
        %2138 = vmax.xlane.f32.xlu0 %v2097
        %v2139 = vpop.xlane.xlu0 %2138
        %2140 = vmax.xlane.f32.xlu0 %v2098
        %v2141 = vpop.xlane.xlu0 %2140
        %2142 = vmax.xlane.f32.xlu0 %v2099
        %v2143 = vpop.xlane.xlu0 %2142
        %2144 = vmax.xlane.f32.xlu0 %v2100
        %v2145 = vpop.xlane.xlu0 %2144
        %2146 = vmax.xlane.f32.xlu0 %v2101
        %v2147 = vpop.xlane.xlu0 %2146
        %2148 = vmax.xlane.f32.xlu0 %v2102
        %v2149 = vpop.xlane.xlu0 %2148
        %2150 = vmax.xlane.f32.xlu0 %v2103
        %v2151 = vpop.xlane.xlu0 %2150
        %2152 = vmax.xlane.f32.xlu0 %v2104
        %v2153 = vpop.xlane.xlu0 %2152
        %v2154 = vmax.f32 %v2106, %v2123
        %v2155 = vmax.f32 %v2107, %v2125
        %v2156 = vmax.f32 %v2108, %v2127
        %v2157 = vmax.f32 %v2109, %v2129
        %v2158 = vmax.f32 %v2110, %v2131
        %v2159 = vmax.f32 %v2111, %v2133
        %v2160 = vmax.f32 %v2112, %v2135
        %v2161 = vmax.f32 %v2113, %v2137
        %v2162 = vmax.f32 %v2114, %v2139
        %v2163 = vmax.f32 %v2115, %v2141
        %v2164 = vmax.f32 %v2116, %v2143
        %v2165 = vmax.f32 %v2117, %v2145
        %v2166 = vmax.f32 %v2118, %v2147
        %v2167 = vmax.f32 %v2119, %v2149
        %v2168 = vmax.f32 %v2120, %v2151
        %v2169 = vmax.f32 %v2121, %v2153
        %v2170 = vsub.f32 %v2106, %v2154
        %v2171 = vsub.f32 %v2107, %v2155
        %v2172 = vsub.f32 %v2108, %v2156
        %v2173 = vsub.f32 %v2109, %v2157
        %v2174 = vsub.f32 %v2110, %v2158
        %v2175 = vsub.f32 %v2111, %v2159
        %v2176 = vsub.f32 %v2112, %v2160
        %v2177 = vsub.f32 %v2113, %v2161
        %v2178 = vsub.f32 %v2114, %v2162
        %v2179 = vsub.f32 %v2115, %v2163
        %v2180 = vsub.f32 %v2116, %v2164
        %v2181 = vsub.f32 %v2117, %v2165
        %v2182 = vsub.f32 %v2118, %v2166
        %v2183 = vsub.f32 %v2119, %v2167
        %v2184 = vsub.f32 %v2120, %v2168
        %v2185 = vsub.f32 %v2121, %v2169
        %v2186 = vmul.f32 %v2170, 1.442695
        %v2187 = vpow.pop %v2186
        %v2188 = vmul.f32 %v2171, 1.442695
        %v2189 = vpow.pop %v2188
        %v2190 = vmul.f32 %v2172, 1.442695
        %v2191 = vpow.pop %v2190
        %v2192 = vmul.f32 %v2173, 1.442695
        %v2193 = vpow.pop %v2192
        %v2194 = vmul.f32 %v2174, 1.442695
        %v2195 = vpow.pop %v2194
        %v2196 = vmul.f32 %v2175, 1.442695
        %v2197 = vpow.pop %v2196
        %v2198 = vmul.f32 %v2176, 1.442695
        %v2199 = vpow.pop %v2198
        %v2200 = vmul.f32 %v2177, 1.442695
        %v2201 = vpow.pop %v2200
        %v2202 = vmul.f32 %v2178, 1.442695
        %v2203 = vpow.pop %v2202
        %v2204 = vmul.f32 %v2179, 1.442695
        %v2205 = vpow.pop %v2204
        %v2206 = vmul.f32 %v2180, 1.442695
        %v2207 = vpow.pop %v2206
        %v2208 = vmul.f32 %v2181, 1.442695
        %v2209 = vpow.pop %v2208
        %v2210 = vmul.f32 %v2182, 1.442695
        %v2211 = vpow.pop %v2210
        %v2212 = vmul.f32 %v2183, 1.442695
        %v2213 = vpow.pop %v2212
        %v2214 = vmul.f32 %v2184, 1.442695
        %v2215 = vpow.pop %v2214
        %v2216 = vmul.f32 %v2185, 1.442695
        %v2217 = vpow.pop %v2216
        %2219 = vset.pattern.permute.xlu0 0
        %2220 = vperm.xlu0 %2219, %v2154
        %v2221 = vpop.permute.xlu0 %2220
        %2224 = vset.pattern.permute.xlu0 0
        %2225 = vperm.xlu0 %2224, %v2155
        %v2226 = vpop.permute.xlu0 %2225
        %2229 = vset.pattern.permute.xlu0 0
        %2230 = vperm.xlu0 %2229, %v2156
        %v2231 = vpop.permute.xlu0 %2230
        %2234 = vset.pattern.permute.xlu0 0
        %2235 = vperm.xlu0 %2234, %v2157
        %v2236 = vpop.permute.xlu0 %2235
        %2239 = vset.pattern.permute.xlu0 0
        %2240 = vperm.xlu0 %2239, %v2158
        %v2241 = vpop.permute.xlu0 %2240
        %2244 = vset.pattern.permute.xlu0 0
        %2245 = vperm.xlu0 %2244, %v2159
        %v2246 = vpop.permute.xlu0 %2245
        %2249 = vset.pattern.permute.xlu0 0
        %2250 = vperm.xlu0 %2249, %v2160
        %v2251 = vpop.permute.xlu0 %2250
        %2254 = vset.pattern.permute.xlu0 0
        %2255 = vperm.xlu0 %2254, %v2161
        %v2256 = vpop.permute.xlu0 %2255
        %2259 = vset.pattern.permute.xlu0 0
        %2260 = vperm.xlu0 %2259, %v2162
        %v2261 = vpop.permute.xlu0 %2260
        %2264 = vset.pattern.permute.xlu0 0
        %2265 = vperm.xlu0 %2264, %v2163
        %v2266 = vpop.permute.xlu0 %2265
        %2269 = vset.pattern.permute.xlu0 0
        %2270 = vperm.xlu0 %2269, %v2164
        %v2271 = vpop.permute.xlu0 %2270
        %2274 = vset.pattern.permute.xlu0 0
        %2275 = vperm.xlu0 %2274, %v2165
        %v2276 = vpop.permute.xlu0 %2275
        %2279 = vset.pattern.permute.xlu0 0
        %2280 = vperm.xlu0 %2279, %v2166
        %v2281 = vpop.permute.xlu0 %2280
        %2284 = vset.pattern.permute.xlu0 0
        %2285 = vperm.xlu0 %2284, %v2167
        %v2286 = vpop.permute.xlu0 %2285
        %2289 = vset.pattern.permute.xlu0 0
        %2290 = vperm.xlu0 %2289, %v2168
        %v2291 = vpop.permute.xlu0 %2290
        %2294 = vset.pattern.permute.xlu0 0
        %2295 = vperm.xlu0 %2294, %v2169
        %v2296 = vpop.permute.xlu0 %2295
        %v2298 = vsub.f32 %v2089, %v2221
        %v2299 = vsub.f32 %v2090, %v2226
        %v2300 = vsub.f32 %v2091, %v2231
        %v2301 = vsub.f32 %v2092, %v2236
        %v2302 = vsub.f32 %v2093, %v2241
        %v2303 = vsub.f32 %v2094, %v2246
        %v2304 = vsub.f32 %v2095, %v2251
        %v2305 = vsub.f32 %v2096, %v2256
        %v2306 = vsub.f32 %v2097, %v2261
        %v2307 = vsub.f32 %v2098, %v2266
        %v2308 = vsub.f32 %v2099, %v2271
        %v2309 = vsub.f32 %v2100, %v2276
        %v2310 = vsub.f32 %v2101, %v2281
        %v2311 = vsub.f32 %v2102, %v2286
        %v2312 = vsub.f32 %v2103, %v2291
        %v2313 = vsub.f32 %v2104, %v2296
        %v2314 = vmul.f32 %v2298, 1.442695
        %v2315 = vpow.pop %v2314
        %v2316 = vmul.f32 %v2299, 1.442695
        %v2317 = vpow.pop %v2316
        %v2318 = vmul.f32 %v2300, 1.442695
        %v2319 = vpow.pop %v2318
        %v2320 = vmul.f32 %v2301, 1.442695
        %v2321 = vpow.pop %v2320
        %v2322 = vmul.f32 %v2302, 1.442695
        %v2323 = vpow.pop %v2322
        %v2324 = vmul.f32 %v2303, 1.442695
        %v2325 = vpow.pop %v2324
        %v2326 = vmul.f32 %v2304, 1.442695
        %v2327 = vpow.pop %v2326
        %v2328 = vmul.f32 %v2305, 1.442695
        %v2329 = vpow.pop %v2328
        %v2330 = vmul.f32 %v2306, 1.442695
        %v2331 = vpow.pop %v2330
        %v2332 = vmul.f32 %v2307, 1.442695
        %v2333 = vpow.pop %v2332
        %v2334 = vmul.f32 %v2308, 1.442695
        %v2335 = vpow.pop %v2334
        %v2336 = vmul.f32 %v2309, 1.442695
        %v2337 = vpow.pop %v2336
        %v2338 = vmul.f32 %v2310, 1.442695
        %v2339 = vpow.pop %v2338
        %v2340 = vmul.f32 %v2311, 1.442695
        %v2341 = vpow.pop %v2340
        %v2342 = vmul.f32 %v2312, 1.442695
        %v2343 = vpow.pop %v2342
        %v2344 = vmul.f32 %v2313, 1.442695
        %v2345 = vpow.pop %v2344
        %s2346 = scalar_lea.vmem [#allocation4], 128
        %v2347 = vld [vmem:[%s2346] sm:$0xff]
        %v2348 = vld [vmem:[%s2346 + $0x8] sm:$0xff]
        %v2349 = vld [vmem:[%s2346 + $0x10] sm:$0xff]
        %v2350 = vld [vmem:[%s2346 + $0x18] sm:$0xff]
        %v2351 = vld [vmem:[%s2346 + $0x20] sm:$0xff]
        %v2352 = vld [vmem:[%s2346 + $0x28] sm:$0xff]
        %v2353 = vld [vmem:[%s2346 + $0x30] sm:$0xff]
        %v2354 = vld [vmem:[%s2346 + $0x38] sm:$0xff]
        %v2355 = vld [vmem:[%s2346 + $0x40] sm:$0xff]
        %v2356 = vld [vmem:[%s2346 + $0x48] sm:$0xff]
        %v2357 = vld [vmem:[%s2346 + $0x50] sm:$0xff]
        %v2358 = vld [vmem:[%s2346 + $0x58] sm:$0xff]
        %v2359 = vld [vmem:[%s2346 + $0x60] sm:$0xff]
        %v2360 = vld [vmem:[%s2346 + $0x68] sm:$0xff]
        %v2361 = vld [vmem:[%s2346 + $0x70] sm:$0xff]
        %v2362 = vld [vmem:[%s2346 + $0x78] sm:$0xff]
        %v2363 = vmul.f32 %v2187, %v2347
        %v2364 = vmul.f32 %v2189, %v2348
        %v2365 = vmul.f32 %v2191, %v2349
        %v2366 = vmul.f32 %v2193, %v2350
        %v2367 = vmul.f32 %v2195, %v2351
        %v2368 = vmul.f32 %v2197, %v2352
        %v2369 = vmul.f32 %v2199, %v2353
        %v2370 = vmul.f32 %v2201, %v2354
        %v2371 = vmul.f32 %v2203, %v2355
        %v2372 = vmul.f32 %v2205, %v2356
        %v2373 = vmul.f32 %v2207, %v2357
        %v2374 = vmul.f32 %v2209, %v2358
        %v2375 = vmul.f32 %v2211, %v2359
        %v2376 = vmul.f32 %v2213, %v2360
        %v2377 = vmul.f32 %v2215, %v2361
        %v2378 = vmul.f32 %v2217, %v2362
        %2379 = vadd.xlane.f32.xlu0 %v2315
        %v2380 = vpop.xlane.xlu0 %2379
        %2381 = vadd.xlane.f32.xlu0 %v2317
        %v2382 = vpop.xlane.xlu0 %2381
        %2383 = vadd.xlane.f32.xlu0 %v2319
        %v2384 = vpop.xlane.xlu0 %2383
        %2385 = vadd.xlane.f32.xlu0 %v2321
        %v2386 = vpop.xlane.xlu0 %2385
        %2387 = vadd.xlane.f32.xlu0 %v2323
        %v2388 = vpop.xlane.xlu0 %2387
        %2389 = vadd.xlane.f32.xlu0 %v2325
        %v2390 = vpop.xlane.xlu0 %2389
        %2391 = vadd.xlane.f32.xlu0 %v2327
        %v2392 = vpop.xlane.xlu0 %2391
        %2393 = vadd.xlane.f32.xlu0 %v2329
        %v2394 = vpop.xlane.xlu0 %2393
        %2395 = vadd.xlane.f32.xlu0 %v2331
        %v2396 = vpop.xlane.xlu0 %2395
        %2397 = vadd.xlane.f32.xlu0 %v2333
        %v2398 = vpop.xlane.xlu0 %2397
        %2399 = vadd.xlane.f32.xlu0 %v2335
        %v2400 = vpop.xlane.xlu0 %2399
        %2401 = vadd.xlane.f32.xlu0 %v2337
        %v2402 = vpop.xlane.xlu0 %2401
        %2403 = vadd.xlane.f32.xlu0 %v2339
        %v2404 = vpop.xlane.xlu0 %2403
        %2405 = vadd.xlane.f32.xlu0 %v2341
        %v2406 = vpop.xlane.xlu0 %2405
        %2407 = vadd.xlane.f32.xlu0 %v2343
        %v2408 = vpop.xlane.xlu0 %2407
        %2409 = vadd.xlane.f32.xlu0 %v2345
        %v2410 = vpop.xlane.xlu0 %2409
        %v2411 = vadd.f32 %v2363, %v2380
        %v2412 = vadd.f32 %v2364, %v2382
        %v2413 = vadd.f32 %v2365, %v2384
        %v2414 = vadd.f32 %v2366, %v2386
        %v2415 = vadd.f32 %v2367, %v2388
        %v2416 = vadd.f32 %v2368, %v2390
        %v2417 = vadd.f32 %v2369, %v2392
        %v2418 = vadd.f32 %v2370, %v2394
        %v2419 = vadd.f32 %v2371, %v2396
        %v2420 = vadd.f32 %v2372, %v2398
        %v2421 = vadd.f32 %v2373, %v2400
        %v2422 = vadd.f32 %v2374, %v2402
        %v2423 = vadd.f32 %v2375, %v2404
        %v2424 = vadd.f32 %v2376, %v2406
        %v2425 = vadd.f32 %v2377, %v2408
        %v2426 = vadd.f32 %v2378, %v2410
        %2427 = vst.msk [vmem:[%s2346] sm:$0xff] %vm1654, %v2411
        %2428 = vst.msk [vmem:[%s2346 + $0x8] sm:$0xff] %vm1654, %v2412
        %2429 = vst.msk [vmem:[%s2346 + $0x10] sm:$0xff] %vm1654, %v2413
        %2430 = vst.msk [vmem:[%s2346 + $0x18] sm:$0xff] %vm1654, %v2414
        %2431 = vst.msk [vmem:[%s2346 + $0x20] sm:$0xff] %vm1654, %v2415
        %2432 = vst.msk [vmem:[%s2346 + $0x28] sm:$0xff] %vm1654, %v2416
        %2433 = vst.msk [vmem:[%s2346 + $0x30] sm:$0xff] %vm1654, %v2417
        %2434 = vst.msk [vmem:[%s2346 + $0x38] sm:$0xff] %vm1654, %v2418
        %2435 = vst.msk [vmem:[%s2346 + $0x40] sm:$0xff] %vm1654, %v2419
        %2436 = vst.msk [vmem:[%s2346 + $0x48] sm:$0xff] %vm1654, %v2420
        %2437 = vst.msk [vmem:[%s2346 + $0x50] sm:$0xff] %vm1654, %v2421
        %2438 = vst.msk [vmem:[%s2346 + $0x58] sm:$0xff] %vm1654, %v2422
        %2439 = vst.msk [vmem:[%s2346 + $0x60] sm:$0xff] %vm1654, %v2423
        %2440 = vst.msk [vmem:[%s2346 + $0x68] sm:$0xff] %vm1654, %v2424
        %2441 = vst.msk [vmem:[%s2346 + $0x70] sm:$0xff] %vm1654, %v2425
        %2442 = vst.msk [vmem:[%s2346 + $0x78] sm:$0xff] %vm1654, %v2426
        %s2443 = scalar_lea.vmem [#allocation5], 128
        %v2444 = vld [vmem:[%s2443] sm:$0xff]
        %v2445 = vld [vmem:[%s2443 + $0x8] sm:$0xff]
        %v2446 = vld [vmem:[%s2443 + $0x10] sm:$0xff]
        %v2447 = vld [vmem:[%s2443 + $0x18] sm:$0xff]
        %v2448 = vld [vmem:[%s2443 + $0x20] sm:$0xff]
        %v2449 = vld [vmem:[%s2443 + $0x28] sm:$0xff]
        %v2450 = vld [vmem:[%s2443 + $0x30] sm:$0xff]
        %v2451 = vld [vmem:[%s2443 + $0x38] sm:$0xff]
        %v2452 = vld [vmem:[%s2443 + $0x40] sm:$0xff]
        %v2453 = vld [vmem:[%s2443 + $0x48] sm:$0xff]
        %v2454 = vld [vmem:[%s2443 + $0x50] sm:$0xff]
        %v2455 = vld [vmem:[%s2443 + $0x58] sm:$0xff]
        %v2456 = vld [vmem:[%s2443 + $0x60] sm:$0xff]
        %v2457 = vld [vmem:[%s2443 + $0x68] sm:$0xff]
        %v2458 = vld [vmem:[%s2443 + $0x70] sm:$0xff]
        %v2459 = vld [vmem:[%s2443 + $0x78] sm:$0xff]
        %2461 = vset.pattern.permute.xlu0 0
        %2462 = vperm.xlu0 %2461, %v2187
        %v2463 = vpop.permute.xlu0 %2462
        %2466 = vset.pattern.permute.xlu0 0
        %2467 = vperm.xlu0 %2466, %v2189
        %v2468 = vpop.permute.xlu0 %2467
        %2471 = vset.pattern.permute.xlu0 0
        %2472 = vperm.xlu0 %2471, %v2191
        %v2473 = vpop.permute.xlu0 %2472
        %2476 = vset.pattern.permute.xlu0 0
        %2477 = vperm.xlu0 %2476, %v2193
        %v2478 = vpop.permute.xlu0 %2477
        %2481 = vset.pattern.permute.xlu0 0
        %2482 = vperm.xlu0 %2481, %v2195
        %v2483 = vpop.permute.xlu0 %2482
        %2486 = vset.pattern.permute.xlu0 0
        %2487 = vperm.xlu0 %2486, %v2197
        %v2488 = vpop.permute.xlu0 %2487
        %2491 = vset.pattern.permute.xlu0 0
        %2492 = vperm.xlu0 %2491, %v2199
        %v2493 = vpop.permute.xlu0 %2492
        %2496 = vset.pattern.permute.xlu0 0
        %2497 = vperm.xlu0 %2496, %v2201
        %v2498 = vpop.permute.xlu0 %2497
        %2501 = vset.pattern.permute.xlu0 0
        %2502 = vperm.xlu0 %2501, %v2203
        %v2503 = vpop.permute.xlu0 %2502
        %2506 = vset.pattern.permute.xlu0 0
        %2507 = vperm.xlu0 %2506, %v2205
        %v2508 = vpop.permute.xlu0 %2507
        %2511 = vset.pattern.permute.xlu0 0
        %2512 = vperm.xlu0 %2511, %v2207
        %v2513 = vpop.permute.xlu0 %2512
        %2516 = vset.pattern.permute.xlu0 0
        %2517 = vperm.xlu0 %2516, %v2209
        %v2518 = vpop.permute.xlu0 %2517
        %2521 = vset.pattern.permute.xlu0 0
        %2522 = vperm.xlu0 %2521, %v2211
        %v2523 = vpop.permute.xlu0 %2522
        %2526 = vset.pattern.permute.xlu0 0
        %2527 = vperm.xlu0 %2526, %v2213
        %v2528 = vpop.permute.xlu0 %2527
        %2531 = vset.pattern.permute.xlu0 0
        %2532 = vperm.xlu0 %2531, %v2215
        %v2533 = vpop.permute.xlu0 %2532
        %2536 = vset.pattern.permute.xlu0 0
        %2537 = vperm.xlu0 %2536, %v2217
        %v2538 = vpop.permute.xlu0 %2537
        %v2540 = vmul.f32 %v2463, %v2444
        %v2541 = vmul.f32 %v2468, %v2445
        %v2542 = vmul.f32 %v2473, %v2446
        %v2543 = vmul.f32 %v2478, %v2447
        %v2544 = vmul.f32 %v2483, %v2448
        %v2545 = vmul.f32 %v2488, %v2449
        %v2546 = vmul.f32 %v2493, %v2450
        %v2547 = vmul.f32 %v2498, %v2451
        %v2548 = vmul.f32 %v2503, %v2452
        %v2549 = vmul.f32 %v2508, %v2453
        %v2550 = vmul.f32 %v2513, %v2454
        %v2551 = vmul.f32 %v2518, %v2455
        %v2552 = vmul.f32 %v2523, %v2456
        %v2553 = vmul.f32 %v2528, %v2457
        %v2554 = vmul.f32 %v2533, %v2458
        %v2555 = vmul.f32 %v2538, %v2459
        %2572 = vrot.lane.b32.xlu0 %v1061, 120
        %v2573 = vpop.permute.xlu0 %2572
        %2574 = vrot.lane.b32.xlu0 %v1064, 120
        %v2575 = vpop.permute.xlu0 %2574
        %2576 = vrot.lane.b32.xlu0 %v1067, 120
        %v2577 = vpop.permute.xlu0 %2576
        %2578 = vrot.lane.b32.xlu0 %v1070, 120
        %v2579 = vpop.permute.xlu0 %2578
        %2580 = vrot.lane.b32.xlu0 %v1073, 120
        %v2581 = vpop.permute.xlu0 %2580
        %2582 = vrot.lane.b32.xlu0 %v1076, 120
        %v2583 = vpop.permute.xlu0 %2582
        %2584 = vrot.lane.b32.xlu0 %v1079, 120
        %v2585 = vpop.permute.xlu0 %2584
        %2586 = vrot.lane.b32.xlu0 %v1082, 120
        %v2587 = vpop.permute.xlu0 %2586
        %2588 = vrot.lane.b32.xlu0 %v1085, 120
        %v2589 = vpop.permute.xlu0 %2588
        %2590 = vrot.lane.b32.xlu0 %v1088, 120
        %v2591 = vpop.permute.xlu0 %2590
        %2592 = vrot.lane.b32.xlu0 %v1091, 120
        %v2593 = vpop.permute.xlu0 %2592
        %2594 = vrot.lane.b32.xlu0 %v1094, 120
        %v2595 = vpop.permute.xlu0 %2594
        %2596 = vrot.lane.b32.xlu0 %v1097, 120
        %v2597 = vpop.permute.xlu0 %2596
        %2598 = vrot.lane.b32.xlu0 %v1100, 120
        %v2599 = vpop.permute.xlu0 %2598
        %2600 = vrot.lane.b32.xlu0 %v1103, 120
        %v2601 = vpop.permute.xlu0 %2600
        %2602 = vrot.lane.b32.xlu0 %v1106, 120
        %v2603 = vpop.permute.xlu0 %2602
        %2620 = vmatpush.msra.mxu0 %v2603
        %2621 = vmatpush.msra.mxu0 %v2601
        %2622 = vmatpush.msra.mxu0 %v2599
        %2623 = vmatpush.msra.mxu0 %v2597
        %2624 = vmatpush.msra.mxu0 %v2595
        %2625 = vmatpush.msra.mxu0 %v2593
        %2626 = vmatpush.msra.mxu0 %v2591
        %2627 = vmatpush.msra.mxu0 %v2589
        %2628 = vmatpush.msra.mxu0 %v2587
        %2629 = vmatpush.msra.mxu0 %v2585
        %2630 = vmatpush.msra.mxu0 %v2583
        %2631 = vmatpush.msra.mxu0 %v2581
        %2632 = vmatpush.msra.mxu0 %v2579
        %2633 = vmatpush.msra.mxu0 %v2577
        %2634 = vmatpush.msra.mxu0 %v2575
        %2635 = vmatpush.msra.mxu0 %v2573
        %2636 = vmatmul.f32.gmra.mxu0 %v2315
        %v2637 = vpop.f32.mrf.mxu0
        %v2638 = vadd.f32 0.0, %v2637
        %2639 = vmatmul.f32.gmra.mxu0 %v2317
        %v2640 = vpop.f32.mrf.mxu0
        %v2641 = vadd.f32 0.0, %v2640
        %2642 = vmatmul.f32.gmra.mxu0 %v2319
        %v2643 = vpop.f32.mrf.mxu0
        %v2644 = vadd.f32 0.0, %v2643
        %2645 = vmatmul.f32.gmra.mxu0 %v2321
        %v2646 = vpop.f32.mrf.mxu0
        %v2647 = vadd.f32 0.0, %v2646
        %2648 = vmatmul.f32.gmra.mxu0 %v2323
        %v2649 = vpop.f32.mrf.mxu0
        %v2650 = vadd.f32 0.0, %v2649
        %2651 = vmatmul.f32.gmra.mxu0 %v2325
        %v2652 = vpop.f32.mrf.mxu0
        %v2653 = vadd.f32 0.0, %v2652
        %2654 = vmatmul.f32.gmra.mxu0 %v2327
        %v2655 = vpop.f32.mrf.mxu0
        %v2656 = vadd.f32 0.0, %v2655
        %2657 = vmatmul.f32.gmra.mxu0 %v2329
        %v2658 = vpop.f32.mrf.mxu0
        %v2659 = vadd.f32 0.0, %v2658
        %2660 = vmatmul.f32.gmra.mxu0 %v2331
        %v2661 = vpop.f32.mrf.mxu0
        %v2662 = vadd.f32 0.0, %v2661
        %2663 = vmatmul.f32.gmra.mxu0 %v2333
        %v2664 = vpop.f32.mrf.mxu0
        %v2665 = vadd.f32 0.0, %v2664
        %2666 = vmatmul.f32.gmra.mxu0 %v2335
        %v2667 = vpop.f32.mrf.mxu0
        %v2668 = vadd.f32 0.0, %v2667
        %2669 = vmatmul.f32.gmra.mxu0 %v2337
        %v2670 = vpop.f32.mrf.mxu0
        %v2671 = vadd.f32 0.0, %v2670
        %2672 = vmatmul.f32.gmra.mxu0 %v2339
        %v2673 = vpop.f32.mrf.mxu0
        %v2674 = vadd.f32 0.0, %v2673
        %2675 = vmatmul.f32.gmra.mxu0 %v2341
        %v2676 = vpop.f32.mrf.mxu0
        %v2677 = vadd.f32 0.0, %v2676
        %2678 = vmatmul.f32.gmra.mxu0 %v2343
        %v2679 = vpop.f32.mrf.mxu0
        %v2680 = vadd.f32 0.0, %v2679
        %2681 = vmatmul.f32.gmra.mxu0 %v2345
        %v2682 = vpop.f32.mrf.mxu0
        %v2683 = vadd.f32 0.0, %v2682
        %2684 = vdwg.mxu0
        %v2685 = vadd.f32 %v2540, %v2638
        %v2686 = vadd.f32 %v2541, %v2641
        %v2687 = vadd.f32 %v2542, %v2644
        %v2688 = vadd.f32 %v2543, %v2647
        %v2689 = vadd.f32 %v2544, %v2650
        %v2690 = vadd.f32 %v2545, %v2653
        %v2691 = vadd.f32 %v2546, %v2656
        %v2692 = vadd.f32 %v2547, %v2659
        %v2693 = vadd.f32 %v2548, %v2662
        %v2694 = vadd.f32 %v2549, %v2665
        %v2695 = vadd.f32 %v2550, %v2668
        %v2696 = vadd.f32 %v2551, %v2671
        %v2697 = vadd.f32 %v2552, %v2674
        %v2698 = vadd.f32 %v2553, %v2677
        %v2699 = vadd.f32 %v2554, %v2680
        %v2700 = vadd.f32 %v2555, %v2683
        %2701 = vst.msk [vmem:[%s2443] sm:$0xff] %vm1156, %v2685
        %2702 = vst.msk [vmem:[%s2443 + $0x8] sm:$0xff] %vm1156, %v2686
        %2703 = vst.msk [vmem:[%s2443 + $0x10] sm:$0xff] %vm1156, %v2687
        %2704 = vst.msk [vmem:[%s2443 + $0x18] sm:$0xff] %vm1156, %v2688
        %2705 = vst.msk [vmem:[%s2443 + $0x20] sm:$0xff] %vm1156, %v2689
        %2706 = vst.msk [vmem:[%s2443 + $0x28] sm:$0xff] %vm1156, %v2690
        %2707 = vst.msk [vmem:[%s2443 + $0x30] sm:$0xff] %vm1156, %v2691
        %2708 = vst.msk [vmem:[%s2443 + $0x38] sm:$0xff] %vm1156, %v2692
        %2709 = vst.msk [vmem:[%s2443 + $0x40] sm:$0xff] %vm1156, %v2693
        %2710 = vst.msk [vmem:[%s2443 + $0x48] sm:$0xff] %vm1156, %v2694
        %2711 = vst.msk [vmem:[%s2443 + $0x50] sm:$0xff] %vm1156, %v2695
        %2712 = vst.msk [vmem:[%s2443 + $0x58] sm:$0xff] %vm1156, %v2696
        %2713 = vst.msk [vmem:[%s2443 + $0x60] sm:$0xff] %vm1156, %v2697
        %2714 = vst.msk [vmem:[%s2443 + $0x68] sm:$0xff] %vm1156, %v2698
        %2715 = vst.msk [vmem:[%s2443 + $0x70] sm:$0xff] %vm1156, %v2699
        %2716 = vst.msk [vmem:[%s2443 + $0x78] sm:$0xff] %vm1156, %v2700
        %2717 = vst.msk [vmem:[%s2105] sm:$0xff] %vm1654, %v2154
        %2718 = vst.msk [vmem:[%s2105 + $0x8] sm:$0xff] %vm1654, %v2155
        %2719 = vst.msk [vmem:[%s2105 + $0x10] sm:$0xff] %vm1654, %v2156
        %2720 = vst.msk [vmem:[%s2105 + $0x18] sm:$0xff] %vm1654, %v2157
        %2721 = vst.msk [vmem:[%s2105 + $0x20] sm:$0xff] %vm1654, %v2158
        %2722 = vst.msk [vmem:[%s2105 + $0x28] sm:$0xff] %vm1654, %v2159
        %2723 = vst.msk [vmem:[%s2105 + $0x30] sm:$0xff] %vm1654, %v2160
        %2724 = vst.msk [vmem:[%s2105 + $0x38] sm:$0xff] %vm1654, %v2161
        %2725 = vst.msk [vmem:[%s2105 + $0x40] sm:$0xff] %vm1654, %v2162
        %2726 = vst.msk [vmem:[%s2105 + $0x48] sm:$0xff] %vm1654, %v2163
        %2727 = vst.msk [vmem:[%s2105 + $0x50] sm:$0xff] %vm1654, %v2164
        %2728 = vst.msk [vmem:[%s2105 + $0x58] sm:$0xff] %vm1654, %v2165
        %2729 = vst.msk [vmem:[%s2105 + $0x60] sm:$0xff] %vm1654, %v2166
        %2730 = vst.msk [vmem:[%s2105 + $0x68] sm:$0xff] %vm1654, %v2167
        %2731 = vst.msk [vmem:[%s2105 + $0x70] sm:$0xff] %vm1654, %v2168
        %2732 = vst.msk [vmem:[%s2105 + $0x78] sm:$0xff] %vm1654, %v2169
        %2733 = vrot.lane.b32.xlu0 %v1140, 112
        %v2734 = vpop.permute.xlu0 %2733
        %2735 = vrot.lane.b32.xlu0 %v1141, 112
        %v2736 = vpop.permute.xlu0 %2735
        %2737 = vrot.lane.b32.xlu0 %v1142, 112
        %v2738 = vpop.permute.xlu0 %2737
        %2739 = vrot.lane.b32.xlu0 %v1143, 112
        %v2740 = vpop.permute.xlu0 %2739
        %2741 = vrot.lane.b32.xlu0 %v1144, 112
        %v2742 = vpop.permute.xlu0 %2741
        %2743 = vrot.lane.b32.xlu0 %v1145, 112
        %v2744 = vpop.permute.xlu0 %2743
        %2745 = vrot.lane.b32.xlu0 %v1146, 112
        %v2746 = vpop.permute.xlu0 %2745
        %2747 = vrot.lane.b32.xlu0 %v1147, 112
        %v2748 = vpop.permute.xlu0 %2747
        %2749 = vrot.lane.b32.xlu0 %v1148, 112
        %v2750 = vpop.permute.xlu0 %2749
        %2751 = vrot.lane.b32.xlu0 %v1149, 112
        %v2752 = vpop.permute.xlu0 %2751
        %2753 = vrot.lane.b32.xlu0 %v1150, 112
        %v2754 = vpop.permute.xlu0 %2753
        %2755 = vrot.lane.b32.xlu0 %v1151, 112
        %v2756 = vpop.permute.xlu0 %2755
        %2757 = vrot.lane.b32.xlu0 %v1152, 112
        %v2758 = vpop.permute.xlu0 %2757
        %2759 = vrot.lane.b32.xlu0 %v1153, 112
        %v2760 = vpop.permute.xlu0 %2759
        %2761 = vrot.lane.b32.xlu0 %v1154, 112
        %v2762 = vpop.permute.xlu0 %2761
        %2763 = vrot.lane.b32.xlu0 %v1155, 112
        %v2764 = vpop.permute.xlu0 %2763
        %2765 = vrot.lane.b32.xlu0 %v992, 112
        %v2766 = vpop.permute.xlu0 %2765
        %2767 = vrot.lane.b32.xlu0 %v995, 112
        %v2768 = vpop.permute.xlu0 %2767
        %2769 = vrot.lane.b32.xlu0 %v998, 112
        %v2770 = vpop.permute.xlu0 %2769
        %2771 = vrot.lane.b32.xlu0 %v1001, 112
        %v2772 = vpop.permute.xlu0 %2771
        %2773 = vrot.lane.b32.xlu0 %v1004, 112
        %v2774 = vpop.permute.xlu0 %2773
        %2775 = vrot.lane.b32.xlu0 %v1007, 112
        %v2776 = vpop.permute.xlu0 %2775
        %2777 = vrot.lane.b32.xlu0 %v1010, 112
        %v2778 = vpop.permute.xlu0 %2777
        %2779 = vrot.lane.b32.xlu0 %v1013, 112
        %v2780 = vpop.permute.xlu0 %2779
        %2781 = vrot.lane.b32.xlu0 %v1016, 112
        %v2782 = vpop.permute.xlu0 %2781
        %2783 = vrot.lane.b32.xlu0 %v1019, 112
        %v2784 = vpop.permute.xlu0 %2783
        %2785 = vrot.lane.b32.xlu0 %v1022, 112
        %v2786 = vpop.permute.xlu0 %2785
        %2787 = vrot.lane.b32.xlu0 %v1025, 112
        %v2788 = vpop.permute.xlu0 %2787
        %2789 = vrot.lane.b32.xlu0 %v1028, 112
        %v2790 = vpop.permute.xlu0 %2789
        %2791 = vrot.lane.b32.xlu0 %v1031, 112
        %v2792 = vpop.permute.xlu0 %2791
        %2793 = vrot.lane.b32.xlu0 %v1034, 112
        %v2794 = vpop.permute.xlu0 %2793
        %2795 = vrot.lane.b32.xlu0 %v1037, 112
        %v2796 = vpop.permute.xlu0 %2795
        %v2797 = vsel %vm1156, %v2734, 0
        %v2799 = vsel %vm1156, %v2736, 0
        %v2801 = vsel %vm1156, %v2738, 0
        %v2803 = vsel %vm1156, %v2740, 0
        %v2805 = vsel %vm1156, %v2742, 0
        %v2807 = vsel %vm1156, %v2744, 0
        %v2809 = vsel %vm1156, %v2746, 0
        %v2811 = vsel %vm1156, %v2748, 0
        %v2813 = vsel %vm1156, %v2750, 0
        %v2815 = vsel %vm1156, %v2752, 0
        %v2817 = vsel %vm1156, %v2754, 0
        %v2819 = vsel %vm1156, %v2756, 0
        %v2821 = vsel %vm1156, %v2758, 0
        %v2823 = vsel %vm1156, %v2760, 0
        %v2825 = vsel %vm1156, %v2762, 0
        %v2827 = vsel %vm1156, %v2764, 0
        %v2829 = vsel %vm1156, %v2766, 0
        %v2831 = vsel %vm1156, %v2768, 0
        %v2833 = vsel %vm1156, %v2770, 0
        %v2835 = vsel %vm1156, %v2772, 0
        %v2837 = vsel %vm1156, %v2774, 0
        %v2839 = vsel %vm1156, %v2776, 0
        %v2841 = vsel %vm1156, %v2778, 0
        %v2843 = vsel %vm1156, %v2780, 0
        %v2845 = vsel %vm1156, %v2782, 0
        %v2847 = vsel %vm1156, %v2784, 0
        %v2849 = vsel %vm1156, %v2786, 0
        %v2851 = vsel %vm1156, %v2788, 0
        %v2853 = vsel %vm1156, %v2790, 0
        %v2855 = vsel %vm1156, %v2792, 0
        %v2857 = vsel %vm1156, %v2794, 0
        %v2859 = vsel %vm1156, %v2796, 0
        %2861 = vmatpush.xpose.msra.mxu0 %v2859
        %2862 = vmatpush.xpose.msra.mxu0 %v2857
        %2863 = vmatpush.xpose.msra.mxu0 %v2855
        %2864 = vmatpush.xpose.msra.mxu0 %v2853
        %2865 = vmatpush.xpose.msra.mxu0 %v2851
        %2866 = vmatpush.xpose.msra.mxu0 %v2849
        %2867 = vmatpush.xpose.msra.mxu0 %v2847
        %2868 = vmatpush.xpose.msra.mxu0 %v2845
        %2869 = vmatpush.xpose.msra.mxu0 %v2843
        %2870 = vmatpush.xpose.msra.mxu0 %v2841
        %2871 = vmatpush.xpose.msra.mxu0 %v2839
        %2872 = vmatpush.xpose.msra.mxu0 %v2837
        %2873 = vmatpush.xpose.msra.mxu0 %v2835
        %2874 = vmatpush.xpose.msra.mxu0 %v2833
        %2875 = vmatpush.xpose.msra.mxu0 %v2831
        %2876 = vmatpush.xpose.msra.mxu0 %v2829
        %2877 = vmatmul.f32.gmra.mxu0 %v2797
        %v2878 = vpop.f32.mrf.mxu0
        %v2879 = vadd.f32 0.0, %v2878
        %2880 = vmatmul.f32.gmra.mxu0 %v2799
        %v2881 = vpop.f32.mrf.mxu0
        %v2882 = vadd.f32 0.0, %v2881
        %2883 = vmatmul.f32.gmra.mxu0 %v2801
        %v2884 = vpop.f32.mrf.mxu0
        %v2885 = vadd.f32 0.0, %v2884
        %2886 = vmatmul.f32.gmra.mxu0 %v2803
        %v2887 = vpop.f32.mrf.mxu0
        %v2888 = vadd.f32 0.0, %v2887
        %2889 = vmatmul.f32.gmra.mxu0 %v2805
        %v2890 = vpop.f32.mrf.mxu0
        %v2891 = vadd.f32 0.0, %v2890
        %2892 = vmatmul.f32.gmra.mxu0 %v2807
        %v2893 = vpop.f32.mrf.mxu0
        %v2894 = vadd.f32 0.0, %v2893
        %2895 = vmatmul.f32.gmra.mxu0 %v2809
        %v2896 = vpop.f32.mrf.mxu0
        %v2897 = vadd.f32 0.0, %v2896
        %2898 = vmatmul.f32.gmra.mxu0 %v2811
        %v2899 = vpop.f32.mrf.mxu0
        %v2900 = vadd.f32 0.0, %v2899
        %2901 = vmatmul.f32.gmra.mxu0 %v2813
        %v2902 = vpop.f32.mrf.mxu0
        %v2903 = vadd.f32 0.0, %v2902
        %2904 = vmatmul.f32.gmra.mxu0 %v2815
        %v2905 = vpop.f32.mrf.mxu0
        %v2906 = vadd.f32 0.0, %v2905
        %2907 = vmatmul.f32.gmra.mxu0 %v2817
        %v2908 = vpop.f32.mrf.mxu0
        %v2909 = vadd.f32 0.0, %v2908
        %2910 = vmatmul.f32.gmra.mxu0 %v2819
        %v2911 = vpop.f32.mrf.mxu0
        %v2912 = vadd.f32 0.0, %v2911
        %2913 = vmatmul.f32.gmra.mxu0 %v2821
        %v2914 = vpop.f32.mrf.mxu0
        %v2915 = vadd.f32 0.0, %v2914
        %2916 = vmatmul.f32.gmra.mxu0 %v2823
        %v2917 = vpop.f32.mrf.mxu0
        %v2918 = vadd.f32 0.0, %v2917
        %2919 = vmatmul.f32.gmra.mxu0 %v2825
        %v2920 = vpop.f32.mrf.mxu0
        %v2921 = vadd.f32 0.0, %v2920
        %2922 = vmatmul.f32.gmra.mxu0 %v2827
        %v2923 = vpop.f32.mrf.mxu0
        %v2924 = vadd.f32 0.0, %v2923
        %2925 = vdwg.mxu0
        %v2926 = vsel %vm1124, %v2879, -9e+15
        %v2927 = vsel %vm1125, %v2882, -9e+15
        %v2928 = vsel %vm1126, %v2885, -9e+15
        %v2929 = vsel %vm1127, %v2888, -9e+15
        %v2930 = vsel %vm1128, %v2891, -9e+15
        %v2931 = vsel %vm1129, %v2894, -9e+15
        %v2932 = vsel %vm1130, %v2897, -9e+15
        %v2933 = vsel %vm1131, %v2900, -9e+15
        %v2934 = vsel %vm1132, %v2903, -9e+15
        %v2935 = vsel %vm1133, %v2906, -9e+15
        %v2936 = vsel %vm1134, %v2909, -9e+15
        %v2937 = vsel %vm1135, %v2912, -9e+15
        %v2938 = vsel %vm1136, %v2915, -9e+15
        %v2939 = vsel %vm1137, %v2918, -9e+15
        %v2940 = vsel %vm1138, %v2921, -9e+15
        %v2941 = vsel %vm1139, %v2924, -9e+15
        %s2942 = scalar_lea.vmem [#allocation3], 256
        %v2943 = vld [vmem:[%s2942] sm:$0xff]
        %v2944 = vld [vmem:[%s2942 + $0x8] sm:$0xff]
        %v2945 = vld [vmem:[%s2942 + $0x10] sm:$0xff]
        %v2946 = vld [vmem:[%s2942 + $0x18] sm:$0xff]
        %v2947 = vld [vmem:[%s2942 + $0x20] sm:$0xff]
        %v2948 = vld [vmem:[%s2942 + $0x28] sm:$0xff]
        %v2949 = vld [vmem:[%s2942 + $0x30] sm:$0xff]
        %v2950 = vld [vmem:[%s2942 + $0x38] sm:$0xff]
        %v2951 = vld [vmem:[%s2942 + $0x40] sm:$0xff]
        %v2952 = vld [vmem:[%s2942 + $0x48] sm:$0xff]
        %v2953 = vld [vmem:[%s2942 + $0x50] sm:$0xff]
        %v2954 = vld [vmem:[%s2942 + $0x58] sm:$0xff]
        %v2955 = vld [vmem:[%s2942 + $0x60] sm:$0xff]
        %v2956 = vld [vmem:[%s2942 + $0x68] sm:$0xff]
        %v2957 = vld [vmem:[%s2942 + $0x70] sm:$0xff]
        %v2958 = vld [vmem:[%s2942 + $0x78] sm:$0xff]
        %2959 = vmax.xlane.f32.xlu0 %v2926
        %v2960 = vpop.xlane.xlu0 %2959
        %2961 = vmax.xlane.f32.xlu0 %v2927
        %v2962 = vpop.xlane.xlu0 %2961
        %2963 = vmax.xlane.f32.xlu0 %v2928
        %v2964 = vpop.xlane.xlu0 %2963
        %2965 = vmax.xlane.f32.xlu0 %v2929
        %v2966 = vpop.xlane.xlu0 %2965
        %2967 = vmax.xlane.f32.xlu0 %v2930
        %v2968 = vpop.xlane.xlu0 %2967
        %2969 = vmax.xlane.f32.xlu0 %v2931
        %v2970 = vpop.xlane.xlu0 %2969
        %2971 = vmax.xlane.f32.xlu0 %v2932
        %v2972 = vpop.xlane.xlu0 %2971
        %2973 = vmax.xlane.f32.xlu0 %v2933
        %v2974 = vpop.xlane.xlu0 %2973
        %2975 = vmax.xlane.f32.xlu0 %v2934
        %v2976 = vpop.xlane.xlu0 %2975
        %2977 = vmax.xlane.f32.xlu0 %v2935
        %v2978 = vpop.xlane.xlu0 %2977
        %2979 = vmax.xlane.f32.xlu0 %v2936
        %v2980 = vpop.xlane.xlu0 %2979
        %2981 = vmax.xlane.f32.xlu0 %v2937
        %v2982 = vpop.xlane.xlu0 %2981
        %2983 = vmax.xlane.f32.xlu0 %v2938
        %v2984 = vpop.xlane.xlu0 %2983
        %2985 = vmax.xlane.f32.xlu0 %v2939
        %v2986 = vpop.xlane.xlu0 %2985
        %2987 = vmax.xlane.f32.xlu0 %v2940
        %v2988 = vpop.xlane.xlu0 %2987
        %2989 = vmax.xlane.f32.xlu0 %v2941
        %v2990 = vpop.xlane.xlu0 %2989
        %v2991 = vmax.f32 %v2943, %v2960
        %v2992 = vmax.f32 %v2944, %v2962
        %v2993 = vmax.f32 %v2945, %v2964
        %v2994 = vmax.f32 %v2946, %v2966
        %v2995 = vmax.f32 %v2947, %v2968
        %v2996 = vmax.f32 %v2948, %v2970
        %v2997 = vmax.f32 %v2949, %v2972
        %v2998 = vmax.f32 %v2950, %v2974
        %v2999 = vmax.f32 %v2951, %v2976
        %v3000 = vmax.f32 %v2952, %v2978
        %v3001 = vmax.f32 %v2953, %v2980
        %v3002 = vmax.f32 %v2954, %v2982
        %v3003 = vmax.f32 %v2955, %v2984
        %v3004 = vmax.f32 %v2956, %v2986
        %v3005 = vmax.f32 %v2957, %v2988
        %v3006 = vmax.f32 %v2958, %v2990
        %v3007 = vsub.f32 %v2943, %v2991
        %v3008 = vsub.f32 %v2944, %v2992
        %v3009 = vsub.f32 %v2945, %v2993
        %v3010 = vsub.f32 %v2946, %v2994
        %v3011 = vsub.f32 %v2947, %v2995
        %v3012 = vsub.f32 %v2948, %v2996
        %v3013 = vsub.f32 %v2949, %v2997
        %v3014 = vsub.f32 %v2950, %v2998
        %v3015 = vsub.f32 %v2951, %v2999
        %v3016 = vsub.f32 %v2952, %v3000
        %v3017 = vsub.f32 %v2953, %v3001
        %v3018 = vsub.f32 %v2954, %v3002
        %v3019 = vsub.f32 %v2955, %v3003
        %v3020 = vsub.f32 %v2956, %v3004
        %v3021 = vsub.f32 %v2957, %v3005
        %v3022 = vsub.f32 %v2958, %v3006
        %v3023 = vmul.f32 %v3007, 1.442695
        %v3024 = vpow.pop %v3023
        %v3025 = vmul.f32 %v3008, 1.442695
        %v3026 = vpow.pop %v3025
        %v3027 = vmul.f32 %v3009, 1.442695
        %v3028 = vpow.pop %v3027
        %v3029 = vmul.f32 %v3010, 1.442695
        %v3030 = vpow.pop %v3029
        %v3031 = vmul.f32 %v3011, 1.442695
        %v3032 = vpow.pop %v3031
        %v3033 = vmul.f32 %v3012, 1.442695
        %v3034 = vpow.pop %v3033
        %v3035 = vmul.f32 %v3013, 1.442695
        %v3036 = vpow.pop %v3035
        %v3037 = vmul.f32 %v3014, 1.442695
        %v3038 = vpow.pop %v3037
        %v3039 = vmul.f32 %v3015, 1.442695
        %v3040 = vpow.pop %v3039
        %v3041 = vmul.f32 %v3016, 1.442695
        %v3042 = vpow.pop %v3041
        %v3043 = vmul.f32 %v3017, 1.442695
        %v3044 = vpow.pop %v3043
        %v3045 = vmul.f32 %v3018, 1.442695
        %v3046 = vpow.pop %v3045
        %v3047 = vmul.f32 %v3019, 1.442695
        %v3048 = vpow.pop %v3047
        %v3049 = vmul.f32 %v3020, 1.442695
        %v3050 = vpow.pop %v3049
        %v3051 = vmul.f32 %v3021, 1.442695
        %v3052 = vpow.pop %v3051
        %v3053 = vmul.f32 %v3022, 1.442695
        %v3054 = vpow.pop %v3053
        %3056 = vset.pattern.permute.xlu0 0
        %3057 = vperm.xlu0 %3056, %v2991
        %v3058 = vpop.permute.xlu0 %3057
        %3061 = vset.pattern.permute.xlu0 0
        %3062 = vperm.xlu0 %3061, %v2992
        %v3063 = vpop.permute.xlu0 %3062
        %3066 = vset.pattern.permute.xlu0 0
        %3067 = vperm.xlu0 %3066, %v2993
        %v3068 = vpop.permute.xlu0 %3067
        %3071 = vset.pattern.permute.xlu0 0
        %3072 = vperm.xlu0 %3071, %v2994
        %v3073 = vpop.permute.xlu0 %3072
        %3076 = vset.pattern.permute.xlu0 0
        %3077 = vperm.xlu0 %3076, %v2995
        %v3078 = vpop.permute.xlu0 %3077
        %3081 = vset.pattern.permute.xlu0 0
        %3082 = vperm.xlu0 %3081, %v2996
        %v3083 = vpop.permute.xlu0 %3082
        %3086 = vset.pattern.permute.xlu0 0
        %3087 = vperm.xlu0 %3086, %v2997
        %v3088 = vpop.permute.xlu0 %3087
        %3091 = vset.pattern.permute.xlu0 0
        %3092 = vperm.xlu0 %3091, %v2998
        %v3093 = vpop.permute.xlu0 %3092
        %3096 = vset.pattern.permute.xlu0 0
        %3097 = vperm.xlu0 %3096, %v2999
        %v3098 = vpop.permute.xlu0 %3097
        %3101 = vset.pattern.permute.xlu0 0
        %3102 = vperm.xlu0 %3101, %v3000
        %v3103 = vpop.permute.xlu0 %3102
        %3106 = vset.pattern.permute.xlu0 0
        %3107 = vperm.xlu0 %3106, %v3001
        %v3108 = vpop.permute.xlu0 %3107
        %3111 = vset.pattern.permute.xlu0 0
        %3112 = vperm.xlu0 %3111, %v3002
        %v3113 = vpop.permute.xlu0 %3112
        %3116 = vset.pattern.permute.xlu0 0
        %3117 = vperm.xlu0 %3116, %v3003
        %v3118 = vpop.permute.xlu0 %3117
        %3121 = vset.pattern.permute.xlu0 0
        %3122 = vperm.xlu0 %3121, %v3004
        %v3123 = vpop.permute.xlu0 %3122
        %3126 = vset.pattern.permute.xlu0 0
        %3127 = vperm.xlu0 %3126, %v3005
        %v3128 = vpop.permute.xlu0 %3127
        %3131 = vset.pattern.permute.xlu0 0
        %3132 = vperm.xlu0 %3131, %v3006
        %v3133 = vpop.permute.xlu0 %3132
        %v3135 = vsub.f32 %v2926, %v3058
        %v3136 = vsub.f32 %v2927, %v3063
        %v3137 = vsub.f32 %v2928, %v3068
        %v3138 = vsub.f32 %v2929, %v3073
        %v3139 = vsub.f32 %v2930, %v3078
        %v3140 = vsub.f32 %v2931, %v3083
        %v3141 = vsub.f32 %v2932, %v3088
        %v3142 = vsub.f32 %v2933, %v3093
        %v3143 = vsub.f32 %v2934, %v3098
        %v3144 = vsub.f32 %v2935, %v3103
        %v3145 = vsub.f32 %v2936, %v3108
        %v3146 = vsub.f32 %v2937, %v3113
        %v3147 = vsub.f32 %v2938, %v3118
        %v3148 = vsub.f32 %v2939, %v3123
        %v3149 = vsub.f32 %v2940, %v3128
        %v3150 = vsub.f32 %v2941, %v3133
        %v3151 = vmul.f32 %v3135, 1.442695
        %v3152 = vpow.pop %v3151
        %v3153 = vmul.f32 %v3136, 1.442695
        %v3154 = vpow.pop %v3153
        %v3155 = vmul.f32 %v3137, 1.442695
        %v3156 = vpow.pop %v3155
        %v3157 = vmul.f32 %v3138, 1.442695
        %v3158 = vpow.pop %v3157
        %v3159 = vmul.f32 %v3139, 1.442695
        %v3160 = vpow.pop %v3159
        %v3161 = vmul.f32 %v3140, 1.442695
        %v3162 = vpow.pop %v3161
        %v3163 = vmul.f32 %v3141, 1.442695
        %v3164 = vpow.pop %v3163
        %v3165 = vmul.f32 %v3142, 1.442695
        %v3166 = vpow.pop %v3165
        %v3167 = vmul.f32 %v3143, 1.442695
        %v3168 = vpow.pop %v3167
        %v3169 = vmul.f32 %v3144, 1.442695
        %v3170 = vpow.pop %v3169
        %v3171 = vmul.f32 %v3145, 1.442695
        %v3172 = vpow.pop %v3171
        %v3173 = vmul.f32 %v3146, 1.442695
        %v3174 = vpow.pop %v3173
        %v3175 = vmul.f32 %v3147, 1.442695
        %v3176 = vpow.pop %v3175
        %v3177 = vmul.f32 %v3148, 1.442695
        %v3178 = vpow.pop %v3177
        %v3179 = vmul.f32 %v3149, 1.442695
        %v3180 = vpow.pop %v3179
        %v3181 = vmul.f32 %v3150, 1.442695
        %v3182 = vpow.pop %v3181
        %s3183 = scalar_lea.vmem [#allocation4], 256
        %v3184 = vld [vmem:[%s3183] sm:$0xff]
        %v3185 = vld [vmem:[%s3183 + $0x8] sm:$0xff]
        %v3186 = vld [vmem:[%s3183 + $0x10] sm:$0xff]
        %v3187 = vld [vmem:[%s3183 + $0x18] sm:$0xff]
        %v3188 = vld [vmem:[%s3183 + $0x20] sm:$0xff]
        %v3189 = vld [vmem:[%s3183 + $0x28] sm:$0xff]
        %v3190 = vld [vmem:[%s3183 + $0x30] sm:$0xff]
        %v3191 = vld [vmem:[%s3183 + $0x38] sm:$0xff]
        %v3192 = vld [vmem:[%s3183 + $0x40] sm:$0xff]
        %v3193 = vld [vmem:[%s3183 + $0x48] sm:$0xff]
        %v3194 = vld [vmem:[%s3183 + $0x50] sm:$0xff]
        %v3195 = vld [vmem:[%s3183 + $0x58] sm:$0xff]
        %v3196 = vld [vmem:[%s3183 + $0x60] sm:$0xff]
        %v3197 = vld [vmem:[%s3183 + $0x68] sm:$0xff]
        %v3198 = vld [vmem:[%s3183 + $0x70] sm:$0xff]
        %v3199 = vld [vmem:[%s3183 + $0x78] sm:$0xff]
        %v3200 = vmul.f32 %v3024, %v3184
        %v3201 = vmul.f32 %v3026, %v3185
        %v3202 = vmul.f32 %v3028, %v3186
        %v3203 = vmul.f32 %v3030, %v3187
        %v3204 = vmul.f32 %v3032, %v3188
        %v3205 = vmul.f32 %v3034, %v3189
        %v3206 = vmul.f32 %v3036, %v3190
        %v3207 = vmul.f32 %v3038, %v3191
        %v3208 = vmul.f32 %v3040, %v3192
        %v3209 = vmul.f32 %v3042, %v3193
        %v3210 = vmul.f32 %v3044, %v3194
        %v3211 = vmul.f32 %v3046, %v3195
        %v3212 = vmul.f32 %v3048, %v3196
        %v3213 = vmul.f32 %v3050, %v3197
        %v3214 = vmul.f32 %v3052, %v3198
        %v3215 = vmul.f32 %v3054, %v3199
        %3216 = vadd.xlane.f32.xlu0 %v3152
        %v3217 = vpop.xlane.xlu0 %3216
        %3218 = vadd.xlane.f32.xlu0 %v3154
        %v3219 = vpop.xlane.xlu0 %3218
        %3220 = vadd.xlane.f32.xlu0 %v3156
        %v3221 = vpop.xlane.xlu0 %3220
        %3222 = vadd.xlane.f32.xlu0 %v3158
        %v3223 = vpop.xlane.xlu0 %3222
        %3224 = vadd.xlane.f32.xlu0 %v3160
        %v3225 = vpop.xlane.xlu0 %3224
        %3226 = vadd.xlane.f32.xlu0 %v3162
        %v3227 = vpop.xlane.xlu0 %3226
        %3228 = vadd.xlane.f32.xlu0 %v3164
        %v3229 = vpop.xlane.xlu0 %3228
        %3230 = vadd.xlane.f32.xlu0 %v3166
        %v3231 = vpop.xlane.xlu0 %3230
        %3232 = vadd.xlane.f32.xlu0 %v3168
        %v3233 = vpop.xlane.xlu0 %3232
        %3234 = vadd.xlane.f32.xlu0 %v3170
        %v3235 = vpop.xlane.xlu0 %3234
        %3236 = vadd.xlane.f32.xlu0 %v3172
        %v3237 = vpop.xlane.xlu0 %3236
        %3238 = vadd.xlane.f32.xlu0 %v3174
        %v3239 = vpop.xlane.xlu0 %3238
        %3240 = vadd.xlane.f32.xlu0 %v3176
        %v3241 = vpop.xlane.xlu0 %3240
        %3242 = vadd.xlane.f32.xlu0 %v3178
        %v3243 = vpop.xlane.xlu0 %3242
        %3244 = vadd.xlane.f32.xlu0 %v3180
        %v3245 = vpop.xlane.xlu0 %3244
        %3246 = vadd.xlane.f32.xlu0 %v3182
        %v3247 = vpop.xlane.xlu0 %3246
        %v3248 = vadd.f32 %v3200, %v3217
        %v3249 = vadd.f32 %v3201, %v3219
        %v3250 = vadd.f32 %v3202, %v3221
        %v3251 = vadd.f32 %v3203, %v3223
        %v3252 = vadd.f32 %v3204, %v3225
        %v3253 = vadd.f32 %v3205, %v3227
        %v3254 = vadd.f32 %v3206, %v3229
        %v3255 = vadd.f32 %v3207, %v3231
        %v3256 = vadd.f32 %v3208, %v3233
        %v3257 = vadd.f32 %v3209, %v3235
        %v3258 = vadd.f32 %v3210, %v3237
        %v3259 = vadd.f32 %v3211, %v3239
        %v3260 = vadd.f32 %v3212, %v3241
        %v3261 = vadd.f32 %v3213, %v3243
        %v3262 = vadd.f32 %v3214, %v3245
        %v3263 = vadd.f32 %v3215, %v3247
        %3264 = vst.msk [vmem:[%s3183] sm:$0xff] %vm1654, %v3248
        %3265 = vst.msk [vmem:[%s3183 + $0x8] sm:$0xff] %vm1654, %v3249
        %3266 = vst.msk [vmem:[%s3183 + $0x10] sm:$0xff] %vm1654, %v3250
        %3267 = vst.msk [vmem:[%s3183 + $0x18] sm:$0xff] %vm1654, %v3251
        %3268 = vst.msk [vmem:[%s3183 + $0x20] sm:$0xff] %vm1654, %v3252
        %3269 = vst.msk [vmem:[%s3183 + $0x28] sm:$0xff] %vm1654, %v3253
        %3270 = vst.msk [vmem:[%s3183 + $0x30] sm:$0xff] %vm1654, %v3254
        %3271 = vst.msk [vmem:[%s3183 + $0x38] sm:$0xff] %vm1654, %v3255
        %3272 = vst.msk [vmem:[%s3183 + $0x40] sm:$0xff] %vm1654, %v3256
        %3273 = vst.msk [vmem:[%s3183 + $0x48] sm:$0xff] %vm1654, %v3257
        %3274 = vst.msk [vmem:[%s3183 + $0x50] sm:$0xff] %vm1654, %v3258
        %3275 = vst.msk [vmem:[%s3183 + $0x58] sm:$0xff] %vm1654, %v3259
        %3276 = vst.msk [vmem:[%s3183 + $0x60] sm:$0xff] %vm1654, %v3260
        %3277 = vst.msk [vmem:[%s3183 + $0x68] sm:$0xff] %vm1654, %v3261
        %3278 = vst.msk [vmem:[%s3183 + $0x70] sm:$0xff] %vm1654, %v3262
        %3279 = vst.msk [vmem:[%s3183 + $0x78] sm:$0xff] %vm1654, %v3263
        %s3280 = scalar_lea.vmem [#allocation5], 256
        %v3281 = vld [vmem:[%s3280] sm:$0xff]
        %v3282 = vld [vmem:[%s3280 + $0x8] sm:$0xff]
        %v3283 = vld [vmem:[%s3280 + $0x10] sm:$0xff]
        %v3284 = vld [vmem:[%s3280 + $0x18] sm:$0xff]
        %v3285 = vld [vmem:[%s3280 + $0x20] sm:$0xff]
        %v3286 = vld [vmem:[%s3280 + $0x28] sm:$0xff]
        %v3287 = vld [vmem:[%s3280 + $0x30] sm:$0xff]
        %v3288 = vld [vmem:[%s3280 + $0x38] sm:$0xff]
        %v3289 = vld [vmem:[%s3280 + $0x40] sm:$0xff]
        %v3290 = vld [vmem:[%s3280 + $0x48] sm:$0xff]
        %v3291 = vld [vmem:[%s3280 + $0x50] sm:$0xff]
        %v3292 = vld [vmem:[%s3280 + $0x58] sm:$0xff]
        %v3293 = vld [vmem:[%s3280 + $0x60] sm:$0xff]
        %v3294 = vld [vmem:[%s3280 + $0x68] sm:$0xff]
        %v3295 = vld [vmem:[%s3280 + $0x70] sm:$0xff]
        %v3296 = vld [vmem:[%s3280 + $0x78] sm:$0xff]
        %3298 = vset.pattern.permute.xlu0 0
        %3299 = vperm.xlu0 %3298, %v3024
        %v3300 = vpop.permute.xlu0 %3299
        %3303 = vset.pattern.permute.xlu0 0
        %3304 = vperm.xlu0 %3303, %v3026
        %v3305 = vpop.permute.xlu0 %3304
        %3308 = vset.pattern.permute.xlu0 0
        %3309 = vperm.xlu0 %3308, %v3028
        %v3310 = vpop.permute.xlu0 %3309
        %3313 = vset.pattern.permute.xlu0 0
        %3314 = vperm.xlu0 %3313, %v3030
        %v3315 = vpop.permute.xlu0 %3314
        %3318 = vset.pattern.permute.xlu0 0
        %3319 = vperm.xlu0 %3318, %v3032
        %v3320 = vpop.permute.xlu0 %3319
        %3323 = vset.pattern.permute.xlu0 0
        %3324 = vperm.xlu0 %3323, %v3034
        %v3325 = vpop.permute.xlu0 %3324
        %3328 = vset.pattern.permute.xlu0 0
        %3329 = vperm.xlu0 %3328, %v3036
        %v3330 = vpop.permute.xlu0 %3329
        %3333 = vset.pattern.permute.xlu0 0
        %3334 = vperm.xlu0 %3333, %v3038
        %v3335 = vpop.permute.xlu0 %3334
        %3338 = vset.pattern.permute.xlu0 0
        %3339 = vperm.xlu0 %3338, %v3040
        %v3340 = vpop.permute.xlu0 %3339
        %3343 = vset.pattern.permute.xlu0 0
        %3344 = vperm.xlu0 %3343, %v3042
        %v3345 = vpop.permute.xlu0 %3344
        %3348 = vset.pattern.permute.xlu0 0
        %3349 = vperm.xlu0 %3348, %v3044
        %v3350 = vpop.permute.xlu0 %3349
        %3353 = vset.pattern.permute.xlu0 0
        %3354 = vperm.xlu0 %3353, %v3046
        %v3355 = vpop.permute.xlu0 %3354
        %3358 = vset.pattern.permute.xlu0 0
        %3359 = vperm.xlu0 %3358, %v3048
        %v3360 = vpop.permute.xlu0 %3359
        %3363 = vset.pattern.permute.xlu0 0
        %3364 = vperm.xlu0 %3363, %v3050
        %v3365 = vpop.permute.xlu0 %3364
        %3368 = vset.pattern.permute.xlu0 0
        %3369 = vperm.xlu0 %3368, %v3052
        %v3370 = vpop.permute.xlu0 %3369
        %3373 = vset.pattern.permute.xlu0 0
        %3374 = vperm.xlu0 %3373, %v3054
        %v3375 = vpop.permute.xlu0 %3374
        %v3377 = vmul.f32 %v3300, %v3281
        %v3378 = vmul.f32 %v3305, %v3282
        %v3379 = vmul.f32 %v3310, %v3283
        %v3380 = vmul.f32 %v3315, %v3284
        %v3381 = vmul.f32 %v3320, %v3285
        %v3382 = vmul.f32 %v3325, %v3286
        %v3383 = vmul.f32 %v3330, %v3287
        %v3384 = vmul.f32 %v3335, %v3288
        %v3385 = vmul.f32 %v3340, %v3289
        %v3386 = vmul.f32 %v3345, %v3290
        %v3387 = vmul.f32 %v3350, %v3291
        %v3388 = vmul.f32 %v3355, %v3292
        %v3389 = vmul.f32 %v3360, %v3293
        %v3390 = vmul.f32 %v3365, %v3294
        %v3391 = vmul.f32 %v3370, %v3295
        %v3392 = vmul.f32 %v3375, %v3296
        %3393 = vrot.lane.b32.xlu0 %v1061, 112
        %v3394 = vpop.permute.xlu0 %3393
        %3395 = vrot.lane.b32.xlu0 %v1064, 112
        %v3396 = vpop.permute.xlu0 %3395
        %3397 = vrot.lane.b32.xlu0 %v1067, 112
        %v3398 = vpop.permute.xlu0 %3397
        %3399 = vrot.lane.b32.xlu0 %v1070, 112
        %v3400 = vpop.permute.xlu0 %3399
        %3401 = vrot.lane.b32.xlu0 %v1073, 112
        %v3402 = vpop.permute.xlu0 %3401
        %3403 = vrot.lane.b32.xlu0 %v1076, 112
        %v3404 = vpop.permute.xlu0 %3403
        %3405 = vrot.lane.b32.xlu0 %v1079, 112
        %v3406 = vpop.permute.xlu0 %3405
        %3407 = vrot.lane.b32.xlu0 %v1082, 112
        %v3408 = vpop.permute.xlu0 %3407
        %3409 = vrot.lane.b32.xlu0 %v1085, 112
        %v3410 = vpop.permute.xlu0 %3409
        %3411 = vrot.lane.b32.xlu0 %v1088, 112
        %v3412 = vpop.permute.xlu0 %3411
        %3413 = vrot.lane.b32.xlu0 %v1091, 112
        %v3414 = vpop.permute.xlu0 %3413
        %3415 = vrot.lane.b32.xlu0 %v1094, 112
        %v3416 = vpop.permute.xlu0 %3415
        %3417 = vrot.lane.b32.xlu0 %v1097, 112
        %v3418 = vpop.permute.xlu0 %3417
        %3419 = vrot.lane.b32.xlu0 %v1100, 112
        %v3420 = vpop.permute.xlu0 %3419
        %3421 = vrot.lane.b32.xlu0 %v1103, 112
        %v3422 = vpop.permute.xlu0 %3421
        %3423 = vrot.lane.b32.xlu0 %v1106, 112
        %v3424 = vpop.permute.xlu0 %3423
        %3441 = vmatpush.msra.mxu0 %v3424
        %3442 = vmatpush.msra.mxu0 %v3422
        %3443 = vmatpush.msra.mxu0 %v3420
        %3444 = vmatpush.msra.mxu0 %v3418
        %3445 = vmatpush.msra.mxu0 %v3416
        %3446 = vmatpush.msra.mxu0 %v3414
        %3447 = vmatpush.msra.mxu0 %v3412
        %3448 = vmatpush.msra.mxu0 %v3410
        %3449 = vmatpush.msra.mxu0 %v3408
        %3450 = vmatpush.msra.mxu0 %v3406
        %3451 = vmatpush.msra.mxu0 %v3404
        %3452 = vmatpush.msra.mxu0 %v3402
        %3453 = vmatpush.msra.mxu0 %v3400
        %3454 = vmatpush.msra.mxu0 %v3398
        %3455 = vmatpush.msra.mxu0 %v3396
        %3456 = vmatpush.msra.mxu0 %v3394
        %3457 = vmatmul.f32.gmra.mxu0 %v3152
        %v3458 = vpop.f32.mrf.mxu0
        %v3459 = vadd.f32 0.0, %v3458
        %3460 = vmatmul.f32.gmra.mxu0 %v3154
        %v3461 = vpop.f32.mrf.mxu0
        %v3462 = vadd.f32 0.0, %v3461
        %3463 = vmatmul.f32.gmra.mxu0 %v3156
        %v3464 = vpop.f32.mrf.mxu0
        %v3465 = vadd.f32 0.0, %v3464
        %3466 = vmatmul.f32.gmra.mxu0 %v3158
        %v3467 = vpop.f32.mrf.mxu0
        %v3468 = vadd.f32 0.0, %v3467
        %3469 = vmatmul.f32.gmra.mxu0 %v3160
        %v3470 = vpop.f32.mrf.mxu0
        %v3471 = vadd.f32 0.0, %v3470
        %3472 = vmatmul.f32.gmra.mxu0 %v3162
        %v3473 = vpop.f32.mrf.mxu0
        %v3474 = vadd.f32 0.0, %v3473
        %3475 = vmatmul.f32.gmra.mxu0 %v3164
        %v3476 = vpop.f32.mrf.mxu0
        %v3477 = vadd.f32 0.0, %v3476
        %3478 = vmatmul.f32.gmra.mxu0 %v3166
        %v3479 = vpop.f32.mrf.mxu0
        %v3480 = vadd.f32 0.0, %v3479
        %3481 = vmatmul.f32.gmra.mxu0 %v3168
        %v3482 = vpop.f32.mrf.mxu0
        %v3483 = vadd.f32 0.0, %v3482
        %3484 = vmatmul.f32.gmra.mxu0 %v3170
        %v3485 = vpop.f32.mrf.mxu0
        %v3486 = vadd.f32 0.0, %v3485
        %3487 = vmatmul.f32.gmra.mxu0 %v3172
        %v3488 = vpop.f32.mrf.mxu0
        %v3489 = vadd.f32 0.0, %v3488
        %3490 = vmatmul.f32.gmra.mxu0 %v3174
        %v3491 = vpop.f32.mrf.mxu0
        %v3492 = vadd.f32 0.0, %v3491
        %3493 = vmatmul.f32.gmra.mxu0 %v3176
        %v3494 = vpop.f32.mrf.mxu0
        %v3495 = vadd.f32 0.0, %v3494
        %3496 = vmatmul.f32.gmra.mxu0 %v3178
        %v3497 = vpop.f32.mrf.mxu0
        %v3498 = vadd.f32 0.0, %v3497
        %3499 = vmatmul.f32.gmra.mxu0 %v3180
        %v3500 = vpop.f32.mrf.mxu0
        %v3501 = vadd.f32 0.0, %v3500
        %3502 = vmatmul.f32.gmra.mxu0 %v3182
        %v3503 = vpop.f32.mrf.mxu0
        %v3504 = vadd.f32 0.0, %v3503
        %3505 = vdwg.mxu0
        %v3506 = vadd.f32 %v3377, %v3459
        %v3507 = vadd.f32 %v3378, %v3462
        %v3508 = vadd.f32 %v3379, %v3465
        %v3509 = vadd.f32 %v3380, %v3468
        %v3510 = vadd.f32 %v3381, %v3471
        %v3511 = vadd.f32 %v3382, %v3474
        %v3512 = vadd.f32 %v3383, %v3477
        %v3513 = vadd.f32 %v3384, %v3480
        %v3514 = vadd.f32 %v3385, %v3483
        %v3515 = vadd.f32 %v3386, %v3486
        %v3516 = vadd.f32 %v3387, %v3489
        %v3517 = vadd.f32 %v3388, %v3492
        %v3518 = vadd.f32 %v3389, %v3495
        %v3519 = vadd.f32 %v3390, %v3498
        %v3520 = vadd.f32 %v3391, %v3501
        %v3521 = vadd.f32 %v3392, %v3504
        %3522 = vst.msk [vmem:[%s3280] sm:$0xff] %vm1156, %v3506
        %3523 = vst.msk [vmem:[%s3280 + $0x8] sm:$0xff] %vm1156, %v3507
        %3524 = vst.msk [vmem:[%s3280 + $0x10] sm:$0xff] %vm1156, %v3508
        %3525 = vst.msk [vmem:[%s3280 + $0x18] sm:$0xff] %vm1156, %v3509
        %3526 = vst.msk [vmem:[%s3280 + $0x20] sm:$0xff] %vm1156, %v3510
        %3527 = vst.msk [vmem:[%s3280 + $0x28] sm:$0xff] %vm1156, %v3511
        %3528 = vst.msk [vmem:[%s3280 + $0x30] sm:$0xff] %vm1156, %v3512
        %3529 = vst.msk [vmem:[%s3280 + $0x38] sm:$0xff] %vm1156, %v3513
        %3530 = vst.msk [vmem:[%s3280 + $0x40] sm:$0xff] %vm1156, %v3514
        %3531 = vst.msk [vmem:[%s3280 + $0x48] sm:$0xff] %vm1156, %v3515
        %3532 = vst.msk [vmem:[%s3280 + $0x50] sm:$0xff] %vm1156, %v3516
        %3533 = vst.msk [vmem:[%s3280 + $0x58] sm:$0xff] %vm1156, %v3517
        %3534 = vst.msk [vmem:[%s3280 + $0x60] sm:$0xff] %vm1156, %v3518
        %3535 = vst.msk [vmem:[%s3280 + $0x68] sm:$0xff] %vm1156, %v3519
        %3536 = vst.msk [vmem:[%s3280 + $0x70] sm:$0xff] %vm1156, %v3520
        %3537 = vst.msk [vmem:[%s3280 + $0x78] sm:$0xff] %vm1156, %v3521
        %3538 = vst.msk [vmem:[%s2942] sm:$0xff] %vm1654, %v2991
        %3539 = vst.msk [vmem:[%s2942 + $0x8] sm:$0xff] %vm1654, %v2992
        %3540 = vst.msk [vmem:[%s2942 + $0x10] sm:$0xff] %vm1654, %v2993
        %3541 = vst.msk [vmem:[%s2942 + $0x18] sm:$0xff] %vm1654, %v2994
        %3542 = vst.msk [vmem:[%s2942 + $0x20] sm:$0xff] %vm1654, %v2995
        %3543 = vst.msk [vmem:[%s2942 + $0x28] sm:$0xff] %vm1654, %v2996
        %3544 = vst.msk [vmem:[%s2942 + $0x30] sm:$0xff] %vm1654, %v2997
        %3545 = vst.msk [vmem:[%s2942 + $0x38] sm:$0xff] %vm1654, %v2998
        %3546 = vst.msk [vmem:[%s2942 + $0x40] sm:$0xff] %vm1654, %v2999
        %3547 = vst.msk [vmem:[%s2942 + $0x48] sm:$0xff] %vm1654, %v3000
        %3548 = vst.msk [vmem:[%s2942 + $0x50] sm:$0xff] %vm1654, %v3001
        %3549 = vst.msk [vmem:[%s2942 + $0x58] sm:$0xff] %vm1654, %v3002
        %3550 = vst.msk [vmem:[%s2942 + $0x60] sm:$0xff] %vm1654, %v3003
        %3551 = vst.msk [vmem:[%s2942 + $0x68] sm:$0xff] %vm1654, %v3004
        %3552 = vst.msk [vmem:[%s2942 + $0x70] sm:$0xff] %vm1654, %v3005
        %3553 = vst.msk [vmem:[%s2942 + $0x78] sm:$0xff] %vm1654, %v3006
        %3554 = vrot.lane.b32.xlu0 %v1140, 104
        %v3555 = vpop.permute.xlu0 %3554
        %3556 = vrot.lane.b32.xlu0 %v1141, 104
        %v3557 = vpop.permute.xlu0 %3556
        %3558 = vrot.lane.b32.xlu0 %v1142, 104
        %v3559 = vpop.permute.xlu0 %3558
        %3560 = vrot.lane.b32.xlu0 %v1143, 104
        %v3561 = vpop.permute.xlu0 %3560
        %3562 = vrot.lane.b32.xlu0 %v1144, 104
        %v3563 = vpop.permute.xlu0 %3562
        %3564 = vrot.lane.b32.xlu0 %v1145, 104
        %v3565 = vpop.permute.xlu0 %3564
        %3566 = vrot.lane.b32.xlu0 %v1146, 104
        %v3567 = vpop.permute.xlu0 %3566
        %3568 = vrot.lane.b32.xlu0 %v1147, 104
        %v3569 = vpop.permute.xlu0 %3568
        %3570 = vrot.lane.b32.xlu0 %v1148, 104
        %v3571 = vpop.permute.xlu0 %3570
        %3572 = vrot.lane.b32.xlu0 %v1149, 104
        %v3573 = vpop.permute.xlu0 %3572
        %3574 = vrot.lane.b32.xlu0 %v1150, 104
        %v3575 = vpop.permute.xlu0 %3574
        %3576 = vrot.lane.b32.xlu0 %v1151, 104
        %v3577 = vpop.permute.xlu0 %3576
        %3578 = vrot.lane.b32.xlu0 %v1152, 104
        %v3579 = vpop.permute.xlu0 %3578
        %3580 = vrot.lane.b32.xlu0 %v1153, 104
        %v3581 = vpop.permute.xlu0 %3580
        %3582 = vrot.lane.b32.xlu0 %v1154, 104
        %v3583 = vpop.permute.xlu0 %3582
        %3584 = vrot.lane.b32.xlu0 %v1155, 104
        %v3585 = vpop.permute.xlu0 %3584
        %3586 = vrot.lane.b32.xlu0 %v992, 104
        %v3587 = vpop.permute.xlu0 %3586
        %3588 = vrot.lane.b32.xlu0 %v995, 104
        %v3589 = vpop.permute.xlu0 %3588
        %3590 = vrot.lane.b32.xlu0 %v998, 104
        %v3591 = vpop.permute.xlu0 %3590
        %3592 = vrot.lane.b32.xlu0 %v1001, 104
        %v3593 = vpop.permute.xlu0 %3592
        %3594 = vrot.lane.b32.xlu0 %v1004, 104
        %v3595 = vpop.permute.xlu0 %3594
        %3596 = vrot.lane.b32.xlu0 %v1007, 104
        %v3597 = vpop.permute.xlu0 %3596
        %3598 = vrot.lane.b32.xlu0 %v1010, 104
        %v3599 = vpop.permute.xlu0 %3598
        %3600 = vrot.lane.b32.xlu0 %v1013, 104
        %v3601 = vpop.permute.xlu0 %3600
        %3602 = vrot.lane.b32.xlu0 %v1016, 104
        %v3603 = vpop.permute.xlu0 %3602
        %3604 = vrot.lane.b32.xlu0 %v1019, 104
        %v3605 = vpop.permute.xlu0 %3604
        %3606 = vrot.lane.b32.xlu0 %v1022, 104
        %v3607 = vpop.permute.xlu0 %3606
        %3608 = vrot.lane.b32.xlu0 %v1025, 104
        %v3609 = vpop.permute.xlu0 %3608
        %3610 = vrot.lane.b32.xlu0 %v1028, 104
        %v3611 = vpop.permute.xlu0 %3610
        %3612 = vrot.lane.b32.xlu0 %v1031, 104
        %v3613 = vpop.permute.xlu0 %3612
        %3614 = vrot.lane.b32.xlu0 %v1034, 104
        %v3615 = vpop.permute.xlu0 %3614
        %3616 = vrot.lane.b32.xlu0 %v1037, 104
        %v3617 = vpop.permute.xlu0 %3616
        %v3618 = vsel %vm1156, %v3555, 0
        %v3620 = vsel %vm1156, %v3557, 0
        %v3622 = vsel %vm1156, %v3559, 0
        %v3624 = vsel %vm1156, %v3561, 0
        %v3626 = vsel %vm1156, %v3563, 0
        %v3628 = vsel %vm1156, %v3565, 0
        %v3630 = vsel %vm1156, %v3567, 0
        %v3632 = vsel %vm1156, %v3569, 0
        %v3634 = vsel %vm1156, %v3571, 0
        %v3636 = vsel %vm1156, %v3573, 0
        %v3638 = vsel %vm1156, %v3575, 0
        %v3640 = vsel %vm1156, %v3577, 0
        %v3642 = vsel %vm1156, %v3579, 0
        %v3644 = vsel %vm1156, %v3581, 0
        %v3646 = vsel %vm1156, %v3583, 0
        %v3648 = vsel %vm1156, %v3585, 0
        %v3650 = vsel %vm1156, %v3587, 0
        %v3652 = vsel %vm1156, %v3589, 0
        %v3654 = vsel %vm1156, %v3591, 0
        %v3656 = vsel %vm1156, %v3593, 0
        %v3658 = vsel %vm1156, %v3595, 0
        %v3660 = vsel %vm1156, %v3597, 0
        %v3662 = vsel %vm1156, %v3599, 0
        %v3664 = vsel %vm1156, %v3601, 0
        %v3666 = vsel %vm1156, %v3603, 0
        %v3668 = vsel %vm1156, %v3605, 0
        %v3670 = vsel %vm1156, %v3607, 0
        %v3672 = vsel %vm1156, %v3609, 0
        %v3674 = vsel %vm1156, %v3611, 0
        %v3676 = vsel %vm1156, %v3613, 0
        %v3678 = vsel %vm1156, %v3615, 0
        %v3680 = vsel %vm1156, %v3617, 0
        %3682 = vmatpush.xpose.msra.mxu0 %v3680
        %3683 = vmatpush.xpose.msra.mxu0 %v3678
        %3684 = vmatpush.xpose.msra.mxu0 %v3676
        %3685 = vmatpush.xpose.msra.mxu0 %v3674
        %3686 = vmatpush.xpose.msra.mxu0 %v3672
        %3687 = vmatpush.xpose.msra.mxu0 %v3670
        %3688 = vmatpush.xpose.msra.mxu0 %v3668
        %3689 = vmatpush.xpose.msra.mxu0 %v3666
        %3690 = vmatpush.xpose.msra.mxu0 %v3664
        %3691 = vmatpush.xpose.msra.mxu0 %v3662
        %3692 = vmatpush.xpose.msra.mxu0 %v3660
        %3693 = vmatpush.xpose.msra.mxu0 %v3658
        %3694 = vmatpush.xpose.msra.mxu0 %v3656
        %3695 = vmatpush.xpose.msra.mxu0 %v3654
        %3696 = vmatpush.xpose.msra.mxu0 %v3652
        %3697 = vmatpush.xpose.msra.mxu0 %v3650
        %3698 = vmatmul.f32.gmra.mxu0 %v3618
        %v3699 = vpop.f32.mrf.mxu0
        %v3700 = vadd.f32 0.0, %v3699
        %3701 = vmatmul.f32.gmra.mxu0 %v3620
        %v3702 = vpop.f32.mrf.mxu0
        %v3703 = vadd.f32 0.0, %v3702
        %3704 = vmatmul.f32.gmra.mxu0 %v3622
        %v3705 = vpop.f32.mrf.mxu0
        %v3706 = vadd.f32 0.0, %v3705
        %3707 = vmatmul.f32.gmra.mxu0 %v3624
        %v3708 = vpop.f32.mrf.mxu0
        %v3709 = vadd.f32 0.0, %v3708
        %3710 = vmatmul.f32.gmra.mxu0 %v3626
        %v3711 = vpop.f32.mrf.mxu0
        %v3712 = vadd.f32 0.0, %v3711
        %3713 = vmatmul.f32.gmra.mxu0 %v3628
        %v3714 = vpop.f32.mrf.mxu0
        %v3715 = vadd.f32 0.0, %v3714
        %3716 = vmatmul.f32.gmra.mxu0 %v3630
        %v3717 = vpop.f32.mrf.mxu0
        %v3718 = vadd.f32 0.0, %v3717
        %3719 = vmatmul.f32.gmra.mxu0 %v3632
        %v3720 = vpop.f32.mrf.mxu0
        %v3721 = vadd.f32 0.0, %v3720
        %3722 = vmatmul.f32.gmra.mxu0 %v3634
        %v3723 = vpop.f32.mrf.mxu0
        %v3724 = vadd.f32 0.0, %v3723
        %3725 = vmatmul.f32.gmra.mxu0 %v3636
        %v3726 = vpop.f32.mrf.mxu0
        %v3727 = vadd.f32 0.0, %v3726
        %3728 = vmatmul.f32.gmra.mxu0 %v3638
        %v3729 = vpop.f32.mrf.mxu0
        %v3730 = vadd.f32 0.0, %v3729
        %3731 = vmatmul.f32.gmra.mxu0 %v3640
        %v3732 = vpop.f32.mrf.mxu0
        %v3733 = vadd.f32 0.0, %v3732
        %3734 = vmatmul.f32.gmra.mxu0 %v3642
        %v3735 = vpop.f32.mrf.mxu0
        %v3736 = vadd.f32 0.0, %v3735
        %3737 = vmatmul.f32.gmra.mxu0 %v3644
        %v3738 = vpop.f32.mrf.mxu0
        %v3739 = vadd.f32 0.0, %v3738
        %3740 = vmatmul.f32.gmra.mxu0 %v3646
        %v3741 = vpop.f32.mrf.mxu0
        %v3742 = vadd.f32 0.0, %v3741
        %3743 = vmatmul.f32.gmra.mxu0 %v3648
        %v3744 = vpop.f32.mrf.mxu0
        %v3745 = vadd.f32 0.0, %v3744
        %3746 = vdwg.mxu0
        %v3747 = vsel %vm1124, %v3700, -9e+15
        %v3748 = vsel %vm1125, %v3703, -9e+15
        %v3749 = vsel %vm1126, %v3706, -9e+15
        %v3750 = vsel %vm1127, %v3709, -9e+15
        %v3751 = vsel %vm1128, %v3712, -9e+15
        %v3752 = vsel %vm1129, %v3715, -9e+15
        %v3753 = vsel %vm1130, %v3718, -9e+15
        %v3754 = vsel %vm1131, %v3721, -9e+15
        %v3755 = vsel %vm1132, %v3724, -9e+15
        %v3756 = vsel %vm1133, %v3727, -9e+15
        %v3757 = vsel %vm1134, %v3730, -9e+15
        %v3758 = vsel %vm1135, %v3733, -9e+15
        %v3759 = vsel %vm1136, %v3736, -9e+15
        %v3760 = vsel %vm1137, %v3739, -9e+15
        %v3761 = vsel %vm1138, %v3742, -9e+15
        %v3762 = vsel %vm1139, %v3745, -9e+15
        %s3763 = scalar_lea.vmem [#allocation3], 384
        %v3764 = vld [vmem:[%s3763] sm:$0xff]
        %v3765 = vld [vmem:[%s3763 + $0x8] sm:$0xff]
        %v3766 = vld [vmem:[%s3763 + $0x10] sm:$0xff]
        %v3767 = vld [vmem:[%s3763 + $0x18] sm:$0xff]
        %v3768 = vld [vmem:[%s3763 + $0x20] sm:$0xff]
        %v3769 = vld [vmem:[%s3763 + $0x28] sm:$0xff]
        %v3770 = vld [vmem:[%s3763 + $0x30] sm:$0xff]
        %v3771 = vld [vmem:[%s3763 + $0x38] sm:$0xff]
        %v3772 = vld [vmem:[%s3763 + $0x40] sm:$0xff]
        %v3773 = vld [vmem:[%s3763 + $0x48] sm:$0xff]
        %v3774 = vld [vmem:[%s3763 + $0x50] sm:$0xff]
        %v3775 = vld [vmem:[%s3763 + $0x58] sm:$0xff]
        %v3776 = vld [vmem:[%s3763 + $0x60] sm:$0xff]
        %v3777 = vld [vmem:[%s3763 + $0x68] sm:$0xff]
        %v3778 = vld [vmem:[%s3763 + $0x70] sm:$0xff]
        %v3779 = vld [vmem:[%s3763 + $0x78] sm:$0xff]
        %3780 = vmax.xlane.f32.xlu0 %v3747
        %v3781 = vpop.xlane.xlu0 %3780
        %3782 = vmax.xlane.f32.xlu0 %v3748
        %v3783 = vpop.xlane.xlu0 %3782
        %3784 = vmax.xlane.f32.xlu0 %v3749
        %v3785 = vpop.xlane.xlu0 %3784
        %3786 = vmax.xlane.f32.xlu0 %v3750
        %v3787 = vpop.xlane.xlu0 %3786
        %3788 = vmax.xlane.f32.xlu0 %v3751
        %v3789 = vpop.xlane.xlu0 %3788
        %3790 = vmax.xlane.f32.xlu0 %v3752
        %v3791 = vpop.xlane.xlu0 %3790
        %3792 = vmax.xlane.f32.xlu0 %v3753
        %v3793 = vpop.xlane.xlu0 %3792
        %3794 = vmax.xlane.f32.xlu0 %v3754
        %v3795 = vpop.xlane.xlu0 %3794
        %3796 = vmax.xlane.f32.xlu0 %v3755
        %v3797 = vpop.xlane.xlu0 %3796
        %3798 = vmax.xlane.f32.xlu0 %v3756
        %v3799 = vpop.xlane.xlu0 %3798
        %3800 = vmax.xlane.f32.xlu0 %v3757
        %v3801 = vpop.xlane.xlu0 %3800
        %3802 = vmax.xlane.f32.xlu0 %v3758
        %v3803 = vpop.xlane.xlu0 %3802
        %3804 = vmax.xlane.f32.xlu0 %v3759
        %v3805 = vpop.xlane.xlu0 %3804
        %3806 = vmax.xlane.f32.xlu0 %v3760
        %v3807 = vpop.xlane.xlu0 %3806
        %3808 = vmax.xlane.f32.xlu0 %v3761
        %v3809 = vpop.xlane.xlu0 %3808
        %3810 = vmax.xlane.f32.xlu0 %v3762
        %v3811 = vpop.xlane.xlu0 %3810
        %v3812 = vmax.f32 %v3764, %v3781
        %v3813 = vmax.f32 %v3765, %v3783
        %v3814 = vmax.f32 %v3766, %v3785
        %v3815 = vmax.f32 %v3767, %v3787
        %v3816 = vmax.f32 %v3768, %v3789
        %v3817 = vmax.f32 %v3769, %v3791
        %v3818 = vmax.f32 %v3770, %v3793
        %v3819 = vmax.f32 %v3771, %v3795
        %v3820 = vmax.f32 %v3772, %v3797
        %v3821 = vmax.f32 %v3773, %v3799
        %v3822 = vmax.f32 %v3774, %v3801
        %v3823 = vmax.f32 %v3775, %v3803
        %v3824 = vmax.f32 %v3776, %v3805
        %v3825 = vmax.f32 %v3777, %v3807
        %v3826 = vmax.f32 %v3778, %v3809
        %v3827 = vmax.f32 %v3779, %v3811
        %v3828 = vsub.f32 %v3764, %v3812
        %v3829 = vsub.f32 %v3765, %v3813
        %v3830 = vsub.f32 %v3766, %v3814
        %v3831 = vsub.f32 %v3767, %v3815
        %v3832 = vsub.f32 %v3768, %v3816
        %v3833 = vsub.f32 %v3769, %v3817
        %v3834 = vsub.f32 %v3770, %v3818
        %v3835 = vsub.f32 %v3771, %v3819
        %v3836 = vsub.f32 %v3772, %v3820
        %v3837 = vsub.f32 %v3773, %v3821
        %v3838 = vsub.f32 %v3774, %v3822
        %v3839 = vsub.f32 %v3775, %v3823
        %v3840 = vsub.f32 %v3776, %v3824
        %v3841 = vsub.f32 %v3777, %v3825
        %v3842 = vsub.f32 %v3778, %v3826
        %v3843 = vsub.f32 %v3779, %v3827
        %v3844 = vmul.f32 %v3828, 1.442695
        %v3845 = vpow.pop %v3844
        %v3846 = vmul.f32 %v3829, 1.442695
        %v3847 = vpow.pop %v3846
        %v3848 = vmul.f32 %v3830, 1.442695
        %v3849 = vpow.pop %v3848
        %v3850 = vmul.f32 %v3831, 1.442695
        %v3851 = vpow.pop %v3850
        %v3852 = vmul.f32 %v3832, 1.442695
        %v3853 = vpow.pop %v3852
        %v3854 = vmul.f32 %v3833, 1.442695
        %v3855 = vpow.pop %v3854
        %v3856 = vmul.f32 %v3834, 1.442695
        %v3857 = vpow.pop %v3856
        %v3858 = vmul.f32 %v3835, 1.442695
        %v3859 = vpow.pop %v3858
        %v3860 = vmul.f32 %v3836, 1.442695
        %v3861 = vpow.pop %v3860
        %v3862 = vmul.f32 %v3837, 1.442695
        %v3863 = vpow.pop %v3862
        %v3864 = vmul.f32 %v3838, 1.442695
        %v3865 = vpow.pop %v3864
        %v3866 = vmul.f32 %v3839, 1.442695
        %v3867 = vpow.pop %v3866
        %v3868 = vmul.f32 %v3840, 1.442695
        %v3869 = vpow.pop %v3868
        %v3870 = vmul.f32 %v3841, 1.442695
        %v3871 = vpow.pop %v3870
        %v3872 = vmul.f32 %v3842, 1.442695
        %v3873 = vpow.pop %v3872
        %v3874 = vmul.f32 %v3843, 1.442695
        %v3875 = vpow.pop %v3874
        %3877 = vset.pattern.permute.xlu0 0
        %3878 = vperm.xlu0 %3877, %v3812
        %v3879 = vpop.permute.xlu0 %3878
        %3882 = vset.pattern.permute.xlu0 0
        %3883 = vperm.xlu0 %3882, %v3813
        %v3884 = vpop.permute.xlu0 %3883
        %3887 = vset.pattern.permute.xlu0 0
        %3888 = vperm.xlu0 %3887, %v3814
        %v3889 = vpop.permute.xlu0 %3888
        %3892 = vset.pattern.permute.xlu0 0
        %3893 = vperm.xlu0 %3892, %v3815
        %v3894 = vpop.permute.xlu0 %3893
        %3897 = vset.pattern.permute.xlu0 0
        %3898 = vperm.xlu0 %3897, %v3816
        %v3899 = vpop.permute.xlu0 %3898
        %3902 = vset.pattern.permute.xlu0 0
        %3903 = vperm.xlu0 %3902, %v3817
        %v3904 = vpop.permute.xlu0 %3903
        %3907 = vset.pattern.permute.xlu0 0
        %3908 = vperm.xlu0 %3907, %v3818
        %v3909 = vpop.permute.xlu0 %3908
        %3912 = vset.pattern.permute.xlu0 0
        %3913 = vperm.xlu0 %3912, %v3819
        %v3914 = vpop.permute.xlu0 %3913
        %3917 = vset.pattern.permute.xlu0 0
        %3918 = vperm.xlu0 %3917, %v3820
        %v3919 = vpop.permute.xlu0 %3918
        %3922 = vset.pattern.permute.xlu0 0
        %3923 = vperm.xlu0 %3922, %v3821
        %v3924 = vpop.permute.xlu0 %3923
        %3927 = vset.pattern.permute.xlu0 0
        %3928 = vperm.xlu0 %3927, %v3822
        %v3929 = vpop.permute.xlu0 %3928
        %3932 = vset.pattern.permute.xlu0 0
        %3933 = vperm.xlu0 %3932, %v3823
        %v3934 = vpop.permute.xlu0 %3933
        %3937 = vset.pattern.permute.xlu0 0
        %3938 = vperm.xlu0 %3937, %v3824
        %v3939 = vpop.permute.xlu0 %3938
        %3942 = vset.pattern.permute.xlu0 0
        %3943 = vperm.xlu0 %3942, %v3825
        %v3944 = vpop.permute.xlu0 %3943
        %3947 = vset.pattern.permute.xlu0 0
        %3948 = vperm.xlu0 %3947, %v3826
        %v3949 = vpop.permute.xlu0 %3948
        %3952 = vset.pattern.permute.xlu0 0
        %3953 = vperm.xlu0 %3952, %v3827
        %v3954 = vpop.permute.xlu0 %3953
        %v3956 = vsub.f32 %v3747, %v3879
        %v3957 = vsub.f32 %v3748, %v3884
        %v3958 = vsub.f32 %v3749, %v3889
        %v3959 = vsub.f32 %v3750, %v3894
        %v3960 = vsub.f32 %v3751, %v3899
        %v3961 = vsub.f32 %v3752, %v3904
        %v3962 = vsub.f32 %v3753, %v3909
        %v3963 = vsub.f32 %v3754, %v3914
        %v3964 = vsub.f32 %v3755, %v3919
        %v3965 = vsub.f32 %v3756, %v3924
        %v3966 = vsub.f32 %v3757, %v3929
        %v3967 = vsub.f32 %v3758, %v3934
        %v3968 = vsub.f32 %v3759, %v3939
        %v3969 = vsub.f32 %v3760, %v3944
        %v3970 = vsub.f32 %v3761, %v3949
        %v3971 = vsub.f32 %v3762, %v3954
        %v3972 = vmul.f32 %v3956, 1.442695
        %v3973 = vpow.pop %v3972
        %v3974 = vmul.f32 %v3957, 1.442695
        %v3975 = vpow.pop %v3974
        %v3976 = vmul.f32 %v3958, 1.442695
        %v3977 = vpow.pop %v3976
        %v3978 = vmul.f32 %v3959, 1.442695
        %v3979 = vpow.pop %v3978
        %v3980 = vmul.f32 %v3960, 1.442695
        %v3981 = vpow.pop %v3980
        %v3982 = vmul.f32 %v3961, 1.442695
        %v3983 = vpow.pop %v3982
        %v3984 = vmul.f32 %v3962, 1.442695
        %v3985 = vpow.pop %v3984
        %v3986 = vmul.f32 %v3963, 1.442695
        %v3987 = vpow.pop %v3986
        %v3988 = vmul.f32 %v3964, 1.442695
        %v3989 = vpow.pop %v3988
        %v3990 = vmul.f32 %v3965, 1.442695
        %v3991 = vpow.pop %v3990
        %v3992 = vmul.f32 %v3966, 1.442695
        %v3993 = vpow.pop %v3992
        %v3994 = vmul.f32 %v3967, 1.442695
        %v3995 = vpow.pop %v3994
        %v3996 = vmul.f32 %v3968, 1.442695
        %v3997 = vpow.pop %v3996
        %v3998 = vmul.f32 %v3969, 1.442695
        %v3999 = vpow.pop %v3998
        %v4000 = vmul.f32 %v3970, 1.442695
        %v4001 = vpow.pop %v4000
        %v4002 = vmul.f32 %v3971, 1.442695
        %v4003 = vpow.pop %v4002
        %s4004 = scalar_lea.vmem [#allocation4], 384
        %v4005 = vld [vmem:[%s4004] sm:$0xff]
        %v4006 = vld [vmem:[%s4004 + $0x8] sm:$0xff]
        %v4007 = vld [vmem:[%s4004 + $0x10] sm:$0xff]
        %v4008 = vld [vmem:[%s4004 + $0x18] sm:$0xff]
        %v4009 = vld [vmem:[%s4004 + $0x20] sm:$0xff]
        %v4010 = vld [vmem:[%s4004 + $0x28] sm:$0xff]
        %v4011 = vld [vmem:[%s4004 + $0x30] sm:$0xff]
        %v4012 = vld [vmem:[%s4004 + $0x38] sm:$0xff]
        %v4013 = vld [vmem:[%s4004 + $0x40] sm:$0xff]
        %v4014 = vld [vmem:[%s4004 + $0x48] sm:$0xff]
        %v4015 = vld [vmem:[%s4004 + $0x50] sm:$0xff]
        %v4016 = vld [vmem:[%s4004 + $0x58] sm:$0xff]
        %v4017 = vld [vmem:[%s4004 + $0x60] sm:$0xff]
        %v4018 = vld [vmem:[%s4004 + $0x68] sm:$0xff]
        %v4019 = vld [vmem:[%s4004 + $0x70] sm:$0xff]
        %v4020 = vld [vmem:[%s4004 + $0x78] sm:$0xff]
        %v4021 = vmul.f32 %v3845, %v4005
        %v4022 = vmul.f32 %v3847, %v4006
        %v4023 = vmul.f32 %v3849, %v4007
        %v4024 = vmul.f32 %v3851, %v4008
        %v4025 = vmul.f32 %v3853, %v4009
        %v4026 = vmul.f32 %v3855, %v4010
        %v4027 = vmul.f32 %v3857, %v4011
        %v4028 = vmul.f32 %v3859, %v4012
        %v4029 = vmul.f32 %v3861, %v4013
        %v4030 = vmul.f32 %v3863, %v4014
        %v4031 = vmul.f32 %v3865, %v4015
        %v4032 = vmul.f32 %v3867, %v4016
        %v4033 = vmul.f32 %v3869, %v4017
        %v4034 = vmul.f32 %v3871, %v4018
        %v4035 = vmul.f32 %v3873, %v4019
        %v4036 = vmul.f32 %v3875, %v4020
        %4037 = vadd.xlane.f32.xlu0 %v3973
        %v4038 = vpop.xlane.xlu0 %4037
        %4039 = vadd.xlane.f32.xlu0 %v3975
        %v4040 = vpop.xlane.xlu0 %4039
        %4041 = vadd.xlane.f32.xlu0 %v3977
        %v4042 = vpop.xlane.xlu0 %4041
        %4043 = vadd.xlane.f32.xlu0 %v3979
        %v4044 = vpop.xlane.xlu0 %4043
        %4045 = vadd.xlane.f32.xlu0 %v3981
        %v4046 = vpop.xlane.xlu0 %4045
        %4047 = vadd.xlane.f32.xlu0 %v3983
        %v4048 = vpop.xlane.xlu0 %4047
        %4049 = vadd.xlane.f32.xlu0 %v3985
        %v4050 = vpop.xlane.xlu0 %4049
        %4051 = vadd.xlane.f32.xlu0 %v3987
        %v4052 = vpop.xlane.xlu0 %4051
        %4053 = vadd.xlane.f32.xlu0 %v3989
        %v4054 = vpop.xlane.xlu0 %4053
        %4055 = vadd.xlane.f32.xlu0 %v3991
        %v4056 = vpop.xlane.xlu0 %4055
        %4057 = vadd.xlane.f32.xlu0 %v3993
        %v4058 = vpop.xlane.xlu0 %4057
        %4059 = vadd.xlane.f32.xlu0 %v3995
        %v4060 = vpop.xlane.xlu0 %4059
        %4061 = vadd.xlane.f32.xlu0 %v3997
        %v4062 = vpop.xlane.xlu0 %4061
        %4063 = vadd.xlane.f32.xlu0 %v3999
        %v4064 = vpop.xlane.xlu0 %4063
        %4065 = vadd.xlane.f32.xlu0 %v4001
        %v4066 = vpop.xlane.xlu0 %4065
        %4067 = vadd.xlane.f32.xlu0 %v4003
        %v4068 = vpop.xlane.xlu0 %4067
        %v4069 = vadd.f32 %v4021, %v4038
        %v4070 = vadd.f32 %v4022, %v4040
        %v4071 = vadd.f32 %v4023, %v4042
        %v4072 = vadd.f32 %v4024, %v4044
        %v4073 = vadd.f32 %v4025, %v4046
        %v4074 = vadd.f32 %v4026, %v4048
        %v4075 = vadd.f32 %v4027, %v4050
        %v4076 = vadd.f32 %v4028, %v4052
        %v4077 = vadd.f32 %v4029, %v4054
        %v4078 = vadd.f32 %v4030, %v4056
        %v4079 = vadd.f32 %v4031, %v4058
        %v4080 = vadd.f32 %v4032, %v4060
        %v4081 = vadd.f32 %v4033, %v4062
        %v4082 = vadd.f32 %v4034, %v4064
        %v4083 = vadd.f32 %v4035, %v4066
        %v4084 = vadd.f32 %v4036, %v4068
        %4085 = vst.msk [vmem:[%s4004] sm:$0xff] %vm1654, %v4069
        %4086 = vst.msk [vmem:[%s4004 + $0x8] sm:$0xff] %vm1654, %v4070
        %4087 = vst.msk [vmem:[%s4004 + $0x10] sm:$0xff] %vm1654, %v4071
        %4088 = vst.msk [vmem:[%s4004 + $0x18] sm:$0xff] %vm1654, %v4072
        %4089 = vst.msk [vmem:[%s4004 + $0x20] sm:$0xff] %vm1654, %v4073
        %4090 = vst.msk [vmem:[%s4004 + $0x28] sm:$0xff] %vm1654, %v4074
        %4091 = vst.msk [vmem:[%s4004 + $0x30] sm:$0xff] %vm1654, %v4075
        %4092 = vst.msk [vmem:[%s4004 + $0x38] sm:$0xff] %vm1654, %v4076
        %4093 = vst.msk [vmem:[%s4004 + $0x40] sm:$0xff] %vm1654, %v4077
        %4094 = vst.msk [vmem:[%s4004 + $0x48] sm:$0xff] %vm1654, %v4078
        %4095 = vst.msk [vmem:[%s4004 + $0x50] sm:$0xff] %vm1654, %v4079
        %4096 = vst.msk [vmem:[%s4004 + $0x58] sm:$0xff] %vm1654, %v4080
        %4097 = vst.msk [vmem:[%s4004 + $0x60] sm:$0xff] %vm1654, %v4081
        %4098 = vst.msk [vmem:[%s4004 + $0x68] sm:$0xff] %vm1654, %v4082
        %4099 = vst.msk [vmem:[%s4004 + $0x70] sm:$0xff] %vm1654, %v4083
        %4100 = vst.msk [vmem:[%s4004 + $0x78] sm:$0xff] %vm1654, %v4084
        %s4101 = scalar_lea.vmem [#allocation5], 384
        %v4102 = vld [vmem:[%s4101] sm:$0xff]
        %v4103 = vld [vmem:[%s4101 + $0x8] sm:$0xff]
        %v4104 = vld [vmem:[%s4101 + $0x10] sm:$0xff]
        %v4105 = vld [vmem:[%s4101 + $0x18] sm:$0xff]
        %v4106 = vld [vmem:[%s4101 + $0x20] sm:$0xff]
        %v4107 = vld [vmem:[%s4101 + $0x28] sm:$0xff]
        %v4108 = vld [vmem:[%s4101 + $0x30] sm:$0xff]
        %v4109 = vld [vmem:[%s4101 + $0x38] sm:$0xff]
        %v4110 = vld [vmem:[%s4101 + $0x40] sm:$0xff]
        %v4111 = vld [vmem:[%s4101 + $0x48] sm:$0xff]
        %v4112 = vld [vmem:[%s4101 + $0x50] sm:$0xff]
        %v4113 = vld [vmem:[%s4101 + $0x58] sm:$0xff]
        %v4114 = vld [vmem:[%s4101 + $0x60] sm:$0xff]
        %v4115 = vld [vmem:[%s4101 + $0x68] sm:$0xff]
        %v4116 = vld [vmem:[%s4101 + $0x70] sm:$0xff]
        %v4117 = vld [vmem:[%s4101 + $0x78] sm:$0xff]
        %4119 = vset.pattern.permute.xlu0 0
        %4120 = vperm.xlu0 %4119, %v3845
        %v4121 = vpop.permute.xlu0 %4120
        %4124 = vset.pattern.permute.xlu0 0
        %4125 = vperm.xlu0 %4124, %v3847
        %v4126 = vpop.permute.xlu0 %4125
        %4129 = vset.pattern.permute.xlu0 0
        %4130 = vperm.xlu0 %4129, %v3849
        %v4131 = vpop.permute.xlu0 %4130
        %4134 = vset.pattern.permute.xlu0 0
        %4135 = vperm.xlu0 %4134, %v3851
        %v4136 = vpop.permute.xlu0 %4135
        %4139 = vset.pattern.permute.xlu0 0
        %4140 = vperm.xlu0 %4139, %v3853
        %v4141 = vpop.permute.xlu0 %4140
        %4144 = vset.pattern.permute.xlu0 0
        %4145 = vperm.xlu0 %4144, %v3855
        %v4146 = vpop.permute.xlu0 %4145
        %4149 = vset.pattern.permute.xlu0 0
        %4150 = vperm.xlu0 %4149, %v3857
        %v4151 = vpop.permute.xlu0 %4150
        %4154 = vset.pattern.permute.xlu0 0
        %4155 = vperm.xlu0 %4154, %v3859
        %v4156 = vpop.permute.xlu0 %4155
        %4159 = vset.pattern.permute.xlu0 0
        %4160 = vperm.xlu0 %4159, %v3861
        %v4161 = vpop.permute.xlu0 %4160
        %4164 = vset.pattern.permute.xlu0 0
        %4165 = vperm.xlu0 %4164, %v3863
        %v4166 = vpop.permute.xlu0 %4165
        %4169 = vset.pattern.permute.xlu0 0
        %4170 = vperm.xlu0 %4169, %v3865
        %v4171 = vpop.permute.xlu0 %4170
        %4174 = vset.pattern.permute.xlu0 0
        %4175 = vperm.xlu0 %4174, %v3867
        %v4176 = vpop.permute.xlu0 %4175
        %4179 = vset.pattern.permute.xlu0 0
        %4180 = vperm.xlu0 %4179, %v3869
        %v4181 = vpop.permute.xlu0 %4180
        %4184 = vset.pattern.permute.xlu0 0
        %4185 = vperm.xlu0 %4184, %v3871
        %v4186 = vpop.permute.xlu0 %4185
        %4189 = vset.pattern.permute.xlu0 0
        %4190 = vperm.xlu0 %4189, %v3873
        %v4191 = vpop.permute.xlu0 %4190
        %4194 = vset.pattern.permute.xlu0 0
        %4195 = vperm.xlu0 %4194, %v3875
        %v4196 = vpop.permute.xlu0 %4195
        %v4198 = vmul.f32 %v4121, %v4102
        %v4199 = vmul.f32 %v4126, %v4103
        %v4200 = vmul.f32 %v4131, %v4104
        %v4201 = vmul.f32 %v4136, %v4105
        %v4202 = vmul.f32 %v4141, %v4106
        %v4203 = vmul.f32 %v4146, %v4107
        %v4204 = vmul.f32 %v4151, %v4108
        %v4205 = vmul.f32 %v4156, %v4109
        %v4206 = vmul.f32 %v4161, %v4110
        %v4207 = vmul.f32 %v4166, %v4111
        %v4208 = vmul.f32 %v4171, %v4112
        %v4209 = vmul.f32 %v4176, %v4113
        %v4210 = vmul.f32 %v4181, %v4114
        %v4211 = vmul.f32 %v4186, %v4115
        %v4212 = vmul.f32 %v4191, %v4116
        %v4213 = vmul.f32 %v4196, %v4117
        %4214 = vrot.lane.b32.xlu0 %v1061, 104
        %v4215 = vpop.permute.xlu0 %4214
        %4216 = vrot.lane.b32.xlu0 %v1064, 104
        %v4217 = vpop.permute.xlu0 %4216
        %4218 = vrot.lane.b32.xlu0 %v1067, 104
        %v4219 = vpop.permute.xlu0 %4218
        %4220 = vrot.lane.b32.xlu0 %v1070, 104
        %v4221 = vpop.permute.xlu0 %4220
        %4222 = vrot.lane.b32.xlu0 %v1073, 104
        %v4223 = vpop.permute.xlu0 %4222
        %4224 = vrot.lane.b32.xlu0 %v1076, 104
        %v4225 = vpop.permute.xlu0 %4224
        %4226 = vrot.lane.b32.xlu0 %v1079, 104
        %v4227 = vpop.permute.xlu0 %4226
        %4228 = vrot.lane.b32.xlu0 %v1082, 104
        %v4229 = vpop.permute.xlu0 %4228
        %4230 = vrot.lane.b32.xlu0 %v1085, 104
        %v4231 = vpop.permute.xlu0 %4230
        %4232 = vrot.lane.b32.xlu0 %v1088, 104
        %v4233 = vpop.permute.xlu0 %4232
        %4234 = vrot.lane.b32.xlu0 %v1091, 104
        %v4235 = vpop.permute.xlu0 %4234
        %4236 = vrot.lane.b32.xlu0 %v1094, 104
        %v4237 = vpop.permute.xlu0 %4236
        %4238 = vrot.lane.b32.xlu0 %v1097, 104
        %v4239 = vpop.permute.xlu0 %4238
        %4240 = vrot.lane.b32.xlu0 %v1100, 104
        %v4241 = vpop.permute.xlu0 %4240
        %4242 = vrot.lane.b32.xlu0 %v1103, 104
        %v4243 = vpop.permute.xlu0 %4242
        %4244 = vrot.lane.b32.xlu0 %v1106, 104
        %v4245 = vpop.permute.xlu0 %4244
        %4262 = vmatpush.msra.mxu0 %v4245
        %4263 = vmatpush.msra.mxu0 %v4243
        %4264 = vmatpush.msra.mxu0 %v4241
        %4265 = vmatpush.msra.mxu0 %v4239
        %4266 = vmatpush.msra.mxu0 %v4237
        %4267 = vmatpush.msra.mxu0 %v4235
        %4268 = vmatpush.msra.mxu0 %v4233
        %4269 = vmatpush.msra.mxu0 %v4231
        %4270 = vmatpush.msra.mxu0 %v4229
        %4271 = vmatpush.msra.mxu0 %v4227
        %4272 = vmatpush.msra.mxu0 %v4225
        %4273 = vmatpush.msra.mxu0 %v4223
        %4274 = vmatpush.msra.mxu0 %v4221
        %4275 = vmatpush.msra.mxu0 %v4219
        %4276 = vmatpush.msra.mxu0 %v4217
        %4277 = vmatpush.msra.mxu0 %v4215
        %4278 = vmatmul.f32.gmra.mxu0 %v3973
        %v4279 = vpop.f32.mrf.mxu0
        %v4280 = vadd.f32 0.0, %v4279
        %4281 = vmatmul.f32.gmra.mxu0 %v3975
        %v4282 = vpop.f32.mrf.mxu0
        %v4283 = vadd.f32 0.0, %v4282
        %4284 = vmatmul.f32.gmra.mxu0 %v3977
        %v4285 = vpop.f32.mrf.mxu0
        %v4286 = vadd.f32 0.0, %v4285
        %4287 = vmatmul.f32.gmra.mxu0 %v3979
        %v4288 = vpop.f32.mrf.mxu0
        %v4289 = vadd.f32 0.0, %v4288
        %4290 = vmatmul.f32.gmra.mxu0 %v3981
        %v4291 = vpop.f32.mrf.mxu0
        %v4292 = vadd.f32 0.0, %v4291
        %4293 = vmatmul.f32.gmra.mxu0 %v3983
        %v4294 = vpop.f32.mrf.mxu0
        %v4295 = vadd.f32 0.0, %v4294
        %4296 = vmatmul.f32.gmra.mxu0 %v3985
        %v4297 = vpop.f32.mrf.mxu0
        %v4298 = vadd.f32 0.0, %v4297
        %4299 = vmatmul.f32.gmra.mxu0 %v3987
        %v4300 = vpop.f32.mrf.mxu0
        %v4301 = vadd.f32 0.0, %v4300
        %4302 = vmatmul.f32.gmra.mxu0 %v3989
        %v4303 = vpop.f32.mrf.mxu0
        %v4304 = vadd.f32 0.0, %v4303
        %4305 = vmatmul.f32.gmra.mxu0 %v3991
        %v4306 = vpop.f32.mrf.mxu0
        %v4307 = vadd.f32 0.0, %v4306
        %4308 = vmatmul.f32.gmra.mxu0 %v3993
        %v4309 = vpop.f32.mrf.mxu0
        %v4310 = vadd.f32 0.0, %v4309
        %4311 = vmatmul.f32.gmra.mxu0 %v3995
        %v4312 = vpop.f32.mrf.mxu0
        %v4313 = vadd.f32 0.0, %v4312
        %4314 = vmatmul.f32.gmra.mxu0 %v3997
        %v4315 = vpop.f32.mrf.mxu0
        %v4316 = vadd.f32 0.0, %v4315
        %4317 = vmatmul.f32.gmra.mxu0 %v3999
        %v4318 = vpop.f32.mrf.mxu0
        %v4319 = vadd.f32 0.0, %v4318
        %4320 = vmatmul.f32.gmra.mxu0 %v4001
        %v4321 = vpop.f32.mrf.mxu0
        %v4322 = vadd.f32 0.0, %v4321
        %4323 = vmatmul.f32.gmra.mxu0 %v4003
        %v4324 = vpop.f32.mrf.mxu0
        %v4325 = vadd.f32 0.0, %v4324
        %4326 = vdwg.mxu0
        %v4327 = vadd.f32 %v4198, %v4280
        %v4328 = vadd.f32 %v4199, %v4283
        %v4329 = vadd.f32 %v4200, %v4286
        %v4330 = vadd.f32 %v4201, %v4289
        %v4331 = vadd.f32 %v4202, %v4292
        %v4332 = vadd.f32 %v4203, %v4295
        %v4333 = vadd.f32 %v4204, %v4298
        %v4334 = vadd.f32 %v4205, %v4301
        %v4335 = vadd.f32 %v4206, %v4304
        %v4336 = vadd.f32 %v4207, %v4307
        %v4337 = vadd.f32 %v4208, %v4310
        %v4338 = vadd.f32 %v4209, %v4313
        %v4339 = vadd.f32 %v4210, %v4316
        %v4340 = vadd.f32 %v4211, %v4319
        %v4341 = vadd.f32 %v4212, %v4322
        %v4342 = vadd.f32 %v4213, %v4325
        %4343 = vst.msk [vmem:[%s4101] sm:$0xff] %vm1156, %v4327
        %4344 = vst.msk [vmem:[%s4101 + $0x8] sm:$0xff] %vm1156, %v4328
        %4345 = vst.msk [vmem:[%s4101 + $0x10] sm:$0xff] %vm1156, %v4329
        %4346 = vst.msk [vmem:[%s4101 + $0x18] sm:$0xff] %vm1156, %v4330
        %4347 = vst.msk [vmem:[%s4101 + $0x20] sm:$0xff] %vm1156, %v4331
        %4348 = vst.msk [vmem:[%s4101 + $0x28] sm:$0xff] %vm1156, %v4332
        %4349 = vst.msk [vmem:[%s4101 + $0x30] sm:$0xff] %vm1156, %v4333
        %4350 = vst.msk [vmem:[%s4101 + $0x38] sm:$0xff] %vm1156, %v4334
        %4351 = vst.msk [vmem:[%s4101 + $0x40] sm:$0xff] %vm1156, %v4335
        %4352 = vst.msk [vmem:[%s4101 + $0x48] sm:$0xff] %vm1156, %v4336
        %4353 = vst.msk [vmem:[%s4101 + $0x50] sm:$0xff] %vm1156, %v4337
        %4354 = vst.msk [vmem:[%s4101 + $0x58] sm:$0xff] %vm1156, %v4338
        %4355 = vst.msk [vmem:[%s4101 + $0x60] sm:$0xff] %vm1156, %v4339
        %4356 = vst.msk [vmem:[%s4101 + $0x68] sm:$0xff] %vm1156, %v4340
        %4357 = vst.msk [vmem:[%s4101 + $0x70] sm:$0xff] %vm1156, %v4341
        %4358 = vst.msk [vmem:[%s4101 + $0x78] sm:$0xff] %vm1156, %v4342
        %4359 = vst.msk [vmem:[%s3763] sm:$0xff] %vm1654, %v3812
        %4360 = vst.msk [vmem:[%s3763 + $0x8] sm:$0xff] %vm1654, %v3813
        %4361 = vst.msk [vmem:[%s3763 + $0x10] sm:$0xff] %vm1654, %v3814
        %4362 = vst.msk [vmem:[%s3763 + $0x18] sm:$0xff] %vm1654, %v3815
        %4363 = vst.msk [vmem:[%s3763 + $0x20] sm:$0xff] %vm1654, %v3816
        %4364 = vst.msk [vmem:[%s3763 + $0x28] sm:$0xff] %vm1654, %v3817
        %4365 = vst.msk [vmem:[%s3763 + $0x30] sm:$0xff] %vm1654, %v3818
        %4366 = vst.msk [vmem:[%s3763 + $0x38] sm:$0xff] %vm1654, %v3819
        %4367 = vst.msk [vmem:[%s3763 + $0x40] sm:$0xff] %vm1654, %v3820
        %4368 = vst.msk [vmem:[%s3763 + $0x48] sm:$0xff] %vm1654, %v3821
        %4369 = vst.msk [vmem:[%s3763 + $0x50] sm:$0xff] %vm1654, %v3822
        %4370 = vst.msk [vmem:[%s3763 + $0x58] sm:$0xff] %vm1654, %v3823
        %4371 = vst.msk [vmem:[%s3763 + $0x60] sm:$0xff] %vm1654, %v3824
        %4372 = vst.msk [vmem:[%s3763 + $0x68] sm:$0xff] %vm1654, %v3825
        %4373 = vst.msk [vmem:[%s3763 + $0x70] sm:$0xff] %vm1654, %v3826
        %4374 = vst.msk [vmem:[%s3763 + $0x78] sm:$0xff] %vm1654, %v3827
        %p4375 = scmp.eq.s32.totalorder %s27, 1
        // Predicated region
        $region111: #{tpu_custom_call.1} parent=89 // pred_check
          %p4376 = pneg %p4375
        $region112: #{tpu_custom_call.1} parent=89 // pred_check_branch
          %4378 = sbr.rel (%p4376) target = $region114
        $region113: #{tpu_custom_call.1} parent=89 // pred_region
          %v4379 = vld [vmem:[#allocation4] sm:$0xff]
          %v4380 = vld [vmem:[#allocation4 + $0x8] sm:$0xff]
          %v4381 = vld [vmem:[#allocation4 + $0x10] sm:$0xff]
          %v4382 = vld [vmem:[#allocation4 + $0x18] sm:$0xff]
          %v4383 = vld [vmem:[#allocation4 + $0x20] sm:$0xff]
          %v4384 = vld [vmem:[#allocation4 + $0x28] sm:$0xff]
          %v4385 = vld [vmem:[#allocation4 + $0x30] sm:$0xff]
          %v4386 = vld [vmem:[#allocation4 + $0x38] sm:$0xff]
          %v4387 = vld [vmem:[#allocation4 + $0x40] sm:$0xff]
          %v4388 = vld [vmem:[#allocation4 + $0x48] sm:$0xff]
          %v4389 = vld [vmem:[#allocation4 + $0x50] sm:$0xff]
          %v4390 = vld [vmem:[#allocation4 + $0x58] sm:$0xff]
          %v4391 = vld [vmem:[#allocation4 + $0x60] sm:$0xff]
          %v4392 = vld [vmem:[#allocation4 + $0x68] sm:$0xff]
          %v4393 = vld [vmem:[#allocation4 + $0x70] sm:$0xff]
          %v4394 = vld [vmem:[#allocation4 + $0x78] sm:$0xff]
          %v4395 = vrcp.pop %v4379
          %v4396 = vmul.f32 %v4379, %v4395
          %v4397 = vsub.f32 1.0, %v4396
          %v4398 = vmul.f32 %v4395, %v4397
          %v4399 = vadd.f32 %v4395, %v4398
          %vm4400 = vweird.f32 %v4379
          %vm4401 = vweird.f32 %v4395
          %vm4402 = vmor %vm4400, %vm4401
          %v4403 = vsel %vm4402, %v4395, %v4399
          %v4404 = vand.u32 2147483647, %v4379
          %vm4405 = vcmp.eq.f32.partialorder %v4404, 8.507059e+37
          %v4406 = vand.u32 %v4379, 2147483648
          %v4407 = vor.u32 1.1754944e-38, %v4406
          %v4408 = vsel %vm4405, %v4407, %v4403
          %v4409 = vrcp.pop %v4380
          %v4410 = vmul.f32 %v4380, %v4409
          %v4411 = vsub.f32 1.0, %v4410
          %v4412 = vmul.f32 %v4409, %v4411
          %v4413 = vadd.f32 %v4409, %v4412
          %vm4414 = vweird.f32 %v4380
          %vm4415 = vweird.f32 %v4409
          %vm4416 = vmor %vm4414, %vm4415
          %v4417 = vsel %vm4416, %v4409, %v4413
          %v4418 = vand.u32 2147483647, %v4380
          %vm4419 = vcmp.eq.f32.partialorder %v4418, 8.507059e+37
          %v4420 = vand.u32 %v4380, 2147483648
          %v4421 = vor.u32 1.1754944e-38, %v4420
          %v4422 = vsel %vm4419, %v4421, %v4417
          %v4423 = vrcp.pop %v4381
          %v4424 = vmul.f32 %v4381, %v4423
          %v4425 = vsub.f32 1.0, %v4424
          %v4426 = vmul.f32 %v4423, %v4425
          %v4427 = vadd.f32 %v4423, %v4426
          %vm4428 = vweird.f32 %v4381
          %vm4429 = vweird.f32 %v4423
          %vm4430 = vmor %vm4428, %vm4429
          %v4431 = vsel %vm4430, %v4423, %v4427
          %v4432 = vand.u32 2147483647, %v4381
          %vm4433 = vcmp.eq.f32.partialorder %v4432, 8.507059e+37
          %v4434 = vand.u32 %v4381, 2147483648
          %v4435 = vor.u32 1.1754944e-38, %v4434
          %v4436 = vsel %vm4433, %v4435, %v4431
          %v4437 = vrcp.pop %v4382
          %v4438 = vmul.f32 %v4382, %v4437
          %v4439 = vsub.f32 1.0, %v4438
          %v4440 = vmul.f32 %v4437, %v4439
          %v4441 = vadd.f32 %v4437, %v4440
          %vm4442 = vweird.f32 %v4382
          %vm4443 = vweird.f32 %v4437
          %vm4444 = vmor %vm4442, %vm4443
          %v4445 = vsel %vm4444, %v4437, %v4441
          %v4446 = vand.u32 2147483647, %v4382
          %vm4447 = vcmp.eq.f32.partialorder %v4446, 8.507059e+37
          %v4448 = vand.u32 %v4382, 2147483648
          %v4449 = vor.u32 1.1754944e-38, %v4448
          %v4450 = vsel %vm4447, %v4449, %v4445
          %v4451 = vrcp.pop %v4383
          %v4452 = vmul.f32 %v4383, %v4451
          %v4453 = vsub.f32 1.0, %v4452
          %v4454 = vmul.f32 %v4451, %v4453
          %v4455 = vadd.f32 %v4451, %v4454
          %vm4456 = vweird.f32 %v4383
          %vm4457 = vweird.f32 %v4451
          %vm4458 = vmor %vm4456, %vm4457
          %v4459 = vsel %vm4458, %v4451, %v4455
          %v4460 = vand.u32 2147483647, %v4383
          %vm4461 = vcmp.eq.f32.partialorder %v4460, 8.507059e+37
          %v4462 = vand.u32 %v4383, 2147483648
          %v4463 = vor.u32 1.1754944e-38, %v4462
          %v4464 = vsel %vm4461, %v4463, %v4459
          %v4465 = vrcp.pop %v4384
          %v4466 = vmul.f32 %v4384, %v4465
          %v4467 = vsub.f32 1.0, %v4466
          %v4468 = vmul.f32 %v4465, %v4467
          %v4469 = vadd.f32 %v4465, %v4468
          %vm4470 = vweird.f32 %v4384
          %vm4471 = vweird.f32 %v4465
          %vm4472 = vmor %vm4470, %vm4471
          %v4473 = vsel %vm4472, %v4465, %v4469
          %v4474 = vand.u32 2147483647, %v4384
          %vm4475 = vcmp.eq.f32.partialorder %v4474, 8.507059e+37
          %v4476 = vand.u32 %v4384, 2147483648
          %v4477 = vor.u32 1.1754944e-38, %v4476
          %v4478 = vsel %vm4475, %v4477, %v4473
          %v4479 = vrcp.pop %v4385
          %v4480 = vmul.f32 %v4385, %v4479
          %v4481 = vsub.f32 1.0, %v4480
          %v4482 = vmul.f32 %v4479, %v4481
          %v4483 = vadd.f32 %v4479, %v4482
          %vm4484 = vweird.f32 %v4385
          %vm4485 = vweird.f32 %v4479
          %vm4486 = vmor %vm4484, %vm4485
          %v4487 = vsel %vm4486, %v4479, %v4483
          %v4488 = vand.u32 2147483647, %v4385
          %vm4489 = vcmp.eq.f32.partialorder %v4488, 8.507059e+37
          %v4490 = vand.u32 %v4385, 2147483648
          %v4491 = vor.u32 1.1754944e-38, %v4490
          %v4492 = vsel %vm4489, %v4491, %v4487
          %v4493 = vrcp.pop %v4386
          %v4494 = vmul.f32 %v4386, %v4493
          %v4495 = vsub.f32 1.0, %v4494
          %v4496 = vmul.f32 %v4493, %v4495
          %v4497 = vadd.f32 %v4493, %v4496
          %vm4498 = vweird.f32 %v4386
          %vm4499 = vweird.f32 %v4493
          %vm4500 = vmor %vm4498, %vm4499
          %v4501 = vsel %vm4500, %v4493, %v4497
          %v4502 = vand.u32 2147483647, %v4386
          %vm4503 = vcmp.eq.f32.partialorder %v4502, 8.507059e+37
          %v4504 = vand.u32 %v4386, 2147483648
          %v4505 = vor.u32 1.1754944e-38, %v4504
          %v4506 = vsel %vm4503, %v4505, %v4501
          %v4507 = vrcp.pop %v4387
          %v4508 = vmul.f32 %v4387, %v4507
          %v4509 = vsub.f32 1.0, %v4508
          %v4510 = vmul.f32 %v4507, %v4509
          %v4511 = vadd.f32 %v4507, %v4510
          %vm4512 = vweird.f32 %v4387
          %vm4513 = vweird.f32 %v4507
          %vm4514 = vmor %vm4512, %vm4513
          %v4515 = vsel %vm4514, %v4507, %v4511
          %v4516 = vand.u32 2147483647, %v4387
          %vm4517 = vcmp.eq.f32.partialorder %v4516, 8.507059e+37
          %v4518 = vand.u32 %v4387, 2147483648
          %v4519 = vor.u32 1.1754944e-38, %v4518
          %v4520 = vsel %vm4517, %v4519, %v4515
          %v4521 = vrcp.pop %v4388
          %v4522 = vmul.f32 %v4388, %v4521
          %v4523 = vsub.f32 1.0, %v4522
          %v4524 = vmul.f32 %v4521, %v4523
          %v4525 = vadd.f32 %v4521, %v4524
          %vm4526 = vweird.f32 %v4388
          %vm4527 = vweird.f32 %v4521
          %vm4528 = vmor %vm4526, %vm4527
          %v4529 = vsel %vm4528, %v4521, %v4525
          %v4530 = vand.u32 2147483647, %v4388
          %vm4531 = vcmp.eq.f32.partialorder %v4530, 8.507059e+37
          %v4532 = vand.u32 %v4388, 2147483648
          %v4533 = vor.u32 1.1754944e-38, %v4532
          %v4534 = vsel %vm4531, %v4533, %v4529
          %v4535 = vrcp.pop %v4389
          %v4536 = vmul.f32 %v4389, %v4535
          %v4537 = vsub.f32 1.0, %v4536
          %v4538 = vmul.f32 %v4535, %v4537
          %v4539 = vadd.f32 %v4535, %v4538
          %vm4540 = vweird.f32 %v4389
          %vm4541 = vweird.f32 %v4535
          %vm4542 = vmor %vm4540, %vm4541
          %v4543 = vsel %vm4542, %v4535, %v4539
          %v4544 = vand.u32 2147483647, %v4389
          %vm4545 = vcmp.eq.f32.partialorder %v4544, 8.507059e+37
          %v4546 = vand.u32 %v4389, 2147483648
          %v4547 = vor.u32 1.1754944e-38, %v4546
          %v4548 = vsel %vm4545, %v4547, %v4543
          %v4549 = vrcp.pop %v4390
          %v4550 = vmul.f32 %v4390, %v4549
          %v4551 = vsub.f32 1.0, %v4550
          %v4552 = vmul.f32 %v4549, %v4551
          %v4553 = vadd.f32 %v4549, %v4552
          %vm4554 = vweird.f32 %v4390
          %vm4555 = vweird.f32 %v4549
          %vm4556 = vmor %vm4554, %vm4555
          %v4557 = vsel %vm4556, %v4549, %v4553
          %v4558 = vand.u32 2147483647, %v4390
          %vm4559 = vcmp.eq.f32.partialorder %v4558, 8.507059e+37
          %v4560 = vand.u32 %v4390, 2147483648
          %v4561 = vor.u32 1.1754944e-38, %v4560
          %v4562 = vsel %vm4559, %v4561, %v4557
          %v4563 = vrcp.pop %v4391
          %v4564 = vmul.f32 %v4391, %v4563
          %v4565 = vsub.f32 1.0, %v4564
          %v4566 = vmul.f32 %v4563, %v4565
          %v4567 = vadd.f32 %v4563, %v4566
          %vm4568 = vweird.f32 %v4391
          %vm4569 = vweird.f32 %v4563
          %vm4570 = vmor %vm4568, %vm4569
          %v4571 = vsel %vm4570, %v4563, %v4567
          %v4572 = vand.u32 2147483647, %v4391
          %vm4573 = vcmp.eq.f32.partialorder %v4572, 8.507059e+37
          %v4574 = vand.u32 %v4391, 2147483648
          %v4575 = vor.u32 1.1754944e-38, %v4574
          %v4576 = vsel %vm4573, %v4575, %v4571
          %v4577 = vrcp.pop %v4392
          %v4578 = vmul.f32 %v4392, %v4577
          %v4579 = vsub.f32 1.0, %v4578
          %v4580 = vmul.f32 %v4577, %v4579
          %v4581 = vadd.f32 %v4577, %v4580
          %vm4582 = vweird.f32 %v4392
          %vm4583 = vweird.f32 %v4577
          %vm4584 = vmor %vm4582, %vm4583
          %v4585 = vsel %vm4584, %v4577, %v4581
          %v4586 = vand.u32 2147483647, %v4392
          %vm4587 = vcmp.eq.f32.partialorder %v4586, 8.507059e+37
          %v4588 = vand.u32 %v4392, 2147483648
          %v4589 = vor.u32 1.1754944e-38, %v4588
          %v4590 = vsel %vm4587, %v4589, %v4585
          %v4591 = vrcp.pop %v4393
          %v4592 = vmul.f32 %v4393, %v4591
          %v4593 = vsub.f32 1.0, %v4592
          %v4594 = vmul.f32 %v4591, %v4593
          %v4595 = vadd.f32 %v4591, %v4594
          %vm4596 = vweird.f32 %v4393
          %vm4597 = vweird.f32 %v4591
          %vm4598 = vmor %vm4596, %vm4597
          %v4599 = vsel %vm4598, %v4591, %v4595
          %v4600 = vand.u32 2147483647, %v4393
          %vm4601 = vcmp.eq.f32.partialorder %v4600, 8.507059e+37
          %v4602 = vand.u32 %v4393, 2147483648
          %v4603 = vor.u32 1.1754944e-38, %v4602
          %v4604 = vsel %vm4601, %v4603, %v4599
          %v4605 = vrcp.pop %v4394
          %v4606 = vmul.f32 %v4394, %v4605
          %v4607 = vsub.f32 1.0, %v4606
          %v4608 = vmul.f32 %v4605, %v4607
          %v4609 = vadd.f32 %v4605, %v4608
          %vm4610 = vweird.f32 %v4394
          %vm4611 = vweird.f32 %v4605
          %vm4612 = vmor %vm4610, %vm4611
          %v4613 = vsel %vm4612, %v4605, %v4609
          %v4614 = vand.u32 2147483647, %v4394
          %vm4615 = vcmp.eq.f32.partialorder %v4614, 8.507059e+37
          %v4616 = vand.u32 %v4394, 2147483648
          %v4617 = vor.u32 1.1754944e-38, %v4616
          %v4618 = vsel %vm4615, %v4617, %v4613
          %v4619 = vld [vmem:[#allocation5] sm:$0xff]
          %v4620 = vld [vmem:[#allocation5 + $0x8] sm:$0xff]
          %v4621 = vld [vmem:[#allocation5 + $0x10] sm:$0xff]
          %v4622 = vld [vmem:[#allocation5 + $0x18] sm:$0xff]
          %v4623 = vld [vmem:[#allocation5 + $0x20] sm:$0xff]
          %v4624 = vld [vmem:[#allocation5 + $0x28] sm:$0xff]
          %v4625 = vld [vmem:[#allocation5 + $0x30] sm:$0xff]
          %v4626 = vld [vmem:[#allocation5 + $0x38] sm:$0xff]
          %v4627 = vld [vmem:[#allocation5 + $0x40] sm:$0xff]
          %v4628 = vld [vmem:[#allocation5 + $0x48] sm:$0xff]
          %v4629 = vld [vmem:[#allocation5 + $0x50] sm:$0xff]
          %v4630 = vld [vmem:[#allocation5 + $0x58] sm:$0xff]
          %v4631 = vld [vmem:[#allocation5 + $0x60] sm:$0xff]
          %v4632 = vld [vmem:[#allocation5 + $0x68] sm:$0xff]
          %v4633 = vld [vmem:[#allocation5 + $0x70] sm:$0xff]
          %v4634 = vld [vmem:[#allocation5 + $0x78] sm:$0xff]
          %4636 = vset.pattern.permute.xlu0 0
          %4637 = vperm.xlu0 %4636, %v4408
          %v4638 = vpop.permute.xlu0 %4637
          %4641 = vset.pattern.permute.xlu0 0
          %4642 = vperm.xlu0 %4641, %v4422
          %v4643 = vpop.permute.xlu0 %4642
          %4646 = vset.pattern.permute.xlu0 0
          %4647 = vperm.xlu0 %4646, %v4436
          %v4648 = vpop.permute.xlu0 %4647
          %4651 = vset.pattern.permute.xlu0 0
          %4652 = vperm.xlu0 %4651, %v4450
          %v4653 = vpop.permute.xlu0 %4652
          %4656 = vset.pattern.permute.xlu0 0
          %4657 = vperm.xlu0 %4656, %v4464
          %v4658 = vpop.permute.xlu0 %4657
          %4661 = vset.pattern.permute.xlu0 0
          %4662 = vperm.xlu0 %4661, %v4478
          %v4663 = vpop.permute.xlu0 %4662
          %4666 = vset.pattern.permute.xlu0 0
          %4667 = vperm.xlu0 %4666, %v4492
          %v4668 = vpop.permute.xlu0 %4667
          %4671 = vset.pattern.permute.xlu0 0
          %4672 = vperm.xlu0 %4671, %v4506
          %v4673 = vpop.permute.xlu0 %4672
          %4676 = vset.pattern.permute.xlu0 0
          %4677 = vperm.xlu0 %4676, %v4520
          %v4678 = vpop.permute.xlu0 %4677
          %4681 = vset.pattern.permute.xlu0 0
          %4682 = vperm.xlu0 %4681, %v4534
          %v4683 = vpop.permute.xlu0 %4682
          %4686 = vset.pattern.permute.xlu0 0
          %4687 = vperm.xlu0 %4686, %v4548
          %v4688 = vpop.permute.xlu0 %4687
          %4691 = vset.pattern.permute.xlu0 0
          %4692 = vperm.xlu0 %4691, %v4562
          %v4693 = vpop.permute.xlu0 %4692
          %4696 = vset.pattern.permute.xlu0 0
          %4697 = vperm.xlu0 %4696, %v4576
          %v4698 = vpop.permute.xlu0 %4697
          %4701 = vset.pattern.permute.xlu0 0
          %4702 = vperm.xlu0 %4701, %v4590
          %v4703 = vpop.permute.xlu0 %4702
          %4706 = vset.pattern.permute.xlu0 0
          %4707 = vperm.xlu0 %4706, %v4604
          %v4708 = vpop.permute.xlu0 %4707
          %4711 = vset.pattern.permute.xlu0 0
          %4712 = vperm.xlu0 %4711, %v4618
          %v4713 = vpop.permute.xlu0 %4712
          %v4715 = vmul.f32 %v4619, %v4638
          %v4716 = vmul.f32 %v4620, %v4643
          %v4717 = vmul.f32 %v4621, %v4648
          %v4718 = vmul.f32 %v4622, %v4653
          %v4719 = vmul.f32 %v4623, %v4658
          %v4720 = vmul.f32 %v4624, %v4663
          %v4721 = vmul.f32 %v4625, %v4668
          %v4722 = vmul.f32 %v4626, %v4673
          %v4723 = vmul.f32 %v4627, %v4678
          %v4724 = vmul.f32 %v4628, %v4683
          %v4725 = vmul.f32 %v4629, %v4688
          %v4726 = vmul.f32 %v4630, %v4693
          %v4727 = vmul.f32 %v4631, %v4698
          %v4728 = vmul.f32 %v4632, %v4703
          %v4729 = vmul.f32 %v4633, %v4708
          %v4730 = vmul.f32 %v4634, %v4713
          %v4731 = vld [vmem:[%s2346] sm:$0xff]
          %v4732 = vld [vmem:[%s2346 + $0x8] sm:$0xff]
          %v4733 = vld [vmem:[%s2346 + $0x10] sm:$0xff]
          %v4734 = vld [vmem:[%s2346 + $0x18] sm:$0xff]
          %v4735 = vld [vmem:[%s2346 + $0x20] sm:$0xff]
          %v4736 = vld [vmem:[%s2346 + $0x28] sm:$0xff]
          %v4737 = vld [vmem:[%s2346 + $0x30] sm:$0xff]
          %v4738 = vld [vmem:[%s2346 + $0x38] sm:$0xff]
          %v4739 = vld [vmem:[%s2346 + $0x40] sm:$0xff]
          %v4740 = vld [vmem:[%s2346 + $0x48] sm:$0xff]
          %v4741 = vld [vmem:[%s2346 + $0x50] sm:$0xff]
          %v4742 = vld [vmem:[%s2346 + $0x58] sm:$0xff]
          %v4743 = vld [vmem:[%s2346 + $0x60] sm:$0xff]
          %v4744 = vld [vmem:[%s2346 + $0x68] sm:$0xff]
          %v4745 = vld [vmem:[%s2346 + $0x70] sm:$0xff]
          %v4746 = vld [vmem:[%s2346 + $0x78] sm:$0xff]
          %v4747 = vrcp.pop %v4731
          %v4748 = vmul.f32 %v4731, %v4747
          %v4749 = vsub.f32 1.0, %v4748
          %v4750 = vmul.f32 %v4747, %v4749
          %v4751 = vadd.f32 %v4747, %v4750
          %vm4752 = vweird.f32 %v4731
          %vm4753 = vweird.f32 %v4747
          %vm4754 = vmor %vm4752, %vm4753
          %v4755 = vsel %vm4754, %v4747, %v4751
          %v4756 = vand.u32 2147483647, %v4731
          %vm4757 = vcmp.eq.f32.partialorder %v4756, 8.507059e+37
          %v4758 = vand.u32 %v4731, 2147483648
          %v4759 = vor.u32 1.1754944e-38, %v4758
          %v4760 = vsel %vm4757, %v4759, %v4755
          %v4761 = vrcp.pop %v4732
          %v4762 = vmul.f32 %v4732, %v4761
          %v4763 = vsub.f32 1.0, %v4762
          %v4764 = vmul.f32 %v4761, %v4763
          %v4765 = vadd.f32 %v4761, %v4764
          %vm4766 = vweird.f32 %v4732
          %vm4767 = vweird.f32 %v4761
          %vm4768 = vmor %vm4766, %vm4767
          %v4769 = vsel %vm4768, %v4761, %v4765
          %v4770 = vand.u32 2147483647, %v4732
          %vm4771 = vcmp.eq.f32.partialorder %v4770, 8.507059e+37
          %v4772 = vand.u32 %v4732, 2147483648
          %v4773 = vor.u32 1.1754944e-38, %v4772
          %v4774 = vsel %vm4771, %v4773, %v4769
          %v4775 = vrcp.pop %v4733
          %v4776 = vmul.f32 %v4733, %v4775
          %v4777 = vsub.f32 1.0, %v4776
          %v4778 = vmul.f32 %v4775, %v4777
          %v4779 = vadd.f32 %v4775, %v4778
          %vm4780 = vweird.f32 %v4733
          %vm4781 = vweird.f32 %v4775
          %vm4782 = vmor %vm4780, %vm4781
          %v4783 = vsel %vm4782, %v4775, %v4779
          %v4784 = vand.u32 2147483647, %v4733
          %vm4785 = vcmp.eq.f32.partialorder %v4784, 8.507059e+37
          %v4786 = vand.u32 %v4733, 2147483648
          %v4787 = vor.u32 1.1754944e-38, %v4786
          %v4788 = vsel %vm4785, %v4787, %v4783
          %v4789 = vrcp.pop %v4734
          %v4790 = vmul.f32 %v4734, %v4789
          %v4791 = vsub.f32 1.0, %v4790
          %v4792 = vmul.f32 %v4789, %v4791
          %v4793 = vadd.f32 %v4789, %v4792
          %vm4794 = vweird.f32 %v4734
          %vm4795 = vweird.f32 %v4789
          %vm4796 = vmor %vm4794, %vm4795
          %v4797 = vsel %vm4796, %v4789, %v4793
          %v4798 = vand.u32 2147483647, %v4734
          %vm4799 = vcmp.eq.f32.partialorder %v4798, 8.507059e+37
          %v4800 = vand.u32 %v4734, 2147483648
          %v4801 = vor.u32 1.1754944e-38, %v4800
          %v4802 = vsel %vm4799, %v4801, %v4797
          %v4803 = vrcp.pop %v4735
          %v4804 = vmul.f32 %v4735, %v4803
          %v4805 = vsub.f32 1.0, %v4804
          %v4806 = vmul.f32 %v4803, %v4805
          %v4807 = vadd.f32 %v4803, %v4806
          %vm4808 = vweird.f32 %v4735
          %vm4809 = vweird.f32 %v4803
          %vm4810 = vmor %vm4808, %vm4809
          %v4811 = vsel %vm4810, %v4803, %v4807
          %v4812 = vand.u32 2147483647, %v4735
          %vm4813 = vcmp.eq.f32.partialorder %v4812, 8.507059e+37
          %v4814 = vand.u32 %v4735, 2147483648
          %v4815 = vor.u32 1.1754944e-38, %v4814
          %v4816 = vsel %vm4813, %v4815, %v4811
          %v4817 = vrcp.pop %v4736
          %v4818 = vmul.f32 %v4736, %v4817
          %v4819 = vsub.f32 1.0, %v4818
          %v4820 = vmul.f32 %v4817, %v4819
          %v4821 = vadd.f32 %v4817, %v4820
          %vm4822 = vweird.f32 %v4736
          %vm4823 = vweird.f32 %v4817
          %vm4824 = vmor %vm4822, %vm4823
          %v4825 = vsel %vm4824, %v4817, %v4821
          %v4826 = vand.u32 2147483647, %v4736
          %vm4827 = vcmp.eq.f32.partialorder %v4826, 8.507059e+37
          %v4828 = vand.u32 %v4736, 2147483648
          %v4829 = vor.u32 1.1754944e-38, %v4828
          %v4830 = vsel %vm4827, %v4829, %v4825
          %v4831 = vrcp.pop %v4737
          %v4832 = vmul.f32 %v4737, %v4831
          %v4833 = vsub.f32 1.0, %v4832
          %v4834 = vmul.f32 %v4831, %v4833
          %v4835 = vadd.f32 %v4831, %v4834
          %vm4836 = vweird.f32 %v4737
          %vm4837 = vweird.f32 %v4831
          %vm4838 = vmor %vm4836, %vm4837
          %v4839 = vsel %vm4838, %v4831, %v4835
          %v4840 = vand.u32 2147483647, %v4737
          %vm4841 = vcmp.eq.f32.partialorder %v4840, 8.507059e+37
          %v4842 = vand.u32 %v4737, 2147483648
          %v4843 = vor.u32 1.1754944e-38, %v4842
          %v4844 = vsel %vm4841, %v4843, %v4839
          %v4845 = vrcp.pop %v4738
          %v4846 = vmul.f32 %v4738, %v4845
          %v4847 = vsub.f32 1.0, %v4846
          %v4848 = vmul.f32 %v4845, %v4847
          %v4849 = vadd.f32 %v4845, %v4848
          %vm4850 = vweird.f32 %v4738
          %vm4851 = vweird.f32 %v4845
          %vm4852 = vmor %vm4850, %vm4851
          %v4853 = vsel %vm4852, %v4845, %v4849
          %v4854 = vand.u32 2147483647, %v4738
          %vm4855 = vcmp.eq.f32.partialorder %v4854, 8.507059e+37
          %v4856 = vand.u32 %v4738, 2147483648
          %v4857 = vor.u32 1.1754944e-38, %v4856
          %v4858 = vsel %vm4855, %v4857, %v4853
          %v4859 = vrcp.pop %v4739
          %v4860 = vmul.f32 %v4739, %v4859
          %v4861 = vsub.f32 1.0, %v4860
          %v4862 = vmul.f32 %v4859, %v4861
          %v4863 = vadd.f32 %v4859, %v4862
          %vm4864 = vweird.f32 %v4739
          %vm4865 = vweird.f32 %v4859
          %vm4866 = vmor %vm4864, %vm4865
          %v4867 = vsel %vm4866, %v4859, %v4863
          %v4868 = vand.u32 2147483647, %v4739
          %vm4869 = vcmp.eq.f32.partialorder %v4868, 8.507059e+37
          %v4870 = vand.u32 %v4739, 2147483648
          %v4871 = vor.u32 1.1754944e-38, %v4870
          %v4872 = vsel %vm4869, %v4871, %v4867
          %v4873 = vrcp.pop %v4740
          %v4874 = vmul.f32 %v4740, %v4873
          %v4875 = vsub.f32 1.0, %v4874
          %v4876 = vmul.f32 %v4873, %v4875
          %v4877 = vadd.f32 %v4873, %v4876
          %vm4878 = vweird.f32 %v4740
          %vm4879 = vweird.f32 %v4873
          %vm4880 = vmor %vm4878, %vm4879
          %v4881 = vsel %vm4880, %v4873, %v4877
          %v4882 = vand.u32 2147483647, %v4740
          %vm4883 = vcmp.eq.f32.partialorder %v4882, 8.507059e+37
          %v4884 = vand.u32 %v4740, 2147483648
          %v4885 = vor.u32 1.1754944e-38, %v4884
          %v4886 = vsel %vm4883, %v4885, %v4881
          %v4887 = vrcp.pop %v4741
          %v4888 = vmul.f32 %v4741, %v4887
          %v4889 = vsub.f32 1.0, %v4888
          %v4890 = vmul.f32 %v4887, %v4889
          %v4891 = vadd.f32 %v4887, %v4890
          %vm4892 = vweird.f32 %v4741
          %vm4893 = vweird.f32 %v4887
          %vm4894 = vmor %vm4892, %vm4893
          %v4895 = vsel %vm4894, %v4887, %v4891
          %v4896 = vand.u32 2147483647, %v4741
          %vm4897 = vcmp.eq.f32.partialorder %v4896, 8.507059e+37
          %v4898 = vand.u32 %v4741, 2147483648
          %v4899 = vor.u32 1.1754944e-38, %v4898
          %v4900 = vsel %vm4897, %v4899, %v4895
          %v4901 = vrcp.pop %v4742
          %v4902 = vmul.f32 %v4742, %v4901
          %v4903 = vsub.f32 1.0, %v4902
          %v4904 = vmul.f32 %v4901, %v4903
          %v4905 = vadd.f32 %v4901, %v4904
          %vm4906 = vweird.f32 %v4742
          %vm4907 = vweird.f32 %v4901
          %vm4908 = vmor %vm4906, %vm4907
          %v4909 = vsel %vm4908, %v4901, %v4905
          %v4910 = vand.u32 2147483647, %v4742
          %vm4911 = vcmp.eq.f32.partialorder %v4910, 8.507059e+37
          %v4912 = vand.u32 %v4742, 2147483648
          %v4913 = vor.u32 1.1754944e-38, %v4912
          %v4914 = vsel %vm4911, %v4913, %v4909
          %v4915 = vrcp.pop %v4743
          %v4916 = vmul.f32 %v4743, %v4915
          %v4917 = vsub.f32 1.0, %v4916
          %v4918 = vmul.f32 %v4915, %v4917
          %v4919 = vadd.f32 %v4915, %v4918
          %vm4920 = vweird.f32 %v4743
          %vm4921 = vweird.f32 %v4915
          %vm4922 = vmor %vm4920, %vm4921
          %v4923 = vsel %vm4922, %v4915, %v4919
          %v4924 = vand.u32 2147483647, %v4743
          %vm4925 = vcmp.eq.f32.partialorder %v4924, 8.507059e+37
          %v4926 = vand.u32 %v4743, 2147483648
          %v4927 = vor.u32 1.1754944e-38, %v4926
          %v4928 = vsel %vm4925, %v4927, %v4923
          %v4929 = vrcp.pop %v4744
          %v4930 = vmul.f32 %v4744, %v4929
          %v4931 = vsub.f32 1.0, %v4930
          %v4932 = vmul.f32 %v4929, %v4931
          %v4933 = vadd.f32 %v4929, %v4932
          %vm4934 = vweird.f32 %v4744
          %vm4935 = vweird.f32 %v4929
          %vm4936 = vmor %vm4934, %vm4935
          %v4937 = vsel %vm4936, %v4929, %v4933
          %v4938 = vand.u32 2147483647, %v4744
          %vm4939 = vcmp.eq.f32.partialorder %v4938, 8.507059e+37
          %v4940 = vand.u32 %v4744, 2147483648
          %v4941 = vor.u32 1.1754944e-38, %v4940
          %v4942 = vsel %vm4939, %v4941, %v4937
          %v4943 = vrcp.pop %v4745
          %v4944 = vmul.f32 %v4745, %v4943
          %v4945 = vsub.f32 1.0, %v4944
          %v4946 = vmul.f32 %v4943, %v4945
          %v4947 = vadd.f32 %v4943, %v4946
          %vm4948 = vweird.f32 %v4745
          %vm4949 = vweird.f32 %v4943
          %vm4950 = vmor %vm4948, %vm4949
          %v4951 = vsel %vm4950, %v4943, %v4947
          %v4952 = vand.u32 2147483647, %v4745
          %vm4953 = vcmp.eq.f32.partialorder %v4952, 8.507059e+37
          %v4954 = vand.u32 %v4745, 2147483648
          %v4955 = vor.u32 1.1754944e-38, %v4954
          %v4956 = vsel %vm4953, %v4955, %v4951
          %v4957 = vrcp.pop %v4746
          %v4958 = vmul.f32 %v4746, %v4957
          %v4959 = vsub.f32 1.0, %v4958
          %v4960 = vmul.f32 %v4957, %v4959
          %v4961 = vadd.f32 %v4957, %v4960
          %vm4962 = vweird.f32 %v4746
          %vm4963 = vweird.f32 %v4957
          %vm4964 = vmor %vm4962, %vm4963
          %v4965 = vsel %vm4964, %v4957, %v4961
          %v4966 = vand.u32 2147483647, %v4746
          %vm4967 = vcmp.eq.f32.partialorder %v4966, 8.507059e+37
          %v4968 = vand.u32 %v4746, 2147483648
          %v4969 = vor.u32 1.1754944e-38, %v4968
          %v4970 = vsel %vm4967, %v4969, %v4965
          %v4971 = vld [vmem:[%s2443] sm:$0xff]
          %v4972 = vld [vmem:[%s2443 + $0x8] sm:$0xff]
          %v4973 = vld [vmem:[%s2443 + $0x10] sm:$0xff]
          %v4974 = vld [vmem:[%s2443 + $0x18] sm:$0xff]
          %v4975 = vld [vmem:[%s2443 + $0x20] sm:$0xff]
          %v4976 = vld [vmem:[%s2443 + $0x28] sm:$0xff]
          %v4977 = vld [vmem:[%s2443 + $0x30] sm:$0xff]
          %v4978 = vld [vmem:[%s2443 + $0x38] sm:$0xff]
          %v4979 = vld [vmem:[%s2443 + $0x40] sm:$0xff]
          %v4980 = vld [vmem:[%s2443 + $0x48] sm:$0xff]
          %v4981 = vld [vmem:[%s2443 + $0x50] sm:$0xff]
          %v4982 = vld [vmem:[%s2443 + $0x58] sm:$0xff]
          %v4983 = vld [vmem:[%s2443 + $0x60] sm:$0xff]
          %v4984 = vld [vmem:[%s2443 + $0x68] sm:$0xff]
          %v4985 = vld [vmem:[%s2443 + $0x70] sm:$0xff]
          %v4986 = vld [vmem:[%s2443 + $0x78] sm:$0xff]
          %4988 = vset.pattern.permute.xlu0 0
          %4989 = vperm.xlu0 %4988, %v4760
          %v4990 = vpop.permute.xlu0 %4989
          %4993 = vset.pattern.permute.xlu0 0
          %4994 = vperm.xlu0 %4993, %v4774
          %v4995 = vpop.permute.xlu0 %4994
          %4998 = vset.pattern.permute.xlu0 0
          %4999 = vperm.xlu0 %4998, %v4788
          %v5000 = vpop.permute.xlu0 %4999
          %5003 = vset.pattern.permute.xlu0 0
          %5004 = vperm.xlu0 %5003, %v4802
          %v5005 = vpop.permute.xlu0 %5004
          %5008 = vset.pattern.permute.xlu0 0
          %5009 = vperm.xlu0 %5008, %v4816
          %v5010 = vpop.permute.xlu0 %5009
          %5013 = vset.pattern.permute.xlu0 0
          %5014 = vperm.xlu0 %5013, %v4830
          %v5015 = vpop.permute.xlu0 %5014
          %5018 = vset.pattern.permute.xlu0 0
          %5019 = vperm.xlu0 %5018, %v4844
          %v5020 = vpop.permute.xlu0 %5019
          %5023 = vset.pattern.permute.xlu0 0
          %5024 = vperm.xlu0 %5023, %v4858
          %v5025 = vpop.permute.xlu0 %5024
          %5028 = vset.pattern.permute.xlu0 0
          %5029 = vperm.xlu0 %5028, %v4872
          %v5030 = vpop.permute.xlu0 %5029
          %5033 = vset.pattern.permute.xlu0 0
          %5034 = vperm.xlu0 %5033, %v4886
          %v5035 = vpop.permute.xlu0 %5034
          %5038 = vset.pattern.permute.xlu0 0
          %5039 = vperm.xlu0 %5038, %v4900
          %v5040 = vpop.permute.xlu0 %5039
          %5043 = vset.pattern.permute.xlu0 0
          %5044 = vperm.xlu0 %5043, %v4914
          %v5045 = vpop.permute.xlu0 %5044
          %5048 = vset.pattern.permute.xlu0 0
          %5049 = vperm.xlu0 %5048, %v4928
          %v5050 = vpop.permute.xlu0 %5049
          %5053 = vset.pattern.permute.xlu0 0
          %5054 = vperm.xlu0 %5053, %v4942
          %v5055 = vpop.permute.xlu0 %5054
          %5058 = vset.pattern.permute.xlu0 0
          %5059 = vperm.xlu0 %5058, %v4956
          %v5060 = vpop.permute.xlu0 %5059
          %5063 = vset.pattern.permute.xlu0 0
          %5064 = vperm.xlu0 %5063, %v4970
          %v5065 = vpop.permute.xlu0 %5064
          %v5067 = vmul.f32 %v4971, %v4990
          %v5068 = vmul.f32 %v4972, %v4995
          %v5069 = vmul.f32 %v4973, %v5000
          %v5070 = vmul.f32 %v4974, %v5005
          %v5071 = vmul.f32 %v4975, %v5010
          %v5072 = vmul.f32 %v4976, %v5015
          %v5073 = vmul.f32 %v4977, %v5020
          %v5074 = vmul.f32 %v4978, %v5025
          %v5075 = vmul.f32 %v4979, %v5030
          %v5076 = vmul.f32 %v4980, %v5035
          %v5077 = vmul.f32 %v4981, %v5040
          %v5078 = vmul.f32 %v4982, %v5045
          %v5079 = vmul.f32 %v4983, %v5050
          %v5080 = vmul.f32 %v4984, %v5055
          %v5081 = vmul.f32 %v4985, %v5060
          %v5082 = vmul.f32 %v4986, %v5065
          %v5083 = vld [vmem:[%s3183] sm:$0xff]
          %v5084 = vld [vmem:[%s3183 + $0x8] sm:$0xff]
          %v5085 = vld [vmem:[%s3183 + $0x10] sm:$0xff]
          %v5086 = vld [vmem:[%s3183 + $0x18] sm:$0xff]
          %v5087 = vld [vmem:[%s3183 + $0x20] sm:$0xff]
          %v5088 = vld [vmem:[%s3183 + $0x28] sm:$0xff]
          %v5089 = vld [vmem:[%s3183 + $0x30] sm:$0xff]
          %v5090 = vld [vmem:[%s3183 + $0x38] sm:$0xff]
          %v5091 = vld [vmem:[%s3183 + $0x40] sm:$0xff]
          %v5092 = vld [vmem:[%s3183 + $0x48] sm:$0xff]
          %v5093 = vld [vmem:[%s3183 + $0x50] sm:$0xff]
          %v5094 = vld [vmem:[%s3183 + $0x58] sm:$0xff]
          %v5095 = vld [vmem:[%s3183 + $0x60] sm:$0xff]
          %v5096 = vld [vmem:[%s3183 + $0x68] sm:$0xff]
          %v5097 = vld [vmem:[%s3183 + $0x70] sm:$0xff]
          %v5098 = vld [vmem:[%s3183 + $0x78] sm:$0xff]
          %v5099 = vrcp.pop %v5083
          %v5100 = vmul.f32 %v5083, %v5099
          %v5101 = vsub.f32 1.0, %v5100
          %v5102 = vmul.f32 %v5099, %v5101
          %v5103 = vadd.f32 %v5099, %v5102
          %vm5104 = vweird.f32 %v5083
          %vm5105 = vweird.f32 %v5099
          %vm5106 = vmor %vm5104, %vm5105
          %v5107 = vsel %vm5106, %v5099, %v5103
          %v5108 = vand.u32 2147483647, %v5083
          %vm5109 = vcmp.eq.f32.partialorder %v5108, 8.507059e+37
          %v5110 = vand.u32 %v5083, 2147483648
          %v5111 = vor.u32 1.1754944e-38, %v5110
          %v5112 = vsel %vm5109, %v5111, %v5107
          %v5113 = vrcp.pop %v5084
          %v5114 = vmul.f32 %v5084, %v5113
          %v5115 = vsub.f32 1.0, %v5114
          %v5116 = vmul.f32 %v5113, %v5115
          %v5117 = vadd.f32 %v5113, %v5116
          %vm5118 = vweird.f32 %v5084
          %vm5119 = vweird.f32 %v5113
          %vm5120 = vmor %vm5118, %vm5119
          %v5121 = vsel %vm5120, %v5113, %v5117
          %v5122 = vand.u32 2147483647, %v5084
          %vm5123 = vcmp.eq.f32.partialorder %v5122, 8.507059e+37
          %v5124 = vand.u32 %v5084, 2147483648
          %v5125 = vor.u32 1.1754944e-38, %v5124
          %v5126 = vsel %vm5123, %v5125, %v5121
          %v5127 = vrcp.pop %v5085
          %v5128 = vmul.f32 %v5085, %v5127
          %v5129 = vsub.f32 1.0, %v5128
          %v5130 = vmul.f32 %v5127, %v5129
          %v5131 = vadd.f32 %v5127, %v5130
          %vm5132 = vweird.f32 %v5085
          %vm5133 = vweird.f32 %v5127
          %vm5134 = vmor %vm5132, %vm5133
          %v5135 = vsel %vm5134, %v5127, %v5131
          %v5136 = vand.u32 2147483647, %v5085
          %vm5137 = vcmp.eq.f32.partialorder %v5136, 8.507059e+37
          %v5138 = vand.u32 %v5085, 2147483648
          %v5139 = vor.u32 1.1754944e-38, %v5138
          %v5140 = vsel %vm5137, %v5139, %v5135
          %v5141 = vrcp.pop %v5086
          %v5142 = vmul.f32 %v5086, %v5141
          %v5143 = vsub.f32 1.0, %v5142
          %v5144 = vmul.f32 %v5141, %v5143
          %v5145 = vadd.f32 %v5141, %v5144
          %vm5146 = vweird.f32 %v5086
          %vm5147 = vweird.f32 %v5141
          %vm5148 = vmor %vm5146, %vm5147
          %v5149 = vsel %vm5148, %v5141, %v5145
          %v5150 = vand.u32 2147483647, %v5086
          %vm5151 = vcmp.eq.f32.partialorder %v5150, 8.507059e+37
          %v5152 = vand.u32 %v5086, 2147483648
          %v5153 = vor.u32 1.1754944e-38, %v5152
          %v5154 = vsel %vm5151, %v5153, %v5149
          %v5155 = vrcp.pop %v5087
          %v5156 = vmul.f32 %v5087, %v5155
          %v5157 = vsub.f32 1.0, %v5156
          %v5158 = vmul.f32 %v5155, %v5157
          %v5159 = vadd.f32 %v5155, %v5158
          %vm5160 = vweird.f32 %v5087
          %vm5161 = vweird.f32 %v5155
          %vm5162 = vmor %vm5160, %vm5161
          %v5163 = vsel %vm5162, %v5155, %v5159
          %v5164 = vand.u32 2147483647, %v5087
          %vm5165 = vcmp.eq.f32.partialorder %v5164, 8.507059e+37
          %v5166 = vand.u32 %v5087, 2147483648
          %v5167 = vor.u32 1.1754944e-38, %v5166
          %v5168 = vsel %vm5165, %v5167, %v5163
          %v5169 = vrcp.pop %v5088
          %v5170 = vmul.f32 %v5088, %v5169
          %v5171 = vsub.f32 1.0, %v5170
          %v5172 = vmul.f32 %v5169, %v5171
          %v5173 = vadd.f32 %v5169, %v5172
          %vm5174 = vweird.f32 %v5088
          %vm5175 = vweird.f32 %v5169
          %vm5176 = vmor %vm5174, %vm5175
          %v5177 = vsel %vm5176, %v5169, %v5173
          %v5178 = vand.u32 2147483647, %v5088
          %vm5179 = vcmp.eq.f32.partialorder %v5178, 8.507059e+37
          %v5180 = vand.u32 %v5088, 2147483648
          %v5181 = vor.u32 1.1754944e-38, %v5180
          %v5182 = vsel %vm5179, %v5181, %v5177
          %v5183 = vrcp.pop %v5089
          %v5184 = vmul.f32 %v5089, %v5183
          %v5185 = vsub.f32 1.0, %v5184
          %v5186 = vmul.f32 %v5183, %v5185
          %v5187 = vadd.f32 %v5183, %v5186
          %vm5188 = vweird.f32 %v5089
          %vm5189 = vweird.f32 %v5183
          %vm5190 = vmor %vm5188, %vm5189
          %v5191 = vsel %vm5190, %v5183, %v5187
          %v5192 = vand.u32 2147483647, %v5089
          %vm5193 = vcmp.eq.f32.partialorder %v5192, 8.507059e+37
          %v5194 = vand.u32 %v5089, 2147483648
          %v5195 = vor.u32 1.1754944e-38, %v5194
          %v5196 = vsel %vm5193, %v5195, %v5191
          %v5197 = vrcp.pop %v5090
          %v5198 = vmul.f32 %v5090, %v5197
          %v5199 = vsub.f32 1.0, %v5198
          %v5200 = vmul.f32 %v5197, %v5199
          %v5201 = vadd.f32 %v5197, %v5200
          %vm5202 = vweird.f32 %v5090
          %vm5203 = vweird.f32 %v5197
          %vm5204 = vmor %vm5202, %vm5203
          %v5205 = vsel %vm5204, %v5197, %v5201
          %v5206 = vand.u32 2147483647, %v5090
          %vm5207 = vcmp.eq.f32.partialorder %v5206, 8.507059e+37
          %v5208 = vand.u32 %v5090, 2147483648
          %v5209 = vor.u32 1.1754944e-38, %v5208
          %v5210 = vsel %vm5207, %v5209, %v5205
          %v5211 = vrcp.pop %v5091
          %v5212 = vmul.f32 %v5091, %v5211
          %v5213 = vsub.f32 1.0, %v5212
          %v5214 = vmul.f32 %v5211, %v5213
          %v5215 = vadd.f32 %v5211, %v5214
          %vm5216 = vweird.f32 %v5091
          %vm5217 = vweird.f32 %v5211
          %vm5218 = vmor %vm5216, %vm5217
          %v5219 = vsel %vm5218, %v5211, %v5215
          %v5220 = vand.u32 2147483647, %v5091
          %vm5221 = vcmp.eq.f32.partialorder %v5220, 8.507059e+37
          %v5222 = vand.u32 %v5091, 2147483648
          %v5223 = vor.u32 1.1754944e-38, %v5222
          %v5224 = vsel %vm5221, %v5223, %v5219
          %v5225 = vrcp.pop %v5092
          %v5226 = vmul.f32 %v5092, %v5225
          %v5227 = vsub.f32 1.0, %v5226
          %v5228 = vmul.f32 %v5225, %v5227
          %v5229 = vadd.f32 %v5225, %v5228
          %vm5230 = vweird.f32 %v5092
          %vm5231 = vweird.f32 %v5225
          %vm5232 = vmor %vm5230, %vm5231
          %v5233 = vsel %vm5232, %v5225, %v5229
          %v5234 = vand.u32 2147483647, %v5092
          %vm5235 = vcmp.eq.f32.partialorder %v5234, 8.507059e+37
          %v5236 = vand.u32 %v5092, 2147483648
          %v5237 = vor.u32 1.1754944e-38, %v5236
          %v5238 = vsel %vm5235, %v5237, %v5233
          %v5239 = vrcp.pop %v5093
          %v5240 = vmul.f32 %v5093, %v5239
          %v5241 = vsub.f32 1.0, %v5240
          %v5242 = vmul.f32 %v5239, %v5241
          %v5243 = vadd.f32 %v5239, %v5242
          %vm5244 = vweird.f32 %v5093
          %vm5245 = vweird.f32 %v5239
          %vm5246 = vmor %vm5244, %vm5245
          %v5247 = vsel %vm5246, %v5239, %v5243
          %v5248 = vand.u32 2147483647, %v5093
          %vm5249 = vcmp.eq.f32.partialorder %v5248, 8.507059e+37
          %v5250 = vand.u32 %v5093, 2147483648
          %v5251 = vor.u32 1.1754944e-38, %v5250
          %v5252 = vsel %vm5249, %v5251, %v5247
          %v5253 = vrcp.pop %v5094
          %v5254 = vmul.f32 %v5094, %v5253
          %v5255 = vsub.f32 1.0, %v5254
          %v5256 = vmul.f32 %v5253, %v5255
          %v5257 = vadd.f32 %v5253, %v5256
          %vm5258 = vweird.f32 %v5094
          %vm5259 = vweird.f32 %v5253
          %vm5260 = vmor %vm5258, %vm5259
          %v5261 = vsel %vm5260, %v5253, %v5257
          %v5262 = vand.u32 2147483647, %v5094
          %vm5263 = vcmp.eq.f32.partialorder %v5262, 8.507059e+37
          %v5264 = vand.u32 %v5094, 2147483648
          %v5265 = vor.u32 1.1754944e-38, %v5264
          %v5266 = vsel %vm5263, %v5265, %v5261
          %v5267 = vrcp.pop %v5095
          %v5268 = vmul.f32 %v5095, %v5267
          %v5269 = vsub.f32 1.0, %v5268
          %v5270 = vmul.f32 %v5267, %v5269
          %v5271 = vadd.f32 %v5267, %v5270
          %vm5272 = vweird.f32 %v5095
          %vm5273 = vweird.f32 %v5267
          %vm5274 = vmor %vm5272, %vm5273
          %v5275 = vsel %vm5274, %v5267, %v5271
          %v5276 = vand.u32 2147483647, %v5095
          %vm5277 = vcmp.eq.f32.partialorder %v5276, 8.507059e+37
          %v5278 = vand.u32 %v5095, 2147483648
          %v5279 = vor.u32 1.1754944e-38, %v5278
          %v5280 = vsel %vm5277, %v5279, %v5275
          %v5281 = vrcp.pop %v5096
          %v5282 = vmul.f32 %v5096, %v5281
          %v5283 = vsub.f32 1.0, %v5282
          %v5284 = vmul.f32 %v5281, %v5283
          %v5285 = vadd.f32 %v5281, %v5284
          %vm5286 = vweird.f32 %v5096
          %vm5287 = vweird.f32 %v5281
          %vm5288 = vmor %vm5286, %vm5287
          %v5289 = vsel %vm5288, %v5281, %v5285
          %v5290 = vand.u32 2147483647, %v5096
          %vm5291 = vcmp.eq.f32.partialorder %v5290, 8.507059e+37
          %v5292 = vand.u32 %v5096, 2147483648
          %v5293 = vor.u32 1.1754944e-38, %v5292
          %v5294 = vsel %vm5291, %v5293, %v5289
          %v5295 = vrcp.pop %v5097
          %v5296 = vmul.f32 %v5097, %v5295
          %v5297 = vsub.f32 1.0, %v5296
          %v5298 = vmul.f32 %v5295, %v5297
          %v5299 = vadd.f32 %v5295, %v5298
          %vm5300 = vweird.f32 %v5097
          %vm5301 = vweird.f32 %v5295
          %vm5302 = vmor %vm5300, %vm5301
          %v5303 = vsel %vm5302, %v5295, %v5299
          %v5304 = vand.u32 2147483647, %v5097
          %vm5305 = vcmp.eq.f32.partialorder %v5304, 8.507059e+37
          %v5306 = vand.u32 %v5097, 2147483648
          %v5307 = vor.u32 1.1754944e-38, %v5306
          %v5308 = vsel %vm5305, %v5307, %v5303
          %v5309 = vrcp.pop %v5098
          %v5310 = vmul.f32 %v5098, %v5309
          %v5311 = vsub.f32 1.0, %v5310
          %v5312 = vmul.f32 %v5309, %v5311
          %v5313 = vadd.f32 %v5309, %v5312
          %vm5314 = vweird.f32 %v5098
          %vm5315 = vweird.f32 %v5309
          %vm5316 = vmor %vm5314, %vm5315
          %v5317 = vsel %vm5316, %v5309, %v5313
          %v5318 = vand.u32 2147483647, %v5098
          %vm5319 = vcmp.eq.f32.partialorder %v5318, 8.507059e+37
          %v5320 = vand.u32 %v5098, 2147483648
          %v5321 = vor.u32 1.1754944e-38, %v5320
          %v5322 = vsel %vm5319, %v5321, %v5317
          %v5323 = vld [vmem:[%s3280] sm:$0xff]
          %v5324 = vld [vmem:[%s3280 + $0x8] sm:$0xff]
          %v5325 = vld [vmem:[%s3280 + $0x10] sm:$0xff]
          %v5326 = vld [vmem:[%s3280 + $0x18] sm:$0xff]
          %v5327 = vld [vmem:[%s3280 + $0x20] sm:$0xff]
          %v5328 = vld [vmem:[%s3280 + $0x28] sm:$0xff]
          %v5329 = vld [vmem:[%s3280 + $0x30] sm:$0xff]
          %v5330 = vld [vmem:[%s3280 + $0x38] sm:$0xff]
          %v5331 = vld [vmem:[%s3280 + $0x40] sm:$0xff]
          %v5332 = vld [vmem:[%s3280 + $0x48] sm:$0xff]
          %v5333 = vld [vmem:[%s3280 + $0x50] sm:$0xff]
          %v5334 = vld [vmem:[%s3280 + $0x58] sm:$0xff]
          %v5335 = vld [vmem:[%s3280 + $0x60] sm:$0xff]
          %v5336 = vld [vmem:[%s3280 + $0x68] sm:$0xff]
          %v5337 = vld [vmem:[%s3280 + $0x70] sm:$0xff]
          %v5338 = vld [vmem:[%s3280 + $0x78] sm:$0xff]
          %5340 = vset.pattern.permute.xlu0 0
          %5341 = vperm.xlu0 %5340, %v5112
          %v5342 = vpop.permute.xlu0 %5341
          %5345 = vset.pattern.permute.xlu0 0
          %5346 = vperm.xlu0 %5345, %v5126
          %v5347 = vpop.permute.xlu0 %5346
          %5350 = vset.pattern.permute.xlu0 0
          %5351 = vperm.xlu0 %5350, %v5140
          %v5352 = vpop.permute.xlu0 %5351
          %5355 = vset.pattern.permute.xlu0 0
          %5356 = vperm.xlu0 %5355, %v5154
          %v5357 = vpop.permute.xlu0 %5356
          %5360 = vset.pattern.permute.xlu0 0
          %5361 = vperm.xlu0 %5360, %v5168
          %v5362 = vpop.permute.xlu0 %5361
          %5365 = vset.pattern.permute.xlu0 0
          %5366 = vperm.xlu0 %5365, %v5182
          %v5367 = vpop.permute.xlu0 %5366
          %5370 = vset.pattern.permute.xlu0 0
          %5371 = vperm.xlu0 %5370, %v5196
          %v5372 = vpop.permute.xlu0 %5371
          %5375 = vset.pattern.permute.xlu0 0
          %5376 = vperm.xlu0 %5375, %v5210
          %v5377 = vpop.permute.xlu0 %5376
          %5380 = vset.pattern.permute.xlu0 0
          %5381 = vperm.xlu0 %5380, %v5224
          %v5382 = vpop.permute.xlu0 %5381
          %5385 = vset.pattern.permute.xlu0 0
          %5386 = vperm.xlu0 %5385, %v5238
          %v5387 = vpop.permute.xlu0 %5386
          %5390 = vset.pattern.permute.xlu0 0
          %5391 = vperm.xlu0 %5390, %v5252
          %v5392 = vpop.permute.xlu0 %5391
          %5395 = vset.pattern.permute.xlu0 0
          %5396 = vperm.xlu0 %5395, %v5266
          %v5397 = vpop.permute.xlu0 %5396
          %5400 = vset.pattern.permute.xlu0 0
          %5401 = vperm.xlu0 %5400, %v5280
          %v5402 = vpop.permute.xlu0 %5401
          %5405 = vset.pattern.permute.xlu0 0
          %5406 = vperm.xlu0 %5405, %v5294
          %v5407 = vpop.permute.xlu0 %5406
          %5410 = vset.pattern.permute.xlu0 0
          %5411 = vperm.xlu0 %5410, %v5308
          %v5412 = vpop.permute.xlu0 %5411
          %5415 = vset.pattern.permute.xlu0 0
          %5416 = vperm.xlu0 %5415, %v5322
          %v5417 = vpop.permute.xlu0 %5416
          %v5419 = vmul.f32 %v5323, %v5342
          %v5420 = vmul.f32 %v5324, %v5347
          %v5421 = vmul.f32 %v5325, %v5352
          %v5422 = vmul.f32 %v5326, %v5357
          %v5423 = vmul.f32 %v5327, %v5362
          %v5424 = vmul.f32 %v5328, %v5367
          %v5425 = vmul.f32 %v5329, %v5372
          %v5426 = vmul.f32 %v5330, %v5377
          %v5427 = vmul.f32 %v5331, %v5382
          %v5428 = vmul.f32 %v5332, %v5387
          %v5429 = vmul.f32 %v5333, %v5392
          %v5430 = vmul.f32 %v5334, %v5397
          %v5431 = vmul.f32 %v5335, %v5402
          %v5432 = vmul.f32 %v5336, %v5407
          %v5433 = vmul.f32 %v5337, %v5412
          %v5434 = vmul.f32 %v5338, %v5417
          %v5435 = vld [vmem:[%s4004] sm:$0xff]
          %v5436 = vld [vmem:[%s4004 + $0x8] sm:$0xff]
          %v5437 = vld [vmem:[%s4004 + $0x10] sm:$0xff]
          %v5438 = vld [vmem:[%s4004 + $0x18] sm:$0xff]
          %v5439 = vld [vmem:[%s4004 + $0x20] sm:$0xff]
          %v5440 = vld [vmem:[%s4004 + $0x28] sm:$0xff]
          %v5441 = vld [vmem:[%s4004 + $0x30] sm:$0xff]
          %v5442 = vld [vmem:[%s4004 + $0x38] sm:$0xff]
          %v5443 = vld [vmem:[%s4004 + $0x40] sm:$0xff]
          %v5444 = vld [vmem:[%s4004 + $0x48] sm:$0xff]
          %v5445 = vld [vmem:[%s4004 + $0x50] sm:$0xff]
          %v5446 = vld [vmem:[%s4004 + $0x58] sm:$0xff]
          %v5447 = vld [vmem:[%s4004 + $0x60] sm:$0xff]
          %v5448 = vld [vmem:[%s4004 + $0x68] sm:$0xff]
          %v5449 = vld [vmem:[%s4004 + $0x70] sm:$0xff]
          %v5450 = vld [vmem:[%s4004 + $0x78] sm:$0xff]
          %v5451 = vrcp.pop %v5435
          %v5452 = vmul.f32 %v5435, %v5451
          %v5453 = vsub.f32 1.0, %v5452
          %v5454 = vmul.f32 %v5451, %v5453
          %v5455 = vadd.f32 %v5451, %v5454
          %vm5456 = vweird.f32 %v5435
          %vm5457 = vweird.f32 %v5451
          %vm5458 = vmor %vm5456, %vm5457
          %v5459 = vsel %vm5458, %v5451, %v5455
          %v5460 = vand.u32 2147483647, %v5435
          %vm5461 = vcmp.eq.f32.partialorder %v5460, 8.507059e+37
          %v5462 = vand.u32 %v5435, 2147483648
          %v5463 = vor.u32 1.1754944e-38, %v5462
          %v5464 = vsel %vm5461, %v5463, %v5459
          %v5465 = vrcp.pop %v5436
          %v5466 = vmul.f32 %v5436, %v5465
          %v5467 = vsub.f32 1.0, %v5466
          %v5468 = vmul.f32 %v5465, %v5467
          %v5469 = vadd.f32 %v5465, %v5468
          %vm5470 = vweird.f32 %v5436
          %vm5471 = vweird.f32 %v5465
          %vm5472 = vmor %vm5470, %vm5471
          %v5473 = vsel %vm5472, %v5465, %v5469
          %v5474 = vand.u32 2147483647, %v5436
          %vm5475 = vcmp.eq.f32.partialorder %v5474, 8.507059e+37
          %v5476 = vand.u32 %v5436, 2147483648
          %v5477 = vor.u32 1.1754944e-38, %v5476
          %v5478 = vsel %vm5475, %v5477, %v5473
          %v5479 = vrcp.pop %v5437
          %v5480 = vmul.f32 %v5437, %v5479
          %v5481 = vsub.f32 1.0, %v5480
          %v5482 = vmul.f32 %v5479, %v5481
          %v5483 = vadd.f32 %v5479, %v5482
          %vm5484 = vweird.f32 %v5437
          %vm5485 = vweird.f32 %v5479
          %vm5486 = vmor %vm5484, %vm5485
          %v5487 = vsel %vm5486, %v5479, %v5483
          %v5488 = vand.u32 2147483647, %v5437
          %vm5489 = vcmp.eq.f32.partialorder %v5488, 8.507059e+37
          %v5490 = vand.u32 %v5437, 2147483648
          %v5491 = vor.u32 1.1754944e-38, %v5490
          %v5492 = vsel %vm5489, %v5491, %v5487
          %v5493 = vrcp.pop %v5438
          %v5494 = vmul.f32 %v5438, %v5493
          %v5495 = vsub.f32 1.0, %v5494
          %v5496 = vmul.f32 %v5493, %v5495
          %v5497 = vadd.f32 %v5493, %v5496
          %vm5498 = vweird.f32 %v5438
          %vm5499 = vweird.f32 %v5493
          %vm5500 = vmor %vm5498, %vm5499
          %v5501 = vsel %vm5500, %v5493, %v5497
          %v5502 = vand.u32 2147483647, %v5438
          %vm5503 = vcmp.eq.f32.partialorder %v5502, 8.507059e+37
          %v5504 = vand.u32 %v5438, 2147483648
          %v5505 = vor.u32 1.1754944e-38, %v5504
          %v5506 = vsel %vm5503, %v5505, %v5501
          %v5507 = vrcp.pop %v5439
          %v5508 = vmul.f32 %v5439, %v5507
          %v5509 = vsub.f32 1.0, %v5508
          %v5510 = vmul.f32 %v5507, %v5509
          %v5511 = vadd.f32 %v5507, %v5510
          %vm5512 = vweird.f32 %v5439
          %vm5513 = vweird.f32 %v5507
          %vm5514 = vmor %vm5512, %vm5513
          %v5515 = vsel %vm5514, %v5507, %v5511
          %v5516 = vand.u32 2147483647, %v5439
          %vm5517 = vcmp.eq.f32.partialorder %v5516, 8.507059e+37
          %v5518 = vand.u32 %v5439, 2147483648
          %v5519 = vor.u32 1.1754944e-38, %v5518
          %v5520 = vsel %vm5517, %v5519, %v5515
          %v5521 = vrcp.pop %v5440
          %v5522 = vmul.f32 %v5440, %v5521
          %v5523 = vsub.f32 1.0, %v5522
          %v5524 = vmul.f32 %v5521, %v5523
          %v5525 = vadd.f32 %v5521, %v5524
          %vm5526 = vweird.f32 %v5440
          %vm5527 = vweird.f32 %v5521
          %vm5528 = vmor %vm5526, %vm5527
          %v5529 = vsel %vm5528, %v5521, %v5525
          %v5530 = vand.u32 2147483647, %v5440
          %vm5531 = vcmp.eq.f32.partialorder %v5530, 8.507059e+37
          %v5532 = vand.u32 %v5440, 2147483648
          %v5533 = vor.u32 1.1754944e-38, %v5532
          %v5534 = vsel %vm5531, %v5533, %v5529
          %v5535 = vrcp.pop %v5441
          %v5536 = vmul.f32 %v5441, %v5535
          %v5537 = vsub.f32 1.0, %v5536
          %v5538 = vmul.f32 %v5535, %v5537
          %v5539 = vadd.f32 %v5535, %v5538
          %vm5540 = vweird.f32 %v5441
          %vm5541 = vweird.f32 %v5535
          %vm5542 = vmor %vm5540, %vm5541
          %v5543 = vsel %vm5542, %v5535, %v5539
          %v5544 = vand.u32 2147483647, %v5441
          %vm5545 = vcmp.eq.f32.partialorder %v5544, 8.507059e+37
          %v5546 = vand.u32 %v5441, 2147483648
          %v5547 = vor.u32 1.1754944e-38, %v5546
          %v5548 = vsel %vm5545, %v5547, %v5543
          %v5549 = vrcp.pop %v5442
          %v5550 = vmul.f32 %v5442, %v5549
          %v5551 = vsub.f32 1.0, %v5550
          %v5552 = vmul.f32 %v5549, %v5551
          %v5553 = vadd.f32 %v5549, %v5552
          %vm5554 = vweird.f32 %v5442
          %vm5555 = vweird.f32 %v5549
          %vm5556 = vmor %vm5554, %vm5555
          %v5557 = vsel %vm5556, %v5549, %v5553
          %v5558 = vand.u32 2147483647, %v5442
          %vm5559 = vcmp.eq.f32.partialorder %v5558, 8.507059e+37
          %v5560 = vand.u32 %v5442, 2147483648
          %v5561 = vor.u32 1.1754944e-38, %v5560
          %v5562 = vsel %vm5559, %v5561, %v5557
          %v5563 = vrcp.pop %v5443
          %v5564 = vmul.f32 %v5443, %v5563
          %v5565 = vsub.f32 1.0, %v5564
          %v5566 = vmul.f32 %v5563, %v5565
          %v5567 = vadd.f32 %v5563, %v5566
          %vm5568 = vweird.f32 %v5443
          %vm5569 = vweird.f32 %v5563
          %vm5570 = vmor %vm5568, %vm5569
          %v5571 = vsel %vm5570, %v5563, %v5567
          %v5572 = vand.u32 2147483647, %v5443
          %vm5573 = vcmp.eq.f32.partialorder %v5572, 8.507059e+37
          %v5574 = vand.u32 %v5443, 2147483648
          %v5575 = vor.u32 1.1754944e-38, %v5574
          %v5576 = vsel %vm5573, %v5575, %v5571
          %v5577 = vrcp.pop %v5444
          %v5578 = vmul.f32 %v5444, %v5577
          %v5579 = vsub.f32 1.0, %v5578
          %v5580 = vmul.f32 %v5577, %v5579
          %v5581 = vadd.f32 %v5577, %v5580
          %vm5582 = vweird.f32 %v5444
          %vm5583 = vweird.f32 %v5577
          %vm5584 = vmor %vm5582, %vm5583
          %v5585 = vsel %vm5584, %v5577, %v5581
          %v5586 = vand.u32 2147483647, %v5444
          %vm5587 = vcmp.eq.f32.partialorder %v5586, 8.507059e+37
          %v5588 = vand.u32 %v5444, 2147483648
          %v5589 = vor.u32 1.1754944e-38, %v5588
          %v5590 = vsel %vm5587, %v5589, %v5585
          %v5591 = vrcp.pop %v5445
          %v5592 = vmul.f32 %v5445, %v5591
          %v5593 = vsub.f32 1.0, %v5592
          %v5594 = vmul.f32 %v5591, %v5593
          %v5595 = vadd.f32 %v5591, %v5594
          %vm5596 = vweird.f32 %v5445
          %vm5597 = vweird.f32 %v5591
          %vm5598 = vmor %vm5596, %vm5597
          %v5599 = vsel %vm5598, %v5591, %v5595
          %v5600 = vand.u32 2147483647, %v5445
          %vm5601 = vcmp.eq.f32.partialorder %v5600, 8.507059e+37
          %v5602 = vand.u32 %v5445, 2147483648
          %v5603 = vor.u32 1.1754944e-38, %v5602
          %v5604 = vsel %vm5601, %v5603, %v5599
          %v5605 = vrcp.pop %v5446
          %v5606 = vmul.f32 %v5446, %v5605
          %v5607 = vsub.f32 1.0, %v5606
          %v5608 = vmul.f32 %v5605, %v5607
          %v5609 = vadd.f32 %v5605, %v5608
          %vm5610 = vweird.f32 %v5446
          %vm5611 = vweird.f32 %v5605
          %vm5612 = vmor %vm5610, %vm5611
          %v5613 = vsel %vm5612, %v5605, %v5609
          %v5614 = vand.u32 2147483647, %v5446
          %vm5615 = vcmp.eq.f32.partialorder %v5614, 8.507059e+37
          %v5616 = vand.u32 %v5446, 2147483648
          %v5617 = vor.u32 1.1754944e-38, %v5616
          %v5618 = vsel %vm5615, %v5617, %v5613
          %v5619 = vrcp.pop %v5447
          %v5620 = vmul.f32 %v5447, %v5619
          %v5621 = vsub.f32 1.0, %v5620
          %v5622 = vmul.f32 %v5619, %v5621
          %v5623 = vadd.f32 %v5619, %v5622
          %vm5624 = vweird.f32 %v5447
          %vm5625 = vweird.f32 %v5619
          %vm5626 = vmor %vm5624, %vm5625
          %v5627 = vsel %vm5626, %v5619, %v5623
          %v5628 = vand.u32 2147483647, %v5447
          %vm5629 = vcmp.eq.f32.partialorder %v5628, 8.507059e+37
          %v5630 = vand.u32 %v5447, 2147483648
          %v5631 = vor.u32 1.1754944e-38, %v5630
          %v5632 = vsel %vm5629, %v5631, %v5627
          %v5633 = vrcp.pop %v5448
          %v5634 = vmul.f32 %v5448, %v5633
          %v5635 = vsub.f32 1.0, %v5634
          %v5636 = vmul.f32 %v5633, %v5635
          %v5637 = vadd.f32 %v5633, %v5636
          %vm5638 = vweird.f32 %v5448
          %vm5639 = vweird.f32 %v5633
          %vm5640 = vmor %vm5638, %vm5639
          %v5641 = vsel %vm5640, %v5633, %v5637
          %v5642 = vand.u32 2147483647, %v5448
          %vm5643 = vcmp.eq.f32.partialorder %v5642, 8.507059e+37
          %v5644 = vand.u32 %v5448, 2147483648
          %v5645 = vor.u32 1.1754944e-38, %v5644
          %v5646 = vsel %vm5643, %v5645, %v5641
          %v5647 = vrcp.pop %v5449
          %v5648 = vmul.f32 %v5449, %v5647
          %v5649 = vsub.f32 1.0, %v5648
          %v5650 = vmul.f32 %v5647, %v5649
          %v5651 = vadd.f32 %v5647, %v5650
          %vm5652 = vweird.f32 %v5449
          %vm5653 = vweird.f32 %v5647
          %vm5654 = vmor %vm5652, %vm5653
          %v5655 = vsel %vm5654, %v5647, %v5651
          %v5656 = vand.u32 2147483647, %v5449
          %vm5657 = vcmp.eq.f32.partialorder %v5656, 8.507059e+37
          %v5658 = vand.u32 %v5449, 2147483648
          %v5659 = vor.u32 1.1754944e-38, %v5658
          %v5660 = vsel %vm5657, %v5659, %v5655
          %v5661 = vrcp.pop %v5450
          %v5662 = vmul.f32 %v5450, %v5661
          %v5663 = vsub.f32 1.0, %v5662
          %v5664 = vmul.f32 %v5661, %v5663
          %v5665 = vadd.f32 %v5661, %v5664
          %vm5666 = vweird.f32 %v5450
          %vm5667 = vweird.f32 %v5661
          %vm5668 = vmor %vm5666, %vm5667
          %v5669 = vsel %vm5668, %v5661, %v5665
          %v5670 = vand.u32 2147483647, %v5450
          %vm5671 = vcmp.eq.f32.partialorder %v5670, 8.507059e+37
          %v5672 = vand.u32 %v5450, 2147483648
          %v5673 = vor.u32 1.1754944e-38, %v5672
          %v5674 = vsel %vm5671, %v5673, %v5669
          %v5675 = vld [vmem:[%s4101] sm:$0xff]
          %v5676 = vld [vmem:[%s4101 + $0x8] sm:$0xff]
          %v5677 = vld [vmem:[%s4101 + $0x10] sm:$0xff]
          %v5678 = vld [vmem:[%s4101 + $0x18] sm:$0xff]
          %v5679 = vld [vmem:[%s4101 + $0x20] sm:$0xff]
          %v5680 = vld [vmem:[%s4101 + $0x28] sm:$0xff]
          %v5681 = vld [vmem:[%s4101 + $0x30] sm:$0xff]
          %v5682 = vld [vmem:[%s4101 + $0x38] sm:$0xff]
          %v5683 = vld [vmem:[%s4101 + $0x40] sm:$0xff]
          %v5684 = vld [vmem:[%s4101 + $0x48] sm:$0xff]
          %v5685 = vld [vmem:[%s4101 + $0x50] sm:$0xff]
          %v5686 = vld [vmem:[%s4101 + $0x58] sm:$0xff]
          %v5687 = vld [vmem:[%s4101 + $0x60] sm:$0xff]
          %v5688 = vld [vmem:[%s4101 + $0x68] sm:$0xff]
          %v5689 = vld [vmem:[%s4101 + $0x70] sm:$0xff]
          %v5690 = vld [vmem:[%s4101 + $0x78] sm:$0xff]
          %5692 = vset.pattern.permute.xlu0 0
          %5693 = vperm.xlu0 %5692, %v5464
          %v5694 = vpop.permute.xlu0 %5693
          %5697 = vset.pattern.permute.xlu0 0
          %5698 = vperm.xlu0 %5697, %v5478
          %v5699 = vpop.permute.xlu0 %5698
          %5702 = vset.pattern.permute.xlu0 0
          %5703 = vperm.xlu0 %5702, %v5492
          %v5704 = vpop.permute.xlu0 %5703
          %5707 = vset.pattern.permute.xlu0 0
          %5708 = vperm.xlu0 %5707, %v5506
          %v5709 = vpop.permute.xlu0 %5708
          %5712 = vset.pattern.permute.xlu0 0
          %5713 = vperm.xlu0 %5712, %v5520
          %v5714 = vpop.permute.xlu0 %5713
          %5717 = vset.pattern.permute.xlu0 0
          %5718 = vperm.xlu0 %5717, %v5534
          %v5719 = vpop.permute.xlu0 %5718
          %5722 = vset.pattern.permute.xlu0 0
          %5723 = vperm.xlu0 %5722, %v5548
          %v5724 = vpop.permute.xlu0 %5723
          %5727 = vset.pattern.permute.xlu0 0
          %5728 = vperm.xlu0 %5727, %v5562
          %v5729 = vpop.permute.xlu0 %5728
          %5732 = vset.pattern.permute.xlu0 0
          %5733 = vperm.xlu0 %5732, %v5576
          %v5734 = vpop.permute.xlu0 %5733
          %5737 = vset.pattern.permute.xlu0 0
          %5738 = vperm.xlu0 %5737, %v5590
          %v5739 = vpop.permute.xlu0 %5738
          %5742 = vset.pattern.permute.xlu0 0
          %5743 = vperm.xlu0 %5742, %v5604
          %v5744 = vpop.permute.xlu0 %5743
          %5747 = vset.pattern.permute.xlu0 0
          %5748 = vperm.xlu0 %5747, %v5618
          %v5749 = vpop.permute.xlu0 %5748
          %5752 = vset.pattern.permute.xlu0 0
          %5753 = vperm.xlu0 %5752, %v5632
          %v5754 = vpop.permute.xlu0 %5753
          %5757 = vset.pattern.permute.xlu0 0
          %5758 = vperm.xlu0 %5757, %v5646
          %v5759 = vpop.permute.xlu0 %5758
          %5762 = vset.pattern.permute.xlu0 0
          %5763 = vperm.xlu0 %5762, %v5660
          %v5764 = vpop.permute.xlu0 %5763
          %5767 = vset.pattern.permute.xlu0 0
          %5768 = vperm.xlu0 %5767, %v5674
          %v5769 = vpop.permute.xlu0 %5768
          %v5771 = vmul.f32 %v5675, %v5694
          %v5772 = vmul.f32 %v5676, %v5699
          %v5773 = vmul.f32 %v5677, %v5704
          %v5774 = vmul.f32 %v5678, %v5709
          %v5775 = vmul.f32 %v5679, %v5714
          %v5776 = vmul.f32 %v5680, %v5719
          %v5777 = vmul.f32 %v5681, %v5724
          %v5778 = vmul.f32 %v5682, %v5729
          %v5779 = vmul.f32 %v5683, %v5734
          %v5780 = vmul.f32 %v5684, %v5739
          %v5781 = vmul.f32 %v5685, %v5744
          %v5782 = vmul.f32 %v5686, %v5749
          %v5783 = vmul.f32 %v5687, %v5754
          %v5784 = vmul.f32 %v5688, %v5759
          %v5785 = vmul.f32 %v5689, %v5764
          %v5786 = vmul.f32 %v5690, %v5769
          %v5787 = vld [vmem:[%s8] sm:$0x1]
          %s5788 = smul.u32 %s26, 128
          %s5789 = sadd.s32 %s5788, 128
          %p5790 = scmp.le.s32.totalorder %s5789, 128
          // Predicated region
          $region115: #{tpu_custom_call.1} parent=113 // pred_check
            %p5791 = pneg %p5790
          $region116: #{tpu_custom_call.1} parent=113 // pred_check_branch
            %5793 = sbr.rel (%p5791) target = $region118
          $region117: #{tpu_custom_call.1} parent=113 // pred_region
            %v5794 = vld [vmem:[#allocation9] sm:$0xff]
            %v5795 = vld [vmem:[#allocation9 + $0x8] sm:$0xff]
            %v5796 = vld [vmem:[#allocation9 + $0x10] sm:$0xff]
            %v5797 = vld [vmem:[#allocation9 + $0x18] sm:$0xff]
            %v5799 = vsel %vm1156, %v5067, 0
            %v5802 = vsel %vm1156, %v5068, 0
            %v5805 = vsel %vm1156, %v5069, 0
            %v5808 = vsel %vm1156, %v5070, 0
            %v5811 = vsel %vm1156, %v5071, 0
            %v5814 = vsel %vm1156, %v5072, 0
            %v5817 = vsel %vm1156, %v5073, 0
            %v5820 = vsel %vm1156, %v5074, 0
            %v5823 = vsel %vm1156, %v5075, 0
            %v5826 = vsel %vm1156, %v5076, 0
            %v5829 = vsel %vm1156, %v5077, 0
            %v5832 = vsel %vm1156, %v5078, 0
            %v5835 = vsel %vm1156, %v5079, 0
            %v5838 = vsel %vm1156, %v5080, 0
            %v5841 = vsel %vm1156, %v5081, 0
            %v5844 = vsel %vm1156, %v5082, 0
            %5846 = vmatpush.msra.mxu0 0.0
            %5847 = vmatpush.msra.mxu0 0.0
            %5848 = vmatpush.msra.mxu0 0.0
            %5849 = vmatpush.msra.mxu0 0.0
            %5850 = vmatpush.msra.mxu0 0.0
            %5851 = vmatpush.msra.mxu0 0.0
            %5852 = vmatpush.msra.mxu0 0.0
            %5853 = vmatpush.msra.mxu0 0.0
            %5854 = vmatpush.msra.mxu0 0.0
            %5855 = vmatpush.msra.mxu0 0.0
            %5856 = vmatpush.msra.mxu0 0.0
            %5857 = vmatpush.msra.mxu0 0.0
            %5858 = vmatpush.msra.mxu0 0.0
            %5859 = vmatpush.msra.mxu0 0.0
            %5860 = vmatpush.msra.mxu0 0.0
            %5861 = vmatpush.msra.mxu0 %v5795
            %5862 = vmatmul.f32.gmra.mxu0 %v5799
            %v5863 = vpop.f32.mrf.mxu0
            %v5864 = vadd.f32 0.0, %v5863
            %5865 = vmatmul.f32.gmra.mxu0 %v5802
            %v5866 = vpop.f32.mrf.mxu0
            %v5867 = vadd.f32 0.0, %v5866
            %5868 = vmatmul.f32.gmra.mxu0 %v5805
            %v5869 = vpop.f32.mrf.mxu0
            %v5870 = vadd.f32 0.0, %v5869
            %5871 = vmatmul.f32.gmra.mxu0 %v5808
            %v5872 = vpop.f32.mrf.mxu0
            %v5873 = vadd.f32 0.0, %v5872
            %5874 = vmatmul.f32.gmra.mxu0 %v5811
            %v5875 = vpop.f32.mrf.mxu0
            %v5876 = vadd.f32 0.0, %v5875
            %5877 = vmatmul.f32.gmra.mxu0 %v5814
            %v5878 = vpop.f32.mrf.mxu0
            %v5879 = vadd.f32 0.0, %v5878
            %5880 = vmatmul.f32.gmra.mxu0 %v5817
            %v5881 = vpop.f32.mrf.mxu0
            %v5882 = vadd.f32 0.0, %v5881
            %5883 = vmatmul.f32.gmra.mxu0 %v5820
            %v5884 = vpop.f32.mrf.mxu0
            %v5885 = vadd.f32 0.0, %v5884
            %5886 = vmatmul.f32.gmra.mxu0 %v5823
            %v5887 = vpop.f32.mrf.mxu0
            %v5888 = vadd.f32 0.0, %v5887
            %5889 = vmatmul.f32.gmra.mxu0 %v5826
            %v5890 = vpop.f32.mrf.mxu0
            %v5891 = vadd.f32 0.0, %v5890
            %5892 = vmatmul.f32.gmra.mxu0 %v5829
            %v5893 = vpop.f32.mrf.mxu0
            %v5894 = vadd.f32 0.0, %v5893
            %5895 = vmatmul.f32.gmra.mxu0 %v5832
            %v5896 = vpop.f32.mrf.mxu0
            %v5897 = vadd.f32 0.0, %v5896
            %5898 = vmatmul.f32.gmra.mxu0 %v5835
            %v5899 = vpop.f32.mrf.mxu0
            %v5900 = vadd.f32 0.0, %v5899
            %5901 = vmatmul.f32.gmra.mxu0 %v5838
            %v5902 = vpop.f32.mrf.mxu0
            %v5903 = vadd.f32 0.0, %v5902
            %5904 = vmatmul.f32.gmra.mxu0 %v5841
            %v5905 = vpop.f32.mrf.mxu0
            %v5906 = vadd.f32 0.0, %v5905
            %5907 = vmatmul.f32.gmra.mxu0 %v5844
            %v5908 = vpop.f32.mrf.mxu0
            %v5909 = vadd.f32 0.0, %v5908
            %5910 = vdwg.mxu0
            %v5912 = vsel %vm1156, %v4715, 0
            %v5915 = vsel %vm1156, %v4716, 0
            %v5918 = vsel %vm1156, %v4717, 0
            %v5921 = vsel %vm1156, %v4718, 0
            %v5924 = vsel %vm1156, %v4719, 0
            %v5927 = vsel %vm1156, %v4720, 0
            %v5930 = vsel %vm1156, %v4721, 0
            %v5933 = vsel %vm1156, %v4722, 0
            %v5936 = vsel %vm1156, %v4723, 0
            %v5939 = vsel %vm1156, %v4724, 0
            %v5942 = vsel %vm1156, %v4725, 0
            %v5945 = vsel %vm1156, %v4726, 0
            %v5948 = vsel %vm1156, %v4727, 0
            %v5951 = vsel %vm1156, %v4728, 0
            %v5954 = vsel %vm1156, %v4729, 0
            %v5957 = vsel %vm1156, %v4730, 0
            %5959 = vmatpush.msra.mxu0 0.0
            %5960 = vmatpush.msra.mxu0 0.0
            %5961 = vmatpush.msra.mxu0 0.0
            %5962 = vmatpush.msra.mxu0 0.0
            %5963 = vmatpush.msra.mxu0 0.0
            %5964 = vmatpush.msra.mxu0 0.0
            %5965 = vmatpush.msra.mxu0 0.0
            %5966 = vmatpush.msra.mxu0 0.0
            %5967 = vmatpush.msra.mxu0 0.0
            %5968 = vmatpush.msra.mxu0 0.0
            %5969 = vmatpush.msra.mxu0 0.0
            %5970 = vmatpush.msra.mxu0 0.0
            %5971 = vmatpush.msra.mxu0 0.0
            %5972 = vmatpush.msra.mxu0 0.0
            %5973 = vmatpush.msra.mxu0 0.0
            %5974 = vmatpush.msra.mxu0 %v5794
            %5975 = vmatmul.f32.gmra.mxu0 %v5912
            %v5976 = vpop.f32.mrf.mxu0
            %v5977 = vadd.f32 %v5864, %v5976
            %5978 = vmatmul.f32.gmra.mxu0 %v5915
            %v5979 = vpop.f32.mrf.mxu0
            %v5980 = vadd.f32 %v5867, %v5979
            %5981 = vmatmul.f32.gmra.mxu0 %v5918
            %v5982 = vpop.f32.mrf.mxu0
            %v5983 = vadd.f32 %v5870, %v5982
            %5984 = vmatmul.f32.gmra.mxu0 %v5921
            %v5985 = vpop.f32.mrf.mxu0
            %v5986 = vadd.f32 %v5873, %v5985
            %5987 = vmatmul.f32.gmra.mxu0 %v5924
            %v5988 = vpop.f32.mrf.mxu0
            %v5989 = vadd.f32 %v5876, %v5988
            %5990 = vmatmul.f32.gmra.mxu0 %v5927
            %v5991 = vpop.f32.mrf.mxu0
            %v5992 = vadd.f32 %v5879, %v5991
            %5993 = vmatmul.f32.gmra.mxu0 %v5930
            %v5994 = vpop.f32.mrf.mxu0
            %v5995 = vadd.f32 %v5882, %v5994
            %5996 = vmatmul.f32.gmra.mxu0 %v5933
            %v5997 = vpop.f32.mrf.mxu0
            %v5998 = vadd.f32 %v5885, %v5997
            %5999 = vmatmul.f32.gmra.mxu0 %v5936
            %v6000 = vpop.f32.mrf.mxu0
            %v6001 = vadd.f32 %v5888, %v6000
            %6002 = vmatmul.f32.gmra.mxu0 %v5939
            %v6003 = vpop.f32.mrf.mxu0
            %v6004 = vadd.f32 %v5891, %v6003
            %6005 = vmatmul.f32.gmra.mxu0 %v5942
            %v6006 = vpop.f32.mrf.mxu0
            %v6007 = vadd.f32 %v5894, %v6006
            %6008 = vmatmul.f32.gmra.mxu0 %v5945
            %v6009 = vpop.f32.mrf.mxu0
            %v6010 = vadd.f32 %v5897, %v6009
            %6011 = vmatmul.f32.gmra.mxu0 %v5948
            %v6012 = vpop.f32.mrf.mxu0
            %v6013 = vadd.f32 %v5900, %v6012
            %6014 = vmatmul.f32.gmra.mxu0 %v5951
            %v6015 = vpop.f32.mrf.mxu0
            %v6016 = vadd.f32 %v5903, %v6015
            %6017 = vmatmul.f32.gmra.mxu0 %v5954
            %v6018 = vpop.f32.mrf.mxu0
            %v6019 = vadd.f32 %v5906, %v6018
            %6020 = vmatmul.f32.gmra.mxu0 %v5957
            %v6021 = vpop.f32.mrf.mxu0
            %v6022 = vadd.f32 %v5909, %v6021
            %6023 = vdwg.mxu0
            %v6025 = vsel %vm1156, %v5419, 0
            %v6028 = vsel %vm1156, %v5420, 0
            %v6031 = vsel %vm1156, %v5421, 0
            %v6034 = vsel %vm1156, %v5422, 0
            %v6037 = vsel %vm1156, %v5423, 0
            %v6040 = vsel %vm1156, %v5424, 0
            %v6043 = vsel %vm1156, %v5425, 0
            %v6046 = vsel %vm1156, %v5426, 0
            %v6049 = vsel %vm1156, %v5427, 0
            %v6052 = vsel %vm1156, %v5428, 0
            %v6055 = vsel %vm1156, %v5429, 0
            %v6058 = vsel %vm1156, %v5430, 0
            %v6061 = vsel %vm1156, %v5431, 0
            %v6064 = vsel %vm1156, %v5432, 0
            %v6067 = vsel %vm1156, %v5433, 0
            %v6070 = vsel %vm1156, %v5434, 0
            %6072 = vmatpush.msra.mxu0 0.0
            %6073 = vmatpush.msra.mxu0 0.0
            %6074 = vmatpush.msra.mxu0 0.0
            %6075 = vmatpush.msra.mxu0 0.0
            %6076 = vmatpush.msra.mxu0 0.0
            %6077 = vmatpush.msra.mxu0 0.0
            %6078 = vmatpush.msra.mxu0 0.0
            %6079 = vmatpush.msra.mxu0 0.0
            %6080 = vmatpush.msra.mxu0 0.0
            %6081 = vmatpush.msra.mxu0 0.0
            %6082 = vmatpush.msra.mxu0 0.0
            %6083 = vmatpush.msra.mxu0 0.0
            %6084 = vmatpush.msra.mxu0 0.0
            %6085 = vmatpush.msra.mxu0 0.0
            %6086 = vmatpush.msra.mxu0 0.0
            %6087 = vmatpush.msra.mxu0 %v5796
            %6088 = vmatmul.f32.gmra.mxu0 %v6025
            %v6089 = vpop.f32.mrf.mxu0
            %v6090 = vadd.f32 0.0, %v6089
            %6091 = vmatmul.f32.gmra.mxu0 %v6028
            %v6092 = vpop.f32.mrf.mxu0
            %v6093 = vadd.f32 0.0, %v6092
            %6094 = vmatmul.f32.gmra.mxu0 %v6031
            %v6095 = vpop.f32.mrf.mxu0
            %v6096 = vadd.f32 0.0, %v6095
            %6097 = vmatmul.f32.gmra.mxu0 %v6034
            %v6098 = vpop.f32.mrf.mxu0
            %v6099 = vadd.f32 0.0, %v6098
            %6100 = vmatmul.f32.gmra.mxu0 %v6037
            %v6101 = vpop.f32.mrf.mxu0
            %v6102 = vadd.f32 0.0, %v6101
            %6103 = vmatmul.f32.gmra.mxu0 %v6040
            %v6104 = vpop.f32.mrf.mxu0
            %v6105 = vadd.f32 0.0, %v6104
            %6106 = vmatmul.f32.gmra.mxu0 %v6043
            %v6107 = vpop.f32.mrf.mxu0
            %v6108 = vadd.f32 0.0, %v6107
            %6109 = vmatmul.f32.gmra.mxu0 %v6046
            %v6110 = vpop.f32.mrf.mxu0
            %v6111 = vadd.f32 0.0, %v6110
            %6112 = vmatmul.f32.gmra.mxu0 %v6049
            %v6113 = vpop.f32.mrf.mxu0
            %v6114 = vadd.f32 0.0, %v6113
            %6115 = vmatmul.f32.gmra.mxu0 %v6052
            %v6116 = vpop.f32.mrf.mxu0
            %v6117 = vadd.f32 0.0, %v6116
            %6118 = vmatmul.f32.gmra.mxu0 %v6055
            %v6119 = vpop.f32.mrf.mxu0
            %v6120 = vadd.f32 0.0, %v6119
            %6121 = vmatmul.f32.gmra.mxu0 %v6058
            %v6122 = vpop.f32.mrf.mxu0
            %v6123 = vadd.f32 0.0, %v6122
            %6124 = vmatmul.f32.gmra.mxu0 %v6061
            %v6125 = vpop.f32.mrf.mxu0
            %v6126 = vadd.f32 0.0, %v6125
            %6127 = vmatmul.f32.gmra.mxu0 %v6064
            %v6128 = vpop.f32.mrf.mxu0
            %v6129 = vadd.f32 0.0, %v6128
            %6130 = vmatmul.f32.gmra.mxu0 %v6067
            %v6131 = vpop.f32.mrf.mxu0
            %v6132 = vadd.f32 0.0, %v6131
            %6133 = vmatmul.f32.gmra.mxu0 %v6070
            %v6134 = vpop.f32.mrf.mxu0
            %v6135 = vadd.f32 0.0, %v6134
            %6136 = vdwg.mxu0
            %v6137 = vadd.f32 %v5977, %v6090
            %v6138 = vadd.f32 %v5980, %v6093
            %v6139 = vadd.f32 %v5983, %v6096
            %v6140 = vadd.f32 %v5986, %v6099
            %v6141 = vadd.f32 %v5989, %v6102
            %v6142 = vadd.f32 %v5992, %v6105
            %v6143 = vadd.f32 %v5995, %v6108
            %v6144 = vadd.f32 %v5998, %v6111
            %v6145 = vadd.f32 %v6001, %v6114
            %v6146 = vadd.f32 %v6004, %v6117
            %v6147 = vadd.f32 %v6007, %v6120
            %v6148 = vadd.f32 %v6010, %v6123
            %v6149 = vadd.f32 %v6013, %v6126
            %v6150 = vadd.f32 %v6016, %v6129
            %v6151 = vadd.f32 %v6019, %v6132
            %v6152 = vadd.f32 %v6022, %v6135
            %v6154 = vsel %vm1156, %v5771, 0
            %v6157 = vsel %vm1156, %v5772, 0
            %v6160 = vsel %vm1156, %v5773, 0
            %v6163 = vsel %vm1156, %v5774, 0
            %v6166 = vsel %vm1156, %v5775, 0
            %v6169 = vsel %vm1156, %v5776, 0
            %v6172 = vsel %vm1156, %v5777, 0
            %v6175 = vsel %vm1156, %v5778, 0
            %v6178 = vsel %vm1156, %v5779, 0
            %v6181 = vsel %vm1156, %v5780, 0
            %v6184 = vsel %vm1156, %v5781, 0
            %v6187 = vsel %vm1156, %v5782, 0
            %v6190 = vsel %vm1156, %v5783, 0
            %v6193 = vsel %vm1156, %v5784, 0
            %v6196 = vsel %vm1156, %v5785, 0
            %v6199 = vsel %vm1156, %v5786, 0
            %6201 = vmatpush.msra.mxu0 0.0
            %6202 = vmatpush.msra.mxu0 0.0
            %6203 = vmatpush.msra.mxu0 0.0
            %6204 = vmatpush.msra.mxu0 0.0
            %6205 = vmatpush.msra.mxu0 0.0
            %6206 = vmatpush.msra.mxu0 0.0
            %6207 = vmatpush.msra.mxu0 0.0
            %6208 = vmatpush.msra.mxu0 0.0
            %6209 = vmatpush.msra.mxu0 0.0
            %6210 = vmatpush.msra.mxu0 0.0
            %6211 = vmatpush.msra.mxu0 0.0
            %6212 = vmatpush.msra.mxu0 0.0
            %6213 = vmatpush.msra.mxu0 0.0
            %6214 = vmatpush.msra.mxu0 0.0
            %6215 = vmatpush.msra.mxu0 0.0
            %6216 = vmatpush.msra.mxu0 %v5797
            %6217 = vmatmul.f32.gmra.mxu0 %v6154
            %v6218 = vpop.f32.mrf.mxu0
            %v6219 = vadd.f32 0.0, %v6218
            %6220 = vmatmul.f32.gmra.mxu0 %v6157
            %v6221 = vpop.f32.mrf.mxu0
            %v6222 = vadd.f32 0.0, %v6221
            %6223 = vmatmul.f32.gmra.mxu0 %v6160
            %v6224 = vpop.f32.mrf.mxu0
            %v6225 = vadd.f32 0.0, %v6224
            %6226 = vmatmul.f32.gmra.mxu0 %v6163
            %v6227 = vpop.f32.mrf.mxu0
            %v6228 = vadd.f32 0.0, %v6227
            %6229 = vmatmul.f32.gmra.mxu0 %v6166
            %v6230 = vpop.f32.mrf.mxu0
            %v6231 = vadd.f32 0.0, %v6230
            %6232 = vmatmul.f32.gmra.mxu0 %v6169
            %v6233 = vpop.f32.mrf.mxu0
            %v6234 = vadd.f32 0.0, %v6233
            %6235 = vmatmul.f32.gmra.mxu0 %v6172
            %v6236 = vpop.f32.mrf.mxu0
            %v6237 = vadd.f32 0.0, %v6236
            %6238 = vmatmul.f32.gmra.mxu0 %v6175
            %v6239 = vpop.f32.mrf.mxu0
            %v6240 = vadd.f32 0.0, %v6239
            %6241 = vmatmul.f32.gmra.mxu0 %v6178
            %v6242 = vpop.f32.mrf.mxu0
            %v6243 = vadd.f32 0.0, %v6242
            %6244 = vmatmul.f32.gmra.mxu0 %v6181
            %v6245 = vpop.f32.mrf.mxu0
            %v6246 = vadd.f32 0.0, %v6245
            %6247 = vmatmul.f32.gmra.mxu0 %v6184
            %v6248 = vpop.f32.mrf.mxu0
            %v6249 = vadd.f32 0.0, %v6248
            %6250 = vmatmul.f32.gmra.mxu0 %v6187
            %v6251 = vpop.f32.mrf.mxu0
            %v6252 = vadd.f32 0.0, %v6251
            %6253 = vmatmul.f32.gmra.mxu0 %v6190
            %v6254 = vpop.f32.mrf.mxu0
            %v6255 = vadd.f32 0.0, %v6254
            %6256 = vmatmul.f32.gmra.mxu0 %v6193
            %v6257 = vpop.f32.mrf.mxu0
            %v6258 = vadd.f32 0.0, %v6257
            %6259 = vmatmul.f32.gmra.mxu0 %v6196
            %v6260 = vpop.f32.mrf.mxu0
            %v6261 = vadd.f32 0.0, %v6260
            %6262 = vmatmul.f32.gmra.mxu0 %v6199
            %v6263 = vpop.f32.mrf.mxu0
            %v6264 = vadd.f32 0.0, %v6263
            %6265 = vdwg.mxu0
            %v6266 = vadd.f32 %v6137, %v6219
            %v6267 = vadd.f32 %v6138, %v6222
            %v6268 = vadd.f32 %v6139, %v6225
            %v6269 = vadd.f32 %v6140, %v6228
            %v6270 = vadd.f32 %v6141, %v6231
            %v6271 = vadd.f32 %v6142, %v6234
            %v6272 = vadd.f32 %v6143, %v6237
            %v6273 = vadd.f32 %v6144, %v6240
            %v6274 = vadd.f32 %v6145, %v6243
            %v6275 = vadd.f32 %v6146, %v6246
            %v6276 = vadd.f32 %v6147, %v6249
            %v6277 = vadd.f32 %v6148, %v6252
            %v6278 = vadd.f32 %v6149, %v6255
            %v6279 = vadd.f32 %v6150, %v6258
            %v6280 = vadd.f32 %v6151, %v6261
            %v6281 = vadd.f32 %v6152, %v6264
            %v6283 = vperm.slane %v5787, 0
            %v6285 = vadd.f32 %v6266, %v6283
            %v6286 = vadd.f32 %v6267, %v6283
            %v6287 = vadd.f32 %v6268, %v6283
            %v6288 = vadd.f32 %v6269, %v6283
            %v6289 = vadd.f32 %v6270, %v6283
            %v6290 = vadd.f32 %v6271, %v6283
            %v6291 = vadd.f32 %v6272, %v6283
            %v6292 = vadd.f32 %v6273, %v6283
            %v6293 = vadd.f32 %v6274, %v6283
            %v6294 = vadd.f32 %v6275, %v6283
            %v6295 = vadd.f32 %v6276, %v6283
            %v6296 = vadd.f32 %v6277, %v6283
            %v6297 = vadd.f32 %v6278, %v6283
            %v6298 = vadd.f32 %v6279, %v6283
            %v6299 = vadd.f32 %v6280, %v6283
            %v6300 = vadd.f32 %v6281, %v6283
            %vm6301 = vcmp.ge.f32.partialorder %v6285, 0.0
            %vm6302 = vcmp.ge.f32.partialorder %v6286, 0.0
            %vm6303 = vcmp.ge.f32.partialorder %v6287, 0.0
            %vm6304 = vcmp.ge.f32.partialorder %v6288, 0.0
            %vm6305 = vcmp.ge.f32.partialorder %v6289, 0.0
            %vm6306 = vcmp.ge.f32.partialorder %v6290, 0.0
            %vm6307 = vcmp.ge.f32.partialorder %v6291, 0.0
            %vm6308 = vcmp.ge.f32.partialorder %v6292, 0.0
            %vm6309 = vcmp.ge.f32.partialorder %v6293, 0.0
            %vm6310 = vcmp.ge.f32.partialorder %v6294, 0.0
            %vm6311 = vcmp.ge.f32.partialorder %v6295, 0.0
            %vm6312 = vcmp.ge.f32.partialorder %v6296, 0.0
            %vm6313 = vcmp.ge.f32.partialorder %v6297, 0.0
            %vm6314 = vcmp.ge.f32.partialorder %v6298, 0.0
            %vm6315 = vcmp.ge.f32.partialorder %v6299, 0.0
            %vm6316 = vcmp.ge.f32.partialorder %v6300, 0.0
            %v6317 = vmul.f32 %v6285, 0.01
            %v6318 = vmul.f32 %v6286, 0.01
            %v6319 = vmul.f32 %v6287, 0.01
            %v6320 = vmul.f32 %v6288, 0.01
            %v6321 = vmul.f32 %v6289, 0.01
            %v6322 = vmul.f32 %v6290, 0.01
            %v6323 = vmul.f32 %v6291, 0.01
            %v6324 = vmul.f32 %v6292, 0.01
            %v6325 = vmul.f32 %v6293, 0.01
            %v6326 = vmul.f32 %v6294, 0.01
            %v6327 = vmul.f32 %v6295, 0.01
            %v6328 = vmul.f32 %v6296, 0.01
            %v6329 = vmul.f32 %v6297, 0.01
            %v6330 = vmul.f32 %v6298, 0.01
            %v6331 = vmul.f32 %v6299, 0.01
            %v6332 = vmul.f32 %v6300, 0.01
            %v6333 = vsel %vm6301, %v6285, %v6317
            %v6334 = vsel %vm6302, %v6286, %v6318
            %v6335 = vsel %vm6303, %v6287, %v6319
            %v6336 = vsel %vm6304, %v6288, %v6320
            %v6337 = vsel %vm6305, %v6289, %v6321
            %v6338 = vsel %vm6306, %v6290, %v6322
            %v6339 = vsel %vm6307, %v6291, %v6323
            %v6340 = vsel %vm6308, %v6292, %v6324
            %v6341 = vsel %vm6309, %v6293, %v6325
            %v6342 = vsel %vm6310, %v6294, %v6326
            %v6343 = vsel %vm6311, %v6295, %v6327
            %v6344 = vsel %vm6312, %v6296, %v6328
            %v6345 = vsel %vm6313, %v6297, %v6329
            %v6346 = vsel %vm6314, %v6298, %v6330
            %v6347 = vsel %vm6315, %v6299, %v6331
            %v6348 = vsel %vm6316, %v6300, %v6332
            %6349 = vst.msk [vmem:[%s539] sm:$0xff] %vm925, %v6333
            %6350 = vst.msk [vmem:[%s539 + $0x8] sm:$0xff] %vm925, %v6334
            %6351 = vst.msk [vmem:[%s539 + $0x10] sm:$0xff] %vm925, %v6335
            %6352 = vst.msk [vmem:[%s539 + $0x18] sm:$0xff] %vm925, %v6336
            %6353 = vst.msk [vmem:[%s539 + $0x20] sm:$0xff] %vm925, %v6337
            %6354 = vst.msk [vmem:[%s539 + $0x28] sm:$0xff] %vm925, %v6338
            %6355 = vst.msk [vmem:[%s539 + $0x30] sm:$0xff] %vm925, %v6339
            %6356 = vst.msk [vmem:[%s539 + $0x38] sm:$0xff] %vm925, %v6340
            %6357 = vst.msk [vmem:[%s539 + $0x40] sm:$0xff] %vm925, %v6341
            %6358 = vst.msk [vmem:[%s539 + $0x48] sm:$0xff] %vm925, %v6342
            %6359 = vst.msk [vmem:[%s539 + $0x50] sm:$0xff] %vm925, %v6343
            %6360 = vst.msk [vmem:[%s539 + $0x58] sm:$0xff] %vm925, %v6344
            %6361 = vst.msk [vmem:[%s539 + $0x60] sm:$0xff] %vm925, %v6345
            %6362 = vst.msk [vmem:[%s539 + $0x68] sm:$0xff] %vm925, %v6346
            %6363 = vst.msk [vmem:[%s539 + $0x70] sm:$0xff] %vm925, %v6347
            %6364 = vst.msk [vmem:[%s539 + $0x78] sm:$0xff] %vm925, %v6348
          $region118: #{tpu_custom_call.1} parent=113 // pred_fallthru
            _
          %p6365 = scmp.ge.s32.totalorder %s5788, 128
          // Predicated region
          $region119: #{tpu_custom_call.1} parent=113 // pred_check
            %p6366 = pneg %p6365
          $region120: #{tpu_custom_call.1} parent=113 // pred_check_branch
            %6368 = sbr.rel (%p6366) target = $region122
          $region121: #{tpu_custom_call.1} parent=113 // pred_region
            %v6369 = vld [vmem:[#allocation11] sm:$0xff]
            %v6370 = vld [vmem:[#allocation11 + $0x8] sm:$0xff]
            %v6371 = vld [vmem:[#allocation11 + $0x10] sm:$0xff]
            %v6372 = vld [vmem:[#allocation11 + $0x18] sm:$0xff]
            %v6374 = vsel %vm1156, %v5067, 0
            %v6377 = vsel %vm1156, %v5068, 0
            %v6380 = vsel %vm1156, %v5069, 0
            %v6383 = vsel %vm1156, %v5070, 0
            %v6386 = vsel %vm1156, %v5071, 0
            %v6389 = vsel %vm1156, %v5072, 0
            %v6392 = vsel %vm1156, %v5073, 0
            %v6395 = vsel %vm1156, %v5074, 0
            %v6398 = vsel %vm1156, %v5075, 0
            %v6401 = vsel %vm1156, %v5076, 0
            %v6404 = vsel %vm1156, %v5077, 0
            %v6407 = vsel %vm1156, %v5078, 0
            %v6410 = vsel %vm1156, %v5079, 0
            %v6413 = vsel %vm1156, %v5080, 0
            %v6416 = vsel %vm1156, %v5081, 0
            %v6419 = vsel %vm1156, %v5082, 0
            %6421 = vmatpush.msra.mxu0 0.0
            %6422 = vmatpush.msra.mxu0 0.0
            %6423 = vmatpush.msra.mxu0 0.0
            %6424 = vmatpush.msra.mxu0 0.0
            %6425 = vmatpush.msra.mxu0 0.0
            %6426 = vmatpush.msra.mxu0 0.0
            %6427 = vmatpush.msra.mxu0 0.0
            %6428 = vmatpush.msra.mxu0 0.0
            %6429 = vmatpush.msra.mxu0 0.0
            %6430 = vmatpush.msra.mxu0 0.0
            %6431 = vmatpush.msra.mxu0 0.0
            %6432 = vmatpush.msra.mxu0 0.0
            %6433 = vmatpush.msra.mxu0 0.0
            %6434 = vmatpush.msra.mxu0 0.0
            %6435 = vmatpush.msra.mxu0 0.0
            %6436 = vmatpush.msra.mxu0 %v6370
            %6437 = vmatmul.f32.gmra.mxu0 %v6374
            %v6438 = vpop.f32.mrf.mxu0
            %v6439 = vadd.f32 0.0, %v6438
            %6440 = vmatmul.f32.gmra.mxu0 %v6377
            %v6441 = vpop.f32.mrf.mxu0
            %v6442 = vadd.f32 0.0, %v6441
            %6443 = vmatmul.f32.gmra.mxu0 %v6380
            %v6444 = vpop.f32.mrf.mxu0
            %v6445 = vadd.f32 0.0, %v6444
            %6446 = vmatmul.f32.gmra.mxu0 %v6383
            %v6447 = vpop.f32.mrf.mxu0
            %v6448 = vadd.f32 0.0, %v6447
            %6449 = vmatmul.f32.gmra.mxu0 %v6386
            %v6450 = vpop.f32.mrf.mxu0
            %v6451 = vadd.f32 0.0, %v6450
            %6452 = vmatmul.f32.gmra.mxu0 %v6389
            %v6453 = vpop.f32.mrf.mxu0
            %v6454 = vadd.f32 0.0, %v6453
            %6455 = vmatmul.f32.gmra.mxu0 %v6392
            %v6456 = vpop.f32.mrf.mxu0
            %v6457 = vadd.f32 0.0, %v6456
            %6458 = vmatmul.f32.gmra.mxu0 %v6395
            %v6459 = vpop.f32.mrf.mxu0
            %v6460 = vadd.f32 0.0, %v6459
            %6461 = vmatmul.f32.gmra.mxu0 %v6398
            %v6462 = vpop.f32.mrf.mxu0
            %v6463 = vadd.f32 0.0, %v6462
            %6464 = vmatmul.f32.gmra.mxu0 %v6401
            %v6465 = vpop.f32.mrf.mxu0
            %v6466 = vadd.f32 0.0, %v6465
            %6467 = vmatmul.f32.gmra.mxu0 %v6404
            %v6468 = vpop.f32.mrf.mxu0
            %v6469 = vadd.f32 0.0, %v6468
            %6470 = vmatmul.f32.gmra.mxu0 %v6407
            %v6471 = vpop.f32.mrf.mxu0
            %v6472 = vadd.f32 0.0, %v6471
            %6473 = vmatmul.f32.gmra.mxu0 %v6410
            %v6474 = vpop.f32.mrf.mxu0
            %v6475 = vadd.f32 0.0, %v6474
            %6476 = vmatmul.f32.gmra.mxu0 %v6413
            %v6477 = vpop.f32.mrf.mxu0
            %v6478 = vadd.f32 0.0, %v6477
            %6479 = vmatmul.f32.gmra.mxu0 %v6416
            %v6480 = vpop.f32.mrf.mxu0
            %v6481 = vadd.f32 0.0, %v6480
            %6482 = vmatmul.f32.gmra.mxu0 %v6419
            %v6483 = vpop.f32.mrf.mxu0
            %v6484 = vadd.f32 0.0, %v6483
            %6485 = vdwg.mxu0
            %v6487 = vsel %vm1156, %v4715, 0
            %v6490 = vsel %vm1156, %v4716, 0
            %v6493 = vsel %vm1156, %v4717, 0
            %v6496 = vsel %vm1156, %v4718, 0
            %v6499 = vsel %vm1156, %v4719, 0
            %v6502 = vsel %vm1156, %v4720, 0
            %v6505 = vsel %vm1156, %v4721, 0
            %v6508 = vsel %vm1156, %v4722, 0
            %v6511 = vsel %vm1156, %v4723, 0
            %v6514 = vsel %vm1156, %v4724, 0
            %v6517 = vsel %vm1156, %v4725, 0
            %v6520 = vsel %vm1156, %v4726, 0
            %v6523 = vsel %vm1156, %v4727, 0
            %v6526 = vsel %vm1156, %v4728, 0
            %v6529 = vsel %vm1156, %v4729, 0
            %v6532 = vsel %vm1156, %v4730, 0
            %6534 = vmatpush.msra.mxu0 0.0
            %6535 = vmatpush.msra.mxu0 0.0
            %6536 = vmatpush.msra.mxu0 0.0
            %6537 = vmatpush.msra.mxu0 0.0
            %6538 = vmatpush.msra.mxu0 0.0
            %6539 = vmatpush.msra.mxu0 0.0
            %6540 = vmatpush.msra.mxu0 0.0
            %6541 = vmatpush.msra.mxu0 0.0
            %6542 = vmatpush.msra.mxu0 0.0
            %6543 = vmatpush.msra.mxu0 0.0
            %6544 = vmatpush.msra.mxu0 0.0
            %6545 = vmatpush.msra.mxu0 0.0
            %6546 = vmatpush.msra.mxu0 0.0
            %6547 = vmatpush.msra.mxu0 0.0
            %6548 = vmatpush.msra.mxu0 0.0
            %6549 = vmatpush.msra.mxu0 %v6369
            %6550 = vmatmul.f32.gmra.mxu0 %v6487
            %v6551 = vpop.f32.mrf.mxu0
            %v6552 = vadd.f32 %v6439, %v6551
            %6553 = vmatmul.f32.gmra.mxu0 %v6490
            %v6554 = vpop.f32.mrf.mxu0
            %v6555 = vadd.f32 %v6442, %v6554
            %6556 = vmatmul.f32.gmra.mxu0 %v6493
            %v6557 = vpop.f32.mrf.mxu0
            %v6558 = vadd.f32 %v6445, %v6557
            %6559 = vmatmul.f32.gmra.mxu0 %v6496
            %v6560 = vpop.f32.mrf.mxu0
            %v6561 = vadd.f32 %v6448, %v6560
            %6562 = vmatmul.f32.gmra.mxu0 %v6499
            %v6563 = vpop.f32.mrf.mxu0
            %v6564 = vadd.f32 %v6451, %v6563
            %6565 = vmatmul.f32.gmra.mxu0 %v6502
            %v6566 = vpop.f32.mrf.mxu0
            %v6567 = vadd.f32 %v6454, %v6566
            %6568 = vmatmul.f32.gmra.mxu0 %v6505
            %v6569 = vpop.f32.mrf.mxu0
            %v6570 = vadd.f32 %v6457, %v6569
            %6571 = vmatmul.f32.gmra.mxu0 %v6508
            %v6572 = vpop.f32.mrf.mxu0
            %v6573 = vadd.f32 %v6460, %v6572
            %6574 = vmatmul.f32.gmra.mxu0 %v6511
            %v6575 = vpop.f32.mrf.mxu0
            %v6576 = vadd.f32 %v6463, %v6575
            %6577 = vmatmul.f32.gmra.mxu0 %v6514
            %v6578 = vpop.f32.mrf.mxu0
            %v6579 = vadd.f32 %v6466, %v6578
            %6580 = vmatmul.f32.gmra.mxu0 %v6517
            %v6581 = vpop.f32.mrf.mxu0
            %v6582 = vadd.f32 %v6469, %v6581
            %6583 = vmatmul.f32.gmra.mxu0 %v6520
            %v6584 = vpop.f32.mrf.mxu0
            %v6585 = vadd.f32 %v6472, %v6584
            %6586 = vmatmul.f32.gmra.mxu0 %v6523
            %v6587 = vpop.f32.mrf.mxu0
            %v6588 = vadd.f32 %v6475, %v6587
            %6589 = vmatmul.f32.gmra.mxu0 %v6526
            %v6590 = vpop.f32.mrf.mxu0
            %v6591 = vadd.f32 %v6478, %v6590
            %6592 = vmatmul.f32.gmra.mxu0 %v6529
            %v6593 = vpop.f32.mrf.mxu0
            %v6594 = vadd.f32 %v6481, %v6593
            %6595 = vmatmul.f32.gmra.mxu0 %v6532
            %v6596 = vpop.f32.mrf.mxu0
            %v6597 = vadd.f32 %v6484, %v6596
            %6598 = vdwg.mxu0
            %v6600 = vsel %vm1156, %v5419, 0
            %v6603 = vsel %vm1156, %v5420, 0
            %v6606 = vsel %vm1156, %v5421, 0
            %v6609 = vsel %vm1156, %v5422, 0
            %v6612 = vsel %vm1156, %v5423, 0
            %v6615 = vsel %vm1156, %v5424, 0
            %v6618 = vsel %vm1156, %v5425, 0
            %v6621 = vsel %vm1156, %v5426, 0
            %v6624 = vsel %vm1156, %v5427, 0
            %v6627 = vsel %vm1156, %v5428, 0
            %v6630 = vsel %vm1156, %v5429, 0
            %v6633 = vsel %vm1156, %v5430, 0
            %v6636 = vsel %vm1156, %v5431, 0
            %v6639 = vsel %vm1156, %v5432, 0
            %v6642 = vsel %vm1156, %v5433, 0
            %v6645 = vsel %vm1156, %v5434, 0
            %6647 = vmatpush.msra.mxu0 0.0
            %6648 = vmatpush.msra.mxu0 0.0
            %6649 = vmatpush.msra.mxu0 0.0
            %6650 = vmatpush.msra.mxu0 0.0
            %6651 = vmatpush.msra.mxu0 0.0
            %6652 = vmatpush.msra.mxu0 0.0
            %6653 = vmatpush.msra.mxu0 0.0
            %6654 = vmatpush.msra.mxu0 0.0
            %6655 = vmatpush.msra.mxu0 0.0
            %6656 = vmatpush.msra.mxu0 0.0
            %6657 = vmatpush.msra.mxu0 0.0
            %6658 = vmatpush.msra.mxu0 0.0
            %6659 = vmatpush.msra.mxu0 0.0
            %6660 = vmatpush.msra.mxu0 0.0
            %6661 = vmatpush.msra.mxu0 0.0
            %6662 = vmatpush.msra.mxu0 %v6371
            %6663 = vmatmul.f32.gmra.mxu0 %v6600
            %v6664 = vpop.f32.mrf.mxu0
            %v6665 = vadd.f32 0.0, %v6664
            %6666 = vmatmul.f32.gmra.mxu0 %v6603
            %v6667 = vpop.f32.mrf.mxu0
            %v6668 = vadd.f32 0.0, %v6667
            %6669 = vmatmul.f32.gmra.mxu0 %v6606
            %v6670 = vpop.f32.mrf.mxu0
            %v6671 = vadd.f32 0.0, %v6670
            %6672 = vmatmul.f32.gmra.mxu0 %v6609
            %v6673 = vpop.f32.mrf.mxu0
            %v6674 = vadd.f32 0.0, %v6673
            %6675 = vmatmul.f32.gmra.mxu0 %v6612
            %v6676 = vpop.f32.mrf.mxu0
            %v6677 = vadd.f32 0.0, %v6676
            %6678 = vmatmul.f32.gmra.mxu0 %v6615
            %v6679 = vpop.f32.mrf.mxu0
            %v6680 = vadd.f32 0.0, %v6679
            %6681 = vmatmul.f32.gmra.mxu0 %v6618
            %v6682 = vpop.f32.mrf.mxu0
            %v6683 = vadd.f32 0.0, %v6682
            %6684 = vmatmul.f32.gmra.mxu0 %v6621
            %v6685 = vpop.f32.mrf.mxu0
            %v6686 = vadd.f32 0.0, %v6685
            %6687 = vmatmul.f32.gmra.mxu0 %v6624
            %v6688 = vpop.f32.mrf.mxu0
            %v6689 = vadd.f32 0.0, %v6688
            %6690 = vmatmul.f32.gmra.mxu0 %v6627
            %v6691 = vpop.f32.mrf.mxu0
            %v6692 = vadd.f32 0.0, %v6691
            %6693 = vmatmul.f32.gmra.mxu0 %v6630
            %v6694 = vpop.f32.mrf.mxu0
            %v6695 = vadd.f32 0.0, %v6694
            %6696 = vmatmul.f32.gmra.mxu0 %v6633
            %v6697 = vpop.f32.mrf.mxu0
            %v6698 = vadd.f32 0.0, %v6697
            %6699 = vmatmul.f32.gmra.mxu0 %v6636
            %v6700 = vpop.f32.mrf.mxu0
            %v6701 = vadd.f32 0.0, %v6700
            %6702 = vmatmul.f32.gmra.mxu0 %v6639
            %v6703 = vpop.f32.mrf.mxu0
            %v6704 = vadd.f32 0.0, %v6703
            %6705 = vmatmul.f32.gmra.mxu0 %v6642
            %v6706 = vpop.f32.mrf.mxu0
            %v6707 = vadd.f32 0.0, %v6706
            %6708 = vmatmul.f32.gmra.mxu0 %v6645
            %v6709 = vpop.f32.mrf.mxu0
            %v6710 = vadd.f32 0.0, %v6709
            %6711 = vdwg.mxu0
            %v6712 = vadd.f32 %v6552, %v6665
            %v6713 = vadd.f32 %v6555, %v6668
            %v6714 = vadd.f32 %v6558, %v6671
            %v6715 = vadd.f32 %v6561, %v6674
            %v6716 = vadd.f32 %v6564, %v6677
            %v6717 = vadd.f32 %v6567, %v6680
            %v6718 = vadd.f32 %v6570, %v6683
            %v6719 = vadd.f32 %v6573, %v6686
            %v6720 = vadd.f32 %v6576, %v6689
            %v6721 = vadd.f32 %v6579, %v6692
            %v6722 = vadd.f32 %v6582, %v6695
            %v6723 = vadd.f32 %v6585, %v6698
            %v6724 = vadd.f32 %v6588, %v6701
            %v6725 = vadd.f32 %v6591, %v6704
            %v6726 = vadd.f32 %v6594, %v6707
            %v6727 = vadd.f32 %v6597, %v6710
            %v6729 = vsel %vm1156, %v5771, 0
            %v6732 = vsel %vm1156, %v5772, 0
            %v6735 = vsel %vm1156, %v5773, 0
            %v6738 = vsel %vm1156, %v5774, 0
            %v6741 = vsel %vm1156, %v5775, 0
            %v6744 = vsel %vm1156, %v5776, 0
            %v6747 = vsel %vm1156, %v5777, 0
            %v6750 = vsel %vm1156, %v5778, 0
            %v6753 = vsel %vm1156, %v5779, 0
            %v6756 = vsel %vm1156, %v5780, 0
            %v6759 = vsel %vm1156, %v5781, 0
            %v6762 = vsel %vm1156, %v5782, 0
            %v6765 = vsel %vm1156, %v5783, 0
            %v6768 = vsel %vm1156, %v5784, 0
            %v6771 = vsel %vm1156, %v5785, 0
            %v6774 = vsel %vm1156, %v5786, 0
            %6776 = vmatpush.msra.mxu0 0.0
            %6777 = vmatpush.msra.mxu0 0.0
            %6778 = vmatpush.msra.mxu0 0.0
            %6779 = vmatpush.msra.mxu0 0.0
            %6780 = vmatpush.msra.mxu0 0.0
            %6781 = vmatpush.msra.mxu0 0.0
            %6782 = vmatpush.msra.mxu0 0.0
            %6783 = vmatpush.msra.mxu0 0.0
            %6784 = vmatpush.msra.mxu0 0.0
            %6785 = vmatpush.msra.mxu0 0.0
            %6786 = vmatpush.msra.mxu0 0.0
            %6787 = vmatpush.msra.mxu0 0.0
            %6788 = vmatpush.msra.mxu0 0.0
            %6789 = vmatpush.msra.mxu0 0.0
            %6790 = vmatpush.msra.mxu0 0.0
            %6791 = vmatpush.msra.mxu0 %v6372
            %6792 = vmatmul.f32.gmra.mxu0 %v6729
            %v6793 = vpop.f32.mrf.mxu0
            %v6794 = vadd.f32 0.0, %v6793
            %6795 = vmatmul.f32.gmra.mxu0 %v6732
            %v6796 = vpop.f32.mrf.mxu0
            %v6797 = vadd.f32 0.0, %v6796
            %6798 = vmatmul.f32.gmra.mxu0 %v6735
            %v6799 = vpop.f32.mrf.mxu0
            %v6800 = vadd.f32 0.0, %v6799
            %6801 = vmatmul.f32.gmra.mxu0 %v6738
            %v6802 = vpop.f32.mrf.mxu0
            %v6803 = vadd.f32 0.0, %v6802
            %6804 = vmatmul.f32.gmra.mxu0 %v6741
            %v6805 = vpop.f32.mrf.mxu0
            %v6806 = vadd.f32 0.0, %v6805
            %6807 = vmatmul.f32.gmra.mxu0 %v6744
            %v6808 = vpop.f32.mrf.mxu0
            %v6809 = vadd.f32 0.0, %v6808
            %6810 = vmatmul.f32.gmra.mxu0 %v6747
            %v6811 = vpop.f32.mrf.mxu0
            %v6812 = vadd.f32 0.0, %v6811
            %6813 = vmatmul.f32.gmra.mxu0 %v6750
            %v6814 = vpop.f32.mrf.mxu0
            %v6815 = vadd.f32 0.0, %v6814
            %6816 = vmatmul.f32.gmra.mxu0 %v6753
            %v6817 = vpop.f32.mrf.mxu0
            %v6818 = vadd.f32 0.0, %v6817
            %6819 = vmatmul.f32.gmra.mxu0 %v6756
            %v6820 = vpop.f32.mrf.mxu0
            %v6821 = vadd.f32 0.0, %v6820
            %6822 = vmatmul.f32.gmra.mxu0 %v6759
            %v6823 = vpop.f32.mrf.mxu0
            %v6824 = vadd.f32 0.0, %v6823
            %6825 = vmatmul.f32.gmra.mxu0 %v6762
            %v6826 = vpop.f32.mrf.mxu0
            %v6827 = vadd.f32 0.0, %v6826
            %6828 = vmatmul.f32.gmra.mxu0 %v6765
            %v6829 = vpop.f32.mrf.mxu0
            %v6830 = vadd.f32 0.0, %v6829
            %6831 = vmatmul.f32.gmra.mxu0 %v6768
            %v6832 = vpop.f32.mrf.mxu0
            %v6833 = vadd.f32 0.0, %v6832
            %6834 = vmatmul.f32.gmra.mxu0 %v6771
            %v6835 = vpop.f32.mrf.mxu0
            %v6836 = vadd.f32 0.0, %v6835
            %6837 = vmatmul.f32.gmra.mxu0 %v6774
            %v6838 = vpop.f32.mrf.mxu0
            %v6839 = vadd.f32 0.0, %v6838
            %6840 = vdwg.mxu0
            %v6841 = vadd.f32 %v6712, %v6794
            %v6842 = vadd.f32 %v6713, %v6797
            %v6843 = vadd.f32 %v6714, %v6800
            %v6844 = vadd.f32 %v6715, %v6803
            %v6845 = vadd.f32 %v6716, %v6806
            %v6846 = vadd.f32 %v6717, %v6809
            %v6847 = vadd.f32 %v6718, %v6812
            %v6848 = vadd.f32 %v6719, %v6815
            %v6849 = vadd.f32 %v6720, %v6818
            %v6850 = vadd.f32 %v6721, %v6821
            %v6851 = vadd.f32 %v6722, %v6824
            %v6852 = vadd.f32 %v6723, %v6827
            %v6853 = vadd.f32 %v6724, %v6830
            %v6854 = vadd.f32 %v6725, %v6833
            %v6855 = vadd.f32 %v6726, %v6836
            %v6856 = vadd.f32 %v6727, %v6839
            %v6858 = vperm.slane %v5787, 0
            %v6860 = vadd.f32 %v6841, %v6858
            %v6861 = vadd.f32 %v6842, %v6858
            %v6862 = vadd.f32 %v6843, %v6858
            %v6863 = vadd.f32 %v6844, %v6858
            %v6864 = vadd.f32 %v6845, %v6858
            %v6865 = vadd.f32 %v6846, %v6858
            %v6866 = vadd.f32 %v6847, %v6858
            %v6867 = vadd.f32 %v6848, %v6858
            %v6868 = vadd.f32 %v6849, %v6858
            %v6869 = vadd.f32 %v6850, %v6858
            %v6870 = vadd.f32 %v6851, %v6858
            %v6871 = vadd.f32 %v6852, %v6858
            %v6872 = vadd.f32 %v6853, %v6858
            %v6873 = vadd.f32 %v6854, %v6858
            %v6874 = vadd.f32 %v6855, %v6858
            %v6875 = vadd.f32 %v6856, %v6858
            %vm6876 = vcmp.ge.f32.partialorder %v6860, 0.0
            %vm6877 = vcmp.ge.f32.partialorder %v6861, 0.0
            %vm6878 = vcmp.ge.f32.partialorder %v6862, 0.0
            %vm6879 = vcmp.ge.f32.partialorder %v6863, 0.0
            %vm6880 = vcmp.ge.f32.partialorder %v6864, 0.0
            %vm6881 = vcmp.ge.f32.partialorder %v6865, 0.0
            %vm6882 = vcmp.ge.f32.partialorder %v6866, 0.0
            %vm6883 = vcmp.ge.f32.partialorder %v6867, 0.0
            %vm6884 = vcmp.ge.f32.partialorder %v6868, 0.0
            %vm6885 = vcmp.ge.f32.partialorder %v6869, 0.0
            %vm6886 = vcmp.ge.f32.partialorder %v6870, 0.0
            %vm6887 = vcmp.ge.f32.partialorder %v6871, 0.0
            %vm6888 = vcmp.ge.f32.partialorder %v6872, 0.0
            %vm6889 = vcmp.ge.f32.partialorder %v6873, 0.0
            %vm6890 = vcmp.ge.f32.partialorder %v6874, 0.0
            %vm6891 = vcmp.ge.f32.partialorder %v6875, 0.0
            %v6892 = vmul.f32 %v6860, 0.01
            %v6893 = vmul.f32 %v6861, 0.01
            %v6894 = vmul.f32 %v6862, 0.01
            %v6895 = vmul.f32 %v6863, 0.01
            %v6896 = vmul.f32 %v6864, 0.01
            %v6897 = vmul.f32 %v6865, 0.01
            %v6898 = vmul.f32 %v6866, 0.01
            %v6899 = vmul.f32 %v6867, 0.01
            %v6900 = vmul.f32 %v6868, 0.01
            %v6901 = vmul.f32 %v6869, 0.01
            %v6902 = vmul.f32 %v6870, 0.01
            %v6903 = vmul.f32 %v6871, 0.01
            %v6904 = vmul.f32 %v6872, 0.01
            %v6905 = vmul.f32 %v6873, 0.01
            %v6906 = vmul.f32 %v6874, 0.01
            %v6907 = vmul.f32 %v6875, 0.01
            %v6908 = vsel %vm6876, %v6860, %v6892
            %v6909 = vsel %vm6877, %v6861, %v6893
            %v6910 = vsel %vm6878, %v6862, %v6894
            %v6911 = vsel %vm6879, %v6863, %v6895
            %v6912 = vsel %vm6880, %v6864, %v6896
            %v6913 = vsel %vm6881, %v6865, %v6897
            %v6914 = vsel %vm6882, %v6866, %v6898
            %v6915 = vsel %vm6883, %v6867, %v6899
            %v6916 = vsel %vm6884, %v6868, %v6900
            %v6917 = vsel %vm6885, %v6869, %v6901
            %v6918 = vsel %vm6886, %v6870, %v6902
            %v6919 = vsel %vm6887, %v6871, %v6903
            %v6920 = vsel %vm6888, %v6872, %v6904
            %v6921 = vsel %vm6889, %v6873, %v6905
            %v6922 = vsel %vm6890, %v6874, %v6906
            %v6923 = vsel %vm6891, %v6875, %v6907
            %6924 = vst.msk [vmem:[%s539] sm:$0xff] %vm925, %v6908
            %6925 = vst.msk [vmem:[%s539 + $0x8] sm:$0xff] %vm925, %v6909
            %6926 = vst.msk [vmem:[%s539 + $0x10] sm:$0xff] %vm925, %v6910
            %6927 = vst.msk [vmem:[%s539 + $0x18] sm:$0xff] %vm925, %v6911
            %6928 = vst.msk [vmem:[%s539 + $0x20] sm:$0xff] %vm925, %v6912
            %6929 = vst.msk [vmem:[%s539 + $0x28] sm:$0xff] %vm925, %v6913
            %6930 = vst.msk [vmem:[%s539 + $0x30] sm:$0xff] %vm925, %v6914
            %6931 = vst.msk [vmem:[%s539 + $0x38] sm:$0xff] %vm925, %v6915
            %6932 = vst.msk [vmem:[%s539 + $0x40] sm:$0xff] %vm925, %v6916
            %6933 = vst.msk [vmem:[%s539 + $0x48] sm:$0xff] %vm925, %v6917
            %6934 = vst.msk [vmem:[%s539 + $0x50] sm:$0xff] %vm925, %v6918
            %6935 = vst.msk [vmem:[%s539 + $0x58] sm:$0xff] %vm925, %v6919
            %6936 = vst.msk [vmem:[%s539 + $0x60] sm:$0xff] %vm925, %v6920
            %6937 = vst.msk [vmem:[%s539 + $0x68] sm:$0xff] %vm925, %v6921
            %6938 = vst.msk [vmem:[%s539 + $0x70] sm:$0xff] %vm925, %v6922
            %6939 = vst.msk [vmem:[%s539 + $0x78] sm:$0xff] %vm925, %v6923
          $region122: #{tpu_custom_call.1} parent=113 // pred_fallthru
            _
          %p6940 = scmp.lt.s32.totalorder %s5788, 128
          %p6941 = scmp.gt.s32.totalorder %s5789, 128
          %p6942 = pnand %p6940, %p6941
          %p6943 = pneg %p6942
          // Predicated region
          $region123: #{tpu_custom_call.1} parent=113 // pred_check
            _
          $region124: #{tpu_custom_call.1} parent=113 // pred_check_branch
            %6945 = sbr.rel (%p6942) target = $region126
          $region125: #{tpu_custom_call.1} parent=113 // pred_region
            %v6946 = vlaneseq
            %v6947 = vshrl.u32 %v6946, 7
            %v6948 = vadd.s32 %v6947, 8
            %v6949 = vadd.s32 %v6947, 16
            %v6950 = vadd.s32 %v6947, 24
            %v6951 = vadd.s32 %v6947, 32
            %v6952 = vadd.s32 %v6947, 40
            %v6953 = vadd.s32 %v6947, 48
            %v6954 = vadd.s32 %v6947, 56
            %v6955 = vadd.s32 %v6947, 64
            %v6956 = vadd.s32 %v6947, 72
            %v6957 = vadd.s32 %v6947, 80
            %v6958 = vadd.s32 %v6947, 88
            %v6959 = vadd.s32 %v6947, 96
            %v6960 = vadd.s32 %v6947, 104
            %v6961 = vadd.s32 %v6947, 112
            %v6962 = vadd.s32 %v6947, 120
            %v6963 = vstv %s5788
            %v6964 = vadd.s32 %v6963, %v6947
            %v6965 = vadd.s32 %v6963, %v6948
            %v6966 = vadd.s32 %v6963, %v6949
            %v6967 = vadd.s32 %v6963, %v6950
            %v6968 = vadd.s32 %v6963, %v6951
            %v6969 = vadd.s32 %v6963, %v6952
            %v6970 = vadd.s32 %v6963, %v6953
            %v6971 = vadd.s32 %v6963, %v6954
            %v6972 = vadd.s32 %v6963, %v6955
            %v6973 = vadd.s32 %v6963, %v6956
            %v6974 = vadd.s32 %v6963, %v6957
            %v6975 = vadd.s32 %v6963, %v6958
            %v6976 = vadd.s32 %v6963, %v6959
            %v6977 = vadd.s32 %v6963, %v6960
            %v6978 = vadd.s32 %v6963, %v6961
            %v6979 = vadd.s32 %v6963, %v6962
            %vm6980 = vcmp.lt.s32.totalorder %v6964, 128
            %vm6981 = vcmp.lt.s32.totalorder %v6965, 128
            %vm6982 = vcmp.lt.s32.totalorder %v6966, 128
            %vm6983 = vcmp.lt.s32.totalorder %v6967, 128
            %vm6984 = vcmp.lt.s32.totalorder %v6968, 128
            %vm6985 = vcmp.lt.s32.totalorder %v6969, 128
            %vm6986 = vcmp.lt.s32.totalorder %v6970, 128
            %vm6987 = vcmp.lt.s32.totalorder %v6971, 128
            %vm6988 = vcmp.lt.s32.totalorder %v6972, 128
            %vm6989 = vcmp.lt.s32.totalorder %v6973, 128
            %vm6990 = vcmp.lt.s32.totalorder %v6974, 128
            %vm6991 = vcmp.lt.s32.totalorder %v6975, 128
            %vm6992 = vcmp.lt.s32.totalorder %v6976, 128
            %vm6993 = vcmp.lt.s32.totalorder %v6977, 128
            %vm6994 = vcmp.lt.s32.totalorder %v6978, 128
            %vm6995 = vcmp.lt.s32.totalorder %v6979, 128
            %v6996 = vld [vmem:[#allocation9] sm:$0xff]
            %v6997 = vld [vmem:[#allocation9 + $0x8] sm:$0xff]
            %v6998 = vld [vmem:[#allocation9 + $0x10] sm:$0xff]
            %v6999 = vld [vmem:[#allocation9 + $0x18] sm:$0xff]
            %v7001 = vsel %vm1156, %v5067, 0
            %v7004 = vsel %vm1156, %v5068, 0
            %v7007 = vsel %vm1156, %v5069, 0
            %v7010 = vsel %vm1156, %v5070, 0
            %v7013 = vsel %vm1156, %v5071, 0
            %v7016 = vsel %vm1156, %v5072, 0
            %v7019 = vsel %vm1156, %v5073, 0
            %v7022 = vsel %vm1156, %v5074, 0
            %v7025 = vsel %vm1156, %v5075, 0
            %v7028 = vsel %vm1156, %v5076, 0
            %v7031 = vsel %vm1156, %v5077, 0
            %v7034 = vsel %vm1156, %v5078, 0
            %v7037 = vsel %vm1156, %v5079, 0
            %v7040 = vsel %vm1156, %v5080, 0
            %v7043 = vsel %vm1156, %v5081, 0
            %v7046 = vsel %vm1156, %v5082, 0
            %7048 = vmatpush.msra.mxu0 0.0
            %7049 = vmatpush.msra.mxu0 0.0
            %7050 = vmatpush.msra.mxu0 0.0
            %7051 = vmatpush.msra.mxu0 0.0
            %7052 = vmatpush.msra.mxu0 0.0
            %7053 = vmatpush.msra.mxu0 0.0
            %7054 = vmatpush.msra.mxu0 0.0
            %7055 = vmatpush.msra.mxu0 0.0
            %7056 = vmatpush.msra.mxu0 0.0
            %7057 = vmatpush.msra.mxu0 0.0
            %7058 = vmatpush.msra.mxu0 0.0
            %7059 = vmatpush.msra.mxu0 0.0
            %7060 = vmatpush.msra.mxu0 0.0
            %7061 = vmatpush.msra.mxu0 0.0
            %7062 = vmatpush.msra.mxu0 0.0
            %7063 = vmatpush.msra.mxu0 %v6997
            %7064 = vmatmul.f32.gmra.mxu0 %v7001
            %v7065 = vpop.f32.mrf.mxu0
            %v7066 = vadd.f32 0.0, %v7065
            %7067 = vmatmul.f32.gmra.mxu0 %v7004
            %v7068 = vpop.f32.mrf.mxu0
            %v7069 = vadd.f32 0.0, %v7068
            %7070 = vmatmul.f32.gmra.mxu0 %v7007
            %v7071 = vpop.f32.mrf.mxu0
            %v7072 = vadd.f32 0.0, %v7071
            %7073 = vmatmul.f32.gmra.mxu0 %v7010
            %v7074 = vpop.f32.mrf.mxu0
            %v7075 = vadd.f32 0.0, %v7074
            %7076 = vmatmul.f32.gmra.mxu0 %v7013
            %v7077 = vpop.f32.mrf.mxu0
            %v7078 = vadd.f32 0.0, %v7077
            %7079 = vmatmul.f32.gmra.mxu0 %v7016
            %v7080 = vpop.f32.mrf.mxu0
            %v7081 = vadd.f32 0.0, %v7080
            %7082 = vmatmul.f32.gmra.mxu0 %v7019
            %v7083 = vpop.f32.mrf.mxu0
            %v7084 = vadd.f32 0.0, %v7083
            %7085 = vmatmul.f32.gmra.mxu0 %v7022
            %v7086 = vpop.f32.mrf.mxu0
            %v7087 = vadd.f32 0.0, %v7086
            %7088 = vmatmul.f32.gmra.mxu0 %v7025
            %v7089 = vpop.f32.mrf.mxu0
            %v7090 = vadd.f32 0.0, %v7089
            %7091 = vmatmul.f32.gmra.mxu0 %v7028
            %v7092 = vpop.f32.mrf.mxu0
            %v7093 = vadd.f32 0.0, %v7092
            %7094 = vmatmul.f32.gmra.mxu0 %v7031
            %v7095 = vpop.f32.mrf.mxu0
            %v7096 = vadd.f32 0.0, %v7095
            %7097 = vmatmul.f32.gmra.mxu0 %v7034
            %v7098 = vpop.f32.mrf.mxu0
            %v7099 = vadd.f32 0.0, %v7098
            %7100 = vmatmul.f32.gmra.mxu0 %v7037
            %v7101 = vpop.f32.mrf.mxu0
            %v7102 = vadd.f32 0.0, %v7101
            %7103 = vmatmul.f32.gmra.mxu0 %v7040
            %v7104 = vpop.f32.mrf.mxu0
            %v7105 = vadd.f32 0.0, %v7104
            %7106 = vmatmul.f32.gmra.mxu0 %v7043
            %v7107 = vpop.f32.mrf.mxu0
            %v7108 = vadd.f32 0.0, %v7107
            %7109 = vmatmul.f32.gmra.mxu0 %v7046
            %v7110 = vpop.f32.mrf.mxu0
            %v7111 = vadd.f32 0.0, %v7110
            %7112 = vdwg.mxu0
            %v7114 = vsel %vm1156, %v4715, 0
            %v7117 = vsel %vm1156, %v4716, 0
            %v7120 = vsel %vm1156, %v4717, 0
            %v7123 = vsel %vm1156, %v4718, 0
            %v7126 = vsel %vm1156, %v4719, 0
            %v7129 = vsel %vm1156, %v4720, 0
            %v7132 = vsel %vm1156, %v4721, 0
            %v7135 = vsel %vm1156, %v4722, 0
            %v7138 = vsel %vm1156, %v4723, 0
            %v7141 = vsel %vm1156, %v4724, 0
            %v7144 = vsel %vm1156, %v4725, 0
            %v7147 = vsel %vm1156, %v4726, 0
            %v7150 = vsel %vm1156, %v4727, 0
            %v7153 = vsel %vm1156, %v4728, 0
            %v7156 = vsel %vm1156, %v4729, 0
            %v7159 = vsel %vm1156, %v4730, 0
            %7161 = vmatpush.msra.mxu0 0.0
            %7162 = vmatpush.msra.mxu0 0.0
            %7163 = vmatpush.msra.mxu0 0.0
            %7164 = vmatpush.msra.mxu0 0.0
            %7165 = vmatpush.msra.mxu0 0.0
            %7166 = vmatpush.msra.mxu0 0.0
            %7167 = vmatpush.msra.mxu0 0.0
            %7168 = vmatpush.msra.mxu0 0.0
            %7169 = vmatpush.msra.mxu0 0.0
            %7170 = vmatpush.msra.mxu0 0.0
            %7171 = vmatpush.msra.mxu0 0.0
            %7172 = vmatpush.msra.mxu0 0.0
            %7173 = vmatpush.msra.mxu0 0.0
            %7174 = vmatpush.msra.mxu0 0.0
            %7175 = vmatpush.msra.mxu0 0.0
            %7176 = vmatpush.msra.mxu0 %v6996
            %7177 = vmatmul.f32.gmra.mxu0 %v7114
            %v7178 = vpop.f32.mrf.mxu0
            %v7179 = vadd.f32 %v7066, %v7178
            %7180 = vmatmul.f32.gmra.mxu0 %v7117
            %v7181 = vpop.f32.mrf.mxu0
            %v7182 = vadd.f32 %v7069, %v7181
            %7183 = vmatmul.f32.gmra.mxu0 %v7120
            %v7184 = vpop.f32.mrf.mxu0
            %v7185 = vadd.f32 %v7072, %v7184
            %7186 = vmatmul.f32.gmra.mxu0 %v7123
            %v7187 = vpop.f32.mrf.mxu0
            %v7188 = vadd.f32 %v7075, %v7187
            %7189 = vmatmul.f32.gmra.mxu0 %v7126
            %v7190 = vpop.f32.mrf.mxu0
            %v7191 = vadd.f32 %v7078, %v7190
            %7192 = vmatmul.f32.gmra.mxu0 %v7129
            %v7193 = vpop.f32.mrf.mxu0
            %v7194 = vadd.f32 %v7081, %v7193
            %7195 = vmatmul.f32.gmra.mxu0 %v7132
            %v7196 = vpop.f32.mrf.mxu0
            %v7197 = vadd.f32 %v7084, %v7196
            %7198 = vmatmul.f32.gmra.mxu0 %v7135
            %v7199 = vpop.f32.mrf.mxu0
            %v7200 = vadd.f32 %v7087, %v7199
            %7201 = vmatmul.f32.gmra.mxu0 %v7138
            %v7202 = vpop.f32.mrf.mxu0
            %v7203 = vadd.f32 %v7090, %v7202
            %7204 = vmatmul.f32.gmra.mxu0 %v7141
            %v7205 = vpop.f32.mrf.mxu0
            %v7206 = vadd.f32 %v7093, %v7205
            %7207 = vmatmul.f32.gmra.mxu0 %v7144
            %v7208 = vpop.f32.mrf.mxu0
            %v7209 = vadd.f32 %v7096, %v7208
            %7210 = vmatmul.f32.gmra.mxu0 %v7147
            %v7211 = vpop.f32.mrf.mxu0
            %v7212 = vadd.f32 %v7099, %v7211
            %7213 = vmatmul.f32.gmra.mxu0 %v7150
            %v7214 = vpop.f32.mrf.mxu0
            %v7215 = vadd.f32 %v7102, %v7214
            %7216 = vmatmul.f32.gmra.mxu0 %v7153
            %v7217 = vpop.f32.mrf.mxu0
            %v7218 = vadd.f32 %v7105, %v7217
            %7219 = vmatmul.f32.gmra.mxu0 %v7156
            %v7220 = vpop.f32.mrf.mxu0
            %v7221 = vadd.f32 %v7108, %v7220
            %7222 = vmatmul.f32.gmra.mxu0 %v7159
            %v7223 = vpop.f32.mrf.mxu0
            %v7224 = vadd.f32 %v7111, %v7223
            %7225 = vdwg.mxu0
            %v7227 = vsel %vm1156, %v5419, 0
            %v7230 = vsel %vm1156, %v5420, 0
            %v7233 = vsel %vm1156, %v5421, 0
            %v7236 = vsel %vm1156, %v5422, 0
            %v7239 = vsel %vm1156, %v5423, 0
            %v7242 = vsel %vm1156, %v5424, 0
            %v7245 = vsel %vm1156, %v5425, 0
            %v7248 = vsel %vm1156, %v5426, 0
            %v7251 = vsel %vm1156, %v5427, 0
            %v7254 = vsel %vm1156, %v5428, 0
            %v7257 = vsel %vm1156, %v5429, 0
            %v7260 = vsel %vm1156, %v5430, 0
            %v7263 = vsel %vm1156, %v5431, 0
            %v7266 = vsel %vm1156, %v5432, 0
            %v7269 = vsel %vm1156, %v5433, 0
            %v7272 = vsel %vm1156, %v5434, 0
            %7274 = vmatpush.msra.mxu0 0.0
            %7275 = vmatpush.msra.mxu0 0.0
            %7276 = vmatpush.msra.mxu0 0.0
            %7277 = vmatpush.msra.mxu0 0.0
            %7278 = vmatpush.msra.mxu0 0.0
            %7279 = vmatpush.msra.mxu0 0.0
            %7280 = vmatpush.msra.mxu0 0.0
            %7281 = vmatpush.msra.mxu0 0.0
            %7282 = vmatpush.msra.mxu0 0.0
            %7283 = vmatpush.msra.mxu0 0.0
            %7284 = vmatpush.msra.mxu0 0.0
            %7285 = vmatpush.msra.mxu0 0.0
            %7286 = vmatpush.msra.mxu0 0.0
            %7287 = vmatpush.msra.mxu0 0.0
            %7288 = vmatpush.msra.mxu0 0.0
            %7289 = vmatpush.msra.mxu0 %v6998
            %7290 = vmatmul.f32.gmra.mxu0 %v7227
            %v7291 = vpop.f32.mrf.mxu0
            %v7292 = vadd.f32 0.0, %v7291
            %7293 = vmatmul.f32.gmra.mxu0 %v7230
            %v7294 = vpop.f32.mrf.mxu0
            %v7295 = vadd.f32 0.0, %v7294
            %7296 = vmatmul.f32.gmra.mxu0 %v7233
            %v7297 = vpop.f32.mrf.mxu0
            %v7298 = vadd.f32 0.0, %v7297
            %7299 = vmatmul.f32.gmra.mxu0 %v7236
            %v7300 = vpop.f32.mrf.mxu0
            %v7301 = vadd.f32 0.0, %v7300
            %7302 = vmatmul.f32.gmra.mxu0 %v7239
            %v7303 = vpop.f32.mrf.mxu0
            %v7304 = vadd.f32 0.0, %v7303
            %7305 = vmatmul.f32.gmra.mxu0 %v7242
            %v7306 = vpop.f32.mrf.mxu0
            %v7307 = vadd.f32 0.0, %v7306
            %7308 = vmatmul.f32.gmra.mxu0 %v7245
            %v7309 = vpop.f32.mrf.mxu0
            %v7310 = vadd.f32 0.0, %v7309
            %7311 = vmatmul.f32.gmra.mxu0 %v7248
            %v7312 = vpop.f32.mrf.mxu0
            %v7313 = vadd.f32 0.0, %v7312
            %7314 = vmatmul.f32.gmra.mxu0 %v7251
            %v7315 = vpop.f32.mrf.mxu0
            %v7316 = vadd.f32 0.0, %v7315
            %7317 = vmatmul.f32.gmra.mxu0 %v7254
            %v7318 = vpop.f32.mrf.mxu0
            %v7319 = vadd.f32 0.0, %v7318
            %7320 = vmatmul.f32.gmra.mxu0 %v7257
            %v7321 = vpop.f32.mrf.mxu0
            %v7322 = vadd.f32 0.0, %v7321
            %7323 = vmatmul.f32.gmra.mxu0 %v7260
            %v7324 = vpop.f32.mrf.mxu0
            %v7325 = vadd.f32 0.0, %v7324
            %7326 = vmatmul.f32.gmra.mxu0 %v7263
            %v7327 = vpop.f32.mrf.mxu0
            %v7328 = vadd.f32 0.0, %v7327
            %7329 = vmatmul.f32.gmra.mxu0 %v7266
            %v7330 = vpop.f32.mrf.mxu0
            %v7331 = vadd.f32 0.0, %v7330
            %7332 = vmatmul.f32.gmra.mxu0 %v7269
            %v7333 = vpop.f32.mrf.mxu0
            %v7334 = vadd.f32 0.0, %v7333
            %7335 = vmatmul.f32.gmra.mxu0 %v7272
            %v7336 = vpop.f32.mrf.mxu0
            %v7337 = vadd.f32 0.0, %v7336
            %7338 = vdwg.mxu0
            %v7339 = vadd.f32 %v7179, %v7292
            %v7340 = vadd.f32 %v7182, %v7295
            %v7341 = vadd.f32 %v7185, %v7298
            %v7342 = vadd.f32 %v7188, %v7301
            %v7343 = vadd.f32 %v7191, %v7304
            %v7344 = vadd.f32 %v7194, %v7307
            %v7345 = vadd.f32 %v7197, %v7310
            %v7346 = vadd.f32 %v7200, %v7313
            %v7347 = vadd.f32 %v7203, %v7316
            %v7348 = vadd.f32 %v7206, %v7319
            %v7349 = vadd.f32 %v7209, %v7322
            %v7350 = vadd.f32 %v7212, %v7325
            %v7351 = vadd.f32 %v7215, %v7328
            %v7352 = vadd.f32 %v7218, %v7331
            %v7353 = vadd.f32 %v7221, %v7334
            %v7354 = vadd.f32 %v7224, %v7337
            %v7356 = vsel %vm1156, %v5771, 0
            %v7359 = vsel %vm1156, %v5772, 0
            %v7362 = vsel %vm1156, %v5773, 0
            %v7365 = vsel %vm1156, %v5774, 0
            %v7368 = vsel %vm1156, %v5775, 0
            %v7371 = vsel %vm1156, %v5776, 0
            %v7374 = vsel %vm1156, %v5777, 0
            %v7377 = vsel %vm1156, %v5778, 0
            %v7380 = vsel %vm1156, %v5779, 0
            %v7383 = vsel %vm1156, %v5780, 0
            %v7386 = vsel %vm1156, %v5781, 0
            %v7389 = vsel %vm1156, %v5782, 0
            %v7392 = vsel %vm1156, %v5783, 0
            %v7395 = vsel %vm1156, %v5784, 0
            %v7398 = vsel %vm1156, %v5785, 0
            %v7401 = vsel %vm1156, %v5786, 0
            %7403 = vmatpush.msra.mxu0 0.0
            %7404 = vmatpush.msra.mxu0 0.0
            %7405 = vmatpush.msra.mxu0 0.0
            %7406 = vmatpush.msra.mxu0 0.0
            %7407 = vmatpush.msra.mxu0 0.0
            %7408 = vmatpush.msra.mxu0 0.0
            %7409 = vmatpush.msra.mxu0 0.0
            %7410 = vmatpush.msra.mxu0 0.0
            %7411 = vmatpush.msra.mxu0 0.0
            %7412 = vmatpush.msra.mxu0 0.0
            %7413 = vmatpush.msra.mxu0 0.0
            %7414 = vmatpush.msra.mxu0 0.0
            %7415 = vmatpush.msra.mxu0 0.0
            %7416 = vmatpush.msra.mxu0 0.0
            %7417 = vmatpush.msra.mxu0 0.0
            %7418 = vmatpush.msra.mxu0 %v6999
            %7419 = vmatmul.f32.gmra.mxu0 %v7356
            %v7420 = vpop.f32.mrf.mxu0
            %v7421 = vadd.f32 0.0, %v7420
            %7422 = vmatmul.f32.gmra.mxu0 %v7359
            %v7423 = vpop.f32.mrf.mxu0
            %v7424 = vadd.f32 0.0, %v7423
            %7425 = vmatmul.f32.gmra.mxu0 %v7362
            %v7426 = vpop.f32.mrf.mxu0
            %v7427 = vadd.f32 0.0, %v7426
            %7428 = vmatmul.f32.gmra.mxu0 %v7365
            %v7429 = vpop.f32.mrf.mxu0
            %v7430 = vadd.f32 0.0, %v7429
            %7431 = vmatmul.f32.gmra.mxu0 %v7368
            %v7432 = vpop.f32.mrf.mxu0
            %v7433 = vadd.f32 0.0, %v7432
            %7434 = vmatmul.f32.gmra.mxu0 %v7371
            %v7435 = vpop.f32.mrf.mxu0
            %v7436 = vadd.f32 0.0, %v7435
            %7437 = vmatmul.f32.gmra.mxu0 %v7374
            %v7438 = vpop.f32.mrf.mxu0
            %v7439 = vadd.f32 0.0, %v7438
            %7440 = vmatmul.f32.gmra.mxu0 %v7377
            %v7441 = vpop.f32.mrf.mxu0
            %v7442 = vadd.f32 0.0, %v7441
            %7443 = vmatmul.f32.gmra.mxu0 %v7380
            %v7444 = vpop.f32.mrf.mxu0
            %v7445 = vadd.f32 0.0, %v7444
            %7446 = vmatmul.f32.gmra.mxu0 %v7383
            %v7447 = vpop.f32.mrf.mxu0
            %v7448 = vadd.f32 0.0, %v7447
            %7449 = vmatmul.f32.gmra.mxu0 %v7386
            %v7450 = vpop.f32.mrf.mxu0
            %v7451 = vadd.f32 0.0, %v7450
            %7452 = vmatmul.f32.gmra.mxu0 %v7389
            %v7453 = vpop.f32.mrf.mxu0
            %v7454 = vadd.f32 0.0, %v7453
            %7455 = vmatmul.f32.gmra.mxu0 %v7392
            %v7456 = vpop.f32.mrf.mxu0
            %v7457 = vadd.f32 0.0, %v7456
            %7458 = vmatmul.f32.gmra.mxu0 %v7395
            %v7459 = vpop.f32.mrf.mxu0
            %v7460 = vadd.f32 0.0, %v7459
            %7461 = vmatmul.f32.gmra.mxu0 %v7398
            %v7462 = vpop.f32.mrf.mxu0
            %v7463 = vadd.f32 0.0, %v7462
            %7464 = vmatmul.f32.gmra.mxu0 %v7401
            %v7465 = vpop.f32.mrf.mxu0
            %v7466 = vadd.f32 0.0, %v7465
            %7467 = vdwg.mxu0
            %v7468 = vadd.f32 %v7339, %v7421
            %v7469 = vadd.f32 %v7340, %v7424
            %v7470 = vadd.f32 %v7341, %v7427
            %v7471 = vadd.f32 %v7342, %v7430
            %v7472 = vadd.f32 %v7343, %v7433
            %v7473 = vadd.f32 %v7344, %v7436
            %v7474 = vadd.f32 %v7345, %v7439
            %v7475 = vadd.f32 %v7346, %v7442
            %v7476 = vadd.f32 %v7347, %v7445
            %v7477 = vadd.f32 %v7348, %v7448
            %v7478 = vadd.f32 %v7349, %v7451
            %v7479 = vadd.f32 %v7350, %v7454
            %v7480 = vadd.f32 %v7351, %v7457
            %v7481 = vadd.f32 %v7352, %v7460
            %v7482 = vadd.f32 %v7353, %v7463
            %v7483 = vadd.f32 %v7354, %v7466
            %v7484 = vld [vmem:[#allocation11] sm:$0xff]
            %v7485 = vld [vmem:[#allocation11 + $0x8] sm:$0xff]
            %v7486 = vld [vmem:[#allocation11 + $0x10] sm:$0xff]
            %v7487 = vld [vmem:[#allocation11 + $0x18] sm:$0xff]
            %7488 = vmatpush.msra.mxu0 0.0
            %7489 = vmatpush.msra.mxu0 0.0
            %7490 = vmatpush.msra.mxu0 0.0
            %7491 = vmatpush.msra.mxu0 0.0
            %7492 = vmatpush.msra.mxu0 0.0
            %7493 = vmatpush.msra.mxu0 0.0
            %7494 = vmatpush.msra.mxu0 0.0
            %7495 = vmatpush.msra.mxu0 0.0
            %7496 = vmatpush.msra.mxu0 0.0
            %7497 = vmatpush.msra.mxu0 0.0
            %7498 = vmatpush.msra.mxu0 0.0
            %7499 = vmatpush.msra.mxu0 0.0
            %7500 = vmatpush.msra.mxu0 0.0
            %7501 = vmatpush.msra.mxu0 0.0
            %7502 = vmatpush.msra.mxu0 0.0
            %7503 = vmatpush.msra.mxu0 %v7485
            %7504 = vmatmul.f32.gmra.mxu0 %v7001
            %v7505 = vpop.f32.mrf.mxu0
            %v7506 = vadd.f32 0.0, %v7505
            %7507 = vmatmul.f32.gmra.mxu0 %v7004
            %v7508 = vpop.f32.mrf.mxu0
            %v7509 = vadd.f32 0.0, %v7508
            %7510 = vmatmul.f32.gmra.mxu0 %v7007
            %v7511 = vpop.f32.mrf.mxu0
            %v7512 = vadd.f32 0.0, %v7511
            %7513 = vmatmul.f32.gmra.mxu0 %v7010
            %v7514 = vpop.f32.mrf.mxu0
            %v7515 = vadd.f32 0.0, %v7514
            %7516 = vmatmul.f32.gmra.mxu0 %v7013
            %v7517 = vpop.f32.mrf.mxu0
            %v7518 = vadd.f32 0.0, %v7517
            %7519 = vmatmul.f32.gmra.mxu0 %v7016
            %v7520 = vpop.f32.mrf.mxu0
            %v7521 = vadd.f32 0.0, %v7520
            %7522 = vmatmul.f32.gmra.mxu0 %v7019
            %v7523 = vpop.f32.mrf.mxu0
            %v7524 = vadd.f32 0.0, %v7523
            %7525 = vmatmul.f32.gmra.mxu0 %v7022
            %v7526 = vpop.f32.mrf.mxu0
            %v7527 = vadd.f32 0.0, %v7526
            %7528 = vmatmul.f32.gmra.mxu0 %v7025
            %v7529 = vpop.f32.mrf.mxu0
            %v7530 = vadd.f32 0.0, %v7529
            %7531 = vmatmul.f32.gmra.mxu0 %v7028
            %v7532 = vpop.f32.mrf.mxu0
            %v7533 = vadd.f32 0.0, %v7532
            %7534 = vmatmul.f32.gmra.mxu0 %v7031
            %v7535 = vpop.f32.mrf.mxu0
            %v7536 = vadd.f32 0.0, %v7535
            %7537 = vmatmul.f32.gmra.mxu0 %v7034
            %v7538 = vpop.f32.mrf.mxu0
            %v7539 = vadd.f32 0.0, %v7538
            %7540 = vmatmul.f32.gmra.mxu0 %v7037
            %v7541 = vpop.f32.mrf.mxu0
            %v7542 = vadd.f32 0.0, %v7541
            %7543 = vmatmul.f32.gmra.mxu0 %v7040
            %v7544 = vpop.f32.mrf.mxu0
            %v7545 = vadd.f32 0.0, %v7544
            %7546 = vmatmul.f32.gmra.mxu0 %v7043
            %v7547 = vpop.f32.mrf.mxu0
            %v7548 = vadd.f32 0.0, %v7547
            %7549 = vmatmul.f32.gmra.mxu0 %v7046
            %v7550 = vpop.f32.mrf.mxu0
            %v7551 = vadd.f32 0.0, %v7550
            %7552 = vdwg.mxu0
            %7553 = vmatpush.msra.mxu0 0.0
            %7554 = vmatpush.msra.mxu0 0.0
            %7555 = vmatpush.msra.mxu0 0.0
            %7556 = vmatpush.msra.mxu0 0.0
            %7557 = vmatpush.msra.mxu0 0.0
            %7558 = vmatpush.msra.mxu0 0.0
            %7559 = vmatpush.msra.mxu0 0.0
            %7560 = vmatpush.msra.mxu0 0.0
            %7561 = vmatpush.msra.mxu0 0.0
            %7562 = vmatpush.msra.mxu0 0.0
            %7563 = vmatpush.msra.mxu0 0.0
            %7564 = vmatpush.msra.mxu0 0.0
            %7565 = vmatpush.msra.mxu0 0.0
            %7566 = vmatpush.msra.mxu0 0.0
            %7567 = vmatpush.msra.mxu0 0.0
            %7568 = vmatpush.msra.mxu0 %v7484
            %7569 = vmatmul.f32.gmra.mxu0 %v7114
            %v7570 = vpop.f32.mrf.mxu0
            %v7571 = vadd.f32 %v7506, %v7570
            %7572 = vmatmul.f32.gmra.mxu0 %v7117
            %v7573 = vpop.f32.mrf.mxu0
            %v7574 = vadd.f32 %v7509, %v7573
            %7575 = vmatmul.f32.gmra.mxu0 %v7120
            %v7576 = vpop.f32.mrf.mxu0
            %v7577 = vadd.f32 %v7512, %v7576
            %7578 = vmatmul.f32.gmra.mxu0 %v7123
            %v7579 = vpop.f32.mrf.mxu0
            %v7580 = vadd.f32 %v7515, %v7579
            %7581 = vmatmul.f32.gmra.mxu0 %v7126
            %v7582 = vpop.f32.mrf.mxu0
            %v7583 = vadd.f32 %v7518, %v7582
            %7584 = vmatmul.f32.gmra.mxu0 %v7129
            %v7585 = vpop.f32.mrf.mxu0
            %v7586 = vadd.f32 %v7521, %v7585
            %7587 = vmatmul.f32.gmra.mxu0 %v7132
            %v7588 = vpop.f32.mrf.mxu0
            %v7589 = vadd.f32 %v7524, %v7588
            %7590 = vmatmul.f32.gmra.mxu0 %v7135
            %v7591 = vpop.f32.mrf.mxu0
            %v7592 = vadd.f32 %v7527, %v7591
            %7593 = vmatmul.f32.gmra.mxu0 %v7138
            %v7594 = vpop.f32.mrf.mxu0
            %v7595 = vadd.f32 %v7530, %v7594
            %7596 = vmatmul.f32.gmra.mxu0 %v7141
            %v7597 = vpop.f32.mrf.mxu0
            %v7598 = vadd.f32 %v7533, %v7597
            %7599 = vmatmul.f32.gmra.mxu0 %v7144
            %v7600 = vpop.f32.mrf.mxu0
            %v7601 = vadd.f32 %v7536, %v7600
            %7602 = vmatmul.f32.gmra.mxu0 %v7147
            %v7603 = vpop.f32.mrf.mxu0
            %v7604 = vadd.f32 %v7539, %v7603
            %7605 = vmatmul.f32.gmra.mxu0 %v7150
            %v7606 = vpop.f32.mrf.mxu0
            %v7607 = vadd.f32 %v7542, %v7606
            %7608 = vmatmul.f32.gmra.mxu0 %v7153
            %v7609 = vpop.f32.mrf.mxu0
            %v7610 = vadd.f32 %v7545, %v7609
            %7611 = vmatmul.f32.gmra.mxu0 %v7156
            %v7612 = vpop.f32.mrf.mxu0
            %v7613 = vadd.f32 %v7548, %v7612
            %7614 = vmatmul.f32.gmra.mxu0 %v7159
            %v7615 = vpop.f32.mrf.mxu0
            %v7616 = vadd.f32 %v7551, %v7615
            %7617 = vdwg.mxu0
            %7618 = vmatpush.msra.mxu0 0.0
            %7619 = vmatpush.msra.mxu0 0.0
            %7620 = vmatpush.msra.mxu0 0.0
            %7621 = vmatpush.msra.mxu0 0.0
            %7622 = vmatpush.msra.mxu0 0.0
            %7623 = vmatpush.msra.mxu0 0.0
            %7624 = vmatpush.msra.mxu0 0.0
            %7625 = vmatpush.msra.mxu0 0.0
            %7626 = vmatpush.msra.mxu0 0.0
            %7627 = vmatpush.msra.mxu0 0.0
            %7628 = vmatpush.msra.mxu0 0.0
            %7629 = vmatpush.msra.mxu0 0.0
            %7630 = vmatpush.msra.mxu0 0.0
            %7631 = vmatpush.msra.mxu0 0.0
            %7632 = vmatpush.msra.mxu0 0.0
            %7633 = vmatpush.msra.mxu0 %v7486
            %7634 = vmatmul.f32.gmra.mxu0 %v7227
            %v7635 = vpop.f32.mrf.mxu0
            %v7636 = vadd.f32 0.0, %v7635
            %7637 = vmatmul.f32.gmra.mxu0 %v7230
            %v7638 = vpop.f32.mrf.mxu0
            %v7639 = vadd.f32 0.0, %v7638
            %7640 = vmatmul.f32.gmra.mxu0 %v7233
            %v7641 = vpop.f32.mrf.mxu0
            %v7642 = vadd.f32 0.0, %v7641
            %7643 = vmatmul.f32.gmra.mxu0 %v7236
            %v7644 = vpop.f32.mrf.mxu0
            %v7645 = vadd.f32 0.0, %v7644
            %7646 = vmatmul.f32.gmra.mxu0 %v7239
            %v7647 = vpop.f32.mrf.mxu0
            %v7648 = vadd.f32 0.0, %v7647
            %7649 = vmatmul.f32.gmra.mxu0 %v7242
            %v7650 = vpop.f32.mrf.mxu0
            %v7651 = vadd.f32 0.0, %v7650
            %7652 = vmatmul.f32.gmra.mxu0 %v7245
            %v7653 = vpop.f32.mrf.mxu0
            %v7654 = vadd.f32 0.0, %v7653
            %7655 = vmatmul.f32.gmra.mxu0 %v7248
            %v7656 = vpop.f32.mrf.mxu0
            %v7657 = vadd.f32 0.0, %v7656
            %7658 = vmatmul.f32.gmra.mxu0 %v7251
            %v7659 = vpop.f32.mrf.mxu0
            %v7660 = vadd.f32 0.0, %v7659
            %7661 = vmatmul.f32.gmra.mxu0 %v7254
            %v7662 = vpop.f32.mrf.mxu0
            %v7663 = vadd.f32 0.0, %v7662
            %7664 = vmatmul.f32.gmra.mxu0 %v7257
            %v7665 = vpop.f32.mrf.mxu0
            %v7666 = vadd.f32 0.0, %v7665
            %7667 = vmatmul.f32.gmra.mxu0 %v7260
            %v7668 = vpop.f32.mrf.mxu0
            %v7669 = vadd.f32 0.0, %v7668
            %7670 = vmatmul.f32.gmra.mxu0 %v7263
            %v7671 = vpop.f32.mrf.mxu0
            %v7672 = vadd.f32 0.0, %v7671
            %7673 = vmatmul.f32.gmra.mxu0 %v7266
            %v7674 = vpop.f32.mrf.mxu0
            %v7675 = vadd.f32 0.0, %v7674
            %7676 = vmatmul.f32.gmra.mxu0 %v7269
            %v7677 = vpop.f32.mrf.mxu0
            %v7678 = vadd.f32 0.0, %v7677
            %7679 = vmatmul.f32.gmra.mxu0 %v7272
            %v7680 = vpop.f32.mrf.mxu0
            %v7681 = vadd.f32 0.0, %v7680
            %7682 = vdwg.mxu0
            %v7683 = vadd.f32 %v7571, %v7636
            %v7684 = vadd.f32 %v7574, %v7639
            %v7685 = vadd.f32 %v7577, %v7642
            %v7686 = vadd.f32 %v7580, %v7645
            %v7687 = vadd.f32 %v7583, %v7648
            %v7688 = vadd.f32 %v7586, %v7651
            %v7689 = vadd.f32 %v7589, %v7654
            %v7690 = vadd.f32 %v7592, %v7657
            %v7691 = vadd.f32 %v7595, %v7660
            %v7692 = vadd.f32 %v7598, %v7663
            %v7693 = vadd.f32 %v7601, %v7666
            %v7694 = vadd.f32 %v7604, %v7669
            %v7695 = vadd.f32 %v7607, %v7672
            %v7696 = vadd.f32 %v7610, %v7675
            %v7697 = vadd.f32 %v7613, %v7678
            %v7698 = vadd.f32 %v7616, %v7681
            %7699 = vmatpush.msra.mxu0 0.0
            %7700 = vmatpush.msra.mxu0 0.0
            %7701 = vmatpush.msra.mxu0 0.0
            %7702 = vmatpush.msra.mxu0 0.0
            %7703 = vmatpush.msra.mxu0 0.0
            %7704 = vmatpush.msra.mxu0 0.0
            %7705 = vmatpush.msra.mxu0 0.0
            %7706 = vmatpush.msra.mxu0 0.0
            %7707 = vmatpush.msra.mxu0 0.0
            %7708 = vmatpush.msra.mxu0 0.0
            %7709 = vmatpush.msra.mxu0 0.0
            %7710 = vmatpush.msra.mxu0 0.0
            %7711 = vmatpush.msra.mxu0 0.0
            %7712 = vmatpush.msra.mxu0 0.0
            %7713 = vmatpush.msra.mxu0 0.0
            %7714 = vmatpush.msra.mxu0 %v7487
            %7715 = vmatmul.f32.gmra.mxu0 %v7356
            %v7716 = vpop.f32.mrf.mxu0
            %v7717 = vadd.f32 0.0, %v7716
            %7718 = vmatmul.f32.gmra.mxu0 %v7359
            %v7719 = vpop.f32.mrf.mxu0
            %v7720 = vadd.f32 0.0, %v7719
            %7721 = vmatmul.f32.gmra.mxu0 %v7362
            %v7722 = vpop.f32.mrf.mxu0
            %v7723 = vadd.f32 0.0, %v7722
            %7724 = vmatmul.f32.gmra.mxu0 %v7365
            %v7725 = vpop.f32.mrf.mxu0
            %v7726 = vadd.f32 0.0, %v7725
            %7727 = vmatmul.f32.gmra.mxu0 %v7368
            %v7728 = vpop.f32.mrf.mxu0
            %v7729 = vadd.f32 0.0, %v7728
            %7730 = vmatmul.f32.gmra.mxu0 %v7371
            %v7731 = vpop.f32.mrf.mxu0
            %v7732 = vadd.f32 0.0, %v7731
            %7733 = vmatmul.f32.gmra.mxu0 %v7374
            %v7734 = vpop.f32.mrf.mxu0
            %v7735 = vadd.f32 0.0, %v7734
            %7736 = vmatmul.f32.gmra.mxu0 %v7377
            %v7737 = vpop.f32.mrf.mxu0
            %v7738 = vadd.f32 0.0, %v7737
            %7739 = vmatmul.f32.gmra.mxu0 %v7380
            %v7740 = vpop.f32.mrf.mxu0
            %v7741 = vadd.f32 0.0, %v7740
            %7742 = vmatmul.f32.gmra.mxu0 %v7383
            %v7743 = vpop.f32.mrf.mxu0
            %v7744 = vadd.f32 0.0, %v7743
            %7745 = vmatmul.f32.gmra.mxu0 %v7386
            %v7746 = vpop.f32.mrf.mxu0
            %v7747 = vadd.f32 0.0, %v7746
            %7748 = vmatmul.f32.gmra.mxu0 %v7389
            %v7749 = vpop.f32.mrf.mxu0
            %v7750 = vadd.f32 0.0, %v7749
            %7751 = vmatmul.f32.gmra.mxu0 %v7392
            %v7752 = vpop.f32.mrf.mxu0
            %v7753 = vadd.f32 0.0, %v7752
            %7754 = vmatmul.f32.gmra.mxu0 %v7395
            %v7755 = vpop.f32.mrf.mxu0
            %v7756 = vadd.f32 0.0, %v7755
            %7757 = vmatmul.f32.gmra.mxu0 %v7398
            %v7758 = vpop.f32.mrf.mxu0
            %v7759 = vadd.f32 0.0, %v7758
            %7760 = vmatmul.f32.gmra.mxu0 %v7401
            %v7761 = vpop.f32.mrf.mxu0
            %v7762 = vadd.f32 0.0, %v7761
            %7763 = vdwg.mxu0
            %v7764 = vadd.f32 %v7683, %v7717
            %v7765 = vadd.f32 %v7684, %v7720
            %v7766 = vadd.f32 %v7685, %v7723
            %v7767 = vadd.f32 %v7686, %v7726
            %v7768 = vadd.f32 %v7687, %v7729
            %v7769 = vadd.f32 %v7688, %v7732
            %v7770 = vadd.f32 %v7689, %v7735
            %v7771 = vadd.f32 %v7690, %v7738
            %v7772 = vadd.f32 %v7691, %v7741
            %v7773 = vadd.f32 %v7692, %v7744
            %v7774 = vadd.f32 %v7693, %v7747
            %v7775 = vadd.f32 %v7694, %v7750
            %v7776 = vadd.f32 %v7695, %v7753
            %v7777 = vadd.f32 %v7696, %v7756
            %v7778 = vadd.f32 %v7697, %v7759
            %v7779 = vadd.f32 %v7698, %v7762
            %v7780 = vsel %vm6980, 1, 0
            %v7781 = vsel %vm6981, 1, 0
            %v7782 = vsel %vm6982, 1, 0
            %v7783 = vsel %vm6983, 1, 0
            %v7784 = vsel %vm6984, 1, 0
            %v7785 = vsel %vm6985, 1, 0
            %v7786 = vsel %vm6986, 1, 0
            %v7787 = vsel %vm6987, 1, 0
            %v7788 = vsel %vm6988, 1, 0
            %v7789 = vsel %vm6989, 1, 0
            %v7790 = vsel %vm6990, 1, 0
            %v7791 = vsel %vm6991, 1, 0
            %v7792 = vsel %vm6992, 1, 0
            %v7793 = vsel %vm6993, 1, 0
            %v7794 = vsel %vm6994, 1, 0
            %v7795 = vsel %vm6995, 1, 0
            %vm7796 = vcmp.eq.s32.totalorder %v7780, 1
            %vm7797 = vcmp.eq.s32.totalorder %v7781, 1
            %vm7798 = vcmp.eq.s32.totalorder %v7782, 1
            %vm7799 = vcmp.eq.s32.totalorder %v7783, 1
            %vm7800 = vcmp.eq.s32.totalorder %v7784, 1
            %vm7801 = vcmp.eq.s32.totalorder %v7785, 1
            %vm7802 = vcmp.eq.s32.totalorder %v7786, 1
            %vm7803 = vcmp.eq.s32.totalorder %v7787, 1
            %vm7804 = vcmp.eq.s32.totalorder %v7788, 1
            %vm7805 = vcmp.eq.s32.totalorder %v7789, 1
            %vm7806 = vcmp.eq.s32.totalorder %v7790, 1
            %vm7807 = vcmp.eq.s32.totalorder %v7791, 1
            %vm7808 = vcmp.eq.s32.totalorder %v7792, 1
            %vm7809 = vcmp.eq.s32.totalorder %v7793, 1
            %vm7810 = vcmp.eq.s32.totalorder %v7794, 1
            %vm7811 = vcmp.eq.s32.totalorder %v7795, 1
            %v7812 = vsel %vm7796, %v7468, %v7764
            %v7813 = vsel %vm7797, %v7469, %v7765
            %v7814 = vsel %vm7798, %v7470, %v7766
            %v7815 = vsel %vm7799, %v7471, %v7767
            %v7816 = vsel %vm7800, %v7472, %v7768
            %v7817 = vsel %vm7801, %v7473, %v7769
            %v7818 = vsel %vm7802, %v7474, %v7770
            %v7819 = vsel %vm7803, %v7475, %v7771
            %v7820 = vsel %vm7804, %v7476, %v7772
            %v7821 = vsel %vm7805, %v7477, %v7773
            %v7822 = vsel %vm7806, %v7478, %v7774
            %v7823 = vsel %vm7807, %v7479, %v7775
            %v7824 = vsel %vm7808, %v7480, %v7776
            %v7825 = vsel %vm7809, %v7481, %v7777
            %v7826 = vsel %vm7810, %v7482, %v7778
            %v7827 = vsel %vm7811, %v7483, %v7779
            %v7829 = vperm.slane %v5787, 0
            %v7831 = vadd.f32 %v7812, %v7829
            %v7832 = vadd.f32 %v7813, %v7829
            %v7833 = vadd.f32 %v7814, %v7829
            %v7834 = vadd.f32 %v7815, %v7829
            %v7835 = vadd.f32 %v7816, %v7829
            %v7836 = vadd.f32 %v7817, %v7829
            %v7837 = vadd.f32 %v7818, %v7829
            %v7838 = vadd.f32 %v7819, %v7829
            %v7839 = vadd.f32 %v7820, %v7829
            %v7840 = vadd.f32 %v7821, %v7829
            %v7841 = vadd.f32 %v7822, %v7829
            %v7842 = vadd.f32 %v7823, %v7829
            %v7843 = vadd.f32 %v7824, %v7829
            %v7844 = vadd.f32 %v7825, %v7829
            %v7845 = vadd.f32 %v7826, %v7829
            %v7846 = vadd.f32 %v7827, %v7829
            %vm7847 = vcmp.ge.f32.partialorder %v7831, 0.0
            %vm7848 = vcmp.ge.f32.partialorder %v7832, 0.0
            %vm7849 = vcmp.ge.f32.partialorder %v7833, 0.0
            %vm7850 = vcmp.ge.f32.partialorder %v7834, 0.0
            %vm7851 = vcmp.ge.f32.partialorder %v7835, 0.0
            %vm7852 = vcmp.ge.f32.partialorder %v7836, 0.0
            %vm7853 = vcmp.ge.f32.partialorder %v7837, 0.0
            %vm7854 = vcmp.ge.f32.partialorder %v7838, 0.0
            %vm7855 = vcmp.ge.f32.partialorder %v7839, 0.0
            %vm7856 = vcmp.ge.f32.partialorder %v7840, 0.0
            %vm7857 = vcmp.ge.f32.partialorder %v7841, 0.0
            %vm7858 = vcmp.ge.f32.partialorder %v7842, 0.0
            %vm7859 = vcmp.ge.f32.partialorder %v7843, 0.0
            %vm7860 = vcmp.ge.f32.partialorder %v7844, 0.0
            %vm7861 = vcmp.ge.f32.partialorder %v7845, 0.0
            %vm7862 = vcmp.ge.f32.partialorder %v7846, 0.0
            %v7863 = vmul.f32 %v7831, 0.01
            %v7864 = vmul.f32 %v7832, 0.01
            %v7865 = vmul.f32 %v7833, 0.01
            %v7866 = vmul.f32 %v7834, 0.01
            %v7867 = vmul.f32 %v7835, 0.01
            %v7868 = vmul.f32 %v7836, 0.01
            %v7869 = vmul.f32 %v7837, 0.01
            %v7870 = vmul.f32 %v7838, 0.01
            %v7871 = vmul.f32 %v7839, 0.01
            %v7872 = vmul.f32 %v7840, 0.01
            %v7873 = vmul.f32 %v7841, 0.01
            %v7874 = vmul.f32 %v7842, 0.01
            %v7875 = vmul.f32 %v7843, 0.01
            %v7876 = vmul.f32 %v7844, 0.01
            %v7877 = vmul.f32 %v7845, 0.01
            %v7878 = vmul.f32 %v7846, 0.01
            %v7879 = vsel %vm7847, %v7831, %v7863
            %v7880 = vsel %vm7848, %v7832, %v7864
            %v7881 = vsel %vm7849, %v7833, %v7865
            %v7882 = vsel %vm7850, %v7834, %v7866
            %v7883 = vsel %vm7851, %v7835, %v7867
            %v7884 = vsel %vm7852, %v7836, %v7868
            %v7885 = vsel %vm7853, %v7837, %v7869
            %v7886 = vsel %vm7854, %v7838, %v7870
            %v7887 = vsel %vm7855, %v7839, %v7871
            %v7888 = vsel %vm7856, %v7840, %v7872
            %v7889 = vsel %vm7857, %v7841, %v7873
            %v7890 = vsel %vm7858, %v7842, %v7874
            %v7891 = vsel %vm7859, %v7843, %v7875
            %v7892 = vsel %vm7860, %v7844, %v7876
            %v7893 = vsel %vm7861, %v7845, %v7877
            %v7894 = vsel %vm7862, %v7846, %v7878
            %7895 = vst.msk [vmem:[%s539] sm:$0xff] %vm925, %v7879
            %7896 = vst.msk [vmem:[%s539 + $0x8] sm:$0xff] %vm925, %v7880
            %7897 = vst.msk [vmem:[%s539 + $0x10] sm:$0xff] %vm925, %v7881
            %7898 = vst.msk [vmem:[%s539 + $0x18] sm:$0xff] %vm925, %v7882
            %7899 = vst.msk [vmem:[%s539 + $0x20] sm:$0xff] %vm925, %v7883
            %7900 = vst.msk [vmem:[%s539 + $0x28] sm:$0xff] %vm925, %v7884
            %7901 = vst.msk [vmem:[%s539 + $0x30] sm:$0xff] %vm925, %v7885
            %7902 = vst.msk [vmem:[%s539 + $0x38] sm:$0xff] %vm925, %v7886
            %7903 = vst.msk [vmem:[%s539 + $0x40] sm:$0xff] %vm925, %v7887
            %7904 = vst.msk [vmem:[%s539 + $0x48] sm:$0xff] %vm925, %v7888
            %7905 = vst.msk [vmem:[%s539 + $0x50] sm:$0xff] %vm925, %v7889
            %7906 = vst.msk [vmem:[%s539 + $0x58] sm:$0xff] %vm925, %v7890
            %7907 = vst.msk [vmem:[%s539 + $0x60] sm:$0xff] %vm925, %v7891
            %7908 = vst.msk [vmem:[%s539 + $0x68] sm:$0xff] %vm925, %v7892
            %7909 = vst.msk [vmem:[%s539 + $0x70] sm:$0xff] %vm925, %v7893
            %7910 = vst.msk [vmem:[%s539 + $0x78] sm:$0xff] %vm925, %v7894
          $region126: #{tpu_custom_call.1} parent=113 // pred_fallthru
            _
        $region114: #{tpu_custom_call.1} parent=89 // pred_fallthru
          _
        %s7911 = smul.u32 16, %s26
        %p7912 = scmp.lt.s32.totalorder %s7911, 31
        %s7913 = scalar_select %p7912, %s7911, 31
        %s7914 = smul.addr %s7913, 8
        %s7915 = scalar_lea.vmem %s9, %s7914
        // Predicated region
        $region127: #{tpu_custom_call.1} parent=89 // pred_check
          %p7916 = pneg %p258
        $region128: #{tpu_custom_call.1} parent=89 // pred_check_branch
          %7918 = sbr.rel (%p7916) target = $region130
        $region129: #{tpu_custom_call.1} parent=89 // pred_region
          %s7919 = smul.u32 16, %s26
        $region130: #{tpu_custom_call.1} parent=89 // pred_fallthru
          _
      $region90: #{tpu_custom_call.1} parent=5 // pred_fallthru
        _
      %p7920 = scmp.le.s32.totalorder 2, %s17
      // Predicated region
      $region131: #{tpu_custom_call.1} parent=5 // pred_check
        %p7921 = pneg %p7920
      $region132: #{tpu_custom_call.1} parent=5 // pred_check_branch
        %7923 = sbr.rel (%p7921) target = $region134
      $region133: #{tpu_custom_call.1} parent=5 // pred_region
        %s7924 = ssub.s32 %s17, 2
        // Predicated region
        $region135: #{tpu_custom_call.1} parent=133 // pred_check
          %p7925 = pneg %p264
        $region136: #{tpu_custom_call.1} parent=133 // pred_check_branch
          %7927 = sbr.rel (%p7925) target = $region138
        $region137: #{tpu_custom_call.1} parent=133 // pred_region
          %s7928 = smul.u32 16, %s28
          %p7929 = scmp.lt.s32.totalorder %s7928, 31
          %s7930 = scalar_select %p7929, %s7928, 31
          %s7931 = smul.addr %s7930, 8
          %s7932 = scalar_lea.vmem %s9, %s7931
        $region138: #{tpu_custom_call.1} parent=133 // pred_fallthru
          _
      $region134: #{tpu_custom_call.1} parent=5 // pred_fallthru
        _
    $region6: #{tpu_custom_call.1} parent=1 // loop_footer
      %s21 = sadd.s32 1, %s17
    $region7: #{tpu_custom_call.1} parent=1 // loop_footer_branch
      %16 = sbr.rel target = $region3
    $region8: #{tpu_custom_call.1} parent=1 // loop_exit
      _
    %7933 = vsyncpa [#allocation8], 1
    %s7934 = scalar_lea.sflag [#allocation8], 1
    %7935 = vsyncpa %s7934, 1
    %7936 = vsyncpa [#allocation10], 1

</llo_original>
